<compile_context>
chip_gen: v7x
topology: tpu7x:2x2x1
jax: 0.10.0
libtpu: 0.0.40
codegen_flags: <defaults>
</compile_context>

<pallas_src>
import numpy as np
import jax
import jax.numpy as jnp
from jax.experimental import pallas as pl
from jax.experimental.pallas import tpu as pltpu

# ---- problem sizes (consistent with the PyTorch module) --------------------
B, C, H, W = 2, 8, 16, 16          # inplanes = 8  (NCHW ref would be (2,8,16,16))
GROUPS = 2
REDUCT = 2
KSIZES = (3, 5, 7)                 # iksize
PLANES = 3 * C                     # final 1x1 conv input channels
GC = C // GROUPS                   # group channels
CR = C // REDUCT                   # reduced channels inside involution
EPS = 1e-5

PMAX = max((k - 1) // 2 for k in KSIZES)      # 3 (shared zero-pad)
WC = W * C                                     # 128  -> full lane width
K2S = tuple(k * k for k in KSIZES)             # (9, 25, 49)
NSHIFT = 2 * PMAX + 1                          # 7 pre-shifted copies of x
QW = (CR + 1) * W                              # 80 conv1 cols per branch (incl. ones)
NCOLS = 3 * QW                                 # 240 conv1 output columns


# ---------------------------------------------------------------------------
# Fused Pallas kernel (single grid step, lane-dense (B*H, W*C) layout).
# ---------------------------------------------------------------------------
def ivou_kernel(xw_ref, xs_ref, w1w_ref, b1w_ref, wt0_ref, wt1_ref, wt2_ref,
                bbn_ref, wcb_ref, out_ref):
    hp = jax.lax.Precision.HIGHEST
    xw = xw_ref[...]                                           # (B*H, 128)

    # conv1 (+folded BN) of all 3 branches + constant-one channel: one MXU matmul.
    t = jnp.dot(xw, w1w_ref[...], precision=hp,
                preferred_element_type=jnp.float32)            # (B*H, 240)
    t = jnp.maximum(t + b1w_ref[...], 0.0)

    y = xw                                                     # residual
    wt_refs = (wt0_ref, wt1_ref, wt2_ref)
    for br, k in enumerate(KSIZES):
        d = PMAX - (k - 1) // 2
        k2 = k * k

        # All per-pixel involution tap weights of this branch in ONE MXU matmul
        # (conv2 bias + outer-BN scale already folded into the packed bf16 table).
        t_br = t[:, br * QW:(br + 1) * QW].astype(jnp.bfloat16)      # (B*H, 80)
        wg = jnp.dot(t_br, wt_refs[br][...],
                     preferred_element_type=jnp.float32)             # (B*H, k2*128)

        # Accumulator in (B, H, WC); initialized with the outer-BN bias.
        acc = jnp.broadcast_to(bbn_ref[br:br + 1, :].reshape(1, 1, WC), (B, H, WC))
        for j in range(k):
            xcol = xs_ref[d + j]                               # (B, H+2*PMAX, 128)
            for i in range(k):
                tap = i * k + j
                xs = xcol[:, d + i:d + i + H, :]               # (B, H, 128) row slice
                wm = wg[:, tap * WC:(tap + 1) * WC].reshape(B, H, WC)
                acc = acc + xs * wm                            # one lane-dense FMA

        o = jnp.maximum(acc.reshape(B * H, WC), 0.0)           # outer BN + ReLU
        # final 1x1 conv contribution of this branch (block-diagonal over w)
        y = y + jnp.dot(o, wcb_ref[br], precision=hp,
                        preferred_element_type=jnp.float32)

    out_ref[...] = y                                           # unmasked lane-dense store


def ivou_bottleneck(x, packed):
    x_wide = x.reshape(B * H, WC)

    # Shared zero-pad once; pre-shift columns so every in-kernel tap read is a
    # pure row (sublane) slice that never needs a lane shift.
    x_pad = jnp.pad(x, ((0, 0), (PMAX, PMAX), (PMAX, PMAX), (0, 0)))   # (B,22,22,C)
    x_shift = jnp.stack(
        [x_pad[:, :, s:s + W, :].reshape(B, H + 2 * PMAX, WC)
         for s in range(NSHIFT)], axis=0)                              # (7,B,22,128)

    def full(shape):
        return pl.BlockSpec(shape, lambda b: (0,) * len(shape))

    out = pl.pallas_call(
        ivou_kernel,
        out_shape=jax.ShapeDtypeStruct((B * H, WC), jnp.float32),
        grid=(1,),
        in_specs=[
            full((B * H, WC)),                        # x, lane dense
            full((NSHIFT, B, H + 2 * PMAX, WC)),      # pre-shifted padded x
            full((WC, NCOLS)),                        # conv1 weights (BN folded + ones)
            full((1, NCOLS)),                         # conv1 bias
            full((QW, K2S[0] * WC)),                  # fused tap tables (bf16)
            full((QW, K2S[1] * WC)),
            full((QW, K2S[2] * WC)),
            full((3, WC)),                            # outer-BN bias
            full((3, WC, WC)),                        # block-diag final 1x1 conv
        ],
        out_specs=full((B * H, WC)),
        compiler_params=pltpu.CompilerParams(dimension_semantics=("arbitrary",)),
    )(x_wide, x_shift, packed["w1w"], packed["b1w"],
      packed["wtap"][0], packed["wtap"][1], packed["wtap"][2],
      packed["bbn"], packed["wcb"])

    return out.reshape(B, H, W, C)


# ---------------------------------------------------------------------------
# Host-side packing of the raw (folded-BN) parameters into kernel operands.
# ---------------------------------------------------------------------------
def pack_params(params):
    w1w = np.zeros((WC, NCOLS), np.float32)
    b1w = np.zeros((1, NCOLS), np.float32)
    bbn = np.zeros((3, WC), np.float32)
    wcb = np.zeros((3, WC, WC), np.float32)
    wtaps = []
    wc = np.asarray(params["wc"], np.float32)                  # (3C, C)
    gidx = np.arange(C) // GC                                  # group of each channel

    for br, k in enumerate(KSIZES):
        p = params["inv"][br]
        k2 = k * k
        w1 = np.asarray(p["w1"], np.float32)                   # (C, CR)
        s1 = np.asarray(p["s1"], np.float32).reshape(-1)       # (CR,)
        b1 = np.asarray(p["b1"], np.float32).reshape(-1)       # (CR,)
        w2 = np.asarray(p["w2"], np.float32)                   # (CR, G*k2)
        b2 = np.asarray(p["b2"], np.float32).reshape(-1)       # (G*k2,)
        sbn = np.asarray(p["sbn"], np.float32).reshape(-1)     # (C,)
        bbn_v = np.asarray(p["bbn"], np.float32).reshape(-1)   # (C,)

        # conv1 (+ its BN scale folded) as a block-diagonal (WC, QW) block, plus
        # a pseudo reduced channel (zero weights, bias 1) -> constant 1 after ReLU.
        w1f = w1 * s1[None, :]
        for r in range(CR):
            for w in range(W):
                w1w[w * C:(w + 1) * C, br * QW + r * W + w] = w1f[:, r]
            b1w[0, br * QW + r * W:br * QW + (r + 1) * W] = b1[r]
        b1w[0, br * QW + CR * W:br * QW + QW] = 1.0

        # fused tap-weight table: wg[row, t*WC + w*C + c] =
        #   sum_r t[b,h,w,r]*w2[r,g(c)*k2+t]*sbn[c] + b2[g(c)*k2+t]*sbn[c]
        v = np.zeros((CR + 1, k2, C), np.float32)
        for t in range(k2):
            cols = gidx * k2 + t                               # weight column per channel
            v[:CR, t, :] = w2[:, cols] * sbn[None, :]
            v[CR, t, :] = b2[cols] * sbn
        wt = np.zeros((CR + 1, W, k2, W, C), np.float32)
        for w in range(W):
            wt[:, w, :, w, :] = v
        wtaps.append(jnp.asarray(wt.reshape(QW, k2 * WC), jnp.bfloat16))

        bbn[br] = np.tile(bbn_v, W)
        wcb[br] = np.kron(np.eye(W, dtype=np.float32), wc[br * C:(br + 1) * C, :])

    return dict(w1w=jnp.asarray(w1w), b1w=jnp.asarray(b1w), wtap=tuple(wtaps),
                bbn=jnp.asarray(bbn), wcb=jnp.asarray(wcb))


# ---------------------------------------------------------------------------
# Deterministic parameter construction (folded-BN inference form).
# ---------------------------------------------------------------------------
def init_params(key):
    keys = iter(jax.random.split(key, 64))

    def bn_fold(shape):
        gamma = jax.random.uniform(next(keys), shape, jnp.float32, 0.5, 1.5)
        beta = jax.random.normal(next(keys), shape, jnp.float32) * 0.1
        mean = jax.random.normal(next(keys), shape, jnp.float32) * 0.1
        var = jax.random.uniform(next(keys), shape, jnp.float32, 0.5, 1.5)
        scale = gamma / jnp.sqrt(var + EPS)
        bias = beta - mean * scale
        return scale, bias

    inv_params = []
    for k in KSIZES:
        k2g = k * k * GROUPS
        w1 = jax.random.normal(next(keys), (C, CR), jnp.float32) * 0.3
        s1, b1 = bn_fold((1, CR))
        w2 = jax.random.normal(next(keys), (CR, k2g), jnp.float32) * 0.3
        b2 = jax.random.normal(next(keys), (1, k2g), jnp.float32) * 0.1
        sbn, bbn = bn_fold((1, 1, C))
        inv_params.append(dict(w1=w1, s1=s1, b1=b1, w2=w2, b2=b2, sbn=sbn, bbn=bbn))

    wc = jax.random.normal(next(keys), (PLANES, C), jnp.float32) * 0.2
    return dict(inv=inv_params, wc=wc)


# ---------------------------------------------------------------------------
# Pure-JAX reference (same math, NHWC) for verification.
# ---------------------------------------------------------------------------
def ivou_reference(x, params):
    hp = jax.lax.Precision.HIGHEST
    outs = []
    for idx, k in enumerate(KSIZES):
        p = params["inv"][idx]
        pad = (k - 1) // 2
        k2 = k * k
        xm = x.reshape(B, H * W, C)
        t = jnp.einsum("bpc,cr->bpr", xm, p["w1"], precision=hp)
        t = jnp.maximum(t * p["s1"] + p["b1"], 0.0)
        wgt = jnp.einsum("bpr,rn->bpn", t, p["w2"], precision=hp) + p["b2"]
        wgt = wgt.reshape(B, H, W, GROUPS, k2)
        xp = jnp.pad(x, ((0, 0), (pad, pad), (pad, pad), (0, 0)))
        acc = jnp.zeros((B, H, W, GROUPS, GC), jnp.float32)
        for i in range(k):
            for j in range(k):
                xs = xp[:, i:i + H, j:j + W, :].reshape(B, H, W, GROUPS, GC)
                acc = acc + xs * wgt[:, :, :, :, i * k + j][..., None]
        o = acc.reshape(B, H, W, C)
        outs.append(jnp.maximum(o * p["sbn"] + p["bbn"], 0.0))
    cat = jnp.concatenate(outs, axis=-1)
    y = jnp.einsum("bhwn,nc->bhwc", cat, params["wc"], precision=hp)
    return y + x


if __name__ == "__main__":
    root = jax.random.PRNGKey(0)
    kx, kp = jax.random.split(root)
    x = jax.random.normal(kx, (B, H, W, C), jnp.float32)   # NHWC
    params = init_params(kp)
    packed = pack_params(params)

    out = jax.block_until_ready(ivou_bottleneck(x, packed))
    ref = jax.block_until_ready(ivou_reference(x, params))

    assert out.shape == (B, H, W, C)
    # Tolerance is intentional: the fused tap-weight table is stored in bf16
    # (per perf review) so the involution weights carry ~2^-9 relative rounding,
    # which accumulates to ~1e-2-level absolute differences vs the f32/HIGHEST
    # reference.  conv1 / final 1x1 matmuls run at precision=HIGHEST.
    err = float(jnp.max(jnp.abs(out - ref)))
    assert jnp.allclose(out, ref, atol=4e-2, rtol=4e-2), err

    print("KERNEL_OK")
</pallas_src>

<mosaic_0001>
module attributes {stable_mosaic.version = 11 : i64} {
  func.func @ivou_kernel(%arg0: i32, %arg1: memref<32x128xf32, #tpu.memory_space<vmem>>, %arg2: memref<7x2x22x128xf32, #tpu.memory_space<vmem>>, %arg3: memref<128x240xf32, #tpu.memory_space<vmem>>, %arg4: memref<1x240xf32, #tpu.memory_space<vmem>>, %arg5: memref<80x1152xbf16, #tpu.memory_space<vmem>>, %arg6: memref<80x3200xbf16, #tpu.memory_space<vmem>>, %arg7: memref<80x6272xbf16, #tpu.memory_space<vmem>>, %arg8: memref<3x128xf32, #tpu.memory_space<vmem>>, %arg9: memref<3x128x128xf32, #tpu.memory_space<vmem>>, %arg10: memref<32x128xf32, #tpu.memory_space<vmem>>) attributes {dimension_semantics = [#tpu.dimension_semantics<arbitrary>], iteration_bounds = array<i64: 1>, scalar_prefetch = 0 : i64, scratch_operands = 0 : i64, tpu.core_type = #tpu.core_type<tc>, window_params = [{pipeline_mode = #tpu.pipeline_mode<synchronous>, transform_indices = @transform_0, window_bounds = array<i64: 32, 128>}, {pipeline_mode = #tpu.pipeline_mode<synchronous>, transform_indices = @transform_1, window_bounds = array<i64: 7, 2, 22, 128>}, {pipeline_mode = #tpu.pipeline_mode<synchronous>, transform_indices = @transform_2, window_bounds = array<i64: 128, 240>}, {pipeline_mode = #tpu.pipeline_mode<synchronous>, transform_indices = @transform_3, window_bounds = array<i64: 1, 240>}, {pipeline_mode = #tpu.pipeline_mode<synchronous>, transform_indices = @transform_4, window_bounds = array<i64: 80, 1152>}, {pipeline_mode = #tpu.pipeline_mode<synchronous>, transform_indices = @transform_5, window_bounds = array<i64: 80, 3200>}, {pipeline_mode = #tpu.pipeline_mode<synchronous>, transform_indices = @transform_6, window_bounds = array<i64: 80, 6272>}, {pipeline_mode = #tpu.pipeline_mode<synchronous>, transform_indices = @transform_7, window_bounds = array<i64: 3, 128>}, {pipeline_mode = #tpu.pipeline_mode<synchronous>, transform_indices = @transform_8, window_bounds = array<i64: 3, 128, 128>}, {pipeline_mode = #tpu.pipeline_mode<synchronous>, transform_indices = @transform_9, window_bounds = array<i64: 32, 128>}]} {
    %c0 = arith.constant 0 : index
    %c0_0 = arith.constant 0 : index
    %0 = vector.load %arg1[%c0, %c0_0] : memref<32x128xf32, #tpu.memory_space<vmem>>, vector<32x128xf32>
    %c0_1 = arith.constant 0 : index
    %c0_2 = arith.constant 0 : index
    %1 = vector.load %arg3[%c0_1, %c0_2] : memref<128x240xf32, #tpu.memory_space<vmem>>, vector<128x240xf32>
    %cst = arith.constant dense<0.000000e+00> : vector<32x240xf32>
    %2 = tpu.matmul %0, %1, %cst {dimension_numbers = #tpu.dot_dimension_numbers<[1], [0], [0], [1], [0, 0, 1, 1], [], []>, precision = #tpu.contract_precision<fp32>} : vector<32x128xf32>, vector<128x240xf32>, vector<32x240xf32> -> vector<32x240xf32>
    %c0_3 = arith.constant 0 : index
    %c0_4 = arith.constant 0 : index
    %3 = vector.load %arg4[%c0_3, %c0_4] : memref<1x240xf32, #tpu.memory_space<vmem>>, vector<1x240xf32>
    %4 = vector.broadcast %3 : vector<1x240xf32> to vector<32x240xf32>
    %5 = arith.addf %2, %4 : vector<32x240xf32>
    %cst_5 = arith.constant 0.000000e+00 : f32
    %6 = vector.broadcast %cst_5 : f32 to vector<32x240xf32>
    %7 = arith.maximumf %5, %6 : vector<32x240xf32>
    %8 = vector.extract_strided_slice %7 {offsets = [0, 0], sizes = [32, 80], strides = [1, 1]} : vector<32x240xf32> to vector<32x80xf32>
    %9 = arith.truncf %8 : vector<32x80xf32> to vector<32x80xbf16>
    %c0_6 = arith.constant 0 : index
    %c0_7 = arith.constant 0 : index
    %10 = vector.load %arg5[%c0_6, %c0_7] : memref<80x1152xbf16, #tpu.memory_space<vmem>>, vector<80x1152xbf16>
    %cst_8 = arith.constant dense<0.000000e+00> : vector<32x1152xf32>
    %11 = tpu.matmul %9, %10, %cst_8 {dimension_numbers = #tpu.dot_dimension_numbers<[1], [0], [0], [1], [0, 0, 1, 1], [], []>} : vector<32x80xbf16>, vector<80x1152xbf16>, vector<32x1152xf32> -> vector<32x1152xf32>
    %c0_9 = arith.constant 0 : index
    %c0_10 = arith.constant 0 : index
    %12 = vector.load %arg8[%c0_9, %c0_10] : memref<3x128xf32, #tpu.memory_space<vmem>>, vector<1x128xf32>
    %13 = vector.shape_cast %12 : vector<1x128xf32> to vector<1x1x128xf32>
    %14 = vector.shape_cast %13 : vector<1x1x128xf32> to vector<1x1x128xf32>
    %15 = vector.broadcast %14 : vector<1x1x128xf32> to vector<2x16x128xf32>
    %c2 = arith.constant 2 : index
    %c0_11 = arith.constant 0 : index
    %c0_12 = arith.constant 0 : index
    %c0_13 = arith.constant 0 : index
    %16 = vector.load %arg2[%c2, %c0_11, %c0_12, %c0_13] : memref<7x2x22x128xf32, #tpu.memory_space<vmem>>, vector<1x2x22x128xf32>
    %17 = vector.shape_cast %16 : vector<1x2x22x128xf32> to vector<2x22x128xf32>
    %18 = vector.extract_strided_slice %17 {offsets = [0, 2, 0], sizes = [2, 16, 128], strides = [1, 1, 1]} : vector<2x22x128xf32> to vector<2x16x128xf32>
    %19 = vector.extract_strided_slice %11 {offsets = [0, 0], sizes = [32, 128], strides = [1, 1]} : vector<32x1152xf32> to vector<32x128xf32>
    %20 = vector.shape_cast %19 : vector<32x128xf32> to vector<2x16x128xf32>
    %21 = arith.mulf %18, %20 : vector<2x16x128xf32>
    %22 = arith.addf %15, %21 : vector<2x16x128xf32>
    %23 = vector.extract_strided_slice %17 {offsets = [0, 3, 0], sizes = [2, 16, 128], strides = [1, 1, 1]} : vector<2x22x128xf32> to vector<2x16x128xf32>
    %24 = vector.extract_strided_slice %11 {offsets = [0, 384], sizes = [32, 128], strides = [1, 1]} : vector<32x1152xf32> to vector<32x128xf32>
    %25 = vector.shape_cast %24 : vector<32x128xf32> to vector<2x16x128xf32>
    %26 = arith.mulf %23, %25 : vector<2x16x128xf32>
    %27 = arith.addf %22, %26 : vector<2x16x128xf32>
    %28 = vector.extract_strided_slice %17 {offsets = [0, 4, 0], sizes = [2, 16, 128], strides = [1, 1, 1]} : vector<2x22x128xf32> to vector<2x16x128xf32>
    %29 = vector.extract_strided_slice %11 {offsets = [0, 768], sizes = [32, 128], strides = [1, 1]} : vector<32x1152xf32> to vector<32x128xf32>
    %30 = vector.shape_cast %29 : vector<32x128xf32> to vector<2x16x128xf32>
    %31 = arith.mulf %28, %30 : vector<2x16x128xf32>
    %32 = arith.addf %27, %31 : vector<2x16x128xf32>
    %c3 = arith.constant 3 : index
    %c0_14 = arith.constant 0 : index
    %c0_15 = arith.constant 0 : index
    %c0_16 = arith.constant 0 : index
    %33 = vector.load %arg2[%c3, %c0_14, %c0_15, %c0_16] : memref<7x2x22x128xf32, #tpu.memory_space<vmem>>, vector<1x2x22x128xf32>
    %34 = vector.shape_cast %33 : vector<1x2x22x128xf32> to vector<2x22x128xf32>
    %35 = vector.extract_strided_slice %34 {offsets = [0, 2, 0], sizes = [2, 16, 128], strides = [1, 1, 1]} : vector<2x22x128xf32> to vector<2x16x128xf32>
    %36 = vector.extract_strided_slice %11 {offsets = [0, 128], sizes = [32, 128], strides = [1, 1]} : vector<32x1152xf32> to vector<32x128xf32>
    %37 = vector.shape_cast %36 : vector<32x128xf32> to vector<2x16x128xf32>
    %38 = arith.mulf %35, %37 : vector<2x16x128xf32>
    %39 = arith.addf %32, %38 : vector<2x16x128xf32>
    %40 = vector.extract_strided_slice %34 {offsets = [0, 3, 0], sizes = [2, 16, 128], strides = [1, 1, 1]} : vector<2x22x128xf32> to vector<2x16x128xf32>
    %41 = vector.extract_strided_slice %11 {offsets = [0, 512], sizes = [32, 128], strides = [1, 1]} : vector<32x1152xf32> to vector<32x128xf32>
    %42 = vector.shape_cast %41 : vector<32x128xf32> to vector<2x16x128xf32>
    %43 = arith.mulf %40, %42 : vector<2x16x128xf32>
    %44 = arith.addf %39, %43 : vector<2x16x128xf32>
    %45 = vector.extract_strided_slice %34 {offsets = [0, 4, 0], sizes = [2, 16, 128], strides = [1, 1, 1]} : vector<2x22x128xf32> to vector<2x16x128xf32>
    %46 = vector.extract_strided_slice %11 {offsets = [0, 896], sizes = [32, 128], strides = [1, 1]} : vector<32x1152xf32> to vector<32x128xf32>
    %47 = vector.shape_cast %46 : vector<32x128xf32> to vector<2x16x128xf32>
    %48 = arith.mulf %45, %47 : vector<2x16x128xf32>
    %49 = arith.addf %44, %48 : vector<2x16x128xf32>
    %c4 = arith.constant 4 : index
    %c0_17 = arith.constant 0 : index
    %c0_18 = arith.constant 0 : index
    %c0_19 = arith.constant 0 : index
    %50 = vector.load %arg2[%c4, %c0_17, %c0_18, %c0_19] : memref<7x2x22x128xf32, #tpu.memory_space<vmem>>, vector<1x2x22x128xf32>
    %51 = vector.shape_cast %50 : vector<1x2x22x128xf32> to vector<2x22x128xf32>
    %52 = vector.extract_strided_slice %51 {offsets = [0, 2, 0], sizes = [2, 16, 128], strides = [1, 1, 1]} : vector<2x22x128xf32> to vector<2x16x128xf32>
    %53 = vector.extract_strided_slice %11 {offsets = [0, 256], sizes = [32, 128], strides = [1, 1]} : vector<32x1152xf32> to vector<32x128xf32>
    %54 = vector.shape_cast %53 : vector<32x128xf32> to vector<2x16x128xf32>
    %55 = arith.mulf %52, %54 : vector<2x16x128xf32>
    %56 = arith.addf %49, %55 : vector<2x16x128xf32>
    %57 = vector.extract_strided_slice %51 {offsets = [0, 3, 0], sizes = [2, 16, 128], strides = [1, 1, 1]} : vector<2x22x128xf32> to vector<2x16x128xf32>
    %58 = vector.extract_strided_slice %11 {offsets = [0, 640], sizes = [32, 128], strides = [1, 1]} : vector<32x1152xf32> to vector<32x128xf32>
    %59 = vector.shape_cast %58 : vector<32x128xf32> to vector<2x16x128xf32>
    %60 = arith.mulf %57, %59 : vector<2x16x128xf32>
    %61 = arith.addf %56, %60 : vector<2x16x128xf32>
    %62 = vector.extract_strided_slice %51 {offsets = [0, 4, 0], sizes = [2, 16, 128], strides = [1, 1, 1]} : vector<2x22x128xf32> to vector<2x16x128xf32>
    %63 = vector.extract_strided_slice %11 {offsets = [0, 1024], sizes = [32, 128], strides = [1, 1]} : vector<32x1152xf32> to vector<32x128xf32>
    %64 = vector.shape_cast %63 : vector<32x128xf32> to vector<2x16x128xf32>
    %65 = arith.mulf %62, %64 : vector<2x16x128xf32>
    %66 = arith.addf %61, %65 : vector<2x16x128xf32>
    %67 = vector.shape_cast %66 : vector<2x16x128xf32> to vector<32x128xf32>
    %cst_20 = arith.constant 0.000000e+00 : f32
    %68 = vector.broadcast %cst_20 : f32 to vector<32x128xf32>
    %69 = arith.maximumf %67, %68 : vector<32x128xf32>
    %c0_21 = arith.constant 0 : index
    %c0_22 = arith.constant 0 : index
    %c0_23 = arith.constant 0 : index
    %70 = vector.load %arg9[%c0_21, %c0_22, %c0_23] : memref<3x128x128xf32, #tpu.memory_space<vmem>>, vector<1x128x128xf32>
    %71 = vector.shape_cast %70 : vector<1x128x128xf32> to vector<128x128xf32>
    %cst_24 = arith.constant dense<0.000000e+00> : vector<32x128xf32>
    %72 = tpu.matmul %69, %71, %cst_24 {dimension_numbers = #tpu.dot_dimension_numbers<[1], [0], [0], [1], [0, 0, 1, 1], [], []>, precision = #tpu.contract_precision<fp32>} : vector<32x128xf32>, vector<128x128xf32>, vector<32x128xf32> -> vector<32x128xf32>
    %73 = arith.addf %0, %72 : vector<32x128xf32>
    %74 = vector.extract_strided_slice %7 {offsets = [0, 80], sizes = [32, 80], strides = [1, 1]} : vector<32x240xf32> to vector<32x80xf32>
    %75 = arith.truncf %74 : vector<32x80xf32> to vector<32x80xbf16>
    %c0_25 = arith.constant 0 : index
    %c0_26 = arith.constant 0 : index
    %76 = vector.load %arg6[%c0_25, %c0_26] : memref<80x3200xbf16, #tpu.memory_space<vmem>>, vector<80x3200xbf16>
    %cst_27 = arith.constant dense<0.000000e+00> : vector<32x3200xf32>
    %77 = tpu.matmul %75, %76, %cst_27 {dimension_numbers = #tpu.dot_dimension_numbers<[1], [0], [0], [1], [0, 0, 1, 1], [], []>} : vector<32x80xbf16>, vector<80x3200xbf16>, vector<32x3200xf32> -> vector<32x3200xf32>
    %c1 = arith.constant 1 : index
    %c0_28 = arith.constant 0 : index
    %78 = vector.load %arg8[%c1, %c0_28] : memref<3x128xf32, #tpu.memory_space<vmem>>, vector<1x128xf32>
    %79 = vector.shape_cast %78 : vector<1x128xf32> to vector<1x1x128xf32>
    %80 = vector.shape_cast %79 : vector<1x1x128xf32> to vector<1x1x128xf32>
    %81 = vector.broadcast %80 : vector<1x1x128xf32> to vector<2x16x128xf32>
    %c1_29 = arith.constant 1 : index
    %c0_30 = arith.constant 0 : index
    %c0_31 = arith.constant 0 : index
    %c0_32 = arith.constant 0 : index
    %82 = vector.load %arg2[%c1_29, %c0_30, %c0_31, %c0_32] : memref<7x2x22x128xf32, #tpu.memory_space<vmem>>, vector<1x2x22x128xf32>
    %83 = vector.shape_cast %82 : vector<1x2x22x128xf32> to vector<2x22x128xf32>
    %84 = vector.extract_strided_slice %83 {offsets = [0, 1, 0], sizes = [2, 16, 128], strides = [1, 1, 1]} : vector<2x22x128xf32> to vector<2x16x128xf32>
    %85 = vector.extract_strided_slice %77 {offsets = [0, 0], sizes = [32, 128], strides = [1, 1]} : vector<32x3200xf32> to vector<32x128xf32>
    %86 = vector.shape_cast %85 : vector<32x128xf32> to vector<2x16x128xf32>
    %87 = arith.mulf %84, %86 : vector<2x16x128xf32>
    %88 = arith.addf %81, %87 : vector<2x16x128xf32>
    %89 = vector.extract_strided_slice %83 {offsets = [0, 2, 0], sizes = [2, 16, 128], strides = [1, 1, 1]} : vector<2x22x128xf32> to vector<2x16x128xf32>
    %90 = vector.extract_strided_slice %77 {offsets = [0, 640], sizes = [32, 128], strides = [1, 1]} : vector<32x3200xf32> to vector<32x128xf32>
    %91 = vector.shape_cast %90 : vector<32x128xf32> to vector<2x16x128xf32>
    %92 = arith.mulf %89, %91 : vector<2x16x128xf32>
    %93 = arith.addf %88, %92 : vector<2x16x128xf32>
    %94 = vector.extract_strided_slice %83 {offsets = [0, 3, 0], sizes = [2, 16, 128], strides = [1, 1, 1]} : vector<2x22x128xf32> to vector<2x16x128xf32>
    %95 = vector.extract_strided_slice %77 {offsets = [0, 1280], sizes = [32, 128], strides = [1, 1]} : vector<32x3200xf32> to vector<32x128xf32>
    %96 = vector.shape_cast %95 : vector<32x128xf32> to vector<2x16x128xf32>
    %97 = arith.mulf %94, %96 : vector<2x16x128xf32>
    %98 = arith.addf %93, %97 : vector<2x16x128xf32>
    %99 = vector.extract_strided_slice %83 {offsets = [0, 4, 0], sizes = [2, 16, 128], strides = [1, 1, 1]} : vector<2x22x128xf32> to vector<2x16x128xf32>
    %100 = vector.extract_strided_slice %77 {offsets = [0, 1920], sizes = [32, 128], strides = [1, 1]} : vector<32x3200xf32> to vector<32x128xf32>
    %101 = vector.shape_cast %100 : vector<32x128xf32> to vector<2x16x128xf32>
    %102 = arith.mulf %99, %101 : vector<2x16x128xf32>
    %103 = arith.addf %98, %102 : vector<2x16x128xf32>
    %104 = vector.extract_strided_slice %83 {offsets = [0, 5, 0], sizes = [2, 16, 128], strides = [1, 1, 1]} : vector<2x22x128xf32> to vector<2x16x128xf32>
    %105 = vector.extract_strided_slice %77 {offsets = [0, 2560], sizes = [32, 128], strides = [1, 1]} : vector<32x3200xf32> to vector<32x128xf32>
    %106 = vector.shape_cast %105 : vector<32x128xf32> to vector<2x16x128xf32>
    %107 = arith.mulf %104, %106 : vector<2x16x128xf32>
    %108 = arith.addf %103, %107 : vector<2x16x128xf32>
    %c2_33 = arith.constant 2 : index
    %c0_34 = arith.constant 0 : index
    %c0_35 = arith.constant 0 : index
    %c0_36 = arith.constant 0 : index
    %109 = vector.load %arg2[%c2_33, %c0_34, %c0_35, %c0_36] : memref<7x2x22x128xf32, #tpu.memory_space<vmem>>, vector<1x2x22x128xf32>
    %110 = vector.shape_cast %109 : vector<1x2x22x128xf32> to vector<2x22x128xf32>
    %111 = vector.extract_strided_slice %110 {offsets = [0, 1, 0], sizes = [2, 16, 128], strides = [1, 1, 1]} : vector<2x22x128xf32> to vector<2x16x128xf32>
    %112 = vector.extract_strided_slice %77 {offsets = [0, 128], sizes = [32, 128], strides = [1, 1]} : vector<32x3200xf32> to vector<32x128xf32>
    %113 = vector.shape_cast %112 : vector<32x128xf32> to vector<2x16x128xf32>
    %114 = arith.mulf %111, %113 : vector<2x16x128xf32>
    %115 = arith.addf %108, %114 : vector<2x16x128xf32>
    %116 = vector.extract_strided_slice %110 {offsets = [0, 2, 0], sizes = [2, 16, 128], strides = [1, 1, 1]} : vector<2x22x128xf32> to vector<2x16x128xf32>
    %117 = vector.extract_strided_slice %77 {offsets = [0, 768], sizes = [32, 128], strides = [1, 1]} : vector<32x3200xf32> to vector<32x128xf32>
    %118 = vector.shape_cast %117 : vector<32x128xf32> to vector<2x16x128xf32>
    %119 = arith.mulf %116, %118 : vector<2x16x128xf32>
    %120 = arith.addf %115, %119 : vector<2x16x128xf32>
    %121 = vector.extract_strided_slice %110 {offsets = [0, 3, 0], sizes = [2, 16, 128], strides = [1, 1, 1]} : vector<2x22x128xf32> to vector<2x16x128xf32>
    %122 = vector.extract_strided_slice %77 {offsets = [0, 1408], sizes = [32, 128], strides = [1, 1]} : vector<32x3200xf32> to vector<32x128xf32>
    %123 = vector.shape_cast %122 : vector<32x128xf32> to vector<2x16x128xf32>
    %124 = arith.mulf %121, %123 : vector<2x16x128xf32>
    %125 = arith.addf %120, %124 : vector<2x16x128xf32>
    %126 = vector.extract_strided_slice %110 {offsets = [0, 4, 0], sizes = [2, 16, 128], strides = [1, 1, 1]} : vector<2x22x128xf32> to vector<2x16x128xf32>
    %127 = vector.extract_strided_slice %77 {offsets = [0, 2048], sizes = [32, 128], strides = [1, 1]} : vector<32x3200xf32> to vector<32x128xf32>
    %128 = vector.shape_cast %127 : vector<32x128xf32> to vector<2x16x128xf32>
    %129 = arith.mulf %126, %128 : vector<2x16x128xf32>
    %130 = arith.addf %125, %129 : vector<2x16x128xf32>
    %131 = vector.extract_strided_slice %110 {offsets = [0, 5, 0], sizes = [2, 16, 128], strides = [1, 1, 1]} : vector<2x22x128xf32> to vector<2x16x128xf32>
    %132 = vector.extract_strided_slice %77 {offsets = [0, 2688], sizes = [32, 128], strides = [1, 1]} : vector<32x3200xf32> to vector<32x128xf32>
    %133 = vector.shape_cast %132 : vector<32x128xf32> to vector<2x16x128xf32>
    %134 = arith.mulf %131, %133 : vector<2x16x128xf32>
    %135 = arith.addf %130, %134 : vector<2x16x128xf32>
    %c3_37 = arith.constant 3 : index
    %c0_38 = arith.constant 0 : index
    %c0_39 = arith.constant 0 : index
    %c0_40 = arith.constant 0 : index
    %136 = vector.load %arg2[%c3_37, %c0_38, %c0_39, %c0_40] : memref<7x2x22x128xf32, #tpu.memory_space<vmem>>, vector<1x2x22x128xf32>
    %137 = vector.shape_cast %136 : vector<1x2x22x128xf32> to vector<2x22x128xf32>
    %138 = vector.extract_strided_slice %137 {offsets = [0, 1, 0], sizes = [2, 16, 128], strides = [1, 1, 1]} : vector<2x22x128xf32> to vector<2x16x128xf32>
    %139 = vector.extract_strided_slice %77 {offsets = [0, 256], sizes = [32, 128], strides = [1, 1]} : vector<32x3200xf32> to vector<32x128xf32>
    %140 = vector.shape_cast %139 : vector<32x128xf32> to vector<2x16x128xf32>
    %141 = arith.mulf %138, %140 : vector<2x16x128xf32>
    %142 = arith.addf %135, %141 : vector<2x16x128xf32>
    %143 = vector.extract_strided_slice %137 {offsets = [0, 2, 0], sizes = [2, 16, 128], strides = [1, 1, 1]} : vector<2x22x128xf32> to vector<2x16x128xf32>
    %144 = vector.extract_strided_slice %77 {offsets = [0, 896], sizes = [32, 128], strides = [1, 1]} : vector<32x3200xf32> to vector<32x128xf32>
    %145 = vector.shape_cast %144 : vector<32x128xf32> to vector<2x16x128xf32>
    %146 = arith.mulf %143, %145 : vector<2x16x128xf32>
    %147 = arith.addf %142, %146 : vector<2x16x128xf32>
    %148 = vector.extract_strided_slice %137 {offsets = [0, 3, 0], sizes = [2, 16, 128], strides = [1, 1, 1]} : vector<2x22x128xf32> to vector<2x16x128xf32>
    %149 = vector.extract_strided_slice %77 {offsets = [0, 1536], sizes = [32, 128], strides = [1, 1]} : vector<32x3200xf32> to vector<32x128xf32>
    %150 = vector.shape_cast %149 : vector<32x128xf32> to vector<2x16x128xf32>
    %151 = arith.mulf %148, %150 : vector<2x16x128xf32>
    %152 = arith.addf %147, %151 : vector<2x16x128xf32>
    %153 = vector.extract_strided_slice %137 {offsets = [0, 4, 0], sizes = [2, 16, 128], strides = [1, 1, 1]} : vector<2x22x128xf32> to vector<2x16x128xf32>
    %154 = vector.extract_strided_slice %77 {offsets = [0, 2176], sizes = [32, 128], strides = [1, 1]} : vector<32x3200xf32> to vector<32x128xf32>
    %155 = vector.shape_cast %154 : vector<32x128xf32> to vector<2x16x128xf32>
    %156 = arith.mulf %153, %155 : vector<2x16x128xf32>
    %157 = arith.addf %152, %156 : vector<2x16x128xf32>
    %158 = vector.extract_strided_slice %137 {offsets = [0, 5, 0], sizes = [2, 16, 128], strides = [1, 1, 1]} : vector<2x22x128xf32> to vector<2x16x128xf32>
    %159 = vector.extract_strided_slice %77 {offsets = [0, 2816], sizes = [32, 128], strides = [1, 1]} : vector<32x3200xf32> to vector<32x128xf32>
    %160 = vector.shape_cast %159 : vector<32x128xf32> to vector<2x16x128xf32>
    %161 = arith.mulf %158, %160 : vector<2x16x128xf32>
    %162 = arith.addf %157, %161 : vector<2x16x128xf32>
    %c4_41 = arith.constant 4 : index
    %c0_42 = arith.constant 0 : index
    %c0_43 = arith.constant 0 : index
    %c0_44 = arith.constant 0 : index
    %163 = vector.load %arg2[%c4_41, %c0_42, %c0_43, %c0_44] : memref<7x2x22x128xf32, #tpu.memory_space<vmem>>, vector<1x2x22x128xf32>
    %164 = vector.shape_cast %163 : vector<1x2x22x128xf32> to vector<2x22x128xf32>
    %165 = vector.extract_strided_slice %164 {offsets = [0, 1, 0], sizes = [2, 16, 128], strides = [1, 1, 1]} : vector<2x22x128xf32> to vector<2x16x128xf32>
    %166 = vector.extract_strided_slice %77 {offsets = [0, 384], sizes = [32, 128], strides = [1, 1]} : vector<32x3200xf32> to vector<32x128xf32>
    %167 = vector.shape_cast %166 : vector<32x128xf32> to vector<2x16x128xf32>
    %168 = arith.mulf %165, %167 : vector<2x16x128xf32>
    %169 = arith.addf %162, %168 : vector<2x16x128xf32>
    %170 = vector.extract_strided_slice %164 {offsets = [0, 2, 0], sizes = [2, 16, 128], strides = [1, 1, 1]} : vector<2x22x128xf32> to vector<2x16x128xf32>
    %171 = vector.extract_strided_slice %77 {offsets = [0, 1024], sizes = [32, 128], strides = [1, 1]} : vector<32x3200xf32> to vector<32x128xf32>
    %172 = vector.shape_cast %171 : vector<32x128xf32> to vector<2x16x128xf32>
    %173 = arith.mulf %170, %172 : vector<2x16x128xf32>
    %174 = arith.addf %169, %173 : vector<2x16x128xf32>
    %175 = vector.extract_strided_slice %164 {offsets = [0, 3, 0], sizes = [2, 16, 128], strides = [1, 1, 1]} : vector<2x22x128xf32> to vector<2x16x128xf32>
    %176 = vector.extract_strided_slice %77 {offsets = [0, 1664], sizes = [32, 128], strides = [1, 1]} : vector<32x3200xf32> to vector<32x128xf32>
    %177 = vector.shape_cast %176 : vector<32x128xf32> to vector<2x16x128xf32>
    %178 = arith.mulf %175, %177 : vector<2x16x128xf32>
    %179 = arith.addf %174, %178 : vector<2x16x128xf32>
    %180 = vector.extract_strided_slice %164 {offsets = [0, 4, 0], sizes = [2, 16, 128], strides = [1, 1, 1]} : vector<2x22x128xf32> to vector<2x16x128xf32>
    %181 = vector.extract_strided_slice %77 {offsets = [0, 2304], sizes = [32, 128], strides = [1, 1]} : vector<32x3200xf32> to vector<32x128xf32>
    %182 = vector.shape_cast %181 : vector<32x128xf32> to vector<2x16x128xf32>
    %183 = arith.mulf %180, %182 : vector<2x16x128xf32>
    %184 = arith.addf %179, %183 : vector<2x16x128xf32>
    %185 = vector.extract_strided_slice %164 {offsets = [0, 5, 0], sizes = [2, 16, 128], strides = [1, 1, 1]} : vector<2x22x128xf32> to vector<2x16x128xf32>
    %186 = vector.extract_strided_slice %77 {offsets = [0, 2944], sizes = [32, 128], strides = [1, 1]} : vector<32x3200xf32> to vector<32x128xf32>
    %187 = vector.shape_cast %186 : vector<32x128xf32> to vector<2x16x128xf32>
    %188 = arith.mulf %185, %187 : vector<2x16x128xf32>
    %189 = arith.addf %184, %188 : vector<2x16x128xf32>
    %c5 = arith.constant 5 : index
    %c0_45 = arith.constant 0 : index
    %c0_46 = arith.constant 0 : index
    %c0_47 = arith.constant 0 : index
    %190 = vector.load %arg2[%c5, %c0_45, %c0_46, %c0_47] : memref<7x2x22x128xf32, #tpu.memory_space<vmem>>, vector<1x2x22x128xf32>
    %191 = vector.shape_cast %190 : vector<1x2x22x128xf32> to vector<2x22x128xf32>
    %192 = vector.extract_strided_slice %191 {offsets = [0, 1, 0], sizes = [2, 16, 128], strides = [1, 1, 1]} : vector<2x22x128xf32> to vector<2x16x128xf32>
    %193 = vector.extract_strided_slice %77 {offsets = [0, 512], sizes = [32, 128], strides = [1, 1]} : vector<32x3200xf32> to vector<32x128xf32>
    %194 = vector.shape_cast %193 : vector<32x128xf32> to vector<2x16x128xf32>
    %195 = arith.mulf %192, %194 : vector<2x16x128xf32>
    %196 = arith.addf %189, %195 : vector<2x16x128xf32>
    %197 = vector.extract_strided_slice %191 {offsets = [0, 2, 0], sizes = [2, 16, 128], strides = [1, 1, 1]} : vector<2x22x128xf32> to vector<2x16x128xf32>
    %198 = vector.extract_strided_slice %77 {offsets = [0, 1152], sizes = [32, 128], strides = [1, 1]} : vector<32x3200xf32> to vector<32x128xf32>
    %199 = vector.shape_cast %198 : vector<32x128xf32> to vector<2x16x128xf32>
    %200 = arith.mulf %197, %199 : vector<2x16x128xf32>
    %201 = arith.addf %196, %200 : vector<2x16x128xf32>
    %202 = vector.extract_strided_slice %191 {offsets = [0, 3, 0], sizes = [2, 16, 128], strides = [1, 1, 1]} : vector<2x22x128xf32> to vector<2x16x128xf32>
    %203 = vector.extract_strided_slice %77 {offsets = [0, 1792], sizes = [32, 128], strides = [1, 1]} : vector<32x3200xf32> to vector<32x128xf32>
    %204 = vector.shape_cast %203 : vector<32x128xf32> to vector<2x16x128xf32>
    %205 = arith.mulf %202, %204 : vector<2x16x128xf32>
    %206 = arith.addf %201, %205 : vector<2x16x128xf32>
    %207 = vector.extract_strided_slice %191 {offsets = [0, 4, 0], sizes = [2, 16, 128], strides = [1, 1, 1]} : vector<2x22x128xf32> to vector<2x16x128xf32>
    %208 = vector.extract_strided_slice %77 {offsets = [0, 2432], sizes = [32, 128], strides = [1, 1]} : vector<32x3200xf32> to vector<32x128xf32>
    %209 = vector.shape_cast %208 : vector<32x128xf32> to vector<2x16x128xf32>
    %210 = arith.mulf %207, %209 : vector<2x16x128xf32>
    %211 = arith.addf %206, %210 : vector<2x16x128xf32>
    %212 = vector.extract_strided_slice %191 {offsets = [0, 5, 0], sizes = [2, 16, 128], strides = [1, 1, 1]} : vector<2x22x128xf32> to vector<2x16x128xf32>
    %213 = vector.extract_strided_slice %77 {offsets = [0, 3072], sizes = [32, 128], strides = [1, 1]} : vector<32x3200xf32> to vector<32x128xf32>
    %214 = vector.shape_cast %213 : vector<32x128xf32> to vector<2x16x128xf32>
    %215 = arith.mulf %212, %214 : vector<2x16x128xf32>
    %216 = arith.addf %211, %215 : vector<2x16x128xf32>
    %217 = vector.shape_cast %216 : vector<2x16x128xf32> to vector<32x128xf32>
    %cst_48 = arith.constant 0.000000e+00 : f32
    %218 = vector.broadcast %cst_48 : f32 to vector<32x128xf32>
    %219 = arith.maximumf %217, %218 : vector<32x128xf32>
    %c1_49 = arith.constant 1 : index
    %c0_50 = arith.constant 0 : index
    %c0_51 = arith.constant 0 : index
    %220 = vector.load %arg9[%c1_49, %c0_50, %c0_51] : memref<3x128x128xf32, #tpu.memory_space<vmem>>, vector<1x128x128xf32>
    %221 = vector.shape_cast %220 : vector<1x128x128xf32> to vector<128x128xf32>
    %cst_52 = arith.constant dense<0.000000e+00> : vector<32x128xf32>
    %222 = tpu.matmul %219, %221, %cst_52 {dimension_numbers = #tpu.dot_dimension_numbers<[1], [0], [0], [1], [0, 0, 1, 1], [], []>, precision = #tpu.contract_precision<fp32>} : vector<32x128xf32>, vector<128x128xf32>, vector<32x128xf32> -> vector<32x128xf32>
    %223 = arith.addf %73, %222 : vector<32x128xf32>
    %224 = vector.extract_strided_slice %7 {offsets = [0, 160], sizes = [32, 80], strides = [1, 1]} : vector<32x240xf32> to vector<32x80xf32>
    %225 = arith.truncf %224 : vector<32x80xf32> to vector<32x80xbf16>
    %c0_53 = arith.constant 0 : index
    %c0_54 = arith.constant 0 : index
    %226 = vector.load %arg7[%c0_53, %c0_54] : memref<80x6272xbf16, #tpu.memory_space<vmem>>, vector<80x6272xbf16>
    %cst_55 = arith.constant dense<0.000000e+00> : vector<32x6272xf32>
    %227 = tpu.matmul %225, %226, %cst_55 {dimension_numbers = #tpu.dot_dimension_numbers<[1], [0], [0], [1], [0, 0, 1, 1], [], []>} : vector<32x80xbf16>, vector<80x6272xbf16>, vector<32x6272xf32> -> vector<32x6272xf32>
    %c2_56 = arith.constant 2 : index
    %c0_57 = arith.constant 0 : index
    %228 = vector.load %arg8[%c2_56, %c0_57] : memref<3x128xf32, #tpu.memory_space<vmem>>, vector<1x128xf32>
    %229 = vector.shape_cast %228 : vector<1x128xf32> to vector<1x1x128xf32>
    %230 = vector.shape_cast %229 : vector<1x1x128xf32> to vector<1x1x128xf32>
    %231 = vector.broadcast %230 : vector<1x1x128xf32> to vector<2x16x128xf32>
    %c0_58 = arith.constant 0 : index
    %c0_59 = arith.constant 0 : index
    %c0_60 = arith.constant 0 : index
    %c0_61 = arith.constant 0 : index
    %232 = vector.load %arg2[%c0_58, %c0_59, %c0_60, %c0_61] : memref<7x2x22x128xf32, #tpu.memory_space<vmem>>, vector<1x2x22x128xf32>
    %233 = vector.shape_cast %232 : vector<1x2x22x128xf32> to vector<2x22x128xf32>
    %234 = vector.extract_strided_slice %233 {offsets = [0, 0, 0], sizes = [2, 16, 128], strides = [1, 1, 1]} : vector<2x22x128xf32> to vector<2x16x128xf32>
    %235 = vector.extract_strided_slice %227 {offsets = [0, 0], sizes = [32, 128], strides = [1, 1]} : vector<32x6272xf32> to vector<32x128xf32>
    %236 = vector.shape_cast %235 : vector<32x128xf32> to vector<2x16x128xf32>
    %237 = arith.mulf %234, %236 : vector<2x16x128xf32>
    %238 = arith.addf %231, %237 : vector<2x16x128xf32>
    %239 = vector.extract_strided_slice %233 {offsets = [0, 1, 0], sizes = [2, 16, 128], strides = [1, 1, 1]} : vector<2x22x128xf32> to vector<2x16x128xf32>
    %240 = vector.extract_strided_slice %227 {offsets = [0, 896], sizes = [32, 128], strides = [1, 1]} : vector<32x6272xf32> to vector<32x128xf32>
    %241 = vector.shape_cast %240 : vector<32x128xf32> to vector<2x16x128xf32>
    %242 = arith.mulf %239, %241 : vector<2x16x128xf32>
    %243 = arith.addf %238, %242 : vector<2x16x128xf32>
    %244 = vector.extract_strided_slice %233 {offsets = [0, 2, 0], sizes = [2, 16, 128], strides = [1, 1, 1]} : vector<2x22x128xf32> to vector<2x16x128xf32>
    %245 = vector.extract_strided_slice %227 {offsets = [0, 1792], sizes = [32, 128], strides = [1, 1]} : vector<32x6272xf32> to vector<32x128xf32>
    %246 = vector.shape_cast %245 : vector<32x128xf32> to vector<2x16x128xf32>
    %247 = arith.mulf %244, %246 : vector<2x16x128xf32>
    %248 = arith.addf %243, %247 : vector<2x16x128xf32>
    %249 = vector.extract_strided_slice %233 {offsets = [0, 3, 0], sizes = [2, 16, 128], strides = [1, 1, 1]} : vector<2x22x128xf32> to vector<2x16x128xf32>
    %250 = vector.extract_strided_slice %227 {offsets = [0, 2688], sizes = [32, 128], strides = [1, 1]} : vector<32x6272xf32> to vector<32x128xf32>
    %251 = vector.shape_cast %250 : vector<32x128xf32> to vector<2x16x128xf32>
    %252 = arith.mulf %249, %251 : vector<2x16x128xf32>
    %253 = arith.addf %248, %252 : vector<2x16x128xf32>
    %254 = vector.extract_strided_slice %233 {offsets = [0, 4, 0], sizes = [2, 16, 128], strides = [1, 1, 1]} : vector<2x22x128xf32> to vector<2x16x128xf32>
    %255 = vector.extract_strided_slice %227 {offsets = [0, 3584], sizes = [32, 128], strides = [1, 1]} : vector<32x6272xf32> to vector<32x128xf32>
    %256 = vector.shape_cast %255 : vector<32x128xf32> to vector<2x16x128xf32>
    %257 = arith.mulf %254, %256 : vector<2x16x128xf32>
    %258 = arith.addf %253, %257 : vector<2x16x128xf32>
    %259 = vector.extract_strided_slice %233 {offsets = [0, 5, 0], sizes = [2, 16, 128], strides = [1, 1, 1]} : vector<2x22x128xf32> to vector<2x16x128xf32>
    %260 = vector.extract_strided_slice %227 {offsets = [0, 4480], sizes = [32, 128], strides = [1, 1]} : vector<32x6272xf32> to vector<32x128xf32>
    %261 = vector.shape_cast %260 : vector<32x128xf32> to vector<2x16x128xf32>
    %262 = arith.mulf %259, %261 : vector<2x16x128xf32>
    %263 = arith.addf %258, %262 : vector<2x16x128xf32>
    %264 = vector.extract_strided_slice %233 {offsets = [0, 6, 0], sizes = [2, 16, 128], strides = [1, 1, 1]} : vector<2x22x128xf32> to vector<2x16x128xf32>
    %265 = vector.extract_strided_slice %227 {offsets = [0, 5376], sizes = [32, 128], strides = [1, 1]} : vector<32x6272xf32> to vector<32x128xf32>
    %266 = vector.shape_cast %265 : vector<32x128xf32> to vector<2x16x128xf32>
    %267 = arith.mulf %264, %266 : vector<2x16x128xf32>
    %268 = arith.addf %263, %267 : vector<2x16x128xf32>
    %c1_62 = arith.constant 1 : index
    %c0_63 = arith.constant 0 : index
    %c0_64 = arith.constant 0 : index
    %c0_65 = arith.constant 0 : index
    %269 = vector.load %arg2[%c1_62, %c0_63, %c0_64, %c0_65] : memref<7x2x22x128xf32, #tpu.memory_space<vmem>>, vector<1x2x22x128xf32>
    %270 = vector.shape_cast %269 : vector<1x2x22x128xf32> to vector<2x22x128xf32>
    %271 = vector.extract_strided_slice %270 {offsets = [0, 0, 0], sizes = [2, 16, 128], strides = [1, 1, 1]} : vector<2x22x128xf32> to vector<2x16x128xf32>
    %272 = vector.extract_strided_slice %227 {offsets = [0, 128], sizes = [32, 128], strides = [1, 1]} : vector<32x6272xf32> to vector<32x128xf32>
    %273 = vector.shape_cast %272 : vector<32x128xf32> to vector<2x16x128xf32>
    %274 = arith.mulf %271, %273 : vector<2x16x128xf32>
    %275 = arith.addf %268, %274 : vector<2x16x128xf32>
    %276 = vector.extract_strided_slice %270 {offsets = [0, 1, 0], sizes = [2, 16, 128], strides = [1, 1, 1]} : vector<2x22x128xf32> to vector<2x16x128xf32>
    %277 = vector.extract_strided_slice %227 {offsets = [0, 1024], sizes = [32, 128], strides = [1, 1]} : vector<32x6272xf32> to vector<32x128xf32>
    %278 = vector.shape_cast %277 : vector<32x128xf32> to vector<2x16x128xf32>
    %279 = arith.mulf %276, %278 : vector<2x16x128xf32>
    %280 = arith.addf %275, %279 : vector<2x16x128xf32>
    %281 = vector.extract_strided_slice %270 {offsets = [0, 2, 0], sizes = [2, 16, 128], strides = [1, 1, 1]} : vector<2x22x128xf32> to vector<2x16x128xf32>
    %282 = vector.extract_strided_slice %227 {offsets = [0, 1920], sizes = [32, 128], strides = [1, 1]} : vector<32x6272xf32> to vector<32x128xf32>
    %283 = vector.shape_cast %282 : vector<32x128xf32> to vector<2x16x128xf32>
    %284 = arith.mulf %281, %283 : vector<2x16x128xf32>
    %285 = arith.addf %280, %284 : vector<2x16x128xf32>
    %286 = vector.extract_strided_slice %270 {offsets = [0, 3, 0], sizes = [2, 16, 128], strides = [1, 1, 1]} : vector<2x22x128xf32> to vector<2x16x128xf32>
    %287 = vector.extract_strided_slice %227 {offsets = [0, 2816], sizes = [32, 128], strides = [1, 1]} : vector<32x6272xf32> to vector<32x128xf32>
    %288 = vector.shape_cast %287 : vector<32x128xf32> to vector<2x16x128xf32>
    %289 = arith.mulf %286, %288 : vector<2x16x128xf32>
    %290 = arith.addf %285, %289 : vector<2x16x128xf32>
    %291 = vector.extract_strided_slice %270 {offsets = [0, 4, 0], sizes = [2, 16, 128], strides = [1, 1, 1]} : vector<2x22x128xf32> to vector<2x16x128xf32>
    %292 = vector.extract_strided_slice %227 {offsets = [0, 3712], sizes = [32, 128], strides = [1, 1]} : vector<32x6272xf32> to vector<32x128xf32>
    %293 = vector.shape_cast %292 : vector<32x128xf32> to vector<2x16x128xf32>
    %294 = arith.mulf %291, %293 : vector<2x16x128xf32>
    %295 = arith.addf %290, %294 : vector<2x16x128xf32>
    %296 = vector.extract_strided_slice %270 {offsets = [0, 5, 0], sizes = [2, 16, 128], strides = [1, 1, 1]} : vector<2x22x128xf32> to vector<2x16x128xf32>
    %297 = vector.extract_strided_slice %227 {offsets = [0, 4608], sizes = [32, 128], strides = [1, 1]} : vector<32x6272xf32> to vector<32x128xf32>
    %298 = vector.shape_cast %297 : vector<32x128xf32> to vector<2x16x128xf32>
    %299 = arith.mulf %296, %298 : vector<2x16x128xf32>
    %300 = arith.addf %295, %299 : vector<2x16x128xf32>
    %301 = vector.extract_strided_slice %270 {offsets = [0, 6, 0], sizes = [2, 16, 128], strides = [1, 1, 1]} : vector<2x22x128xf32> to vector<2x16x128xf32>
    %302 = vector.extract_strided_slice %227 {offsets = [0, 5504], sizes = [32, 128], strides = [1, 1]} : vector<32x6272xf32> to vector<32x128xf32>
    %303 = vector.shape_cast %302 : vector<32x128xf32> to vector<2x16x128xf32>
    %304 = arith.mulf %301, %303 : vector<2x16x128xf32>
    %305 = arith.addf %300, %304 : vector<2x16x128xf32>
    %c2_66 = arith.constant 2 : index
    %c0_67 = arith.constant 0 : index
    %c0_68 = arith.constant 0 : index
    %c0_69 = arith.constant 0 : index
    %306 = vector.load %arg2[%c2_66, %c0_67, %c0_68, %c0_69] : memref<7x2x22x128xf32, #tpu.memory_space<vmem>>, vector<1x2x22x128xf32>
    %307 = vector.shape_cast %306 : vector<1x2x22x128xf32> to vector<2x22x128xf32>
    %308 = vector.extract_strided_slice %307 {offsets = [0, 0, 0], sizes = [2, 16, 128], strides = [1, 1, 1]} : vector<2x22x128xf32> to vector<2x16x128xf32>
    %309 = vector.extract_strided_slice %227 {offsets = [0, 256], sizes = [32, 128], strides = [1, 1]} : vector<32x6272xf32> to vector<32x128xf32>
    %310 = vector.shape_cast %309 : vector<32x128xf32> to vector<2x16x128xf32>
    %311 = arith.mulf %308, %310 : vector<2x16x128xf32>
    %312 = arith.addf %305, %311 : vector<2x16x128xf32>
    %313 = vector.extract_strided_slice %307 {offsets = [0, 1, 0], sizes = [2, 16, 128], strides = [1, 1, 1]} : vector<2x22x128xf32> to vector<2x16x128xf32>
    %314 = vector.extract_strided_slice %227 {offsets = [0, 1152], sizes = [32, 128], strides = [1, 1]} : vector<32x6272xf32> to vector<32x128xf32>
    %315 = vector.shape_cast %314 : vector<32x128xf32> to vector<2x16x128xf32>
    %316 = arith.mulf %313, %315 : vector<2x16x128xf32>
    %317 = arith.addf %312, %316 : vector<2x16x128xf32>
    %318 = vector.extract_strided_slice %307 {offsets = [0, 2, 0], sizes = [2, 16, 128], strides = [1, 1, 1]} : vector<2x22x128xf32> to vector<2x16x128xf32>
    %319 = vector.extract_strided_slice %227 {offsets = [0, 2048], sizes = [32, 128], strides = [1, 1]} : vector<32x6272xf32> to vector<32x128xf32>
    %320 = vector.shape_cast %319 : vector<32x128xf32> to vector<2x16x128xf32>
    %321 = arith.mulf %318, %320 : vector<2x16x128xf32>
    %322 = arith.addf %317, %321 : vector<2x16x128xf32>
    %323 = vector.extract_strided_slice %307 {offsets = [0, 3, 0], sizes = [2, 16, 128], strides = [1, 1, 1]} : vector<2x22x128xf32> to vector<2x16x128xf32>
    %324 = vector.extract_strided_slice %227 {offsets = [0, 2944], sizes = [32, 128], strides = [1, 1]} : vector<32x6272xf32> to vector<32x128xf32>
    %325 = vector.shape_cast %324 : vector<32x128xf32> to vector<2x16x128xf32>
    %326 = arith.mulf %323, %325 : vector<2x16x128xf32>
    %327 = arith.addf %322, %326 : vector<2x16x128xf32>
    %328 = vector.extract_strided_slice %307 {offsets = [0, 4, 0], sizes = [2, 16, 128], strides = [1, 1, 1]} : vector<2x22x128xf32> to vector<2x16x128xf32>
    %329 = vector.extract_strided_slice %227 {offsets = [0, 3840], sizes = [32, 128], strides = [1, 1]} : vector<32x6272xf32> to vector<32x128xf32>
    %330 = vector.shape_cast %329 : vector<32x128xf32> to vector<2x16x128xf32>
    %331 = arith.mulf %328, %330 : vector<2x16x128xf32>
    %332 = arith.addf %327, %331 : vector<2x16x128xf32>
    %333 = vector.extract_strided_slice %307 {offsets = [0, 5, 0], sizes = [2, 16, 128], strides = [1, 1, 1]} : vector<2x22x128xf32> to vector<2x16x128xf32>
    %334 = vector.extract_strided_slice %227 {offsets = [0, 4736], sizes = [32, 128], strides = [1, 1]} : vector<32x6272xf32> to vector<32x128xf32>
    %335 = vector.shape_cast %334 : vector<32x128xf32> to vector<2x16x128xf32>
    %336 = arith.mulf %333, %335 : vector<2x16x128xf32>
    %337 = arith.addf %332, %336 : vector<2x16x128xf32>
    %338 = vector.extract_strided_slice %307 {offsets = [0, 6, 0], sizes = [2, 16, 128], strides = [1, 1, 1]} : vector<2x22x128xf32> to vector<2x16x128xf32>
    %339 = vector.extract_strided_slice %227 {offsets = [0, 5632], sizes = [32, 128], strides = [1, 1]} : vector<32x6272xf32> to vector<32x128xf32>
    %340 = vector.shape_cast %339 : vector<32x128xf32> to vector<2x16x128xf32>
    %341 = arith.mulf %338, %340 : vector<2x16x128xf32>
    %342 = arith.addf %337, %341 : vector<2x16x128xf32>
    %c3_70 = arith.constant 3 : index
    %c0_71 = arith.constant 0 : index
    %c0_72 = arith.constant 0 : index
    %c0_73 = arith.constant 0 : index
    %343 = vector.load %arg2[%c3_70, %c0_71, %c0_72, %c0_73] : memref<7x2x22x128xf32, #tpu.memory_space<vmem>>, vector<1x2x22x128xf32>
    %344 = vector.shape_cast %343 : vector<1x2x22x128xf32> to vector<2x22x128xf32>
    %345 = vector.extract_strided_slice %344 {offsets = [0, 0, 0], sizes = [2, 16, 128], strides = [1, 1, 1]} : vector<2x22x128xf32> to vector<2x16x128xf32>
    %346 = vector.extract_strided_slice %227 {offsets = [0, 384], sizes = [32, 128], strides = [1, 1]} : vector<32x6272xf32> to vector<32x128xf32>
    %347 = vector.shape_cast %346 : vector<32x128xf32> to vector<2x16x128xf32>
    %348 = arith.mulf %345, %347 : vector<2x16x128xf32>
    %349 = arith.addf %342, %348 : vector<2x16x128xf32>
    %350 = vector.extract_strided_slice %344 {offsets = [0, 1, 0], sizes = [2, 16, 128], strides = [1, 1, 1]} : vector<2x22x128xf32> to vector<2x16x128xf32>
    %351 = vector.extract_strided_slice %227 {offsets = [0, 1280], sizes = [32, 128], strides = [1, 1]} : vector<32x6272xf32> to vector<32x128xf32>
    %352 = vector.shape_cast %351 : vector<32x128xf32> to vector<2x16x128xf32>
    %353 = arith.mulf %350, %352 : vector<2x16x128xf32>
    %354 = arith.addf %349, %353 : vector<2x16x128xf32>
    %355 = vector.extract_strided_slice %344 {offsets = [0, 2, 0], sizes = [2, 16, 128], strides = [1, 1, 1]} : vector<2x22x128xf32> to vector<2x16x128xf32>
    %356 = vector.extract_strided_slice %227 {offsets = [0, 2176], sizes = [32, 128], strides = [1, 1]} : vector<32x6272xf32> to vector<32x128xf32>
    %357 = vector.shape_cast %356 : vector<32x128xf32> to vector<2x16x128xf32>
    %358 = arith.mulf %355, %357 : vector<2x16x128xf32>
    %359 = arith.addf %354, %358 : vector<2x16x128xf32>
    %360 = vector.extract_strided_slice %344 {offsets = [0, 3, 0], sizes = [2, 16, 128], strides = [1, 1, 1]} : vector<2x22x128xf32> to vector<2x16x128xf32>
    %361 = vector.extract_strided_slice %227 {offsets = [0, 3072], sizes = [32, 128], strides = [1, 1]} : vector<32x6272xf32> to vector<32x128xf32>
    %362 = vector.shape_cast %361 : vector<32x128xf32> to vector<2x16x128xf32>
    %363 = arith.mulf %360, %362 : vector<2x16x128xf32>
    %364 = arith.addf %359, %363 : vector<2x16x128xf32>
    %365 = vector.extract_strided_slice %344 {offsets = [0, 4, 0], sizes = [2, 16, 128], strides = [1, 1, 1]} : vector<2x22x128xf32> to vector<2x16x128xf32>
    %366 = vector.extract_strided_slice %227 {offsets = [0, 3968], sizes = [32, 128], strides = [1, 1]} : vector<32x6272xf32> to vector<32x128xf32>
    %367 = vector.shape_cast %366 : vector<32x128xf32> to vector<2x16x128xf32>
    %368 = arith.mulf %365, %367 : vector<2x16x128xf32>
    %369 = arith.addf %364, %368 : vector<2x16x128xf32>
    %370 = vector.extract_strided_slice %344 {offsets = [0, 5, 0], sizes = [2, 16, 128], strides = [1, 1, 1]} : vector<2x22x128xf32> to vector<2x16x128xf32>
    %371 = vector.extract_strided_slice %227 {offsets = [0, 4864], sizes = [32, 128], strides = [1, 1]} : vector<32x6272xf32> to vector<32x128xf32>
    %372 = vector.shape_cast %371 : vector<32x128xf32> to vector<2x16x128xf32>
    %373 = arith.mulf %370, %372 : vector<2x16x128xf32>
    %374 = arith.addf %369, %373 : vector<2x16x128xf32>
    %375 = vector.extract_strided_slice %344 {offsets = [0, 6, 0], sizes = [2, 16, 128], strides = [1, 1, 1]} : vector<2x22x128xf32> to vector<2x16x128xf32>
    %376 = vector.extract_strided_slice %227 {offsets = [0, 5760], sizes = [32, 128], strides = [1, 1]} : vector<32x6272xf32> to vector<32x128xf32>
    %377 = vector.shape_cast %376 : vector<32x128xf32> to vector<2x16x128xf32>
    %378 = arith.mulf %375, %377 : vector<2x16x128xf32>
    %379 = arith.addf %374, %378 : vector<2x16x128xf32>
    %c4_74 = arith.constant 4 : index
    %c0_75 = arith.constant 0 : index
    %c0_76 = arith.constant 0 : index
    %c0_77 = arith.constant 0 : index
    %380 = vector.load %arg2[%c4_74, %c0_75, %c0_76, %c0_77] : memref<7x2x22x128xf32, #tpu.memory_space<vmem>>, vector<1x2x22x128xf32>
    %381 = vector.shape_cast %380 : vector<1x2x22x128xf32> to vector<2x22x128xf32>
    %382 = vector.extract_strided_slice %381 {offsets = [0, 0, 0], sizes = [2, 16, 128], strides = [1, 1, 1]} : vector<2x22x128xf32> to vector<2x16x128xf32>
    %383 = vector.extract_strided_slice %227 {offsets = [0, 512], sizes = [32, 128], strides = [1, 1]} : vector<32x6272xf32> to vector<32x128xf32>
    %384 = vector.shape_cast %383 : vector<32x128xf32> to vector<2x16x128xf32>
    %385 = arith.mulf %382, %384 : vector<2x16x128xf32>
    %386 = arith.addf %379, %385 : vector<2x16x128xf32>
    %387 = vector.extract_strided_slice %381 {offsets = [0, 1, 0], sizes = [2, 16, 128], strides = [1, 1, 1]} : vector<2x22x128xf32> to vector<2x16x128xf32>
    %388 = vector.extract_strided_slice %227 {offsets = [0, 1408], sizes = [32, 128], strides = [1, 1]} : vector<32x6272xf32> to vector<32x128xf32>
    %389 = vector.shape_cast %388 : vector<32x128xf32> to vector<2x16x128xf32>
    %390 = arith.mulf %387, %389 : vector<2x16x128xf32>
    %391 = arith.addf %386, %390 : vector<2x16x128xf32>
    %392 = vector.extract_strided_slice %381 {offsets = [0, 2, 0], sizes = [2, 16, 128], strides = [1, 1, 1]} : vector<2x22x128xf32> to vector<2x16x128xf32>
    %393 = vector.extract_strided_slice %227 {offsets = [0, 2304], sizes = [32, 128], strides = [1, 1]} : vector<32x6272xf32> to vector<32x128xf32>
    %394 = vector.shape_cast %393 : vector<32x128xf32> to vector<2x16x128xf32>
    %395 = arith.mulf %392, %394 : vector<2x16x128xf32>
    %396 = arith.addf %391, %395 : vector<2x16x128xf32>
    %397 = vector.extract_strided_slice %381 {offsets = [0, 3, 0], sizes = [2, 16, 128], strides = [1, 1, 1]} : vector<2x22x128xf32> to vector<2x16x128xf32>
    %398 = vector.extract_strided_slice %227 {offsets = [0, 3200], sizes = [32, 128], strides = [1, 1]} : vector<32x6272xf32> to vector<32x128xf32>
    %399 = vector.shape_cast %398 : vector<32x128xf32> to vector<2x16x128xf32>
    %400 = arith.mulf %397, %399 : vector<2x16x128xf32>
    %401 = arith.addf %396, %400 : vector<2x16x128xf32>
    %402 = vector.extract_strided_slice %381 {offsets = [0, 4, 0], sizes = [2, 16, 128], strides = [1, 1, 1]} : vector<2x22x128xf32> to vector<2x16x128xf32>
    %403 = vector.extract_strided_slice %227 {offsets = [0, 4096], sizes = [32, 128], strides = [1, 1]} : vector<32x6272xf32> to vector<32x128xf32>
    %404 = vector.shape_cast %403 : vector<32x128xf32> to vector<2x16x128xf32>
    %405 = arith.mulf %402, %404 : vector<2x16x128xf32>
    %406 = arith.addf %401, %405 : vector<2x16x128xf32>
    %407 = vector.extract_strided_slice %381 {offsets = [0, 5, 0], sizes = [2, 16, 128], strides = [1, 1, 1]} : vector<2x22x128xf32> to vector<2x16x128xf32>
    %408 = vector.extract_strided_slice %227 {offsets = [0, 4992], sizes = [32, 128], strides = [1, 1]} : vector<32x6272xf32> to vector<32x128xf32>
    %409 = vector.shape_cast %408 : vector<32x128xf32> to vector<2x16x128xf32>
    %410 = arith.mulf %407, %409 : vector<2x16x128xf32>
    %411 = arith.addf %406, %410 : vector<2x16x128xf32>
    %412 = vector.extract_strided_slice %381 {offsets = [0, 6, 0], sizes = [2, 16, 128], strides = [1, 1, 1]} : vector<2x22x128xf32> to vector<2x16x128xf32>
    %413 = vector.extract_strided_slice %227 {offsets = [0, 5888], sizes = [32, 128], strides = [1, 1]} : vector<32x6272xf32> to vector<32x128xf32>
    %414 = vector.shape_cast %413 : vector<32x128xf32> to vector<2x16x128xf32>
    %415 = arith.mulf %412, %414 : vector<2x16x128xf32>
    %416 = arith.addf %411, %415 : vector<2x16x128xf32>
    %c5_78 = arith.constant 5 : index
    %c0_79 = arith.constant 0 : index
    %c0_80 = arith.constant 0 : index
    %c0_81 = arith.constant 0 : index
    %417 = vector.load %arg2[%c5_78, %c0_79, %c0_80, %c0_81] : memref<7x2x22x128xf32, #tpu.memory_space<vmem>>, vector<1x2x22x128xf32>
    %418 = vector.shape_cast %417 : vector<1x2x22x128xf32> to vector<2x22x128xf32>
    %419 = vector.extract_strided_slice %418 {offsets = [0, 0, 0], sizes = [2, 16, 128], strides = [1, 1, 1]} : vector<2x22x128xf32> to vector<2x16x128xf32>
    %420 = vector.extract_strided_slice %227 {offsets = [0, 640], sizes = [32, 128], strides = [1, 1]} : vector<32x6272xf32> to vector<32x128xf32>
    %421 = vector.shape_cast %420 : vector<32x128xf32> to vector<2x16x128xf32>
    %422 = arith.mulf %419, %421 : vector<2x16x128xf32>
    %423 = arith.addf %416, %422 : vector<2x16x128xf32>
    %424 = vector.extract_strided_slice %418 {offsets = [0, 1, 0], sizes = [2, 16, 128], strides = [1, 1, 1]} : vector<2x22x128xf32> to vector<2x16x128xf32>
    %425 = vector.extract_strided_slice %227 {offsets = [0, 1536], sizes = [32, 128], strides = [1, 1]} : vector<32x6272xf32> to vector<32x128xf32>
    %426 = vector.shape_cast %425 : vector<32x128xf32> to vector<2x16x128xf32>
    %427 = arith.mulf %424, %426 : vector<2x16x128xf32>
    %428 = arith.addf %423, %427 : vector<2x16x128xf32>
    %429 = vector.extract_strided_slice %418 {offsets = [0, 2, 0], sizes = [2, 16, 128], strides = [1, 1, 1]} : vector<2x22x128xf32> to vector<2x16x128xf32>
    %430 = vector.extract_strided_slice %227 {offsets = [0, 2432], sizes = [32, 128], strides = [1, 1]} : vector<32x6272xf32> to vector<32x128xf32>
    %431 = vector.shape_cast %430 : vector<32x128xf32> to vector<2x16x128xf32>
    %432 = arith.mulf %429, %431 : vector<2x16x128xf32>
    %433 = arith.addf %428, %432 : vector<2x16x128xf32>
    %434 = vector.extract_strided_slice %418 {offsets = [0, 3, 0], sizes = [2, 16, 128], strides = [1, 1, 1]} : vector<2x22x128xf32> to vector<2x16x128xf32>
    %435 = vector.extract_strided_slice %227 {offsets = [0, 3328], sizes = [32, 128], strides = [1, 1]} : vector<32x6272xf32> to vector<32x128xf32>
    %436 = vector.shape_cast %435 : vector<32x128xf32> to vector<2x16x128xf32>
    %437 = arith.mulf %434, %436 : vector<2x16x128xf32>
    %438 = arith.addf %433, %437 : vector<2x16x128xf32>
    %439 = vector.extract_strided_slice %418 {offsets = [0, 4, 0], sizes = [2, 16, 128], strides = [1, 1, 1]} : vector<2x22x128xf32> to vector<2x16x128xf32>
    %440 = vector.extract_strided_slice %227 {offsets = [0, 4224], sizes = [32, 128], strides = [1, 1]} : vector<32x6272xf32> to vector<32x128xf32>
    %441 = vector.shape_cast %440 : vector<32x128xf32> to vector<2x16x128xf32>
    %442 = arith.mulf %439, %441 : vector<2x16x128xf32>
    %443 = arith.addf %438, %442 : vector<2x16x128xf32>
    %444 = vector.extract_strided_slice %418 {offsets = [0, 5, 0], sizes = [2, 16, 128], strides = [1, 1, 1]} : vector<2x22x128xf32> to vector<2x16x128xf32>
    %445 = vector.extract_strided_slice %227 {offsets = [0, 5120], sizes = [32, 128], strides = [1, 1]} : vector<32x6272xf32> to vector<32x128xf32>
    %446 = vector.shape_cast %445 : vector<32x128xf32> to vector<2x16x128xf32>
    %447 = arith.mulf %444, %446 : vector<2x16x128xf32>
    %448 = arith.addf %443, %447 : vector<2x16x128xf32>
    %449 = vector.extract_strided_slice %418 {offsets = [0, 6, 0], sizes = [2, 16, 128], strides = [1, 1, 1]} : vector<2x22x128xf32> to vector<2x16x128xf32>
    %450 = vector.extract_strided_slice %227 {offsets = [0, 6016], sizes = [32, 128], strides = [1, 1]} : vector<32x6272xf32> to vector<32x128xf32>
    %451 = vector.shape_cast %450 : vector<32x128xf32> to vector<2x16x128xf32>
    %452 = arith.mulf %449, %451 : vector<2x16x128xf32>
    %453 = arith.addf %448, %452 : vector<2x16x128xf32>
    %c6 = arith.constant 6 : index
    %c0_82 = arith.constant 0 : index
    %c0_83 = arith.constant 0 : index
    %c0_84 = arith.constant 0 : index
    %454 = vector.load %arg2[%c6, %c0_82, %c0_83, %c0_84] : memref<7x2x22x128xf32, #tpu.memory_space<vmem>>, vector<1x2x22x128xf32>
    %455 = vector.shape_cast %454 : vector<1x2x22x128xf32> to vector<2x22x128xf32>
    %456 = vector.extract_strided_slice %455 {offsets = [0, 0, 0], sizes = [2, 16, 128], strides = [1, 1, 1]} : vector<2x22x128xf32> to vector<2x16x128xf32>
    %457 = vector.extract_strided_slice %227 {offsets = [0, 768], sizes = [32, 128], strides = [1, 1]} : vector<32x6272xf32> to vector<32x128xf32>
    %458 = vector.shape_cast %457 : vector<32x128xf32> to vector<2x16x128xf32>
    %459 = arith.mulf %456, %458 : vector<2x16x128xf32>
    %460 = arith.addf %453, %459 : vector<2x16x128xf32>
    %461 = vector.extract_strided_slice %455 {offsets = [0, 1, 0], sizes = [2, 16, 128], strides = [1, 1, 1]} : vector<2x22x128xf32> to vector<2x16x128xf32>
    %462 = vector.extract_strided_slice %227 {offsets = [0, 1664], sizes = [32, 128], strides = [1, 1]} : vector<32x6272xf32> to vector<32x128xf32>
    %463 = vector.shape_cast %462 : vector<32x128xf32> to vector<2x16x128xf32>
    %464 = arith.mulf %461, %463 : vector<2x16x128xf32>
    %465 = arith.addf %460, %464 : vector<2x16x128xf32>
    %466 = vector.extract_strided_slice %455 {offsets = [0, 2, 0], sizes = [2, 16, 128], strides = [1, 1, 1]} : vector<2x22x128xf32> to vector<2x16x128xf32>
    %467 = vector.extract_strided_slice %227 {offsets = [0, 2560], sizes = [32, 128], strides = [1, 1]} : vector<32x6272xf32> to vector<32x128xf32>
    %468 = vector.shape_cast %467 : vector<32x128xf32> to vector<2x16x128xf32>
    %469 = arith.mulf %466, %468 : vector<2x16x128xf32>
    %470 = arith.addf %465, %469 : vector<2x16x128xf32>
    %471 = vector.extract_strided_slice %455 {offsets = [0, 3, 0], sizes = [2, 16, 128], strides = [1, 1, 1]} : vector<2x22x128xf32> to vector<2x16x128xf32>
    %472 = vector.extract_strided_slice %227 {offsets = [0, 3456], sizes = [32, 128], strides = [1, 1]} : vector<32x6272xf32> to vector<32x128xf32>
    %473 = vector.shape_cast %472 : vector<32x128xf32> to vector<2x16x128xf32>
    %474 = arith.mulf %471, %473 : vector<2x16x128xf32>
    %475 = arith.addf %470, %474 : vector<2x16x128xf32>
    %476 = vector.extract_strided_slice %455 {offsets = [0, 4, 0], sizes = [2, 16, 128], strides = [1, 1, 1]} : vector<2x22x128xf32> to vector<2x16x128xf32>
    %477 = vector.extract_strided_slice %227 {offsets = [0, 4352], sizes = [32, 128], strides = [1, 1]} : vector<32x6272xf32> to vector<32x128xf32>
    %478 = vector.shape_cast %477 : vector<32x128xf32> to vector<2x16x128xf32>
    %479 = arith.mulf %476, %478 : vector<2x16x128xf32>
    %480 = arith.addf %475, %479 : vector<2x16x128xf32>
    %481 = vector.extract_strided_slice %455 {offsets = [0, 5, 0], sizes = [2, 16, 128], strides = [1, 1, 1]} : vector<2x22x128xf32> to vector<2x16x128xf32>
    %482 = vector.extract_strided_slice %227 {offsets = [0, 5248], sizes = [32, 128], strides = [1, 1]} : vector<32x6272xf32> to vector<32x128xf32>
    %483 = vector.shape_cast %482 : vector<32x128xf32> to vector<2x16x128xf32>
    %484 = arith.mulf %481, %483 : vector<2x16x128xf32>
    %485 = arith.addf %480, %484 : vector<2x16x128xf32>
    %486 = vector.extract_strided_slice %455 {offsets = [0, 6, 0], sizes = [2, 16, 128], strides = [1, 1, 1]} : vector<2x22x128xf32> to vector<2x16x128xf32>
    %487 = vector.extract_strided_slice %227 {offsets = [0, 6144], sizes = [32, 128], strides = [1, 1]} : vector<32x6272xf32> to vector<32x128xf32>
    %488 = vector.shape_cast %487 : vector<32x128xf32> to vector<2x16x128xf32>
    %489 = arith.mulf %486, %488 : vector<2x16x128xf32>
    %490 = arith.addf %485, %489 : vector<2x16x128xf32>
    %491 = vector.shape_cast %490 : vector<2x16x128xf32> to vector<32x128xf32>
    %cst_85 = arith.constant 0.000000e+00 : f32
    %492 = vector.broadcast %cst_85 : f32 to vector<32x128xf32>
    %493 = arith.maximumf %491, %492 : vector<32x128xf32>
    %c2_86 = arith.constant 2 : index
    %c0_87 = arith.constant 0 : index
    %c0_88 = arith.constant 0 : index
    %494 = vector.load %arg9[%c2_86, %c0_87, %c0_88] : memref<3x128x128xf32, #tpu.memory_space<vmem>>, vector<1x128x128xf32>
    %495 = vector.shape_cast %494 : vector<1x128x128xf32> to vector<128x128xf32>
    %cst_89 = arith.constant dense<0.000000e+00> : vector<32x128xf32>
    %496 = tpu.matmul %493, %495, %cst_89 {dimension_numbers = #tpu.dot_dimension_numbers<[1], [0], [0], [1], [0, 0, 1, 1], [], []>, precision = #tpu.contract_precision<fp32>} : vector<32x128xf32>, vector<128x128xf32>, vector<32x128xf32> -> vector<32x128xf32>
    %497 = arith.addf %223, %496 : vector<32x128xf32>
    %c0_90 = arith.constant 0 : index
    %c0_91 = arith.constant 0 : index
    %498 = vector.load %arg10[%c0_90, %c0_91] : memref<32x128xf32, #tpu.memory_space<vmem>>, vector<32x128xf32>
    tpu.vector_store %arg10[%c0_90, %c0_91], %497 {strides = array<i32>} : memref<32x128xf32, #tpu.memory_space<vmem>>, vector<32x128xf32>,
    return
  }
  func.func @transform_0(%arg0: i32) -> (i32, i32) {
    %c0_i32 = arith.constant 0 : i32
    %c0_i32_0 = arith.constant 0 : i32
    %c0_i32_1 = arith.constant 0 : i32
    return %c0_i32, %c0_i32_0 : i32, i32
  }
  func.func @transform_1(%arg0: i32) -> (i32, i32, i32, i32) {
    %c0_i32 = arith.constant 0 : i32
    %c0_i32_0 = arith.constant 0 : i32
    %c0_i32_1 = arith.constant 0 : i32
    %c0_i32_2 = arith.constant 0 : i32
    %c0_i32_3 = arith.constant 0 : i32
    return %c0_i32, %c0_i32_0, %c0_i32_1, %c0_i32_2 : i32, i32, i32, i32
  }
  func.func @transform_2(%arg0: i32) -> (i32, i32) {
    %c0_i32 = arith.constant 0 : i32
    %c0_i32_0 = arith.constant 0 : i32
    %c0_i32_1 = arith.constant 0 : i32
    return %c0_i32, %c0_i32_0 : i32, i32
  }
  func.func @transform_3(%arg0: i32) -> (i32, i32) {
    %c0_i32 = arith.constant 0 : i32
    %c0_i32_0 = arith.constant 0 : i32
    %c0_i32_1 = arith.constant 0 : i32
    return %c0_i32, %c0_i32_0 : i32, i32
  }
  func.func @transform_4(%arg0: i32) -> (i32, i32) {
    %c0_i32 = arith.constant 0 : i32
    %c0_i32_0 = arith.constant 0 : i32
    %c0_i32_1 = arith.constant 0 : i32
    return %c0_i32, %c0_i32_0 : i32, i32
  }
  func.func @transform_5(%arg0: i32) -> (i32, i32) {
    %c0_i32 = arith.constant 0 : i32
    %c0_i32_0 = arith.constant 0 : i32
    %c0_i32_1 = arith.constant 0 : i32
    return %c0_i32, %c0_i32_0 : i32, i32
  }
  func.func @transform_6(%arg0: i32) -> (i32, i32) {
    %c0_i32 = arith.constant 0 : i32
    %c0_i32_0 = arith.constant 0 : i32
    %c0_i32_1 = arith.constant 0 : i32
    return %c0_i32, %c0_i32_0 : i32, i32
  }
  func.func @transform_7(%arg0: i32) -> (i32, i32) {
    %c0_i32 = arith.constant 0 : i32
    %c0_i32_0 = arith.constant 0 : i32
    %c0_i32_1 = arith.constant 0 : i32
    return %c0_i32, %c0_i32_0 : i32, i32
  }
  func.func @transform_8(%arg0: i32) -> (i32, i32, i32) {
    %c0_i32 = arith.constant 0 : i32
    %c0_i32_0 = arith.constant 0 : i32
    %c0_i32_1 = arith.constant 0 : i32
    %c0_i32_2 = arith.constant 0 : i32
    return %c0_i32, %c0_i32_0, %c0_i32_1 : i32, i32, i32
  }
  func.func @transform_9(%arg0: i32) -> (i32, i32) {
    %c0_i32 = arith.constant 0 : i32
    %c0_i32_0 = arith.constant 0 : i32
    %c0_i32_1 = arith.constant 0 : i32
    return %c0_i32, %c0_i32_0 : i32, i32
  }
}

</mosaic_0001>

<llo_original>
// kernel: tpu_custom_call.1
$region0: #{tpu_custom_call.1}
  #allocation0 [shape = 'u32[]', space=smem, size = 0x4, offset = 0x4, fixed_abs, tag = 'smem constant byte address 0x4 - core index']
  #allocation1 [shape = 'u32[144,128]{1,0:T(1,128)}', space=vmem, size = 0x12000, scoped, tag = 'internal scratch']
  %s0 = inlined_call_operand.vmem [shape: f32[32,128], index: 0, kind: input, shape index: {}]
  %s1 = inlined_call_operand.vmem [shape: f32[7,2,22,128], index: 1, kind: input, shape index: {}]
  %s2 = inlined_call_operand.vmem [shape: f32[128,240], index: 2, kind: input, shape index: {}]
  %s3 = inlined_call_operand.vmem [shape: f32[1,240], index: 3, kind: input, shape index: {}]
  %s4 = inlined_call_operand.hbm [shape: bf16[80,1152], index: 4, kind: input, shape index: {}]
  %s5 = inlined_call_operand.vmem [shape: bf16[80,3200], index: 5, kind: input, shape index: {}]
  %s6 = inlined_call_operand.hbm [shape: bf16[80,6272], index: 6, kind: input, shape index: {}]
  %s7 = inlined_call_operand.vmem [shape: f32[3,128], index: 7, kind: input, shape index: {}]
  %s8 = inlined_call_operand.hbm [shape: f32[3,128,128], index: 8, kind: input, shape index: {}]
  %s9 = inlined_call_operand.hbm [shape: f32[32,128], index: 9, kind: output, shape index: {}]
  %s10 = sld [smem:[#allocation0]]
  $region58: #{tpu_custom_call.1} parent=0
    _
  %s12 = ssub.s32 1, %s10
  %s13 = scalar_select 0, %s12, %s10
  $region1: #{tpu_custom_call.1} parent=0
    #allocation2 [shape = 'u8[184320]{0}', space=vmem, size = 0x2d000, scoped, tag = 'input window, operand 4, single buffered']
    #allocation3 [shape = 's32[1]{0}', space=sflag, size = 0x4, scoped, tag = 'scoped memory for tpu_custom_call.1']
    #allocation4 [shape = 's32[1]{0}', space=sflag, size = 0x4, scoped, tag = 'scoped memory for tpu_custom_call.1']
    #allocation5 [shape = 'u8[1003520]{0}', space=vmem, size = 0xf5000, scoped, tag = 'input window, operand 6, single buffered']
    #allocation6 [shape = 's32[1]{0}', space=sflag, size = 0x4, scoped, tag = 'scoped memory for tpu_custom_call.1']
    #allocation7 [shape = 'u8[196608]{0}', space=vmem, size = 0x30000, scoped, tag = 'input window, operand 8, single buffered']
    #allocation8 [shape = 'u8[16384]{0}', space=vmem, size = 0x4000, scoped, tag = 'output window, operand 0, single buffered']
    %14 = vsyncpa [#allocation3], 0
    %15 = vsyncpa [#allocation6], 0
    %16 = vsyncpa [#allocation4], 0
    // Predicated region
    $region2: #{tpu_custom_call.1} parent=1 // pred_check
      _
    $region3: #{tpu_custom_call.1} parent=1 // pred_check_branch
      %18 = sbr.rel (0) target = $region5
    $region4: #{tpu_custom_call.1} parent=1 // pred_region
      _
    $region5: #{tpu_custom_call.1} parent=1 // pred_fallthru
      _
    // Predicated region
    $region6: #{tpu_custom_call.1} parent=1 // pred_check
      _
    $region7: #{tpu_custom_call.1} parent=1 // pred_check_branch
      %20 = sbr.rel (0) target = $region9
    $region8: #{tpu_custom_call.1} parent=1 // pred_region
      _
    $region9: #{tpu_custom_call.1} parent=1 // pred_fallthru
      _
    // Predicated region
    $region10: #{tpu_custom_call.1} parent=1 // pred_check
      _
    $region11: #{tpu_custom_call.1} parent=1 // pred_check_branch
      %22 = sbr.rel (0) target = $region13
    $region12: #{tpu_custom_call.1} parent=1 // pred_region
      _
    $region13: #{tpu_custom_call.1} parent=1 // pred_fallthru
      _
    // Predicated region
    $region14: #{tpu_custom_call.1} parent=1 // pred_check
      _
    $region15: #{tpu_custom_call.1} parent=1 // pred_check_branch
      %24 = sbr.rel (0) target = $region17
    $region16: #{tpu_custom_call.1} parent=1 // pred_region
      _
    $region17: #{tpu_custom_call.1} parent=1 // pred_fallthru
      _
    // Predicated region
    $region18: #{tpu_custom_call.1} parent=1 // pred_check
      _
    $region19: #{tpu_custom_call.1} parent=1 // pred_check_branch
      %26 = sbr.rel (0) target = $region21
    $region20: #{tpu_custom_call.1} parent=1 // pred_region
      %s28 = ssub.s32 5760, 5760
      %29 = vsyncadd [#allocation3], %s28
      %s30 = sshll.u32 [#allocation2], 4
      %s31 = int_to_ptr.vmem [resolvable:$true] %s30
      %36 = dma.hbm_to_vmem [thread:$0]  %s4, 5760, %s31, [#allocation3], 576, 576, 36
    $region21: #{tpu_custom_call.1} parent=1 // pred_fallthru
      _
    // Predicated region
    $region22: #{tpu_custom_call.1} parent=1 // pred_check
      _
    $region23: #{tpu_custom_call.1} parent=1 // pred_check_branch
      %38 = sbr.rel (0) target = $region25
    $region24: #{tpu_custom_call.1} parent=1 // pred_region
      _
    $region25: #{tpu_custom_call.1} parent=1 // pred_fallthru
      _
    // Predicated region
    $region26: #{tpu_custom_call.1} parent=1 // pred_check
      _
    $region27: #{tpu_custom_call.1} parent=1 // pred_check_branch
      %40 = sbr.rel (0) target = $region29
    $region28: #{tpu_custom_call.1} parent=1 // pred_region
      %s42 = ssub.s32 31360, 31360
      %43 = vsyncadd [#allocation6], %s42
      %s44 = sshll.u32 [#allocation5], 4
      %s45 = int_to_ptr.vmem [resolvable:$true] %s44
      %50 = dma.hbm_to_vmem [thread:$0]  %s6, 31360, %s45, [#allocation6], 3136, 3136, 196
    $region29: #{tpu_custom_call.1} parent=1 // pred_fallthru
      _
    // Predicated region
    $region30: #{tpu_custom_call.1} parent=1 // pred_check
      _
    $region31: #{tpu_custom_call.1} parent=1 // pred_check_branch
      %52 = sbr.rel (0) target = $region33
    $region32: #{tpu_custom_call.1} parent=1 // pred_region
      _
    $region33: #{tpu_custom_call.1} parent=1 // pred_fallthru
      _
    // Predicated region
    $region34: #{tpu_custom_call.1} parent=1 // pred_check
      _
    $region35: #{tpu_custom_call.1} parent=1 // pred_check_branch
      %54 = sbr.rel (0) target = $region37
    $region36: #{tpu_custom_call.1} parent=1 // pred_region
      %s56 = ssub.s32 6144, 6144
      %57 = vsyncadd [#allocation6], %s56
      %s58 = sshll.u32 [#allocation7], 4
      %s59 = int_to_ptr.vmem [resolvable:$true] %s58
      %64 = dma.hbm_to_vmem [thread:$0]  %s8, 6144, %s59, [#allocation6], 128, 128, 8
    $region37: #{tpu_custom_call.1} parent=1 // pred_fallthru
      _
    // Predicated region
    $region38: #{tpu_custom_call.1} parent=1 // pred_check
      _
    $region39: #{tpu_custom_call.1} parent=1 // pred_check_branch
      %66 = sbr.rel (0) target = $region41
    $region40: #{tpu_custom_call.1} parent=1 // pred_region
      %67 = dma.done [#allocation3], 5760
    $region41: #{tpu_custom_call.1} parent=1 // pred_fallthru
      _
    // Predicated region
    $region42: #{tpu_custom_call.1} parent=1 // pred_check
      _
    $region43: #{tpu_custom_call.1} parent=1 // pred_check_branch
      %69 = sbr.rel (0) target = $region45
    $region44: #{tpu_custom_call.1} parent=1 // pred_region
      %70 = dma.done [#allocation6], 31360
    $region45: #{tpu_custom_call.1} parent=1 // pred_fallthru
      _
    // Predicated region
    $region46: #{tpu_custom_call.1} parent=1 // pred_check
      _
    $region47: #{tpu_custom_call.1} parent=1 // pred_check_branch
      %72 = sbr.rel (0) target = $region49
    $region48: #{tpu_custom_call.1} parent=1 // pred_region
      %73 = dma.done [#allocation6], 6144
    $region49: #{tpu_custom_call.1} parent=1 // pred_fallthru
      _
    %v75 = vld [vmem:[%s0] sm:$0xff]
    %v76 = vld [vmem:[%s0 + $0x8] sm:$0xff]
    %v77 = vld [vmem:[%s0 + $0x10] sm:$0xff]
    %v78 = vld [vmem:[%s0 + $0x18] sm:$0xff]
    %v79 = vld [vmem:[%s2] sm:$0xff]
    %v80 = vld [vmem:[%s2 + $0x8] sm:$0xff]
    %v81 = vld [vmem:[%s2 + $0x10] sm:$0xff]
    %v82 = vld [vmem:[%s2 + $0x18] sm:$0xff]
    %v83 = vld [vmem:[%s2 + $0x20] sm:$0xff]
    %v84 = vld [vmem:[%s2 + $0x28] sm:$0xff]
    %v85 = vld [vmem:[%s2 + $0x30] sm:$0xff]
    %v86 = vld [vmem:[%s2 + $0x38] sm:$0xff]
    %v87 = vld [vmem:[%s2 + $0x40] sm:$0xff]
    %v88 = vld [vmem:[%s2 + $0x48] sm:$0xff]
    %v89 = vld [vmem:[%s2 + $0x50] sm:$0xff]
    %v90 = vld [vmem:[%s2 + $0x58] sm:$0xff]
    %v91 = vld [vmem:[%s2 + $0x60] sm:$0xff]
    %v92 = vld [vmem:[%s2 + $0x68] sm:$0xff]
    %v93 = vld [vmem:[%s2 + $0x70] sm:$0xff]
    %v94 = vld [vmem:[%s2 + $0x78] sm:$0xff]
    %v95 = vld [vmem:[%s2 + $0x80] sm:$0xff]
    %v96 = vld [vmem:[%s2 + $0x88] sm:$0xff]
    %v97 = vld [vmem:[%s2 + $0x90] sm:$0xff]
    %v98 = vld [vmem:[%s2 + $0x98] sm:$0xff]
    %v99 = vld [vmem:[%s2 + $0xa0] sm:$0xff]
    %v100 = vld [vmem:[%s2 + $0xa8] sm:$0xff]
    %v101 = vld [vmem:[%s2 + $0xb0] sm:$0xff]
    %v102 = vld [vmem:[%s2 + $0xb8] sm:$0xff]
    %v103 = vld [vmem:[%s2 + $0xc0] sm:$0xff]
    %v104 = vld [vmem:[%s2 + $0xc8] sm:$0xff]
    %v105 = vld [vmem:[%s2 + $0xd0] sm:$0xff]
    %v106 = vld [vmem:[%s2 + $0xd8] sm:$0xff]
    %v107 = vld [vmem:[%s2 + $0xe0] sm:$0xff]
    %v108 = vld [vmem:[%s2 + $0xe8] sm:$0xff]
    %v109 = vld [vmem:[%s2 + $0xf0] sm:$0xff]
    %v110 = vld [vmem:[%s2 + $0xf8] sm:$0xff]
    %v111 = vld [vmem:[%s3] sm:$0x3]
    %v113 = vlaneseq
    %v114 = vshrl.u32 %v113, 7
    %v115 = vsub.s32 0, %v114
    %v116 = vrot.slane %v111, %v115
    %v117 = vlaneseq
    %v118 = vshrl.u32 %v117, 7
    %v119 = vsub.s32 1, %v118
    %v120 = vrot.slane %v111, %v119
    %v123 = vand.u32 %v80, 4294901760
    %124 = vmatprep.subr.mxu0 %v123
    %v125 = vand.u32 %v79, 4294901760
    %126 = vmatpush1.msra.mxu0 %v125
    %v127 = vand.u32 %v82, 4294901760
    %128 = vmatprep.subr.mxu0 %v127
    %v129 = vand.u32 %v81, 4294901760
    %130 = vmatpush1.msra.mxu0 %v129
    %v131 = vand.u32 %v84, 4294901760
    %132 = vmatprep.subr.mxu0 %v131
    %v133 = vand.u32 %v83, 4294901760
    %134 = vmatpush1.msra.mxu0 %v133
    %v135 = vand.u32 %v86, 4294901760
    %136 = vmatprep.subr.mxu0 %v135
    %v137 = vand.u32 %v85, 4294901760
    %138 = vmatpush1.msra.mxu0 %v137
    %v139 = vand.u32 %v88, 4294901760
    %140 = vmatprep.subr.mxu0 %v139
    %v141 = vand.u32 %v87, 4294901760
    %142 = vmatpush1.msra.mxu0 %v141
    %v143 = vand.u32 %v90, 4294901760
    %144 = vmatprep.subr.mxu0 %v143
    %v145 = vand.u32 %v89, 4294901760
    %146 = vmatpush1.msra.mxu0 %v145
    %v147 = vand.u32 %v92, 4294901760
    %148 = vmatprep.subr.mxu0 %v147
    %v149 = vand.u32 %v91, 4294901760
    %150 = vmatpush1.msra.mxu0 %v149
    %v151 = vand.u32 %v94, 4294901760
    %152 = vmatprep.subr.mxu0 %v151
    %v153 = vand.u32 %v93, 4294901760
    %154 = vmatpush1.msra.mxu0 %v153
    %v155 = vand.u32 %v96, 4294901760
    %156 = vmatprep.subr.mxu0 %v155
    %v157 = vand.u32 %v95, 4294901760
    %158 = vmatpush1.msra.mxu0 %v157
    %v159 = vand.u32 %v98, 4294901760
    %160 = vmatprep.subr.mxu0 %v159
    %v161 = vand.u32 %v97, 4294901760
    %162 = vmatpush1.msra.mxu0 %v161
    %v163 = vand.u32 %v100, 4294901760
    %164 = vmatprep.subr.mxu0 %v163
    %v165 = vand.u32 %v99, 4294901760
    %166 = vmatpush1.msra.mxu0 %v165
    %v167 = vand.u32 %v102, 4294901760
    %168 = vmatprep.subr.mxu0 %v167
    %v169 = vand.u32 %v101, 4294901760
    %170 = vmatpush1.msra.mxu0 %v169
    %v171 = vand.u32 %v104, 4294901760
    %172 = vmatprep.subr.mxu0 %v171
    %v173 = vand.u32 %v103, 4294901760
    %174 = vmatpush1.msra.mxu0 %v173
    %v175 = vand.u32 %v106, 4294901760
    %176 = vmatprep.subr.mxu0 %v175
    %v177 = vand.u32 %v105, 4294901760
    %178 = vmatpush1.msra.mxu0 %v177
    %v179 = vand.u32 %v108, 4294901760
    %180 = vmatprep.subr.mxu0 %v179
    %v181 = vand.u32 %v107, 4294901760
    %182 = vmatpush1.msra.mxu0 %v181
    %v183 = vand.u32 %v110, 4294901760
    %184 = vmatprep.subr.mxu0 %v183
    %v185 = vand.u32 %v109, 4294901760
    %186 = vmatpush1.msra.mxu0 %v185
    %187 = vmatprep.subr.mxu0 0.0
    %188 = vmatpush1.msra.mxu0 0.0
    %189 = vmatprep.subr.mxu0 0.0
    %190 = vmatpush1.msra.mxu0 0.0
    %191 = vmatprep.subr.mxu0 0.0
    %192 = vmatpush1.msra.mxu0 0.0
    %193 = vmatprep.subr.mxu0 0.0
    %194 = vmatpush1.msra.mxu0 0.0
    %195 = vmatprep.subr.mxu0 0.0
    %196 = vmatpush1.msra.mxu0 0.0
    %197 = vmatprep.subr.mxu0 0.0
    %198 = vmatpush1.msra.mxu0 0.0
    %199 = vmatprep.subr.mxu0 0.0
    %200 = vmatpush1.msra.mxu0 0.0
    %201 = vmatprep.subr.mxu0 0.0
    %202 = vmatpush1.msra.mxu0 0.0
    %203 = vmatprep.subr.mxu0 0.0
    %204 = vmatpush1.msra.mxu0 0.0
    %205 = vmatprep.subr.mxu0 0.0
    %206 = vmatpush1.msra.mxu0 0.0
    %207 = vmatprep.subr.mxu0 0.0
    %208 = vmatpush1.msra.mxu0 0.0
    %209 = vmatprep.subr.mxu0 0.0
    %210 = vmatpush1.msra.mxu0 0.0
    %211 = vmatprep.subr.mxu0 0.0
    %212 = vmatpush1.msra.mxu0 0.0
    %213 = vmatprep.subr.mxu0 0.0
    %214 = vmatpush1.msra.mxu0 0.0
    %215 = vmatprep.subr.mxu0 0.0
    %216 = vmatpush1.msra.mxu0 0.0
    %217 = vmatprep.subr.mxu0 0.0
    %218 = vmatpush1.msra.mxu0 0.0
    %219 = vmatprep.mubr.f32.mxu0 0.0
    %v220 = vand.u32 %v75, 4294901760
    %v221 = vsub.f32 %v75, %v220
    %v222 = vand.u32 %v221, 4294901760
    %v223 = vsub.f32 %v221, %v222
    %v224 = vand.u32 %v223, 4294901760
    %225 = vmatmul.mubr.f32.gmra.mrb[0].mxu0 %v224
    %v226 = vpop.f32.mrb[0].mxu0
    %v227 = vadd.f32 %v116, %v226
    %v228 = vpop.f32.mrb[0].mxu0
    %v229 = vadd.f32 %v120, %v228
    %230 = vmatprep.mubr.f32.mxu0 0.0
    %v231 = vand.u32 %v76, 4294901760
    %v232 = vsub.f32 %v76, %v231
    %v233 = vand.u32 %v232, 4294901760
    %v234 = vsub.f32 %v232, %v233
    %v235 = vand.u32 %v234, 4294901760
    %236 = vmatmul.mubr.f32.gmra.mrb[0].mxu0 %v235
    %v237 = vpop.f32.mrb[0].mxu0
    %v238 = vadd.f32 %v116, %v237
    %v239 = vpop.f32.mrb[0].mxu0
    %v240 = vadd.f32 %v120, %v239
    %241 = vmatprep.mubr.f32.mxu0 0.0
    %v242 = vand.u32 %v77, 4294901760
    %v243 = vsub.f32 %v77, %v242
    %v244 = vand.u32 %v243, 4294901760
    %v245 = vsub.f32 %v243, %v244
    %v246 = vand.u32 %v245, 4294901760
    %247 = vmatmul.mubr.f32.gmra.mrb[0].mxu0 %v246
    %v248 = vpop.f32.mrb[0].mxu0
    %v249 = vadd.f32 %v116, %v248
    %v250 = vpop.f32.mrb[0].mxu0
    %v251 = vadd.f32 %v120, %v250
    %252 = vmatprep.mubr.f32.mxu0 0.0
    %v253 = vand.u32 %v78, 4294901760
    %v254 = vsub.f32 %v78, %v253
    %v255 = vand.u32 %v254, 4294901760
    %v256 = vsub.f32 %v254, %v255
    %v257 = vand.u32 %v256, 4294901760
    %258 = vmatmul.mubr.f32.gmra.mrb[0].mxu0 %v257
    %v259 = vpop.f32.mrb[0].mxu0
    %v260 = vadd.f32 %v116, %v259
    %v261 = vpop.f32.mrb[0].mxu0
    %v262 = vadd.f32 %v120, %v261
    %263 = vdwg.mxu0
    %v264 = vand.u32 %v80, 4294901760
    %v265 = vsub.f32 %v80, %v264
    %v266 = vand.u32 %v265, 4294901760
    %v267 = vsub.f32 %v265, %v266
    %v268 = vand.u32 %v267, 4294901760
    %269 = vmatprep.subr.mxu0 %v268
    %v270 = vand.u32 %v79, 4294901760
    %v271 = vsub.f32 %v79, %v270
    %v272 = vand.u32 %v271, 4294901760
    %v273 = vsub.f32 %v271, %v272
    %v274 = vand.u32 %v273, 4294901760
    %275 = vmatpush1.msra.mxu0 %v274
    %v276 = vand.u32 %v82, 4294901760
    %v277 = vsub.f32 %v82, %v276
    %v278 = vand.u32 %v277, 4294901760
    %v279 = vsub.f32 %v277, %v278
    %v280 = vand.u32 %v279, 4294901760
    %281 = vmatprep.subr.mxu0 %v280
    %v282 = vand.u32 %v81, 4294901760
    %v283 = vsub.f32 %v81, %v282
    %v284 = vand.u32 %v283, 4294901760
    %v285 = vsub.f32 %v283, %v284
    %v286 = vand.u32 %v285, 4294901760
    %287 = vmatpush1.msra.mxu0 %v286
    %v288 = vand.u32 %v84, 4294901760
    %v289 = vsub.f32 %v84, %v288
    %v290 = vand.u32 %v289, 4294901760
    %v291 = vsub.f32 %v289, %v290
    %v292 = vand.u32 %v291, 4294901760
    %293 = vmatprep.subr.mxu0 %v292
    %v294 = vand.u32 %v83, 4294901760
    %v295 = vsub.f32 %v83, %v294
    %v296 = vand.u32 %v295, 4294901760
    %v297 = vsub.f32 %v295, %v296
    %v298 = vand.u32 %v297, 4294901760
    %299 = vmatpush1.msra.mxu0 %v298
    %v300 = vand.u32 %v86, 4294901760
    %v301 = vsub.f32 %v86, %v300
    %v302 = vand.u32 %v301, 4294901760
    %v303 = vsub.f32 %v301, %v302
    %v304 = vand.u32 %v303, 4294901760
    %305 = vmatprep.subr.mxu0 %v304
    %v306 = vand.u32 %v85, 4294901760
    %v307 = vsub.f32 %v85, %v306
    %v308 = vand.u32 %v307, 4294901760
    %v309 = vsub.f32 %v307, %v308
    %v310 = vand.u32 %v309, 4294901760
    %311 = vmatpush1.msra.mxu0 %v310
    %v312 = vand.u32 %v88, 4294901760
    %v313 = vsub.f32 %v88, %v312
    %v314 = vand.u32 %v313, 4294901760
    %v315 = vsub.f32 %v313, %v314
    %v316 = vand.u32 %v315, 4294901760
    %317 = vmatprep.subr.mxu0 %v316
    %v318 = vand.u32 %v87, 4294901760
    %v319 = vsub.f32 %v87, %v318
    %v320 = vand.u32 %v319, 4294901760
    %v321 = vsub.f32 %v319, %v320
    %v322 = vand.u32 %v321, 4294901760
    %323 = vmatpush1.msra.mxu0 %v322
    %v324 = vand.u32 %v90, 4294901760
    %v325 = vsub.f32 %v90, %v324
    %v326 = vand.u32 %v325, 4294901760
    %v327 = vsub.f32 %v325, %v326
    %v328 = vand.u32 %v327, 4294901760
    %329 = vmatprep.subr.mxu0 %v328
    %v330 = vand.u32 %v89, 4294901760
    %v331 = vsub.f32 %v89, %v330
    %v332 = vand.u32 %v331, 4294901760
    %v333 = vsub.f32 %v331, %v332
    %v334 = vand.u32 %v333, 4294901760
    %335 = vmatpush1.msra.mxu0 %v334
    %v336 = vand.u32 %v92, 4294901760
    %v337 = vsub.f32 %v92, %v336
    %v338 = vand.u32 %v337, 4294901760
    %v339 = vsub.f32 %v337, %v338
    %v340 = vand.u32 %v339, 4294901760
    %341 = vmatprep.subr.mxu0 %v340
    %v342 = vand.u32 %v91, 4294901760
    %v343 = vsub.f32 %v91, %v342
    %v344 = vand.u32 %v343, 4294901760
    %v345 = vsub.f32 %v343, %v344
    %v346 = vand.u32 %v345, 4294901760
    %347 = vmatpush1.msra.mxu0 %v346
    %v348 = vand.u32 %v94, 4294901760
    %v349 = vsub.f32 %v94, %v348
    %v350 = vand.u32 %v349, 4294901760
    %v351 = vsub.f32 %v349, %v350
    %v352 = vand.u32 %v351, 4294901760
    %353 = vmatprep.subr.mxu0 %v352
    %v354 = vand.u32 %v93, 4294901760
    %v355 = vsub.f32 %v93, %v354
    %v356 = vand.u32 %v355, 4294901760
    %v357 = vsub.f32 %v355, %v356
    %v358 = vand.u32 %v357, 4294901760
    %359 = vmatpush1.msra.mxu0 %v358
    %v360 = vand.u32 %v96, 4294901760
    %v361 = vsub.f32 %v96, %v360
    %v362 = vand.u32 %v361, 4294901760
    %v363 = vsub.f32 %v361, %v362
    %v364 = vand.u32 %v363, 4294901760
    %365 = vmatprep.subr.mxu0 %v364
    %v366 = vand.u32 %v95, 4294901760
    %v367 = vsub.f32 %v95, %v366
    %v368 = vand.u32 %v367, 4294901760
    %v369 = vsub.f32 %v367, %v368
    %v370 = vand.u32 %v369, 4294901760
    %371 = vmatpush1.msra.mxu0 %v370
    %v372 = vand.u32 %v98, 4294901760
    %v373 = vsub.f32 %v98, %v372
    %v374 = vand.u32 %v373, 4294901760
    %v375 = vsub.f32 %v373, %v374
    %v376 = vand.u32 %v375, 4294901760
    %377 = vmatprep.subr.mxu0 %v376
    %v378 = vand.u32 %v97, 4294901760
    %v379 = vsub.f32 %v97, %v378
    %v380 = vand.u32 %v379, 4294901760
    %v381 = vsub.f32 %v379, %v380
    %v382 = vand.u32 %v381, 4294901760
    %383 = vmatpush1.msra.mxu0 %v382
    %v384 = vand.u32 %v100, 4294901760
    %v385 = vsub.f32 %v100, %v384
    %v386 = vand.u32 %v385, 4294901760
    %v387 = vsub.f32 %v385, %v386
    %v388 = vand.u32 %v387, 4294901760
    %389 = vmatprep.subr.mxu0 %v388
    %v390 = vand.u32 %v99, 4294901760
    %v391 = vsub.f32 %v99, %v390
    %v392 = vand.u32 %v391, 4294901760
    %v393 = vsub.f32 %v391, %v392
    %v394 = vand.u32 %v393, 4294901760
    %395 = vmatpush1.msra.mxu0 %v394
    %v396 = vand.u32 %v102, 4294901760
    %v397 = vsub.f32 %v102, %v396
    %v398 = vand.u32 %v397, 4294901760
    %v399 = vsub.f32 %v397, %v398
    %v400 = vand.u32 %v399, 4294901760
    %401 = vmatprep.subr.mxu0 %v400
    %v402 = vand.u32 %v101, 4294901760
    %v403 = vsub.f32 %v101, %v402
    %v404 = vand.u32 %v403, 4294901760
    %v405 = vsub.f32 %v403, %v404
    %v406 = vand.u32 %v405, 4294901760
    %407 = vmatpush1.msra.mxu0 %v406
    %v408 = vand.u32 %v104, 4294901760
    %v409 = vsub.f32 %v104, %v408
    %v410 = vand.u32 %v409, 4294901760
    %v411 = vsub.f32 %v409, %v410
    %v412 = vand.u32 %v411, 4294901760
    %413 = vmatprep.subr.mxu0 %v412
    %v414 = vand.u32 %v103, 4294901760
    %v415 = vsub.f32 %v103, %v414
    %v416 = vand.u32 %v415, 4294901760
    %v417 = vsub.f32 %v415, %v416
    %v418 = vand.u32 %v417, 4294901760
    %419 = vmatpush1.msra.mxu0 %v418
    %v420 = vand.u32 %v106, 4294901760
    %v421 = vsub.f32 %v106, %v420
    %v422 = vand.u32 %v421, 4294901760
    %v423 = vsub.f32 %v421, %v422
    %v424 = vand.u32 %v423, 4294901760
    %425 = vmatprep.subr.mxu0 %v424
    %v426 = vand.u32 %v105, 4294901760
    %v427 = vsub.f32 %v105, %v426
    %v428 = vand.u32 %v427, 4294901760
    %v429 = vsub.f32 %v427, %v428
    %v430 = vand.u32 %v429, 4294901760
    %431 = vmatpush1.msra.mxu0 %v430
    %v432 = vand.u32 %v108, 4294901760
    %v433 = vsub.f32 %v108, %v432
    %v434 = vand.u32 %v433, 4294901760
    %v435 = vsub.f32 %v433, %v434
    %v436 = vand.u32 %v435, 4294901760
    %437 = vmatprep.subr.mxu0 %v436
    %v438 = vand.u32 %v107, 4294901760
    %v439 = vsub.f32 %v107, %v438
    %v440 = vand.u32 %v439, 4294901760
    %v441 = vsub.f32 %v439, %v440
    %v442 = vand.u32 %v441, 4294901760
    %443 = vmatpush1.msra.mxu0 %v442
    %v444 = vand.u32 %v110, 4294901760
    %v445 = vsub.f32 %v110, %v444
    %v446 = vand.u32 %v445, 4294901760
    %v447 = vsub.f32 %v445, %v446
    %v448 = vand.u32 %v447, 4294901760
    %449 = vmatprep.subr.mxu0 %v448
    %v450 = vand.u32 %v109, 4294901760
    %v451 = vsub.f32 %v109, %v450
    %v452 = vand.u32 %v451, 4294901760
    %v453 = vsub.f32 %v451, %v452
    %v454 = vand.u32 %v453, 4294901760
    %455 = vmatpush1.msra.mxu0 %v454
    %456 = vmatprep.subr.mxu0 0.0
    %457 = vmatpush1.msra.mxu0 0.0
    %458 = vmatprep.subr.mxu0 0.0
    %459 = vmatpush1.msra.mxu0 0.0
    %460 = vmatprep.subr.mxu0 0.0
    %461 = vmatpush1.msra.mxu0 0.0
    %462 = vmatprep.subr.mxu0 0.0
    %463 = vmatpush1.msra.mxu0 0.0
    %464 = vmatprep.subr.mxu0 0.0
    %465 = vmatpush1.msra.mxu0 0.0
    %466 = vmatprep.subr.mxu0 0.0
    %467 = vmatpush1.msra.mxu0 0.0
    %468 = vmatprep.subr.mxu0 0.0
    %469 = vmatpush1.msra.mxu0 0.0
    %470 = vmatprep.subr.mxu0 0.0
    %471 = vmatpush1.msra.mxu0 0.0
    %472 = vmatprep.subr.mxu0 0.0
    %473 = vmatpush1.msra.mxu0 0.0
    %474 = vmatprep.subr.mxu0 0.0
    %475 = vmatpush1.msra.mxu0 0.0
    %476 = vmatprep.subr.mxu0 0.0
    %477 = vmatpush1.msra.mxu0 0.0
    %478 = vmatprep.subr.mxu0 0.0
    %479 = vmatpush1.msra.mxu0 0.0
    %480 = vmatprep.subr.mxu0 0.0
    %481 = vmatpush1.msra.mxu0 0.0
    %482 = vmatprep.subr.mxu0 0.0
    %483 = vmatpush1.msra.mxu0 0.0
    %484 = vmatprep.subr.mxu0 0.0
    %485 = vmatpush1.msra.mxu0 0.0
    %486 = vmatprep.subr.mxu0 0.0
    %487 = vmatpush1.msra.mxu0 0.0
    %488 = vmatprep.mubr.f32.mxu0 0.0
    %v489 = vand.u32 %v75, 4294901760
    %490 = vmatmul.mubr.f32.gmra.mrb[0].mxu0 %v489
    %v491 = vpop.f32.mrb[0].mxu0
    %v492 = vadd.f32 %v227, %v491
    %v493 = vpop.f32.mrb[0].mxu0
    %v494 = vadd.f32 %v229, %v493
    %495 = vmatprep.mubr.f32.mxu0 0.0
    %v496 = vand.u32 %v76, 4294901760
    %497 = vmatmul.mubr.f32.gmra.mrb[0].mxu0 %v496
    %v498 = vpop.f32.mrb[0].mxu0
    %v499 = vadd.f32 %v238, %v498
    %v500 = vpop.f32.mrb[0].mxu0
    %v501 = vadd.f32 %v240, %v500
    %502 = vmatprep.mubr.f32.mxu0 0.0
    %v503 = vand.u32 %v77, 4294901760
    %504 = vmatmul.mubr.f32.gmra.mrb[0].mxu0 %v503
    %v505 = vpop.f32.mrb[0].mxu0
    %v506 = vadd.f32 %v249, %v505
    %v507 = vpop.f32.mrb[0].mxu0
    %v508 = vadd.f32 %v251, %v507
    %509 = vmatprep.mubr.f32.mxu0 0.0
    %v510 = vand.u32 %v78, 4294901760
    %511 = vmatmul.mubr.f32.gmra.mrb[0].mxu0 %v510
    %v512 = vpop.f32.mrb[0].mxu0
    %v513 = vadd.f32 %v260, %v512
    %v514 = vpop.f32.mrb[0].mxu0
    %v515 = vadd.f32 %v262, %v514
    %516 = vdwg.mxu0
    %v517 = vand.u32 %v80, 4294901760
    %v518 = vsub.f32 %v80, %v517
    %519 = vmatprep.subr.mxu0 %v518
    %v520 = vand.u32 %v79, 4294901760
    %v521 = vsub.f32 %v79, %v520
    %522 = vmatpush1.msra.mxu0 %v521
    %v523 = vand.u32 %v82, 4294901760
    %v524 = vsub.f32 %v82, %v523
    %525 = vmatprep.subr.mxu0 %v524
    %v526 = vand.u32 %v81, 4294901760
    %v527 = vsub.f32 %v81, %v526
    %528 = vmatpush1.msra.mxu0 %v527
    %v529 = vand.u32 %v84, 4294901760
    %v530 = vsub.f32 %v84, %v529
    %531 = vmatprep.subr.mxu0 %v530
    %v532 = vand.u32 %v83, 4294901760
    %v533 = vsub.f32 %v83, %v532
    %534 = vmatpush1.msra.mxu0 %v533
    %v535 = vand.u32 %v86, 4294901760
    %v536 = vsub.f32 %v86, %v535
    %537 = vmatprep.subr.mxu0 %v536
    %v538 = vand.u32 %v85, 4294901760
    %v539 = vsub.f32 %v85, %v538
    %540 = vmatpush1.msra.mxu0 %v539
    %v541 = vand.u32 %v88, 4294901760
    %v542 = vsub.f32 %v88, %v541
    %543 = vmatprep.subr.mxu0 %v542
    %v544 = vand.u32 %v87, 4294901760
    %v545 = vsub.f32 %v87, %v544
    %546 = vmatpush1.msra.mxu0 %v545
    %v547 = vand.u32 %v90, 4294901760
    %v548 = vsub.f32 %v90, %v547
    %549 = vmatprep.subr.mxu0 %v548
    %v550 = vand.u32 %v89, 4294901760
    %v551 = vsub.f32 %v89, %v550
    %552 = vmatpush1.msra.mxu0 %v551
    %v553 = vand.u32 %v92, 4294901760
    %v554 = vsub.f32 %v92, %v553
    %555 = vmatprep.subr.mxu0 %v554
    %v556 = vand.u32 %v91, 4294901760
    %v557 = vsub.f32 %v91, %v556
    %558 = vmatpush1.msra.mxu0 %v557
    %v559 = vand.u32 %v94, 4294901760
    %v560 = vsub.f32 %v94, %v559
    %561 = vmatprep.subr.mxu0 %v560
    %v562 = vand.u32 %v93, 4294901760
    %v563 = vsub.f32 %v93, %v562
    %564 = vmatpush1.msra.mxu0 %v563
    %v565 = vand.u32 %v96, 4294901760
    %v566 = vsub.f32 %v96, %v565
    %567 = vmatprep.subr.mxu0 %v566
    %v568 = vand.u32 %v95, 4294901760
    %v569 = vsub.f32 %v95, %v568
    %570 = vmatpush1.msra.mxu0 %v569
    %v571 = vand.u32 %v98, 4294901760
    %v572 = vsub.f32 %v98, %v571
    %573 = vmatprep.subr.mxu0 %v572
    %v574 = vand.u32 %v97, 4294901760
    %v575 = vsub.f32 %v97, %v574
    %576 = vmatpush1.msra.mxu0 %v575
    %v577 = vand.u32 %v100, 4294901760
    %v578 = vsub.f32 %v100, %v577
    %579 = vmatprep.subr.mxu0 %v578
    %v580 = vand.u32 %v99, 4294901760
    %v581 = vsub.f32 %v99, %v580
    %582 = vmatpush1.msra.mxu0 %v581
    %v583 = vand.u32 %v102, 4294901760
    %v584 = vsub.f32 %v102, %v583
    %585 = vmatprep.subr.mxu0 %v584
    %v586 = vand.u32 %v101, 4294901760
    %v587 = vsub.f32 %v101, %v586
    %588 = vmatpush1.msra.mxu0 %v587
    %v589 = vand.u32 %v104, 4294901760
    %v590 = vsub.f32 %v104, %v589
    %591 = vmatprep.subr.mxu0 %v590
    %v592 = vand.u32 %v103, 4294901760
    %v593 = vsub.f32 %v103, %v592
    %594 = vmatpush1.msra.mxu0 %v593
    %v595 = vand.u32 %v106, 4294901760
    %v596 = vsub.f32 %v106, %v595
    %597 = vmatprep.subr.mxu0 %v596
    %v598 = vand.u32 %v105, 4294901760
    %v599 = vsub.f32 %v105, %v598
    %600 = vmatpush1.msra.mxu0 %v599
    %v601 = vand.u32 %v108, 4294901760
    %v602 = vsub.f32 %v108, %v601
    %603 = vmatprep.subr.mxu0 %v602
    %v604 = vand.u32 %v107, 4294901760
    %v605 = vsub.f32 %v107, %v604
    %606 = vmatpush1.msra.mxu0 %v605
    %v607 = vand.u32 %v110, 4294901760
    %v608 = vsub.f32 %v110, %v607
    %609 = vmatprep.subr.mxu0 %v608
    %v610 = vand.u32 %v109, 4294901760
    %v611 = vsub.f32 %v109, %v610
    %612 = vmatpush1.msra.mxu0 %v611
    %613 = vmatprep.subr.mxu0 0.0
    %614 = vmatpush1.msra.mxu0 0.0
    %615 = vmatprep.subr.mxu0 0.0
    %616 = vmatpush1.msra.mxu0 0.0
    %617 = vmatprep.subr.mxu0 0.0
    %618 = vmatpush1.msra.mxu0 0.0
    %619 = vmatprep.subr.mxu0 0.0
    %620 = vmatpush1.msra.mxu0 0.0
    %621 = vmatprep.subr.mxu0 0.0
    %622 = vmatpush1.msra.mxu0 0.0
    %623 = vmatprep.subr.mxu0 0.0
    %624 = vmatpush1.msra.mxu0 0.0
    %625 = vmatprep.subr.mxu0 0.0
    %626 = vmatpush1.msra.mxu0 0.0
    %627 = vmatprep.subr.mxu0 0.0
    %628 = vmatpush1.msra.mxu0 0.0
    %629 = vmatprep.subr.mxu0 0.0
    %630 = vmatpush1.msra.mxu0 0.0
    %631 = vmatprep.subr.mxu0 0.0
    %632 = vmatpush1.msra.mxu0 0.0
    %633 = vmatprep.subr.mxu0 0.0
    %634 = vmatpush1.msra.mxu0 0.0
    %635 = vmatprep.subr.mxu0 0.0
    %636 = vmatpush1.msra.mxu0 0.0
    %637 = vmatprep.subr.mxu0 0.0
    %638 = vmatpush1.msra.mxu0 0.0
    %639 = vmatprep.subr.mxu0 0.0
    %640 = vmatpush1.msra.mxu0 0.0
    %641 = vmatprep.subr.mxu0 0.0
    %642 = vmatpush1.msra.mxu0 0.0
    %643 = vmatprep.subr.mxu0 0.0
    %644 = vmatpush1.msra.mxu0 0.0
    %645 = vmatprep.mubr.f32.mxu0 0.0
    %v646 = vand.u32 %v75, 4294901760
    %v647 = vsub.f32 %v75, %v646
    %648 = vmatmul.mubr.f32.gmra.mrb[0].mxu0 %v647
    %v649 = vpop.f32.mrb[0].mxu0
    %v650 = vadd.f32 %v492, %v649
    %v651 = vpop.f32.mrb[0].mxu0
    %v652 = vadd.f32 %v494, %v651
    %653 = vmatprep.mubr.f32.mxu0 0.0
    %v654 = vand.u32 %v76, 4294901760
    %v655 = vsub.f32 %v76, %v654
    %656 = vmatmul.mubr.f32.gmra.mrb[0].mxu0 %v655
    %v657 = vpop.f32.mrb[0].mxu0
    %v658 = vadd.f32 %v499, %v657
    %v659 = vpop.f32.mrb[0].mxu0
    %v660 = vadd.f32 %v501, %v659
    %661 = vmatprep.mubr.f32.mxu0 0.0
    %v662 = vand.u32 %v77, 4294901760
    %v663 = vsub.f32 %v77, %v662
    %664 = vmatmul.mubr.f32.gmra.mrb[0].mxu0 %v663
    %v665 = vpop.f32.mrb[0].mxu0
    %v666 = vadd.f32 %v506, %v665
    %v667 = vpop.f32.mrb[0].mxu0
    %v668 = vadd.f32 %v508, %v667
    %669 = vmatprep.mubr.f32.mxu0 0.0
    %v670 = vand.u32 %v78, 4294901760
    %v671 = vsub.f32 %v78, %v670
    %672 = vmatmul.mubr.f32.gmra.mrb[0].mxu0 %v671
    %v673 = vpop.f32.mrb[0].mxu0
    %v674 = vadd.f32 %v513, %v673
    %v675 = vpop.f32.mrb[0].mxu0
    %v676 = vadd.f32 %v515, %v675
    %677 = vdwg.mxu0
    %v678 = vand.u32 %v80, 4294901760
    %679 = vmatprep.subr.mxu0 %v678
    %v680 = vand.u32 %v79, 4294901760
    %681 = vmatpush1.msra.mxu0 %v680
    %v682 = vand.u32 %v82, 4294901760
    %683 = vmatprep.subr.mxu0 %v682
    %v684 = vand.u32 %v81, 4294901760
    %685 = vmatpush1.msra.mxu0 %v684
    %v686 = vand.u32 %v84, 4294901760
    %687 = vmatprep.subr.mxu0 %v686
    %v688 = vand.u32 %v83, 4294901760
    %689 = vmatpush1.msra.mxu0 %v688
    %v690 = vand.u32 %v86, 4294901760
    %691 = vmatprep.subr.mxu0 %v690
    %v692 = vand.u32 %v85, 4294901760
    %693 = vmatpush1.msra.mxu0 %v692
    %v694 = vand.u32 %v88, 4294901760
    %695 = vmatprep.subr.mxu0 %v694
    %v696 = vand.u32 %v87, 4294901760
    %697 = vmatpush1.msra.mxu0 %v696
    %v698 = vand.u32 %v90, 4294901760
    %699 = vmatprep.subr.mxu0 %v698
    %v700 = vand.u32 %v89, 4294901760
    %701 = vmatpush1.msra.mxu0 %v700
    %v702 = vand.u32 %v92, 4294901760
    %703 = vmatprep.subr.mxu0 %v702
    %v704 = vand.u32 %v91, 4294901760
    %705 = vmatpush1.msra.mxu0 %v704
    %v706 = vand.u32 %v94, 4294901760
    %707 = vmatprep.subr.mxu0 %v706
    %v708 = vand.u32 %v93, 4294901760
    %709 = vmatpush1.msra.mxu0 %v708
    %v710 = vand.u32 %v96, 4294901760
    %711 = vmatprep.subr.mxu0 %v710
    %v712 = vand.u32 %v95, 4294901760
    %713 = vmatpush1.msra.mxu0 %v712
    %v714 = vand.u32 %v98, 4294901760
    %715 = vmatprep.subr.mxu0 %v714
    %v716 = vand.u32 %v97, 4294901760
    %717 = vmatpush1.msra.mxu0 %v716
    %v718 = vand.u32 %v100, 4294901760
    %719 = vmatprep.subr.mxu0 %v718
    %v720 = vand.u32 %v99, 4294901760
    %721 = vmatpush1.msra.mxu0 %v720
    %v722 = vand.u32 %v102, 4294901760
    %723 = vmatprep.subr.mxu0 %v722
    %v724 = vand.u32 %v101, 4294901760
    %725 = vmatpush1.msra.mxu0 %v724
    %v726 = vand.u32 %v104, 4294901760
    %727 = vmatprep.subr.mxu0 %v726
    %v728 = vand.u32 %v103, 4294901760
    %729 = vmatpush1.msra.mxu0 %v728
    %v730 = vand.u32 %v106, 4294901760
    %731 = vmatprep.subr.mxu0 %v730
    %v732 = vand.u32 %v105, 4294901760
    %733 = vmatpush1.msra.mxu0 %v732
    %v734 = vand.u32 %v108, 4294901760
    %735 = vmatprep.subr.mxu0 %v734
    %v736 = vand.u32 %v107, 4294901760
    %737 = vmatpush1.msra.mxu0 %v736
    %v738 = vand.u32 %v110, 4294901760
    %739 = vmatprep.subr.mxu0 %v738
    %v740 = vand.u32 %v109, 4294901760
    %741 = vmatpush1.msra.mxu0 %v740
    %742 = vmatprep.subr.mxu0 0.0
    %743 = vmatpush1.msra.mxu0 0.0
    %744 = vmatprep.subr.mxu0 0.0
    %745 = vmatpush1.msra.mxu0 0.0
    %746 = vmatprep.subr.mxu0 0.0
    %747 = vmatpush1.msra.mxu0 0.0
    %748 = vmatprep.subr.mxu0 0.0
    %749 = vmatpush1.msra.mxu0 0.0
    %750 = vmatprep.subr.mxu0 0.0
    %751 = vmatpush1.msra.mxu0 0.0
    %752 = vmatprep.subr.mxu0 0.0
    %753 = vmatpush1.msra.mxu0 0.0
    %754 = vmatprep.subr.mxu0 0.0
    %755 = vmatpush1.msra.mxu0 0.0
    %756 = vmatprep.subr.mxu0 0.0
    %757 = vmatpush1.msra.mxu0 0.0
    %758 = vmatprep.subr.mxu0 0.0
    %759 = vmatpush1.msra.mxu0 0.0
    %760 = vmatprep.subr.mxu0 0.0
    %761 = vmatpush1.msra.mxu0 0.0
    %762 = vmatprep.subr.mxu0 0.0
    %763 = vmatpush1.msra.mxu0 0.0
    %764 = vmatprep.subr.mxu0 0.0
    %765 = vmatpush1.msra.mxu0 0.0
    %766 = vmatprep.subr.mxu0 0.0
    %767 = vmatpush1.msra.mxu0 0.0
    %768 = vmatprep.subr.mxu0 0.0
    %769 = vmatpush1.msra.mxu0 0.0
    %770 = vmatprep.subr.mxu0 0.0
    %771 = vmatpush1.msra.mxu0 0.0
    %772 = vmatprep.subr.mxu0 0.0
    %773 = vmatpush1.msra.mxu0 0.0
    %774 = vmatprep.mubr.f32.mxu0 0.0
    %v775 = vand.u32 %v75, 4294901760
    %v776 = vsub.f32 %v75, %v775
    %v777 = vand.u32 %v776, 4294901760
    %778 = vmatmul.mubr.f32.gmra.mrb[0].mxu0 %v777
    %v779 = vpop.f32.mrb[0].mxu0
    %v780 = vadd.f32 %v650, %v779
    %v781 = vpop.f32.mrb[0].mxu0
    %v782 = vadd.f32 %v652, %v781
    %783 = vmatprep.mubr.f32.mxu0 0.0
    %v784 = vand.u32 %v76, 4294901760
    %v785 = vsub.f32 %v76, %v784
    %v786 = vand.u32 %v785, 4294901760
    %787 = vmatmul.mubr.f32.gmra.mrb[0].mxu0 %v786
    %v788 = vpop.f32.mrb[0].mxu0
    %v789 = vadd.f32 %v658, %v788
    %v790 = vpop.f32.mrb[0].mxu0
    %v791 = vadd.f32 %v660, %v790
    %792 = vmatprep.mubr.f32.mxu0 0.0
    %v793 = vand.u32 %v77, 4294901760
    %v794 = vsub.f32 %v77, %v793
    %v795 = vand.u32 %v794, 4294901760
    %796 = vmatmul.mubr.f32.gmra.mrb[0].mxu0 %v795
    %v797 = vpop.f32.mrb[0].mxu0
    %v798 = vadd.f32 %v666, %v797
    %v799 = vpop.f32.mrb[0].mxu0
    %v800 = vadd.f32 %v668, %v799
    %801 = vmatprep.mubr.f32.mxu0 0.0
    %v802 = vand.u32 %v78, 4294901760
    %v803 = vsub.f32 %v78, %v802
    %v804 = vand.u32 %v803, 4294901760
    %805 = vmatmul.mubr.f32.gmra.mrb[0].mxu0 %v804
    %v806 = vpop.f32.mrb[0].mxu0
    %v807 = vadd.f32 %v674, %v806
    %v808 = vpop.f32.mrb[0].mxu0
    %v809 = vadd.f32 %v676, %v808
    %810 = vdwg.mxu0
    %v811 = vand.u32 %v80, 4294901760
    %v812 = vsub.f32 %v80, %v811
    %v813 = vand.u32 %v812, 4294901760
    %814 = vmatprep.subr.mxu0 %v813
    %v815 = vand.u32 %v79, 4294901760
    %v816 = vsub.f32 %v79, %v815
    %v817 = vand.u32 %v816, 4294901760
    %818 = vmatpush1.msra.mxu0 %v817
    %v819 = vand.u32 %v82, 4294901760
    %v820 = vsub.f32 %v82, %v819
    %v821 = vand.u32 %v820, 4294901760
    %822 = vmatprep.subr.mxu0 %v821
    %v823 = vand.u32 %v81, 4294901760
    %v824 = vsub.f32 %v81, %v823
    %v825 = vand.u32 %v824, 4294901760
    %826 = vmatpush1.msra.mxu0 %v825
    %v827 = vand.u32 %v84, 4294901760
    %v828 = vsub.f32 %v84, %v827
    %v829 = vand.u32 %v828, 4294901760
    %830 = vmatprep.subr.mxu0 %v829
    %v831 = vand.u32 %v83, 4294901760
    %v832 = vsub.f32 %v83, %v831
    %v833 = vand.u32 %v832, 4294901760
    %834 = vmatpush1.msra.mxu0 %v833
    %v835 = vand.u32 %v86, 4294901760
    %v836 = vsub.f32 %v86, %v835
    %v837 = vand.u32 %v836, 4294901760
    %838 = vmatprep.subr.mxu0 %v837
    %v839 = vand.u32 %v85, 4294901760
    %v840 = vsub.f32 %v85, %v839
    %v841 = vand.u32 %v840, 4294901760
    %842 = vmatpush1.msra.mxu0 %v841
    %v843 = vand.u32 %v88, 4294901760
    %v844 = vsub.f32 %v88, %v843
    %v845 = vand.u32 %v844, 4294901760
    %846 = vmatprep.subr.mxu0 %v845
    %v847 = vand.u32 %v87, 4294901760
    %v848 = vsub.f32 %v87, %v847
    %v849 = vand.u32 %v848, 4294901760
    %850 = vmatpush1.msra.mxu0 %v849
    %v851 = vand.u32 %v90, 4294901760
    %v852 = vsub.f32 %v90, %v851
    %v853 = vand.u32 %v852, 4294901760
    %854 = vmatprep.subr.mxu0 %v853
    %v855 = vand.u32 %v89, 4294901760
    %v856 = vsub.f32 %v89, %v855
    %v857 = vand.u32 %v856, 4294901760
    %858 = vmatpush1.msra.mxu0 %v857
    %v859 = vand.u32 %v92, 4294901760
    %v860 = vsub.f32 %v92, %v859
    %v861 = vand.u32 %v860, 4294901760
    %862 = vmatprep.subr.mxu0 %v861
    %v863 = vand.u32 %v91, 4294901760
    %v864 = vsub.f32 %v91, %v863
    %v865 = vand.u32 %v864, 4294901760
    %866 = vmatpush1.msra.mxu0 %v865
    %v867 = vand.u32 %v94, 4294901760
    %v868 = vsub.f32 %v94, %v867
    %v869 = vand.u32 %v868, 4294901760
    %870 = vmatprep.subr.mxu0 %v869
    %v871 = vand.u32 %v93, 4294901760
    %v872 = vsub.f32 %v93, %v871
    %v873 = vand.u32 %v872, 4294901760
    %874 = vmatpush1.msra.mxu0 %v873
    %v875 = vand.u32 %v96, 4294901760
    %v876 = vsub.f32 %v96, %v875
    %v877 = vand.u32 %v876, 4294901760
    %878 = vmatprep.subr.mxu0 %v877
    %v879 = vand.u32 %v95, 4294901760
    %v880 = vsub.f32 %v95, %v879
    %v881 = vand.u32 %v880, 4294901760
    %882 = vmatpush1.msra.mxu0 %v881
    %v883 = vand.u32 %v98, 4294901760
    %v884 = vsub.f32 %v98, %v883
    %v885 = vand.u32 %v884, 4294901760
    %886 = vmatprep.subr.mxu0 %v885
    %v887 = vand.u32 %v97, 4294901760
    %v888 = vsub.f32 %v97, %v887
    %v889 = vand.u32 %v888, 4294901760
    %890 = vmatpush1.msra.mxu0 %v889
    %v891 = vand.u32 %v100, 4294901760
    %v892 = vsub.f32 %v100, %v891
    %v893 = vand.u32 %v892, 4294901760
    %894 = vmatprep.subr.mxu0 %v893
    %v895 = vand.u32 %v99, 4294901760
    %v896 = vsub.f32 %v99, %v895
    %v897 = vand.u32 %v896, 4294901760
    %898 = vmatpush1.msra.mxu0 %v897
    %v899 = vand.u32 %v102, 4294901760
    %v900 = vsub.f32 %v102, %v899
    %v901 = vand.u32 %v900, 4294901760
    %902 = vmatprep.subr.mxu0 %v901
    %v903 = vand.u32 %v101, 4294901760
    %v904 = vsub.f32 %v101, %v903
    %v905 = vand.u32 %v904, 4294901760
    %906 = vmatpush1.msra.mxu0 %v905
    %v907 = vand.u32 %v104, 4294901760
    %v908 = vsub.f32 %v104, %v907
    %v909 = vand.u32 %v908, 4294901760
    %910 = vmatprep.subr.mxu0 %v909
    %v911 = vand.u32 %v103, 4294901760
    %v912 = vsub.f32 %v103, %v911
    %v913 = vand.u32 %v912, 4294901760
    %914 = vmatpush1.msra.mxu0 %v913
    %v915 = vand.u32 %v106, 4294901760
    %v916 = vsub.f32 %v106, %v915
    %v917 = vand.u32 %v916, 4294901760
    %918 = vmatprep.subr.mxu0 %v917
    %v919 = vand.u32 %v105, 4294901760
    %v920 = vsub.f32 %v105, %v919
    %v921 = vand.u32 %v920, 4294901760
    %922 = vmatpush1.msra.mxu0 %v921
    %v923 = vand.u32 %v108, 4294901760
    %v924 = vsub.f32 %v108, %v923
    %v925 = vand.u32 %v924, 4294901760
    %926 = vmatprep.subr.mxu0 %v925
    %v927 = vand.u32 %v107, 4294901760
    %v928 = vsub.f32 %v107, %v927
    %v929 = vand.u32 %v928, 4294901760
    %930 = vmatpush1.msra.mxu0 %v929
    %v931 = vand.u32 %v110, 4294901760
    %v932 = vsub.f32 %v110, %v931
    %v933 = vand.u32 %v932, 4294901760
    %934 = vmatprep.subr.mxu0 %v933
    %v935 = vand.u32 %v109, 4294901760
    %v936 = vsub.f32 %v109, %v935
    %v937 = vand.u32 %v936, 4294901760
    %938 = vmatpush1.msra.mxu0 %v937
    %939 = vmatprep.subr.mxu0 0.0
    %940 = vmatpush1.msra.mxu0 0.0
    %941 = vmatprep.subr.mxu0 0.0
    %942 = vmatpush1.msra.mxu0 0.0
    %943 = vmatprep.subr.mxu0 0.0
    %944 = vmatpush1.msra.mxu0 0.0
    %945 = vmatprep.subr.mxu0 0.0
    %946 = vmatpush1.msra.mxu0 0.0
    %947 = vmatprep.subr.mxu0 0.0
    %948 = vmatpush1.msra.mxu0 0.0
    %949 = vmatprep.subr.mxu0 0.0
    %950 = vmatpush1.msra.mxu0 0.0
    %951 = vmatprep.subr.mxu0 0.0
    %952 = vmatpush1.msra.mxu0 0.0
    %953 = vmatprep.subr.mxu0 0.0
    %954 = vmatpush1.msra.mxu0 0.0
    %955 = vmatprep.subr.mxu0 0.0
    %956 = vmatpush1.msra.mxu0 0.0
    %957 = vmatprep.subr.mxu0 0.0
    %958 = vmatpush1.msra.mxu0 0.0
    %959 = vmatprep.subr.mxu0 0.0
    %960 = vmatpush1.msra.mxu0 0.0
    %961 = vmatprep.subr.mxu0 0.0
    %962 = vmatpush1.msra.mxu0 0.0
    %963 = vmatprep.subr.mxu0 0.0
    %964 = vmatpush1.msra.mxu0 0.0
    %965 = vmatprep.subr.mxu0 0.0
    %966 = vmatpush1.msra.mxu0 0.0
    %967 = vmatprep.subr.mxu0 0.0
    %968 = vmatpush1.msra.mxu0 0.0
    %969 = vmatprep.subr.mxu0 0.0
    %970 = vmatpush1.msra.mxu0 0.0
    %971 = vmatprep.mubr.f32.mxu0 0.0
    %v972 = vand.u32 %v75, 4294901760
    %973 = vmatmul.mubr.f32.gmra.mrb[0].mxu0 %v972
    %v974 = vpop.f32.mrb[0].mxu0
    %v975 = vadd.f32 %v780, %v974
    %v976 = vpop.f32.mrb[0].mxu0
    %v977 = vadd.f32 %v782, %v976
    %978 = vmatprep.mubr.f32.mxu0 0.0
    %v979 = vand.u32 %v76, 4294901760
    %980 = vmatmul.mubr.f32.gmra.mrb[0].mxu0 %v979
    %v981 = vpop.f32.mrb[0].mxu0
    %v982 = vadd.f32 %v789, %v981
    %v983 = vpop.f32.mrb[0].mxu0
    %v984 = vadd.f32 %v791, %v983
    %985 = vmatprep.mubr.f32.mxu0 0.0
    %v986 = vand.u32 %v77, 4294901760
    %987 = vmatmul.mubr.f32.gmra.mrb[0].mxu0 %v986
    %v988 = vpop.f32.mrb[0].mxu0
    %v989 = vadd.f32 %v798, %v988
    %v990 = vpop.f32.mrb[0].mxu0
    %v991 = vadd.f32 %v800, %v990
    %992 = vmatprep.mubr.f32.mxu0 0.0
    %v993 = vand.u32 %v78, 4294901760
    %994 = vmatmul.mubr.f32.gmra.mrb[0].mxu0 %v993
    %v995 = vpop.f32.mrb[0].mxu0
    %v996 = vadd.f32 %v807, %v995
    %v997 = vpop.f32.mrb[0].mxu0
    %v998 = vadd.f32 %v809, %v997
    %999 = vdwg.mxu0
    %v1000 = vand.u32 %v80, 4294901760
    %1001 = vmatprep.subr.mxu0 %v1000
    %v1002 = vand.u32 %v79, 4294901760
    %1003 = vmatpush1.msra.mxu0 %v1002
    %v1004 = vand.u32 %v82, 4294901760
    %1005 = vmatprep.subr.mxu0 %v1004
    %v1006 = vand.u32 %v81, 4294901760
    %1007 = vmatpush1.msra.mxu0 %v1006
    %v1008 = vand.u32 %v84, 4294901760
    %1009 = vmatprep.subr.mxu0 %v1008
    %v1010 = vand.u32 %v83, 4294901760
    %1011 = vmatpush1.msra.mxu0 %v1010
    %v1012 = vand.u32 %v86, 4294901760
    %1013 = vmatprep.subr.mxu0 %v1012
    %v1014 = vand.u32 %v85, 4294901760
    %1015 = vmatpush1.msra.mxu0 %v1014
    %v1016 = vand.u32 %v88, 4294901760
    %1017 = vmatprep.subr.mxu0 %v1016
    %v1018 = vand.u32 %v87, 4294901760
    %1019 = vmatpush1.msra.mxu0 %v1018
    %v1020 = vand.u32 %v90, 4294901760
    %1021 = vmatprep.subr.mxu0 %v1020
    %v1022 = vand.u32 %v89, 4294901760
    %1023 = vmatpush1.msra.mxu0 %v1022
    %v1024 = vand.u32 %v92, 4294901760
    %1025 = vmatprep.subr.mxu0 %v1024
    %v1026 = vand.u32 %v91, 4294901760
    %1027 = vmatpush1.msra.mxu0 %v1026
    %v1028 = vand.u32 %v94, 4294901760
    %1029 = vmatprep.subr.mxu0 %v1028
    %v1030 = vand.u32 %v93, 4294901760
    %1031 = vmatpush1.msra.mxu0 %v1030
    %v1032 = vand.u32 %v96, 4294901760
    %1033 = vmatprep.subr.mxu0 %v1032
    %v1034 = vand.u32 %v95, 4294901760
    %1035 = vmatpush1.msra.mxu0 %v1034
    %v1036 = vand.u32 %v98, 4294901760
    %1037 = vmatprep.subr.mxu0 %v1036
    %v1038 = vand.u32 %v97, 4294901760
    %1039 = vmatpush1.msra.mxu0 %v1038
    %v1040 = vand.u32 %v100, 4294901760
    %1041 = vmatprep.subr.mxu0 %v1040
    %v1042 = vand.u32 %v99, 4294901760
    %1043 = vmatpush1.msra.mxu0 %v1042
    %v1044 = vand.u32 %v102, 4294901760
    %1045 = vmatprep.subr.mxu0 %v1044
    %v1046 = vand.u32 %v101, 4294901760
    %1047 = vmatpush1.msra.mxu0 %v1046
    %v1048 = vand.u32 %v104, 4294901760
    %1049 = vmatprep.subr.mxu0 %v1048
    %v1050 = vand.u32 %v103, 4294901760
    %1051 = vmatpush1.msra.mxu0 %v1050
    %v1052 = vand.u32 %v106, 4294901760
    %1053 = vmatprep.subr.mxu0 %v1052
    %v1054 = vand.u32 %v105, 4294901760
    %1055 = vmatpush1.msra.mxu0 %v1054
    %v1056 = vand.u32 %v108, 4294901760
    %1057 = vmatprep.subr.mxu0 %v1056
    %v1058 = vand.u32 %v107, 4294901760
    %1059 = vmatpush1.msra.mxu0 %v1058
    %v1060 = vand.u32 %v110, 4294901760
    %1061 = vmatprep.subr.mxu0 %v1060
    %v1062 = vand.u32 %v109, 4294901760
    %1063 = vmatpush1.msra.mxu0 %v1062
    %1064 = vmatprep.subr.mxu0 0.0
    %1065 = vmatpush1.msra.mxu0 0.0
    %1066 = vmatprep.subr.mxu0 0.0
    %1067 = vmatpush1.msra.mxu0 0.0
    %1068 = vmatprep.subr.mxu0 0.0
    %1069 = vmatpush1.msra.mxu0 0.0
    %1070 = vmatprep.subr.mxu0 0.0
    %1071 = vmatpush1.msra.mxu0 0.0
    %1072 = vmatprep.subr.mxu0 0.0
    %1073 = vmatpush1.msra.mxu0 0.0
    %1074 = vmatprep.subr.mxu0 0.0
    %1075 = vmatpush1.msra.mxu0 0.0
    %1076 = vmatprep.subr.mxu0 0.0
    %1077 = vmatpush1.msra.mxu0 0.0
    %1078 = vmatprep.subr.mxu0 0.0
    %1079 = vmatpush1.msra.mxu0 0.0
    %1080 = vmatprep.subr.mxu0 0.0
    %1081 = vmatpush1.msra.mxu0 0.0
    %1082 = vmatprep.subr.mxu0 0.0
    %1083 = vmatpush1.msra.mxu0 0.0
    %1084 = vmatprep.subr.mxu0 0.0
    %1085 = vmatpush1.msra.mxu0 0.0
    %1086 = vmatprep.subr.mxu0 0.0
    %1087 = vmatpush1.msra.mxu0 0.0
    %1088 = vmatprep.subr.mxu0 0.0
    %1089 = vmatpush1.msra.mxu0 0.0
    %1090 = vmatprep.subr.mxu0 0.0
    %1091 = vmatpush1.msra.mxu0 0.0
    %1092 = vmatprep.subr.mxu0 0.0
    %1093 = vmatpush1.msra.mxu0 0.0
    %1094 = vmatprep.subr.mxu0 0.0
    %1095 = vmatpush1.msra.mxu0 0.0
    %1096 = vmatprep.mubr.f32.mxu0 0.0
    %v1097 = vand.u32 %v75, 4294901760
    %1098 = vmatmul.mubr.f32.gmra.mrb[0].mxu0 %v1097
    %v1099 = vpop.f32.mrb[0].mxu0
    %v1100 = vadd.f32 %v975, %v1099
    %v1101 = vpop.f32.mrb[0].mxu0
    %v1102 = vadd.f32 %v977, %v1101
    %1103 = vmatprep.mubr.f32.mxu0 0.0
    %v1104 = vand.u32 %v76, 4294901760
    %1105 = vmatmul.mubr.f32.gmra.mrb[0].mxu0 %v1104
    %v1106 = vpop.f32.mrb[0].mxu0
    %v1107 = vadd.f32 %v982, %v1106
    %v1108 = vpop.f32.mrb[0].mxu0
    %v1109 = vadd.f32 %v984, %v1108
    %1110 = vmatprep.mubr.f32.mxu0 0.0
    %v1111 = vand.u32 %v77, 4294901760
    %1112 = vmatmul.mubr.f32.gmra.mrb[0].mxu0 %v1111
    %v1113 = vpop.f32.mrb[0].mxu0
    %v1114 = vadd.f32 %v989, %v1113
    %v1115 = vpop.f32.mrb[0].mxu0
    %v1116 = vadd.f32 %v991, %v1115
    %1117 = vmatprep.mubr.f32.mxu0 0.0
    %v1118 = vand.u32 %v78, 4294901760
    %1119 = vmatmul.mubr.f32.gmra.mrb[0].mxu0 %v1118
    %v1120 = vpop.f32.mrb[0].mxu0
    %v1121 = vadd.f32 %v996, %v1120
    %v1122 = vpop.f32.mrb[0].mxu0
    %v1123 = vadd.f32 %v998, %v1122
    %1124 = vdwg.mxu0
    %v1125 = vmax.f32 %v1100, 0.0
    %v1126 = vmax.f32 %v1102, 0.0
    %v1127 = vmax.f32 %v1107, 0.0
    %v1128 = vmax.f32 %v1109, 0.0
    %v1129 = vmax.f32 %v1114, 0.0
    %v1130 = vmax.f32 %v1116, 0.0
    %v1131 = vmax.f32 %v1121, 0.0
    %v1132 = vmax.f32 %v1123, 0.0
    %v1133 = vpack.c.bf16 %v1127, %v1125
    %v1134 = vpack.c.bf16 %v1131, %v1129
    %v1135 = vld [vmem:[#allocation2] sm:$0xff]
    %v1136 = vld [vmem:[#allocation2 + $0x8] sm:$0xff]
    %v1137 = vld [vmem:[#allocation2 + $0x10] sm:$0xff]
    %v1138 = vld [vmem:[#allocation2 + $0x18] sm:$0xff]
    %v1139 = vld [vmem:[#allocation2 + $0x20] sm:$0xf]
    %v1140 = vld [vmem:[#allocation2 + $0x24] sm:$0xff]
    %v1141 = vld [vmem:[#allocation2 + $0x2c] sm:$0xff]
    %v1142 = vld [vmem:[#allocation2 + $0x34] sm:$0xff]
    %v1143 = vld [vmem:[#allocation2 + $0x3c] sm:$0xff]
    %v1144 = vld [vmem:[#allocation2 + $0x44] sm:$0xf]
    %v1145 = vld [vmem:[#allocation2 + $0x48] sm:$0xff]
    %v1146 = vld [vmem:[#allocation2 + $0x50] sm:$0xff]
    %v1147 = vld [vmem:[#allocation2 + $0x58] sm:$0xff]
    %v1148 = vld [vmem:[#allocation2 + $0x60] sm:$0xff]
    %v1149 = vld [vmem:[#allocation2 + $0x68] sm:$0xf]
    %v1150 = vld [vmem:[#allocation2 + $0x6c] sm:$0xff]
    %v1151 = vld [vmem:[#allocation2 + $0x74] sm:$0xff]
    %v1152 = vld [vmem:[#allocation2 + $0x7c] sm:$0xff]
    %v1153 = vld [vmem:[#allocation2 + $0x84] sm:$0xff]
    %v1154 = vld [vmem:[#allocation2 + $0x8c] sm:$0xf]
    %v1155 = vld [vmem:[#allocation2 + $0x90] sm:$0xff]
    %v1156 = vld [vmem:[#allocation2 + $0x98] sm:$0xff]
    %v1157 = vld [vmem:[#allocation2 + $0xa0] sm:$0xff]
    %v1158 = vld [vmem:[#allocation2 + $0xa8] sm:$0xff]
    %v1159 = vld [vmem:[#allocation2 + $0xb0] sm:$0xf]
    %v1160 = vld [vmem:[#allocation2 + $0xb4] sm:$0xff]
    %v1161 = vld [vmem:[#allocation2 + $0xbc] sm:$0xff]
    %v1162 = vld [vmem:[#allocation2 + $0xc4] sm:$0xff]
    %v1163 = vld [vmem:[#allocation2 + $0xcc] sm:$0xff]
    %v1164 = vld [vmem:[#allocation2 + $0xd4] sm:$0xf]
    %v1165 = vld [vmem:[#allocation2 + $0xd8] sm:$0xff]
    %v1166 = vld [vmem:[#allocation2 + $0xe0] sm:$0xff]
    %v1167 = vld [vmem:[#allocation2 + $0xe8] sm:$0xff]
    %v1168 = vld [vmem:[#allocation2 + $0xf0] sm:$0xff]
    %v1169 = vld [vmem:[#allocation2 + $0xf8] sm:$0xf]
    %v1170 = vld [vmem:[#allocation2 + $0xfc] sm:$0xff]
    %v1171 = vld [vmem:[#allocation2 + $0x104] sm:$0xff]
    %v1172 = vld [vmem:[#allocation2 + $0x10c] sm:$0xff]
    %v1173 = vld [vmem:[#allocation2 + $0x114] sm:$0xff]
    %v1174 = vld [vmem:[#allocation2 + $0x11c] sm:$0xf]
    %v1175 = vld [vmem:[#allocation2 + $0x120] sm:$0xff]
    %v1176 = vld [vmem:[#allocation2 + $0x128] sm:$0xff]
    %v1177 = vld [vmem:[#allocation2 + $0x130] sm:$0xff]
    %v1178 = vld [vmem:[#allocation2 + $0x138] sm:$0xff]
    %v1179 = vld [vmem:[#allocation2 + $0x140] sm:$0xf]
    %v1180 = vld [vmem:[#allocation2 + $0x144] sm:$0xff]
    %v1181 = vld [vmem:[#allocation2 + $0x14c] sm:$0xff]
    %v1182 = vld [vmem:[#allocation2 + $0x154] sm:$0xff]
    %v1183 = vld [vmem:[#allocation2 + $0x15c] sm:$0xff]
    %v1184 = vld [vmem:[#allocation2 + $0x164] sm:$0xf]
    %v1235 = vunpack.c.l.b16 %v1135
    %v1236 = vunpack.c.h.b16 %v1135
    %v1237 = vunpack.c.l.b16 %v1136
    %v1238 = vunpack.c.h.b16 %v1136
    %v1239 = vunpack.c.l.b16 %v1137
    %v1240 = vunpack.c.h.b16 %v1137
    %v1241 = vunpack.c.l.b16 %v1138
    %v1242 = vunpack.c.h.b16 %v1138
    %v1243 = vunpack.c.l.b16 %v1139
    %v1244 = vunpack.c.l.b16 %v1140
    %v1245 = vunpack.c.h.b16 %v1140
    %v1246 = vunpack.c.l.b16 %v1141
    %v1247 = vunpack.c.h.b16 %v1141
    %v1248 = vunpack.c.l.b16 %v1142
    %v1249 = vunpack.c.h.b16 %v1142
    %v1250 = vunpack.c.l.b16 %v1143
    %v1251 = vunpack.c.h.b16 %v1143
    %v1252 = vunpack.c.l.b16 %v1144
    %v1253 = vunpack.c.l.b16 %v1145
    %v1254 = vunpack.c.h.b16 %v1145
    %v1255 = vunpack.c.l.b16 %v1146
    %v1256 = vunpack.c.h.b16 %v1146
    %v1257 = vunpack.c.l.b16 %v1147
    %v1258 = vunpack.c.h.b16 %v1147
    %v1259 = vunpack.c.l.b16 %v1148
    %v1260 = vunpack.c.h.b16 %v1148
    %v1261 = vunpack.c.l.b16 %v1149
    %v1262 = vunpack.c.l.b16 %v1150
    %v1263 = vunpack.c.h.b16 %v1150
    %v1264 = vunpack.c.l.b16 %v1151
    %v1265 = vunpack.c.h.b16 %v1151
    %v1266 = vunpack.c.l.b16 %v1152
    %v1267 = vunpack.c.h.b16 %v1152
    %v1268 = vunpack.c.l.b16 %v1153
    %v1269 = vunpack.c.h.b16 %v1153
    %v1270 = vunpack.c.l.b16 %v1154
    %v1271 = vunpack.c.l.b16 %v1155
    %v1272 = vunpack.c.h.b16 %v1155
    %v1273 = vunpack.c.l.b16 %v1156
    %v1274 = vunpack.c.h.b16 %v1156
    %v1275 = vunpack.c.l.b16 %v1157
    %v1276 = vunpack.c.h.b16 %v1157
    %v1277 = vunpack.c.l.b16 %v1158
    %v1278 = vunpack.c.h.b16 %v1158
    %v1279 = vunpack.c.l.b16 %v1159
    %v1280 = vunpack.c.l.b16 %v1160
    %v1281 = vunpack.c.h.b16 %v1160
    %v1282 = vunpack.c.l.b16 %v1161
    %v1283 = vunpack.c.h.b16 %v1161
    %v1284 = vunpack.c.l.b16 %v1162
    %v1285 = vunpack.c.h.b16 %v1162
    %v1286 = vunpack.c.l.b16 %v1163
    %v1287 = vunpack.c.h.b16 %v1163
    %v1288 = vunpack.c.l.b16 %v1164
    %v1289 = vunpack.c.l.b16 %v1165
    %v1290 = vunpack.c.h.b16 %v1165
    %v1291 = vunpack.c.l.b16 %v1166
    %v1292 = vunpack.c.h.b16 %v1166
    %v1293 = vunpack.c.l.b16 %v1167
    %v1294 = vunpack.c.h.b16 %v1167
    %v1295 = vunpack.c.l.b16 %v1168
    %v1296 = vunpack.c.h.b16 %v1168
    %v1297 = vunpack.c.l.b16 %v1169
    %v1298 = vunpack.c.l.b16 %v1170
    %v1299 = vunpack.c.h.b16 %v1170
    %v1300 = vunpack.c.l.b16 %v1171
    %v1301 = vunpack.c.h.b16 %v1171
    %v1302 = vunpack.c.l.b16 %v1172
    %v1303 = vunpack.c.h.b16 %v1172
    %v1304 = vunpack.c.l.b16 %v1173
    %v1305 = vunpack.c.h.b16 %v1173
    %v1306 = vunpack.c.l.b16 %v1174
    %v1307 = vunpack.c.l.b16 %v1175
    %v1308 = vunpack.c.h.b16 %v1175
    %v1309 = vunpack.c.l.b16 %v1176
    %v1310 = vunpack.c.h.b16 %v1176
    %v1311 = vunpack.c.l.b16 %v1177
    %v1312 = vunpack.c.h.b16 %v1177
    %v1313 = vunpack.c.l.b16 %v1178
    %v1314 = vunpack.c.h.b16 %v1178
    %v1315 = vunpack.c.l.b16 %v1179
    %v1316 = vunpack.c.l.b16 %v1180
    %v1317 = vunpack.c.h.b16 %v1180
    %v1318 = vunpack.c.l.b16 %v1181
    %v1319 = vunpack.c.h.b16 %v1181
    %v1320 = vunpack.c.l.b16 %v1182
    %v1321 = vunpack.c.h.b16 %v1182
    %v1322 = vunpack.c.l.b16 %v1183
    %v1323 = vunpack.c.h.b16 %v1183
    %v1324 = vunpack.c.l.b16 %v1184
    %v1325 = vpack.c.b16 %v1244, %v1235
    %v1326 = vpack.c.b16 %v1245, %v1236
    %v1327 = vpack.c.b16 %v1246, %v1237
    %v1328 = vpack.c.b16 %v1247, %v1238
    %v1329 = vpack.c.b16 %v1248, %v1239
    %v1330 = vpack.c.b16 %v1249, %v1240
    %v1331 = vpack.c.b16 %v1250, %v1241
    %v1332 = vpack.c.b16 %v1251, %v1242
    %v1333 = vpack.c.b16 %v1252, %v1243
    %v1334 = vpack.c.b16 %v1262, %v1253
    %v1335 = vpack.c.b16 %v1263, %v1254
    %v1336 = vpack.c.b16 %v1264, %v1255
    %v1337 = vpack.c.b16 %v1265, %v1256
    %v1338 = vpack.c.b16 %v1266, %v1257
    %v1339 = vpack.c.b16 %v1267, %v1258
    %v1340 = vpack.c.b16 %v1268, %v1259
    %v1341 = vpack.c.b16 %v1269, %v1260
    %v1342 = vpack.c.b16 %v1270, %v1261
    %v1343 = vpack.c.b16 %v1280, %v1271
    %v1344 = vpack.c.b16 %v1281, %v1272
    %v1345 = vpack.c.b16 %v1282, %v1273
    %v1346 = vpack.c.b16 %v1283, %v1274
    %v1347 = vpack.c.b16 %v1284, %v1275
    %v1348 = vpack.c.b16 %v1285, %v1276
    %v1349 = vpack.c.b16 %v1286, %v1277
    %v1350 = vpack.c.b16 %v1287, %v1278
    %v1351 = vpack.c.b16 %v1288, %v1279
    %v1352 = vpack.c.b16 %v1298, %v1289
    %v1353 = vpack.c.b16 %v1299, %v1290
    %v1354 = vpack.c.b16 %v1300, %v1291
    %v1355 = vpack.c.b16 %v1301, %v1292
    %v1356 = vpack.c.b16 %v1302, %v1293
    %v1357 = vpack.c.b16 %v1303, %v1294
    %v1358 = vpack.c.b16 %v1304, %v1295
    %v1359 = vpack.c.b16 %v1305, %v1296
    %v1360 = vpack.c.b16 %v1306, %v1297
    %v1361 = vpack.c.b16 %v1316, %v1307
    %v1362 = vpack.c.b16 %v1317, %v1308
    %v1363 = vpack.c.b16 %v1318, %v1309
    %v1364 = vpack.c.b16 %v1319, %v1310
    %v1365 = vpack.c.b16 %v1320, %v1311
    %v1366 = vpack.c.b16 %v1321, %v1312
    %v1367 = vpack.c.b16 %v1322, %v1313
    %v1368 = vpack.c.b16 %v1323, %v1314
    %v1369 = vpack.c.b16 %v1324, %v1315
    %vm1415 = vcmask 654336
    %v1417 = vsel %vm1415, %v1133, 0
    %v1420 = vsel %vm1415, %v1134, 0
    %1422 = vmatprep.subr.bf16.mxu0 %v1326
    %1423 = vmatpush1.bf16.msra.mxu0 %v1325
    %1424 = vmatprep.subr.bf16.mxu0 %v1335
    %1425 = vmatpush1.bf16.msra.mxu0 %v1334
    %1426 = vmatprep.subr.bf16.mxu0 %v1344
    %1427 = vmatpush1.bf16.msra.mxu0 %v1343
    %1428 = vmatprep.subr.bf16.mxu0 %v1353
    %1429 = vmatpush1.bf16.msra.mxu0 %v1352
    %1430 = vmatprep.subr.bf16.mxu0 %v1362
    %1431 = vmatpush1.bf16.msra.mxu0 %v1361
    %1432 = vmatprep.subr.bf16.mxu0 0
    %1433 = vmatpush1.bf16.msra.mxu0 0
    %1434 = vmatprep.subr.bf16.mxu0 0
    %1435 = vmatpush1.bf16.msra.mxu0 0
    %1436 = vmatprep.subr.bf16.mxu0 0
    %1437 = vmatpush1.bf16.msra.mxu0 0
    %1438 = vmatprep.subr.bf16.mxu0 0
    %1439 = vmatpush1.bf16.msra.mxu0 0
    %1440 = vmatprep.subr.bf16.mxu0 0
    %1441 = vmatpush1.bf16.msra.mxu0 0
    %1442 = vmatprep.subr.bf16.mxu0 0
    %1443 = vmatpush1.bf16.msra.mxu0 0
    %1444 = vmatprep.subr.bf16.mxu0 0
    %1445 = vmatpush1.bf16.msra.mxu0 0
    %1446 = vmatprep.subr.bf16.mxu0 0
    %1447 = vmatpush1.bf16.msra.mxu0 0
    %1448 = vmatprep.subr.bf16.mxu0 0
    %1449 = vmatpush1.bf16.msra.mxu0 0
    %1450 = vmatprep.subr.bf16.mxu0 0
    %1451 = vmatpush1.bf16.msra.mxu0 0
    %1452 = vmatprep.subr.bf16.mxu0 0
    %1453 = vmatpush1.bf16.msra.mxu0 0
    %1454 = vmatprep.mubr.bf16.mxu0 0
    %1455 = vmatmul.mubr.bf16.gmra.mrb[0].mxu0 %v1417
    %v1456 = vpop.f32.mrb[0].mxu0
    %v1457 = vadd.f32 0.0, %v1456
    %v1458 = vpop.f32.mrb[0].mxu0
    %v1459 = vadd.f32 0.0, %v1458
    %v1460 = vpop.f32.mrb[0].mxu0
    %v1461 = vadd.f32 0.0, %v1460
    %v1462 = vpop.f32.mrb[0].mxu0
    %v1463 = vadd.f32 0.0, %v1462
    %1464 = vmatprep.mubr.bf16.mxu0 0
    %1465 = vmatmul.mubr.bf16.gmra.mrb[0].mxu0 %v1420
    %v1466 = vpop.f32.mrb[0].mxu0
    %v1467 = vadd.f32 0.0, %v1466
    %v1468 = vpop.f32.mrb[0].mxu0
    %v1469 = vadd.f32 0.0, %v1468
    %v1470 = vpop.f32.mrb[0].mxu0
    %v1471 = vadd.f32 0.0, %v1470
    %v1472 = vpop.f32.mrb[0].mxu0
    %v1473 = vadd.f32 0.0, %v1472
    %1474 = vdwg.mxu0
    %1475 = vmatprep.subr.bf16.mxu0 %v1328
    %1476 = vmatpush1.bf16.msra.mxu0 %v1327
    %1477 = vmatprep.subr.bf16.mxu0 %v1337
    %1478 = vmatpush1.bf16.msra.mxu0 %v1336
    %1479 = vmatprep.subr.bf16.mxu0 %v1346
    %1480 = vmatpush1.bf16.msra.mxu0 %v1345
    %1481 = vmatprep.subr.bf16.mxu0 %v1355
    %1482 = vmatpush1.bf16.msra.mxu0 %v1354
    %1483 = vmatprep.subr.bf16.mxu0 %v1364
    %1484 = vmatpush1.bf16.msra.mxu0 %v1363
    %1485 = vmatprep.subr.bf16.mxu0 0
    %1486 = vmatpush1.bf16.msra.mxu0 0
    %1487 = vmatprep.subr.bf16.mxu0 0
    %1488 = vmatpush1.bf16.msra.mxu0 0
    %1489 = vmatprep.subr.bf16.mxu0 0
    %1490 = vmatpush1.bf16.msra.mxu0 0
    %1491 = vmatprep.subr.bf16.mxu0 0
    %1492 = vmatpush1.bf16.msra.mxu0 0
    %1493 = vmatprep.subr.bf16.mxu0 0
    %1494 = vmatpush1.bf16.msra.mxu0 0
    %1495 = vmatprep.subr.bf16.mxu0 0
    %1496 = vmatpush1.bf16.msra.mxu0 0
    %1497 = vmatprep.subr.bf16.mxu0 0
    %1498 = vmatpush1.bf16.msra.mxu0 0
    %1499 = vmatprep.subr.bf16.mxu0 0
    %1500 = vmatpush1.bf16.msra.mxu0 0
    %1501 = vmatprep.subr.bf16.mxu0 0
    %1502 = vmatpush1.bf16.msra.mxu0 0
    %1503 = vmatprep.subr.bf16.mxu0 0
    %1504 = vmatpush1.bf16.msra.mxu0 0
    %1505 = vmatprep.subr.bf16.mxu0 0
    %1506 = vmatpush1.bf16.msra.mxu0 0
    %1507 = vmatprep.mubr.bf16.mxu0 0
    %1508 = vmatmul.mubr.bf16.gmra.mrb[0].mxu0 %v1417
    %v1509 = vpop.f32.mrb[0].mxu0
    %v1510 = vadd.f32 0.0, %v1509
    %v1511 = vpop.f32.mrb[0].mxu0
    %v1512 = vadd.f32 0.0, %v1511
    %v1513 = vpop.f32.mrb[0].mxu0
    %v1514 = vadd.f32 0.0, %v1513
    %v1515 = vpop.f32.mrb[0].mxu0
    %v1516 = vadd.f32 0.0, %v1515
    %1517 = vmatprep.mubr.bf16.mxu0 0
    %1518 = vmatmul.mubr.bf16.gmra.mrb[0].mxu0 %v1420
    %v1519 = vpop.f32.mrb[0].mxu0
    %v1520 = vadd.f32 0.0, %v1519
    %v1521 = vpop.f32.mrb[0].mxu0
    %v1522 = vadd.f32 0.0, %v1521
    %v1523 = vpop.f32.mrb[0].mxu0
    %v1524 = vadd.f32 0.0, %v1523
    %v1525 = vpop.f32.mrb[0].mxu0
    %v1526 = vadd.f32 0.0, %v1525
    %1527 = vdwg.mxu0
    %1528 = vmatprep.subr.bf16.mxu0 %v1330
    %1529 = vmatpush1.bf16.msra.mxu0 %v1329
    %1530 = vmatprep.subr.bf16.mxu0 %v1339
    %1531 = vmatpush1.bf16.msra.mxu0 %v1338
    %1532 = vmatprep.subr.bf16.mxu0 %v1348
    %1533 = vmatpush1.bf16.msra.mxu0 %v1347
    %1534 = vmatprep.subr.bf16.mxu0 %v1357
    %1535 = vmatpush1.bf16.msra.mxu0 %v1356
    %1536 = vmatprep.subr.bf16.mxu0 %v1366
    %1537 = vmatpush1.bf16.msra.mxu0 %v1365
    %1538 = vmatprep.subr.bf16.mxu0 0
    %1539 = vmatpush1.bf16.msra.mxu0 0
    %1540 = vmatprep.subr.bf16.mxu0 0
    %1541 = vmatpush1.bf16.msra.mxu0 0
    %1542 = vmatprep.subr.bf16.mxu0 0
    %1543 = vmatpush1.bf16.msra.mxu0 0
    %1544 = vmatprep.subr.bf16.mxu0 0
    %1545 = vmatpush1.bf16.msra.mxu0 0
    %1546 = vmatprep.subr.bf16.mxu0 0
    %1547 = vmatpush1.bf16.msra.mxu0 0
    %1548 = vmatprep.subr.bf16.mxu0 0
    %1549 = vmatpush1.bf16.msra.mxu0 0
    %1550 = vmatprep.subr.bf16.mxu0 0
    %1551 = vmatpush1.bf16.msra.mxu0 0
    %1552 = vmatprep.subr.bf16.mxu0 0
    %1553 = vmatpush1.bf16.msra.mxu0 0
    %1554 = vmatprep.subr.bf16.mxu0 0
    %1555 = vmatpush1.bf16.msra.mxu0 0
    %1556 = vmatprep.subr.bf16.mxu0 0
    %1557 = vmatpush1.bf16.msra.mxu0 0
    %1558 = vmatprep.subr.bf16.mxu0 0
    %1559 = vmatpush1.bf16.msra.mxu0 0
    %1560 = vmatprep.mubr.bf16.mxu0 0
    %1561 = vmatmul.mubr.bf16.gmra.mrb[0].mxu0 %v1417
    %v1562 = vpop.f32.mrb[0].mxu0
    %v1563 = vadd.f32 0.0, %v1562
    %v1564 = vpop.f32.mrb[0].mxu0
    %v1565 = vadd.f32 0.0, %v1564
    %v1566 = vpop.f32.mrb[0].mxu0
    %v1567 = vadd.f32 0.0, %v1566
    %v1568 = vpop.f32.mrb[0].mxu0
    %v1569 = vadd.f32 0.0, %v1568
    %1570 = vmatprep.mubr.bf16.mxu0 0
    %1571 = vmatmul.mubr.bf16.gmra.mrb[0].mxu0 %v1420
    %v1572 = vpop.f32.mrb[0].mxu0
    %v1573 = vadd.f32 0.0, %v1572
    %v1574 = vpop.f32.mrb[0].mxu0
    %v1575 = vadd.f32 0.0, %v1574
    %v1576 = vpop.f32.mrb[0].mxu0
    %v1577 = vadd.f32 0.0, %v1576
    %v1578 = vpop.f32.mrb[0].mxu0
    %v1579 = vadd.f32 0.0, %v1578
    %1580 = vdwg.mxu0
    %1581 = vmatprep.subr.bf16.mxu0 %v1332
    %1582 = vmatpush1.bf16.msra.mxu0 %v1331
    %1583 = vmatprep.subr.bf16.mxu0 %v1341
    %1584 = vmatpush1.bf16.msra.mxu0 %v1340
    %1585 = vmatprep.subr.bf16.mxu0 %v1350
    %1586 = vmatpush1.bf16.msra.mxu0 %v1349
    %1587 = vmatprep.subr.bf16.mxu0 %v1359
    %1588 = vmatpush1.bf16.msra.mxu0 %v1358
    %1589 = vmatprep.subr.bf16.mxu0 %v1368
    %1590 = vmatpush1.bf16.msra.mxu0 %v1367
    %1591 = vmatprep.subr.bf16.mxu0 0
    %1592 = vmatpush1.bf16.msra.mxu0 0
    %1593 = vmatprep.subr.bf16.mxu0 0
    %1594 = vmatpush1.bf16.msra.mxu0 0
    %1595 = vmatprep.subr.bf16.mxu0 0
    %1596 = vmatpush1.bf16.msra.mxu0 0
    %1597 = vmatprep.subr.bf16.mxu0 0
    %1598 = vmatpush1.bf16.msra.mxu0 0
    %1599 = vmatprep.subr.bf16.mxu0 0
    %1600 = vmatpush1.bf16.msra.mxu0 0
    %1601 = vmatprep.subr.bf16.mxu0 0
    %1602 = vmatpush1.bf16.msra.mxu0 0
    %1603 = vmatprep.subr.bf16.mxu0 0
    %1604 = vmatpush1.bf16.msra.mxu0 0
    %1605 = vmatprep.subr.bf16.mxu0 0
    %1606 = vmatpush1.bf16.msra.mxu0 0
    %1607 = vmatprep.subr.bf16.mxu0 0
    %1608 = vmatpush1.bf16.msra.mxu0 0
    %1609 = vmatprep.subr.bf16.mxu0 0
    %1610 = vmatpush1.bf16.msra.mxu0 0
    %1611 = vmatprep.subr.bf16.mxu0 0
    %1612 = vmatpush1.bf16.msra.mxu0 0
    %1613 = vmatprep.mubr.bf16.mxu0 0
    %1614 = vmatmul.mubr.bf16.gmra.mrb[0].mxu0 %v1417
    %v1615 = vpop.f32.mrb[0].mxu0
    %v1616 = vadd.f32 0.0, %v1615
    %v1617 = vpop.f32.mrb[0].mxu0
    %v1618 = vadd.f32 0.0, %v1617
    %v1619 = vpop.f32.mrb[0].mxu0
    %v1620 = vadd.f32 0.0, %v1619
    %v1621 = vpop.f32.mrb[0].mxu0
    %v1622 = vadd.f32 0.0, %v1621
    %1623 = vmatprep.mubr.bf16.mxu0 0
    %1624 = vmatmul.mubr.bf16.gmra.mrb[0].mxu0 %v1420
    %v1625 = vpop.f32.mrb[0].mxu0
    %v1626 = vadd.f32 0.0, %v1625
    %v1627 = vpop.f32.mrb[0].mxu0
    %v1628 = vadd.f32 0.0, %v1627
    %v1629 = vpop.f32.mrb[0].mxu0
    %v1630 = vadd.f32 0.0, %v1629
    %v1631 = vpop.f32.mrb[0].mxu0
    %v1632 = vadd.f32 0.0, %v1631
    %1633 = vdwg.mxu0
    %1634 = vmatprep.subr.bf16.mxu0 0
    %1635 = vmatpush1.bf16.msra.mxu0 %v1333
    %1636 = vmatprep.subr.bf16.mxu0 0
    %1637 = vmatpush1.bf16.msra.mxu0 %v1342
    %1638 = vmatprep.subr.bf16.mxu0 0
    %1639 = vmatpush1.bf16.msra.mxu0 %v1351
    %1640 = vmatprep.subr.bf16.mxu0 0
    %1641 = vmatpush1.bf16.msra.mxu0 %v1360
    %1642 = vmatprep.subr.bf16.mxu0 0
    %1643 = vmatpush1.bf16.msra.mxu0 %v1369
    %1644 = vmatprep.subr.bf16.mxu0 0
    %1645 = vmatpush1.bf16.msra.mxu0 0
    %1646 = vmatprep.subr.bf16.mxu0 0
    %1647 = vmatpush1.bf16.msra.mxu0 0
    %1648 = vmatprep.subr.bf16.mxu0 0
    %1649 = vmatpush1.bf16.msra.mxu0 0
    %1650 = vmatprep.subr.bf16.mxu0 0
    %1651 = vmatpush1.bf16.msra.mxu0 0
    %1652 = vmatprep.subr.bf16.mxu0 0
    %1653 = vmatpush1.bf16.msra.mxu0 0
    %1654 = vmatprep.subr.bf16.mxu0 0
    %1655 = vmatpush1.bf16.msra.mxu0 0
    %1656 = vmatprep.subr.bf16.mxu0 0
    %1657 = vmatpush1.bf16.msra.mxu0 0
    %1658 = vmatprep.subr.bf16.mxu0 0
    %1659 = vmatpush1.bf16.msra.mxu0 0
    %1660 = vmatprep.subr.bf16.mxu0 0
    %1661 = vmatpush1.bf16.msra.mxu0 0
    %1662 = vmatprep.subr.bf16.mxu0 0
    %1663 = vmatpush1.bf16.msra.mxu0 0
    %1664 = vmatprep.subr.bf16.mxu0 0
    %1665 = vmatpush1.bf16.msra.mxu0 0
    %1666 = vmatprep.mubr.bf16.mxu0 0
    %1667 = vmatmul.mubr.bf16.gmra.mrb[0].mxu0 %v1417
    %v1668 = vpop.f32.mrb[0].mxu0
    %v1669 = vadd.f32 0.0, %v1668
    %v1670 = vpop.f32.mrb[0].mxu0
    %v1671 = vpop.f32.mrb[0].mxu0
    %v1672 = vadd.f32 0.0, %v1671
    %v1673 = vpop.f32.mrb[0].mxu0
    %1674 = vmatprep.mubr.bf16.mxu0 0
    %1675 = vmatmul.mubr.bf16.gmra.mrb[0].mxu0 %v1420
    %v1676 = vpop.f32.mrb[0].mxu0
    %v1677 = vadd.f32 0.0, %v1676
    %v1678 = vpop.f32.mrb[0].mxu0
    %v1679 = vpop.f32.mrb[0].mxu0
    %v1680 = vadd.f32 0.0, %v1679
    %v1681 = vpop.f32.mrb[0].mxu0
    %1682 = vdwg.mxu0
    %v1683 = vld [vmem:[%s7] sm:$0x1]
    %v1684 = vlaneseq
    %v1685 = vshrl.u32 %v1684, 7
    %v1686 = vsub.s32 0, %v1685
    %v1687 = vrot.slane %v1683, %v1686
    %s1688 = scalar_lea.vmem %s1, 96
    %v1689 = vld [vmem:[%s1688] sm:$0xff]
    %v1690 = vld [vmem:[%s1688 + $0x8] sm:$0xff]
    %v1691 = vld [vmem:[%s1688 + $0x10] sm:$0x3f]
    %v1692 = vld [vmem:[%s1688 + $0x18] sm:$0xff]
    %v1693 = vld [vmem:[%s1688 + $0x20] sm:$0xff]
    %v1694 = vld [vmem:[%s1688 + $0x28] sm:$0x3f]
    %vm1699 = vcmask 1041408
    %v1700 = vrot.slane %v1457, 6
    %v1701 = vrot.slane %v1461, 6
    %v1702 = vsel %vm1699, %v1700, %v1701
    %v1703 = vrot.slane %v1467, 6
    %v1704 = vrot.slane %v1471, 6
    %v1705 = vsel %vm1699, %v1703, %v1704
    %v1712 = vmul.f32 %v1689, %v1700
    %v1713 = vmul.f32 %v1690, %v1702
    %v1714 = vmul.f32 %v1691, %v1701
    %v1715 = vmul.f32 %v1692, %v1703
    %v1716 = vmul.f32 %v1693, %v1705
    %v1717 = vmul.f32 %v1694, %v1704
    %v1718 = vadd.f32 %v1687, %v1712
    %v1719 = vadd.f32 %v1687, %v1713
    %v1720 = vadd.f32 %v1687, %v1714
    %v1721 = vadd.f32 %v1687, %v1715
    %v1722 = vadd.f32 %v1687, %v1716
    %v1723 = vadd.f32 %v1687, %v1717
    %vm1728 = vcmask 1042432
    %v1729 = vrot.slane %v1512, 5
    %v1730 = vrot.slane %v1516, 5
    %v1731 = vsel %vm1728, %v1729, %v1730
    %v1732 = vrot.slane %v1522, 5
    %v1733 = vrot.slane %v1526, 5
    %v1734 = vsel %vm1728, %v1732, %v1733
    %v1741 = vmul.f32 %v1689, %v1729
    %v1742 = vmul.f32 %v1690, %v1731
    %v1743 = vmul.f32 %v1691, %v1730
    %v1744 = vmul.f32 %v1692, %v1732
    %v1745 = vmul.f32 %v1693, %v1734
    %v1746 = vmul.f32 %v1694, %v1733
    %vm1753 = vcmask 1046528
    %v1754 = vrot.slane %v1741, 1
    %v1755 = vrot.slane %v1742, 1
    %v1756 = vsel %vm1753, %v1754, %v1755
    %v1757 = vrot.slane %v1743, 1
    %v1758 = vsel %vm1753, %v1755, %v1757
    %v1759 = vrot.slane %v1744, 1
    %v1760 = vrot.slane %v1745, 1
    %v1761 = vsel %vm1753, %v1759, %v1760
    %v1762 = vrot.slane %v1746, 1
    %v1763 = vsel %vm1753, %v1760, %v1762
    %v1770 = vadd.f32 %v1718, %v1756
    %v1771 = vadd.f32 %v1719, %v1758
    %v1772 = vadd.f32 %v1720, %v1757
    %v1773 = vadd.f32 %v1721, %v1761
    %v1774 = vadd.f32 %v1722, %v1763
    %v1775 = vadd.f32 %v1723, %v1762
    %vm1780 = vcmask 1043456
    %v1781 = vrot.slane %v1616, 4
    %v1782 = vrot.slane %v1620, 4
    %v1783 = vsel %vm1780, %v1781, %v1782
    %v1784 = vrot.slane %v1626, 4
    %v1785 = vrot.slane %v1630, 4
    %v1786 = vsel %vm1780, %v1784, %v1785
    %v1793 = vmul.f32 %v1689, %v1781
    %v1794 = vmul.f32 %v1690, %v1783
    %v1795 = vmul.f32 %v1691, %v1782
    %v1796 = vmul.f32 %v1692, %v1784
    %v1797 = vmul.f32 %v1693, %v1786
    %v1798 = vmul.f32 %v1694, %v1785
    %vm1805 = vcmask 1045504
    %v1806 = vrot.slane %v1793, 2
    %v1807 = vrot.slane %v1794, 2
    %v1808 = vsel %vm1805, %v1806, %v1807
    %v1809 = vrot.slane %v1795, 2
    %v1810 = vsel %vm1805, %v1807, %v1809
    %v1811 = vrot.slane %v1796, 2
    %v1812 = vrot.slane %v1797, 2
    %v1813 = vsel %vm1805, %v1811, %v1812
    %v1814 = vrot.slane %v1798, 2
    %v1815 = vsel %vm1805, %v1812, %v1814
    %v1822 = vadd.f32 %v1770, %v1808
    %v1823 = vadd.f32 %v1771, %v1810
    %v1824 = vadd.f32 %v1772, %v1809
    %v1825 = vadd.f32 %v1773, %v1813
    %v1826 = vadd.f32 %v1774, %v1815
    %v1827 = vadd.f32 %v1775, %v1814
    %s1828 = scalar_lea.vmem %s1, 144
    %v1829 = vld [vmem:[%s1828] sm:$0xff]
    %v1830 = vld [vmem:[%s1828 + $0x8] sm:$0xff]
    %v1831 = vld [vmem:[%s1828 + $0x10] sm:$0x3f]
    %v1832 = vld [vmem:[%s1828 + $0x18] sm:$0xff]
    %v1833 = vld [vmem:[%s1828 + $0x20] sm:$0xff]
    %v1834 = vld [vmem:[%s1828 + $0x28] sm:$0x3f]
    %v1839 = vrot.slane %v1459, 6
    %v1840 = vrot.slane %v1463, 6
    %v1841 = vsel %vm1699, %v1839, %v1840
    %v1842 = vrot.slane %v1469, 6
    %v1843 = vrot.slane %v1473, 6
    %v1844 = vsel %vm1699, %v1842, %v1843
    %v1851 = vmul.f32 %v1829, %v1839
    %v1852 = vmul.f32 %v1830, %v1841
    %v1853 = vmul.f32 %v1831, %v1840
    %v1854 = vmul.f32 %v1832, %v1842
    %v1855 = vmul.f32 %v1833, %v1844
    %v1856 = vmul.f32 %v1834, %v1843
    %v1857 = vadd.f32 %v1822, %v1851
    %v1858 = vadd.f32 %v1823, %v1852
    %v1859 = vadd.f32 %v1824, %v1853
    %v1860 = vadd.f32 %v1825, %v1854
    %v1861 = vadd.f32 %v1826, %v1855
    %v1862 = vadd.f32 %v1827, %v1856
    %v1867 = vrot.slane %v1563, 5
    %v1868 = vrot.slane %v1567, 5
    %v1869 = vsel %vm1728, %v1867, %v1868
    %v1870 = vrot.slane %v1573, 5
    %v1871 = vrot.slane %v1577, 5
    %v1872 = vsel %vm1728, %v1870, %v1871
    %v1879 = vmul.f32 %v1829, %v1867
    %v1880 = vmul.f32 %v1830, %v1869
    %v1881 = vmul.f32 %v1831, %v1868
    %v1882 = vmul.f32 %v1832, %v1870
    %v1883 = vmul.f32 %v1833, %v1872
    %v1884 = vmul.f32 %v1834, %v1871
    %v1891 = vrot.slane %v1879, 1
    %v1892 = vrot.slane %v1880, 1
    %v1893 = vsel %vm1753, %v1891, %v1892
    %v1894 = vrot.slane %v1881, 1
    %v1895 = vsel %vm1753, %v1892, %v1894
    %v1896 = vrot.slane %v1882, 1
    %v1897 = vrot.slane %v1883, 1
    %v1898 = vsel %vm1753, %v1896, %v1897
    %v1899 = vrot.slane %v1884, 1
    %v1900 = vsel %vm1753, %v1897, %v1899
    %v1907 = vadd.f32 %v1857, %v1893
    %v1908 = vadd.f32 %v1858, %v1895
    %v1909 = vadd.f32 %v1859, %v1894
    %v1910 = vadd.f32 %v1860, %v1898
    %v1911 = vadd.f32 %v1861, %v1900
    %v1912 = vadd.f32 %v1862, %v1899
    %v1917 = vrot.slane %v1618, 4
    %v1918 = vrot.slane %v1622, 4
    %v1919 = vsel %vm1780, %v1917, %v1918
    %v1920 = vrot.slane %v1628, 4
    %v1921 = vrot.slane %v1632, 4
    %v1922 = vsel %vm1780, %v1920, %v1921
    %v1929 = vmul.f32 %v1829, %v1917
    %v1930 = vmul.f32 %v1830, %v1919
    %v1931 = vmul.f32 %v1831, %v1918
    %v1932 = vmul.f32 %v1832, %v1920
    %v1933 = vmul.f32 %v1833, %v1922
    %v1934 = vmul.f32 %v1834, %v1921
    %v1941 = vrot.slane %v1929, 2
    %v1942 = vrot.slane %v1930, 2
    %v1943 = vsel %vm1805, %v1941, %v1942
    %v1944 = vrot.slane %v1931, 2
    %v1945 = vsel %vm1805, %v1942, %v1944
    %v1946 = vrot.slane %v1932, 2
    %v1947 = vrot.slane %v1933, 2
    %v1948 = vsel %vm1805, %v1946, %v1947
    %v1949 = vrot.slane %v1934, 2
    %v1950 = vsel %vm1805, %v1947, %v1949
    %v1957 = vadd.f32 %v1907, %v1943
    %v1958 = vadd.f32 %v1908, %v1945
    %v1959 = vadd.f32 %v1909, %v1944
    %v1960 = vadd.f32 %v1910, %v1948
    %v1961 = vadd.f32 %v1911, %v1950
    %v1962 = vadd.f32 %v1912, %v1949
    %s1963 = scalar_lea.vmem %s1, 192
    %v1964 = vld [vmem:[%s1963] sm:$0xff]
    %v1965 = vld [vmem:[%s1963 + $0x8] sm:$0xff]
    %v1966 = vld [vmem:[%s1963 + $0x10] sm:$0x3f]
    %v1967 = vld [vmem:[%s1963 + $0x18] sm:$0xff]
    %v1968 = vld [vmem:[%s1963 + $0x20] sm:$0xff]
    %v1969 = vld [vmem:[%s1963 + $0x28] sm:$0x3f]
    %v1974 = vrot.slane %v1510, 6
    %v1975 = vrot.slane %v1514, 6
    %v1976 = vsel %vm1699, %v1974, %v1975
    %v1977 = vrot.slane %v1520, 6
    %v1978 = vrot.slane %v1524, 6
    %v1979 = vsel %vm1699, %v1977, %v1978
    %v1986 = vmul.f32 %v1964, %v1974
    %v1987 = vmul.f32 %v1965, %v1976
    %v1988 = vmul.f32 %v1966, %v1975
    %v1989 = vmul.f32 %v1967, %v1977
    %v1990 = vmul.f32 %v1968, %v1979
    %v1991 = vmul.f32 %v1969, %v1978
    %v1992 = vadd.f32 %v1957, %v1986
    %v1993 = vadd.f32 %v1958, %v1987
    %v1994 = vadd.f32 %v1959, %v1988
    %v1995 = vadd.f32 %v1960, %v1989
    %v1996 = vadd.f32 %v1961, %v1990
    %v1997 = vadd.f32 %v1962, %v1991
    %v2002 = vrot.slane %v1565, 5
    %v2003 = vrot.slane %v1569, 5
    %v2004 = vsel %vm1728, %v2002, %v2003
    %v2005 = vrot.slane %v1575, 5
    %v2006 = vrot.slane %v1579, 5
    %v2007 = vsel %vm1728, %v2005, %v2006
    %v2014 = vmul.f32 %v1964, %v2002
    %v2015 = vmul.f32 %v1965, %v2004
    %v2016 = vmul.f32 %v1966, %v2003
    %v2017 = vmul.f32 %v1967, %v2005
    %v2018 = vmul.f32 %v1968, %v2007
    %v2019 = vmul.f32 %v1969, %v2006
    %v2026 = vrot.slane %v2014, 1
    %v2027 = vrot.slane %v2015, 1
    %v2028 = vsel %vm1753, %v2026, %v2027
    %v2029 = vrot.slane %v2016, 1
    %v2030 = vsel %vm1753, %v2027, %v2029
    %v2031 = vrot.slane %v2017, 1
    %v2032 = vrot.slane %v2018, 1
    %v2033 = vsel %vm1753, %v2031, %v2032
    %v2034 = vrot.slane %v2019, 1
    %v2035 = vsel %vm1753, %v2032, %v2034
    %v2042 = vadd.f32 %v1992, %v2028
    %v2043 = vadd.f32 %v1993, %v2030
    %v2044 = vadd.f32 %v1994, %v2029
    %v2045 = vadd.f32 %v1995, %v2033
    %v2046 = vadd.f32 %v1996, %v2035
    %v2047 = vadd.f32 %v1997, %v2034
    %v2052 = vrot.slane %v1669, 4
    %v2053 = vrot.slane %v1672, 4
    %v2054 = vsel %vm1780, %v2052, %v2053
    %v2055 = vrot.slane %v1677, 4
    %v2056 = vrot.slane %v1680, 4
    %v2057 = vsel %vm1780, %v2055, %v2056
    %v2064 = vmul.f32 %v1964, %v2052
    %v2065 = vmul.f32 %v1965, %v2054
    %v2066 = vmul.f32 %v1966, %v2053
    %v2067 = vmul.f32 %v1967, %v2055
    %v2068 = vmul.f32 %v1968, %v2057
    %v2069 = vmul.f32 %v1969, %v2056
    %v2076 = vrot.slane %v2064, 2
    %v2077 = vrot.slane %v2065, 2
    %v2078 = vsel %vm1805, %v2076, %v2077
    %v2079 = vrot.slane %v2066, 2
    %v2080 = vsel %vm1805, %v2077, %v2079
    %v2081 = vrot.slane %v2067, 2
    %v2082 = vrot.slane %v2068, 2
    %v2083 = vsel %vm1805, %v2081, %v2082
    %v2084 = vrot.slane %v2069, 2
    %v2085 = vsel %vm1805, %v2082, %v2084
    %v2092 = vadd.f32 %v2042, %v2078
    %v2093 = vadd.f32 %v2043, %v2080
    %v2094 = vadd.f32 %v2044, %v2079
    %v2095 = vadd.f32 %v2045, %v2083
    %v2096 = vadd.f32 %v2046, %v2085
    %v2097 = vadd.f32 %v2047, %v2084
    %v2104 = vrot.slane %v2092, 2
    %v2105 = vrot.slane %v2093, 2
    %v2106 = vsel %vm1805, %v2104, %v2105
    %v2107 = vrot.slane %v2094, 2
    %v2108 = vsel %vm1805, %v2105, %v2107
    %v2109 = vrot.slane %v2095, 2
    %v2110 = vrot.slane %v2096, 2
    %v2111 = vsel %vm1805, %v2109, %v2110
    %v2112 = vrot.slane %v2097, 2
    %v2113 = vsel %vm1805, %v2110, %v2112
    %v2118 = vmax.f32 %v2106, 0.0
    %v2119 = vmax.f32 %v2108, 0.0
    %v2120 = vmax.f32 %v2111, 0.0
    %v2121 = vmax.f32 %v2113, 0.0
    %v2122 = vld [vmem:[#allocation7] sm:$0xff]
    %v2123 = vld [vmem:[#allocation7 + $0x8] sm:$0xff]
    %v2124 = vld [vmem:[#allocation7 + $0x10] sm:$0xff]
    %v2125 = vld [vmem:[#allocation7 + $0x18] sm:$0xff]
    %v2126 = vld [vmem:[#allocation7 + $0x20] sm:$0xff]
    %v2127 = vld [vmem:[#allocation7 + $0x28] sm:$0xff]
    %v2128 = vld [vmem:[#allocation7 + $0x30] sm:$0xff]
    %v2129 = vld [vmem:[#allocation7 + $0x38] sm:$0xff]
    %v2130 = vld [vmem:[#allocation7 + $0x40] sm:$0xff]
    %v2131 = vld [vmem:[#allocation7 + $0x48] sm:$0xff]
    %v2132 = vld [vmem:[#allocation7 + $0x50] sm:$0xff]
    %v2133 = vld [vmem:[#allocation7 + $0x58] sm:$0xff]
    %v2134 = vld [vmem:[#allocation7 + $0x60] sm:$0xff]
    %v2135 = vld [vmem:[#allocation7 + $0x68] sm:$0xff]
    %v2136 = vld [vmem:[#allocation7 + $0x70] sm:$0xff]
    %v2137 = vld [vmem:[#allocation7 + $0x78] sm:$0xff]
    %2138 = vmatprep.subr.mxu0 0.0
    %v2139 = vand.u32 %v2122, 4294901760
    %2140 = vmatpush1.msra.mxu0 %v2139
    %2141 = vmatprep.subr.mxu0 0.0
    %v2142 = vand.u32 %v2123, 4294901760
    %2143 = vmatpush1.msra.mxu0 %v2142
    %2144 = vmatprep.subr.mxu0 0.0
    %v2145 = vand.u32 %v2124, 4294901760
    %2146 = vmatpush1.msra.mxu0 %v2145
    %2147 = vmatprep.subr.mxu0 0.0
    %v2148 = vand.u32 %v2125, 4294901760
    %2149 = vmatpush1.msra.mxu0 %v2148
    %2150 = vmatprep.subr.mxu0 0.0
    %v2151 = vand.u32 %v2126, 4294901760
    %2152 = vmatpush1.msra.mxu0 %v2151
    %2153 = vmatprep.subr.mxu0 0.0
    %v2154 = vand.u32 %v2127, 4294901760
    %2155 = vmatpush1.msra.mxu0 %v2154
    %2156 = vmatprep.subr.mxu0 0.0
    %v2157 = vand.u32 %v2128, 4294901760
    %2158 = vmatpush1.msra.mxu0 %v2157
    %2159 = vmatprep.subr.mxu0 0.0
    %v2160 = vand.u32 %v2129, 4294901760
    %2161 = vmatpush1.msra.mxu0 %v2160
    %2162 = vmatprep.subr.mxu0 0.0
    %v2163 = vand.u32 %v2130, 4294901760
    %2164 = vmatpush1.msra.mxu0 %v2163
    %2165 = vmatprep.subr.mxu0 0.0
    %v2166 = vand.u32 %v2131, 4294901760
    %2167 = vmatpush1.msra.mxu0 %v2166
    %2168 = vmatprep.subr.mxu0 0.0
    %v2169 = vand.u32 %v2132, 4294901760
    %2170 = vmatpush1.msra.mxu0 %v2169
    %2171 = vmatprep.subr.mxu0 0.0
    %v2172 = vand.u32 %v2133, 4294901760
    %2173 = vmatpush1.msra.mxu0 %v2172
    %2174 = vmatprep.subr.mxu0 0.0
    %v2175 = vand.u32 %v2134, 4294901760
    %2176 = vmatpush1.msra.mxu0 %v2175
    %2177 = vmatprep.subr.mxu0 0.0
    %v2178 = vand.u32 %v2135, 4294901760
    %2179 = vmatpush1.msra.mxu0 %v2178
    %2180 = vmatprep.subr.mxu0 0.0
    %v2181 = vand.u32 %v2136, 4294901760
    %2182 = vmatpush1.msra.mxu0 %v2181
    %2183 = vmatprep.subr.mxu0 0.0
    %v2184 = vand.u32 %v2137, 4294901760
    %2185 = vmatpush1.msra.mxu0 %v2184
    %2186 = vmatprep.subr.mxu0 0.0
    %2187 = vmatpush1.msra.mxu0 0.0
    %2188 = vmatprep.subr.mxu0 0.0
    %2189 = vmatpush1.msra.mxu0 0.0
    %2190 = vmatprep.subr.mxu0 0.0
    %2191 = vmatpush1.msra.mxu0 0.0
    %2192 = vmatprep.subr.mxu0 0.0
    %2193 = vmatpush1.msra.mxu0 0.0
    %2194 = vmatprep.subr.mxu0 0.0
    %2195 = vmatpush1.msra.mxu0 0.0
    %2196 = vmatprep.subr.mxu0 0.0
    %2197 = vmatpush1.msra.mxu0 0.0
    %2198 = vmatprep.subr.mxu0 0.0
    %2199 = vmatpush1.msra.mxu0 0.0
    %2200 = vmatprep.subr.mxu0 0.0
    %2201 = vmatpush1.msra.mxu0 0.0
    %2202 = vmatprep.subr.mxu0 0.0
    %2203 = vmatpush1.msra.mxu0 0.0
    %2204 = vmatprep.subr.mxu0 0.0
    %2205 = vmatpush1.msra.mxu0 0.0
    %2206 = vmatprep.subr.mxu0 0.0
    %2207 = vmatpush1.msra.mxu0 0.0
    %2208 = vmatprep.subr.mxu0 0.0
    %2209 = vmatpush1.msra.mxu0 0.0
    %2210 = vmatprep.subr.mxu0 0.0
    %2211 = vmatpush1.msra.mxu0 0.0
    %2212 = vmatprep.subr.mxu0 0.0
    %2213 = vmatpush1.msra.mxu0 0.0
    %2214 = vmatprep.subr.mxu0 0.0
    %2215 = vmatpush1.msra.mxu0 0.0
    %2216 = vmatprep.subr.mxu0 0.0
    %2217 = vmatpush1.msra.mxu0 0.0
    %2218 = vmatprep.mubr.f32.mxu0 0.0
    %v2219 = vand.u32 %v2118, 4294901760
    %v2220 = vsub.f32 %v2118, %v2219
    %v2221 = vand.u32 %v2220, 4294901760
    %v2222 = vsub.f32 %v2220, %v2221
    %v2223 = vand.u32 %v2222, 4294901760
    %2224 = vmatmul.mubr.f32.gmra.mrb[0].mxu0 %v2223
    %v2225 = vpop.f32.mrb[0].mxu0
    %v2226 = vadd.f32 0.0, %v2225
    %v2227 = vpop.f32.mrb[0].mxu0
    %2228 = vmatprep.mubr.f32.mxu0 0.0
    %v2229 = vand.u32 %v2119, 4294901760
    %v2230 = vsub.f32 %v2119, %v2229
    %v2231 = vand.u32 %v2230, 4294901760
    %v2232 = vsub.f32 %v2230, %v2231
    %v2233 = vand.u32 %v2232, 4294901760
    %2234 = vmatmul.mubr.f32.gmra.mrb[0].mxu0 %v2233
    %v2235 = vpop.f32.mrb[0].mxu0
    %v2236 = vadd.f32 0.0, %v2235
    %v2237 = vpop.f32.mrb[0].mxu0
    %2238 = vmatprep.mubr.f32.mxu0 0.0
    %v2239 = vand.u32 %v2120, 4294901760
    %v2240 = vsub.f32 %v2120, %v2239
    %v2241 = vand.u32 %v2240, 4294901760
    %v2242 = vsub.f32 %v2240, %v2241
    %v2243 = vand.u32 %v2242, 4294901760
    %2244 = vmatmul.mubr.f32.gmra.mrb[0].mxu0 %v2243
    %v2245 = vpop.f32.mrb[0].mxu0
    %v2246 = vadd.f32 0.0, %v2245
    %v2247 = vpop.f32.mrb[0].mxu0
    %2248 = vmatprep.mubr.f32.mxu0 0.0
    %v2249 = vand.u32 %v2121, 4294901760
    %v2250 = vsub.f32 %v2121, %v2249
    %v2251 = vand.u32 %v2250, 4294901760
    %v2252 = vsub.f32 %v2250, %v2251
    %v2253 = vand.u32 %v2252, 4294901760
    %2254 = vmatmul.mubr.f32.gmra.mrb[0].mxu0 %v2253
    %v2255 = vpop.f32.mrb[0].mxu0
    %v2256 = vadd.f32 0.0, %v2255
    %v2257 = vpop.f32.mrb[0].mxu0
    %2258 = vdwg.mxu0
    %2259 = vmatprep.subr.mxu0 0.0
    %v2260 = vand.u32 %v2122, 4294901760
    %v2261 = vsub.f32 %v2122, %v2260
    %v2262 = vand.u32 %v2261, 4294901760
    %v2263 = vsub.f32 %v2261, %v2262
    %v2264 = vand.u32 %v2263, 4294901760
    %2265 = vmatpush1.msra.mxu0 %v2264
    %2266 = vmatprep.subr.mxu0 0.0
    %v2267 = vand.u32 %v2123, 4294901760
    %v2268 = vsub.f32 %v2123, %v2267
    %v2269 = vand.u32 %v2268, 4294901760
    %v2270 = vsub.f32 %v2268, %v2269
    %v2271 = vand.u32 %v2270, 4294901760
    %2272 = vmatpush1.msra.mxu0 %v2271
    %2273 = vmatprep.subr.mxu0 0.0
    %v2274 = vand.u32 %v2124, 4294901760
    %v2275 = vsub.f32 %v2124, %v2274
    %v2276 = vand.u32 %v2275, 4294901760
    %v2277 = vsub.f32 %v2275, %v2276
    %v2278 = vand.u32 %v2277, 4294901760
    %2279 = vmatpush1.msra.mxu0 %v2278
    %2280 = vmatprep.subr.mxu0 0.0
    %v2281 = vand.u32 %v2125, 4294901760
    %v2282 = vsub.f32 %v2125, %v2281
    %v2283 = vand.u32 %v2282, 4294901760
    %v2284 = vsub.f32 %v2282, %v2283
    %v2285 = vand.u32 %v2284, 4294901760
    %2286 = vmatpush1.msra.mxu0 %v2285
    %2287 = vmatprep.subr.mxu0 0.0
    %v2288 = vand.u32 %v2126, 4294901760
    %v2289 = vsub.f32 %v2126, %v2288
    %v2290 = vand.u32 %v2289, 4294901760
    %v2291 = vsub.f32 %v2289, %v2290
    %v2292 = vand.u32 %v2291, 4294901760
    %2293 = vmatpush1.msra.mxu0 %v2292
    %2294 = vmatprep.subr.mxu0 0.0
    %v2295 = vand.u32 %v2127, 4294901760
    %v2296 = vsub.f32 %v2127, %v2295
    %v2297 = vand.u32 %v2296, 4294901760
    %v2298 = vsub.f32 %v2296, %v2297
    %v2299 = vand.u32 %v2298, 4294901760
    %2300 = vmatpush1.msra.mxu0 %v2299
    %2301 = vmatprep.subr.mxu0 0.0
    %v2302 = vand.u32 %v2128, 4294901760
    %v2303 = vsub.f32 %v2128, %v2302
    %v2304 = vand.u32 %v2303, 4294901760
    %v2305 = vsub.f32 %v2303, %v2304
    %v2306 = vand.u32 %v2305, 4294901760
    %2307 = vmatpush1.msra.mxu0 %v2306
    %2308 = vmatprep.subr.mxu0 0.0
    %v2309 = vand.u32 %v2129, 4294901760
    %v2310 = vsub.f32 %v2129, %v2309
    %v2311 = vand.u32 %v2310, 4294901760
    %v2312 = vsub.f32 %v2310, %v2311
    %v2313 = vand.u32 %v2312, 4294901760
    %2314 = vmatpush1.msra.mxu0 %v2313
    %2315 = vmatprep.subr.mxu0 0.0
    %v2316 = vand.u32 %v2130, 4294901760
    %v2317 = vsub.f32 %v2130, %v2316
    %v2318 = vand.u32 %v2317, 4294901760
    %v2319 = vsub.f32 %v2317, %v2318
    %v2320 = vand.u32 %v2319, 4294901760
    %2321 = vmatpush1.msra.mxu0 %v2320
    %2322 = vmatprep.subr.mxu0 0.0
    %v2323 = vand.u32 %v2131, 4294901760
    %v2324 = vsub.f32 %v2131, %v2323
    %v2325 = vand.u32 %v2324, 4294901760
    %v2326 = vsub.f32 %v2324, %v2325
    %v2327 = vand.u32 %v2326, 4294901760
    %2328 = vmatpush1.msra.mxu0 %v2327
    %2329 = vmatprep.subr.mxu0 0.0
    %v2330 = vand.u32 %v2132, 4294901760
    %v2331 = vsub.f32 %v2132, %v2330
    %v2332 = vand.u32 %v2331, 4294901760
    %v2333 = vsub.f32 %v2331, %v2332
    %v2334 = vand.u32 %v2333, 4294901760
    %2335 = vmatpush1.msra.mxu0 %v2334
    %2336 = vmatprep.subr.mxu0 0.0
    %v2337 = vand.u32 %v2133, 4294901760
    %v2338 = vsub.f32 %v2133, %v2337
    %v2339 = vand.u32 %v2338, 4294901760
    %v2340 = vsub.f32 %v2338, %v2339
    %v2341 = vand.u32 %v2340, 4294901760
    %2342 = vmatpush1.msra.mxu0 %v2341
    %2343 = vmatprep.subr.mxu0 0.0
    %v2344 = vand.u32 %v2134, 4294901760
    %v2345 = vsub.f32 %v2134, %v2344
    %v2346 = vand.u32 %v2345, 4294901760
    %v2347 = vsub.f32 %v2345, %v2346
    %v2348 = vand.u32 %v2347, 4294901760
    %2349 = vmatpush1.msra.mxu0 %v2348
    %2350 = vmatprep.subr.mxu0 0.0
    %v2351 = vand.u32 %v2135, 4294901760
    %v2352 = vsub.f32 %v2135, %v2351
    %v2353 = vand.u32 %v2352, 4294901760
    %v2354 = vsub.f32 %v2352, %v2353
    %v2355 = vand.u32 %v2354, 4294901760
    %2356 = vmatpush1.msra.mxu0 %v2355
    %2357 = vmatprep.subr.mxu0 0.0
    %v2358 = vand.u32 %v2136, 4294901760
    %v2359 = vsub.f32 %v2136, %v2358
    %v2360 = vand.u32 %v2359, 4294901760
    %v2361 = vsub.f32 %v2359, %v2360
    %v2362 = vand.u32 %v2361, 4294901760
    %2363 = vmatpush1.msra.mxu0 %v2362
    %2364 = vmatprep.subr.mxu0 0.0
    %v2365 = vand.u32 %v2137, 4294901760
    %v2366 = vsub.f32 %v2137, %v2365
    %v2367 = vand.u32 %v2366, 4294901760
    %v2368 = vsub.f32 %v2366, %v2367
    %v2369 = vand.u32 %v2368, 4294901760
    %2370 = vmatpush1.msra.mxu0 %v2369
    %2371 = vmatprep.subr.mxu0 0.0
    %2372 = vmatpush1.msra.mxu0 0.0
    %2373 = vmatprep.subr.mxu0 0.0
    %2374 = vmatpush1.msra.mxu0 0.0
    %2375 = vmatprep.subr.mxu0 0.0
    %2376 = vmatpush1.msra.mxu0 0.0
    %2377 = vmatprep.subr.mxu0 0.0
    %2378 = vmatpush1.msra.mxu0 0.0
    %2379 = vmatprep.subr.mxu0 0.0
    %2380 = vmatpush1.msra.mxu0 0.0
    %2381 = vmatprep.subr.mxu0 0.0
    %2382 = vmatpush1.msra.mxu0 0.0
    %2383 = vmatprep.subr.mxu0 0.0
    %2384 = vmatpush1.msra.mxu0 0.0
    %2385 = vmatprep.subr.mxu0 0.0
    %2386 = vmatpush1.msra.mxu0 0.0
    %2387 = vmatprep.subr.mxu0 0.0
    %2388 = vmatpush1.msra.mxu0 0.0
    %2389 = vmatprep.subr.mxu0 0.0
    %2390 = vmatpush1.msra.mxu0 0.0
    %2391 = vmatprep.subr.mxu0 0.0
    %2392 = vmatpush1.msra.mxu0 0.0
    %2393 = vmatprep.subr.mxu0 0.0
    %2394 = vmatpush1.msra.mxu0 0.0
    %2395 = vmatprep.subr.mxu0 0.0
    %2396 = vmatpush1.msra.mxu0 0.0
    %2397 = vmatprep.subr.mxu0 0.0
    %2398 = vmatpush1.msra.mxu0 0.0
    %2399 = vmatprep.subr.mxu0 0.0
    %2400 = vmatpush1.msra.mxu0 0.0
    %2401 = vmatprep.subr.mxu0 0.0
    %2402 = vmatpush1.msra.mxu0 0.0
    %2403 = vmatprep.mubr.f32.mxu0 0.0
    %v2404 = vand.u32 %v2118, 4294901760
    %2405 = vmatmul.mubr.f32.gmra.mrb[0].mxu0 %v2404
    %v2406 = vpop.f32.mrb[0].mxu0
    %v2407 = vadd.f32 %v2226, %v2406
    %v2408 = vpop.f32.mrb[0].mxu0
    %2409 = vmatprep.mubr.f32.mxu0 0.0
    %v2410 = vand.u32 %v2119, 4294901760
    %2411 = vmatmul.mubr.f32.gmra.mrb[0].mxu0 %v2410
    %v2412 = vpop.f32.mrb[0].mxu0
    %v2413 = vadd.f32 %v2236, %v2412
    %v2414 = vpop.f32.mrb[0].mxu0
    %2415 = vmatprep.mubr.f32.mxu0 0.0
    %v2416 = vand.u32 %v2120, 4294901760
    %2417 = vmatmul.mubr.f32.gmra.mrb[0].mxu0 %v2416
    %v2418 = vpop.f32.mrb[0].mxu0
    %v2419 = vadd.f32 %v2246, %v2418
    %v2420 = vpop.f32.mrb[0].mxu0
    %2421 = vmatprep.mubr.f32.mxu0 0.0
    %v2422 = vand.u32 %v2121, 4294901760
    %2423 = vmatmul.mubr.f32.gmra.mrb[0].mxu0 %v2422
    %v2424 = vpop.f32.mrb[0].mxu0
    %v2425 = vadd.f32 %v2256, %v2424
    %v2426 = vpop.f32.mrb[0].mxu0
    %2427 = vdwg.mxu0
    %2428 = vmatprep.subr.mxu0 0.0
    %v2429 = vand.u32 %v2122, 4294901760
    %v2430 = vsub.f32 %v2122, %v2429
    %2431 = vmatpush1.msra.mxu0 %v2430
    %2432 = vmatprep.subr.mxu0 0.0
    %v2433 = vand.u32 %v2123, 4294901760
    %v2434 = vsub.f32 %v2123, %v2433
    %2435 = vmatpush1.msra.mxu0 %v2434
    %2436 = vmatprep.subr.mxu0 0.0
    %v2437 = vand.u32 %v2124, 4294901760
    %v2438 = vsub.f32 %v2124, %v2437
    %2439 = vmatpush1.msra.mxu0 %v2438
    %2440 = vmatprep.subr.mxu0 0.0
    %v2441 = vand.u32 %v2125, 4294901760
    %v2442 = vsub.f32 %v2125, %v2441
    %2443 = vmatpush1.msra.mxu0 %v2442
    %2444 = vmatprep.subr.mxu0 0.0
    %v2445 = vand.u32 %v2126, 4294901760
    %v2446 = vsub.f32 %v2126, %v2445
    %2447 = vmatpush1.msra.mxu0 %v2446
    %2448 = vmatprep.subr.mxu0 0.0
    %v2449 = vand.u32 %v2127, 4294901760
    %v2450 = vsub.f32 %v2127, %v2449
    %2451 = vmatpush1.msra.mxu0 %v2450
    %2452 = vmatprep.subr.mxu0 0.0
    %v2453 = vand.u32 %v2128, 4294901760
    %v2454 = vsub.f32 %v2128, %v2453
    %2455 = vmatpush1.msra.mxu0 %v2454
    %2456 = vmatprep.subr.mxu0 0.0
    %v2457 = vand.u32 %v2129, 4294901760
    %v2458 = vsub.f32 %v2129, %v2457
    %2459 = vmatpush1.msra.mxu0 %v2458
    %2460 = vmatprep.subr.mxu0 0.0
    %v2461 = vand.u32 %v2130, 4294901760
    %v2462 = vsub.f32 %v2130, %v2461
    %2463 = vmatpush1.msra.mxu0 %v2462
    %2464 = vmatprep.subr.mxu0 0.0
    %v2465 = vand.u32 %v2131, 4294901760
    %v2466 = vsub.f32 %v2131, %v2465
    %2467 = vmatpush1.msra.mxu0 %v2466
    %2468 = vmatprep.subr.mxu0 0.0
    %v2469 = vand.u32 %v2132, 4294901760
    %v2470 = vsub.f32 %v2132, %v2469
    %2471 = vmatpush1.msra.mxu0 %v2470
    %2472 = vmatprep.subr.mxu0 0.0
    %v2473 = vand.u32 %v2133, 4294901760
    %v2474 = vsub.f32 %v2133, %v2473
    %2475 = vmatpush1.msra.mxu0 %v2474
    %2476 = vmatprep.subr.mxu0 0.0
    %v2477 = vand.u32 %v2134, 4294901760
    %v2478 = vsub.f32 %v2134, %v2477
    %2479 = vmatpush1.msra.mxu0 %v2478
    %2480 = vmatprep.subr.mxu0 0.0
    %v2481 = vand.u32 %v2135, 4294901760
    %v2482 = vsub.f32 %v2135, %v2481
    %2483 = vmatpush1.msra.mxu0 %v2482
    %2484 = vmatprep.subr.mxu0 0.0
    %v2485 = vand.u32 %v2136, 4294901760
    %v2486 = vsub.f32 %v2136, %v2485
    %2487 = vmatpush1.msra.mxu0 %v2486
    %2488 = vmatprep.subr.mxu0 0.0
    %v2489 = vand.u32 %v2137, 4294901760
    %v2490 = vsub.f32 %v2137, %v2489
    %2491 = vmatpush1.msra.mxu0 %v2490
    %2492 = vmatprep.subr.mxu0 0.0
    %2493 = vmatpush1.msra.mxu0 0.0
    %2494 = vmatprep.subr.mxu0 0.0
    %2495 = vmatpush1.msra.mxu0 0.0
    %2496 = vmatprep.subr.mxu0 0.0
    %2497 = vmatpush1.msra.mxu0 0.0
    %2498 = vmatprep.subr.mxu0 0.0
    %2499 = vmatpush1.msra.mxu0 0.0
    %2500 = vmatprep.subr.mxu0 0.0
    %2501 = vmatpush1.msra.mxu0 0.0
    %2502 = vmatprep.subr.mxu0 0.0
    %2503 = vmatpush1.msra.mxu0 0.0
    %2504 = vmatprep.subr.mxu0 0.0
    %2505 = vmatpush1.msra.mxu0 0.0
    %2506 = vmatprep.subr.mxu0 0.0
    %2507 = vmatpush1.msra.mxu0 0.0
    %2508 = vmatprep.subr.mxu0 0.0
    %2509 = vmatpush1.msra.mxu0 0.0
    %2510 = vmatprep.subr.mxu0 0.0
    %2511 = vmatpush1.msra.mxu0 0.0
    %2512 = vmatprep.subr.mxu0 0.0
    %2513 = vmatpush1.msra.mxu0 0.0
    %2514 = vmatprep.subr.mxu0 0.0
    %2515 = vmatpush1.msra.mxu0 0.0
    %2516 = vmatprep.subr.mxu0 0.0
    %2517 = vmatpush1.msra.mxu0 0.0
    %2518 = vmatprep.subr.mxu0 0.0
    %2519 = vmatpush1.msra.mxu0 0.0
    %2520 = vmatprep.subr.mxu0 0.0
    %2521 = vmatpush1.msra.mxu0 0.0
    %2522 = vmatprep.subr.mxu0 0.0
    %2523 = vmatpush1.msra.mxu0 0.0
    %2524 = vmatprep.mubr.f32.mxu0 0.0
    %v2525 = vand.u32 %v2118, 4294901760
    %v2526 = vsub.f32 %v2118, %v2525
    %2527 = vmatmul.mubr.f32.gmra.mrb[0].mxu0 %v2526
    %v2528 = vpop.f32.mrb[0].mxu0
    %v2529 = vadd.f32 %v2407, %v2528
    %v2530 = vpop.f32.mrb[0].mxu0
    %2531 = vmatprep.mubr.f32.mxu0 0.0
    %v2532 = vand.u32 %v2119, 4294901760
    %v2533 = vsub.f32 %v2119, %v2532
    %2534 = vmatmul.mubr.f32.gmra.mrb[0].mxu0 %v2533
    %v2535 = vpop.f32.mrb[0].mxu0
    %v2536 = vadd.f32 %v2413, %v2535
    %v2537 = vpop.f32.mrb[0].mxu0
    %2538 = vmatprep.mubr.f32.mxu0 0.0
    %v2539 = vand.u32 %v2120, 4294901760
    %v2540 = vsub.f32 %v2120, %v2539
    %2541 = vmatmul.mubr.f32.gmra.mrb[0].mxu0 %v2540
    %v2542 = vpop.f32.mrb[0].mxu0
    %v2543 = vadd.f32 %v2419, %v2542
    %v2544 = vpop.f32.mrb[0].mxu0
    %2545 = vmatprep.mubr.f32.mxu0 0.0
    %v2546 = vand.u32 %v2121, 4294901760
    %v2547 = vsub.f32 %v2121, %v2546
    %2548 = vmatmul.mubr.f32.gmra.mrb[0].mxu0 %v2547
    %v2549 = vpop.f32.mrb[0].mxu0
    %v2550 = vadd.f32 %v2425, %v2549
    %v2551 = vpop.f32.mrb[0].mxu0
    %2552 = vdwg.mxu0
    %2553 = vmatprep.subr.mxu0 0.0
    %v2554 = vand.u32 %v2122, 4294901760
    %2555 = vmatpush1.msra.mxu0 %v2554
    %2556 = vmatprep.subr.mxu0 0.0
    %v2557 = vand.u32 %v2123, 4294901760
    %2558 = vmatpush1.msra.mxu0 %v2557
    %2559 = vmatprep.subr.mxu0 0.0
    %v2560 = vand.u32 %v2124, 4294901760
    %2561 = vmatpush1.msra.mxu0 %v2560
    %2562 = vmatprep.subr.mxu0 0.0
    %v2563 = vand.u32 %v2125, 4294901760
    %2564 = vmatpush1.msra.mxu0 %v2563
    %2565 = vmatprep.subr.mxu0 0.0
    %v2566 = vand.u32 %v2126, 4294901760
    %2567 = vmatpush1.msra.mxu0 %v2566
    %2568 = vmatprep.subr.mxu0 0.0
    %v2569 = vand.u32 %v2127, 4294901760
    %2570 = vmatpush1.msra.mxu0 %v2569
    %2571 = vmatprep.subr.mxu0 0.0
    %v2572 = vand.u32 %v2128, 4294901760
    %2573 = vmatpush1.msra.mxu0 %v2572
    %2574 = vmatprep.subr.mxu0 0.0
    %v2575 = vand.u32 %v2129, 4294901760
    %2576 = vmatpush1.msra.mxu0 %v2575
    %2577 = vmatprep.subr.mxu0 0.0
    %v2578 = vand.u32 %v2130, 4294901760
    %2579 = vmatpush1.msra.mxu0 %v2578
    %2580 = vmatprep.subr.mxu0 0.0
    %v2581 = vand.u32 %v2131, 4294901760
    %2582 = vmatpush1.msra.mxu0 %v2581
    %2583 = vmatprep.subr.mxu0 0.0
    %v2584 = vand.u32 %v2132, 4294901760
    %2585 = vmatpush1.msra.mxu0 %v2584
    %2586 = vmatprep.subr.mxu0 0.0
    %v2587 = vand.u32 %v2133, 4294901760
    %2588 = vmatpush1.msra.mxu0 %v2587
    %2589 = vmatprep.subr.mxu0 0.0
    %v2590 = vand.u32 %v2134, 4294901760
    %2591 = vmatpush1.msra.mxu0 %v2590
    %2592 = vmatprep.subr.mxu0 0.0
    %v2593 = vand.u32 %v2135, 4294901760
    %2594 = vmatpush1.msra.mxu0 %v2593
    %2595 = vmatprep.subr.mxu0 0.0
    %v2596 = vand.u32 %v2136, 4294901760
    %2597 = vmatpush1.msra.mxu0 %v2596
    %2598 = vmatprep.subr.mxu0 0.0
    %v2599 = vand.u32 %v2137, 4294901760
    %2600 = vmatpush1.msra.mxu0 %v2599
    %2601 = vmatprep.subr.mxu0 0.0
    %2602 = vmatpush1.msra.mxu0 0.0
    %2603 = vmatprep.subr.mxu0 0.0
    %2604 = vmatpush1.msra.mxu0 0.0
    %2605 = vmatprep.subr.mxu0 0.0
    %2606 = vmatpush1.msra.mxu0 0.0
    %2607 = vmatprep.subr.mxu0 0.0
    %2608 = vmatpush1.msra.mxu0 0.0
    %2609 = vmatprep.subr.mxu0 0.0
    %2610 = vmatpush1.msra.mxu0 0.0
    %2611 = vmatprep.subr.mxu0 0.0
    %2612 = vmatpush1.msra.mxu0 0.0
    %2613 = vmatprep.subr.mxu0 0.0
    %2614 = vmatpush1.msra.mxu0 0.0
    %2615 = vmatprep.subr.mxu0 0.0
    %2616 = vmatpush1.msra.mxu0 0.0
    %2617 = vmatprep.subr.mxu0 0.0
    %2618 = vmatpush1.msra.mxu0 0.0
    %2619 = vmatprep.subr.mxu0 0.0
    %2620 = vmatpush1.msra.mxu0 0.0
    %2621 = vmatprep.subr.mxu0 0.0
    %2622 = vmatpush1.msra.mxu0 0.0
    %2623 = vmatprep.subr.mxu0 0.0
    %2624 = vmatpush1.msra.mxu0 0.0
    %2625 = vmatprep.subr.mxu0 0.0
    %2626 = vmatpush1.msra.mxu0 0.0
    %2627 = vmatprep.subr.mxu0 0.0
    %2628 = vmatpush1.msra.mxu0 0.0
    %2629 = vmatprep.subr.mxu0 0.0
    %2630 = vmatpush1.msra.mxu0 0.0
    %2631 = vmatprep.subr.mxu0 0.0
    %2632 = vmatpush1.msra.mxu0 0.0
    %2633 = vmatprep.mubr.f32.mxu0 0.0
    %v2634 = vand.u32 %v2118, 4294901760
    %v2635 = vsub.f32 %v2118, %v2634
    %v2636 = vand.u32 %v2635, 4294901760
    %2637 = vmatmul.mubr.f32.gmra.mrb[0].mxu0 %v2636
    %v2638 = vpop.f32.mrb[0].mxu0
    %v2639 = vadd.f32 %v2529, %v2638
    %v2640 = vpop.f32.mrb[0].mxu0
    %2641 = vmatprep.mubr.f32.mxu0 0.0
    %v2642 = vand.u32 %v2119, 4294901760
    %v2643 = vsub.f32 %v2119, %v2642
    %v2644 = vand.u32 %v2643, 4294901760
    %2645 = vmatmul.mubr.f32.gmra.mrb[0].mxu0 %v2644
    %v2646 = vpop.f32.mrb[0].mxu0
    %v2647 = vadd.f32 %v2536, %v2646
    %v2648 = vpop.f32.mrb[0].mxu0
    %2649 = vmatprep.mubr.f32.mxu0 0.0
    %v2650 = vand.u32 %v2120, 4294901760
    %v2651 = vsub.f32 %v2120, %v2650
    %v2652 = vand.u32 %v2651, 4294901760
    %2653 = vmatmul.mubr.f32.gmra.mrb[0].mxu0 %v2652
    %v2654 = vpop.f32.mrb[0].mxu0
    %v2655 = vadd.f32 %v2543, %v2654
    %v2656 = vpop.f32.mrb[0].mxu0
    %2657 = vmatprep.mubr.f32.mxu0 0.0
    %v2658 = vand.u32 %v2121, 4294901760
    %v2659 = vsub.f32 %v2121, %v2658
    %v2660 = vand.u32 %v2659, 4294901760
    %2661 = vmatmul.mubr.f32.gmra.mrb[0].mxu0 %v2660
    %v2662 = vpop.f32.mrb[0].mxu0
    %v2663 = vadd.f32 %v2550, %v2662
    %v2664 = vpop.f32.mrb[0].mxu0
    %2665 = vdwg.mxu0
    %2666 = vmatprep.subr.mxu0 0.0
    %v2667 = vand.u32 %v2122, 4294901760
    %v2668 = vsub.f32 %v2122, %v2667
    %v2669 = vand.u32 %v2668, 4294901760
    %2670 = vmatpush1.msra.mxu0 %v2669
    %2671 = vmatprep.subr.mxu0 0.0
    %v2672 = vand.u32 %v2123, 4294901760
    %v2673 = vsub.f32 %v2123, %v2672
    %v2674 = vand.u32 %v2673, 4294901760
    %2675 = vmatpush1.msra.mxu0 %v2674
    %2676 = vmatprep.subr.mxu0 0.0
    %v2677 = vand.u32 %v2124, 4294901760
    %v2678 = vsub.f32 %v2124, %v2677
    %v2679 = vand.u32 %v2678, 4294901760
    %2680 = vmatpush1.msra.mxu0 %v2679
    %2681 = vmatprep.subr.mxu0 0.0
    %v2682 = vand.u32 %v2125, 4294901760
    %v2683 = vsub.f32 %v2125, %v2682
    %v2684 = vand.u32 %v2683, 4294901760
    %2685 = vmatpush1.msra.mxu0 %v2684
    %2686 = vmatprep.subr.mxu0 0.0
    %v2687 = vand.u32 %v2126, 4294901760
    %v2688 = vsub.f32 %v2126, %v2687
    %v2689 = vand.u32 %v2688, 4294901760
    %2690 = vmatpush1.msra.mxu0 %v2689
    %2691 = vmatprep.subr.mxu0 0.0
    %v2692 = vand.u32 %v2127, 4294901760
    %v2693 = vsub.f32 %v2127, %v2692
    %v2694 = vand.u32 %v2693, 4294901760
    %2695 = vmatpush1.msra.mxu0 %v2694
    %2696 = vmatprep.subr.mxu0 0.0
    %v2697 = vand.u32 %v2128, 4294901760
    %v2698 = vsub.f32 %v2128, %v2697
    %v2699 = vand.u32 %v2698, 4294901760
    %2700 = vmatpush1.msra.mxu0 %v2699
    %2701 = vmatprep.subr.mxu0 0.0
    %v2702 = vand.u32 %v2129, 4294901760
    %v2703 = vsub.f32 %v2129, %v2702
    %v2704 = vand.u32 %v2703, 4294901760
    %2705 = vmatpush1.msra.mxu0 %v2704
    %2706 = vmatprep.subr.mxu0 0.0
    %v2707 = vand.u32 %v2130, 4294901760
    %v2708 = vsub.f32 %v2130, %v2707
    %v2709 = vand.u32 %v2708, 4294901760
    %2710 = vmatpush1.msra.mxu0 %v2709
    %2711 = vmatprep.subr.mxu0 0.0
    %v2712 = vand.u32 %v2131, 4294901760
    %v2713 = vsub.f32 %v2131, %v2712
    %v2714 = vand.u32 %v2713, 4294901760
    %2715 = vmatpush1.msra.mxu0 %v2714
    %2716 = vmatprep.subr.mxu0 0.0
    %v2717 = vand.u32 %v2132, 4294901760
    %v2718 = vsub.f32 %v2132, %v2717
    %v2719 = vand.u32 %v2718, 4294901760
    %2720 = vmatpush1.msra.mxu0 %v2719
    %2721 = vmatprep.subr.mxu0 0.0
    %v2722 = vand.u32 %v2133, 4294901760
    %v2723 = vsub.f32 %v2133, %v2722
    %v2724 = vand.u32 %v2723, 4294901760
    %2725 = vmatpush1.msra.mxu0 %v2724
    %2726 = vmatprep.subr.mxu0 0.0
    %v2727 = vand.u32 %v2134, 4294901760
    %v2728 = vsub.f32 %v2134, %v2727
    %v2729 = vand.u32 %v2728, 4294901760
    %2730 = vmatpush1.msra.mxu0 %v2729
    %2731 = vmatprep.subr.mxu0 0.0
    %v2732 = vand.u32 %v2135, 4294901760
    %v2733 = vsub.f32 %v2135, %v2732
    %v2734 = vand.u32 %v2733, 4294901760
    %2735 = vmatpush1.msra.mxu0 %v2734
    %2736 = vmatprep.subr.mxu0 0.0
    %v2737 = vand.u32 %v2136, 4294901760
    %v2738 = vsub.f32 %v2136, %v2737
    %v2739 = vand.u32 %v2738, 4294901760
    %2740 = vmatpush1.msra.mxu0 %v2739
    %2741 = vmatprep.subr.mxu0 0.0
    %v2742 = vand.u32 %v2137, 4294901760
    %v2743 = vsub.f32 %v2137, %v2742
    %v2744 = vand.u32 %v2743, 4294901760
    %2745 = vmatpush1.msra.mxu0 %v2744
    %2746 = vmatprep.subr.mxu0 0.0
    %2747 = vmatpush1.msra.mxu0 0.0
    %2748 = vmatprep.subr.mxu0 0.0
    %2749 = vmatpush1.msra.mxu0 0.0
    %2750 = vmatprep.subr.mxu0 0.0
    %2751 = vmatpush1.msra.mxu0 0.0
    %2752 = vmatprep.subr.mxu0 0.0
    %2753 = vmatpush1.msra.mxu0 0.0
    %2754 = vmatprep.subr.mxu0 0.0
    %2755 = vmatpush1.msra.mxu0 0.0
    %2756 = vmatprep.subr.mxu0 0.0
    %2757 = vmatpush1.msra.mxu0 0.0
    %2758 = vmatprep.subr.mxu0 0.0
    %2759 = vmatpush1.msra.mxu0 0.0
    %2760 = vmatprep.subr.mxu0 0.0
    %2761 = vmatpush1.msra.mxu0 0.0
    %2762 = vmatprep.subr.mxu0 0.0
    %2763 = vmatpush1.msra.mxu0 0.0
    %2764 = vmatprep.subr.mxu0 0.0
    %2765 = vmatpush1.msra.mxu0 0.0
    %2766 = vmatprep.subr.mxu0 0.0
    %2767 = vmatpush1.msra.mxu0 0.0
    %2768 = vmatprep.subr.mxu0 0.0
    %2769 = vmatpush1.msra.mxu0 0.0
    %2770 = vmatprep.subr.mxu0 0.0
    %2771 = vmatpush1.msra.mxu0 0.0
    %2772 = vmatprep.subr.mxu0 0.0
    %2773 = vmatpush1.msra.mxu0 0.0
    %2774 = vmatprep.subr.mxu0 0.0
    %2775 = vmatpush1.msra.mxu0 0.0
    %2776 = vmatprep.subr.mxu0 0.0
    %2777 = vmatpush1.msra.mxu0 0.0
    %2778 = vmatprep.mubr.f32.mxu0 0.0
    %v2779 = vand.u32 %v2118, 4294901760
    %2780 = vmatmul.mubr.f32.gmra.mrb[0].mxu0 %v2779
    %v2781 = vpop.f32.mrb[0].mxu0
    %v2782 = vadd.f32 %v2639, %v2781
    %v2783 = vpop.f32.mrb[0].mxu0
    %2784 = vmatprep.mubr.f32.mxu0 0.0
    %v2785 = vand.u32 %v2119, 4294901760
    %2786 = vmatmul.mubr.f32.gmra.mrb[0].mxu0 %v2785
    %v2787 = vpop.f32.mrb[0].mxu0
    %v2788 = vadd.f32 %v2647, %v2787
    %v2789 = vpop.f32.mrb[0].mxu0
    %2790 = vmatprep.mubr.f32.mxu0 0.0
    %v2791 = vand.u32 %v2120, 4294901760
    %2792 = vmatmul.mubr.f32.gmra.mrb[0].mxu0 %v2791
    %v2793 = vpop.f32.mrb[0].mxu0
    %v2794 = vadd.f32 %v2655, %v2793
    %v2795 = vpop.f32.mrb[0].mxu0
    %2796 = vmatprep.mubr.f32.mxu0 0.0
    %v2797 = vand.u32 %v2121, 4294901760
    %2798 = vmatmul.mubr.f32.gmra.mrb[0].mxu0 %v2797
    %v2799 = vpop.f32.mrb[0].mxu0
    %v2800 = vadd.f32 %v2663, %v2799
    %v2801 = vpop.f32.mrb[0].mxu0
    %2802 = vdwg.mxu0
    %2803 = vmatprep.subr.mxu0 0.0
    %v2804 = vand.u32 %v2122, 4294901760
    %2805 = vmatpush1.msra.mxu0 %v2804
    %2806 = vmatprep.subr.mxu0 0.0
    %v2807 = vand.u32 %v2123, 4294901760
    %2808 = vmatpush1.msra.mxu0 %v2807
    %2809 = vmatprep.subr.mxu0 0.0
    %v2810 = vand.u32 %v2124, 4294901760
    %2811 = vmatpush1.msra.mxu0 %v2810
    %2812 = vmatprep.subr.mxu0 0.0
    %v2813 = vand.u32 %v2125, 4294901760
    %2814 = vmatpush1.msra.mxu0 %v2813
    %2815 = vmatprep.subr.mxu0 0.0
    %v2816 = vand.u32 %v2126, 4294901760
    %2817 = vmatpush1.msra.mxu0 %v2816
    %2818 = vmatprep.subr.mxu0 0.0
    %v2819 = vand.u32 %v2127, 4294901760
    %2820 = vmatpush1.msra.mxu0 %v2819
    %2821 = vmatprep.subr.mxu0 0.0
    %v2822 = vand.u32 %v2128, 4294901760
    %2823 = vmatpush1.msra.mxu0 %v2822
    %2824 = vmatprep.subr.mxu0 0.0
    %v2825 = vand.u32 %v2129, 4294901760
    %2826 = vmatpush1.msra.mxu0 %v2825
    %2827 = vmatprep.subr.mxu0 0.0
    %v2828 = vand.u32 %v2130, 4294901760
    %2829 = vmatpush1.msra.mxu0 %v2828
    %2830 = vmatprep.subr.mxu0 0.0
    %v2831 = vand.u32 %v2131, 4294901760
    %2832 = vmatpush1.msra.mxu0 %v2831
    %2833 = vmatprep.subr.mxu0 0.0
    %v2834 = vand.u32 %v2132, 4294901760
    %2835 = vmatpush1.msra.mxu0 %v2834
    %2836 = vmatprep.subr.mxu0 0.0
    %v2837 = vand.u32 %v2133, 4294901760
    %2838 = vmatpush1.msra.mxu0 %v2837
    %2839 = vmatprep.subr.mxu0 0.0
    %v2840 = vand.u32 %v2134, 4294901760
    %2841 = vmatpush1.msra.mxu0 %v2840
    %2842 = vmatprep.subr.mxu0 0.0
    %v2843 = vand.u32 %v2135, 4294901760
    %2844 = vmatpush1.msra.mxu0 %v2843
    %2845 = vmatprep.subr.mxu0 0.0
    %v2846 = vand.u32 %v2136, 4294901760
    %2847 = vmatpush1.msra.mxu0 %v2846
    %2848 = vmatprep.subr.mxu0 0.0
    %v2849 = vand.u32 %v2137, 4294901760
    %2850 = vmatpush1.msra.mxu0 %v2849
    %2851 = vmatprep.subr.mxu0 0.0
    %2852 = vmatpush1.msra.mxu0 0.0
    %2853 = vmatprep.subr.mxu0 0.0
    %2854 = vmatpush1.msra.mxu0 0.0
    %2855 = vmatprep.subr.mxu0 0.0
    %2856 = vmatpush1.msra.mxu0 0.0
    %2857 = vmatprep.subr.mxu0 0.0
    %2858 = vmatpush1.msra.mxu0 0.0
    %2859 = vmatprep.subr.mxu0 0.0
    %2860 = vmatpush1.msra.mxu0 0.0
    %2861 = vmatprep.subr.mxu0 0.0
    %2862 = vmatpush1.msra.mxu0 0.0
    %2863 = vmatprep.subr.mxu0 0.0
    %2864 = vmatpush1.msra.mxu0 0.0
    %2865 = vmatprep.subr.mxu0 0.0
    %2866 = vmatpush1.msra.mxu0 0.0
    %2867 = vmatprep.subr.mxu0 0.0
    %2868 = vmatpush1.msra.mxu0 0.0
    %2869 = vmatprep.subr.mxu0 0.0
    %2870 = vmatpush1.msra.mxu0 0.0
    %2871 = vmatprep.subr.mxu0 0.0
    %2872 = vmatpush1.msra.mxu0 0.0
    %2873 = vmatprep.subr.mxu0 0.0
    %2874 = vmatpush1.msra.mxu0 0.0
    %2875 = vmatprep.subr.mxu0 0.0
    %2876 = vmatpush1.msra.mxu0 0.0
    %2877 = vmatprep.subr.mxu0 0.0
    %2878 = vmatpush1.msra.mxu0 0.0
    %2879 = vmatprep.subr.mxu0 0.0
    %2880 = vmatpush1.msra.mxu0 0.0
    %2881 = vmatprep.subr.mxu0 0.0
    %2882 = vmatpush1.msra.mxu0 0.0
    %2883 = vmatprep.mubr.f32.mxu0 0.0
    %v2884 = vand.u32 %v2118, 4294901760
    %2885 = vmatmul.mubr.f32.gmra.mrb[0].mxu0 %v2884
    %v2886 = vpop.f32.mrb[0].mxu0
    %v2887 = vadd.f32 %v2782, %v2886
    %v2888 = vpop.f32.mrb[0].mxu0
    %2889 = vmatprep.mubr.f32.mxu0 0.0
    %v2890 = vand.u32 %v2119, 4294901760
    %2891 = vmatmul.mubr.f32.gmra.mrb[0].mxu0 %v2890
    %v2892 = vpop.f32.mrb[0].mxu0
    %v2893 = vadd.f32 %v2788, %v2892
    %v2894 = vpop.f32.mrb[0].mxu0
    %2895 = vmatprep.mubr.f32.mxu0 0.0
    %v2896 = vand.u32 %v2120, 4294901760
    %2897 = vmatmul.mubr.f32.gmra.mrb[0].mxu0 %v2896
    %v2898 = vpop.f32.mrb[0].mxu0
    %v2899 = vadd.f32 %v2794, %v2898
    %v2900 = vpop.f32.mrb[0].mxu0
    %2901 = vmatprep.mubr.f32.mxu0 0.0
    %v2902 = vand.u32 %v2121, 4294901760
    %2903 = vmatmul.mubr.f32.gmra.mrb[0].mxu0 %v2902
    %v2904 = vpop.f32.mrb[0].mxu0
    %v2905 = vadd.f32 %v2800, %v2904
    %v2906 = vpop.f32.mrb[0].mxu0
    %2907 = vdwg.mxu0
    %v2908 = vadd.f32 %v75, %v2887
    %v2909 = vadd.f32 %v76, %v2893
    %v2910 = vadd.f32 %v77, %v2899
    %v2911 = vadd.f32 %v78, %v2905
    %v2912 = vpack.c.bf16 %v1128, %v1126
    %v2913 = vpack.c.bf16 %v1132, %v1130
    %v2914 = vld [vmem:[%s5] sm:$0xff]
    %v2915 = vld [vmem:[%s5 + $0x8] sm:$0xff]
    %v2916 = vld [vmem:[%s5 + $0x10] sm:$0xff]
    %v2917 = vld [vmem:[%s5 + $0x18] sm:$0xff]
    %v2918 = vld [vmem:[%s5 + $0x20] sm:$0xff]
    %v2919 = vld [vmem:[%s5 + $0x28] sm:$0xff]
    %v2920 = vld [vmem:[%s5 + $0x30] sm:$0xff]
    %v2921 = vld [vmem:[%s5 + $0x38] sm:$0xff]
    %v2922 = vld [vmem:[%s5 + $0x40] sm:$0xff]
    %v2923 = vld [vmem:[%s5 + $0x48] sm:$0xff]
    %v2924 = vld [vmem:[%s5 + $0x50] sm:$0xff]
    %v2925 = vld [vmem:[%s5 + $0x58] sm:$0xff]
    %v2926 = vld [vmem:[%s5 + $0x60] sm:$0xf]
    %v2927 = vld [vmem:[%s5 + $0x64] sm:$0xff]
    %v2928 = vld [vmem:[%s5 + $0x6c] sm:$0xff]
    %v2929 = vld [vmem:[%s5 + $0x74] sm:$0xff]
    %v2930 = vld [vmem:[%s5 + $0x7c] sm:$0xff]
    %v2931 = vld [vmem:[%s5 + $0x84] sm:$0xff]
    %v2932 = vld [vmem:[%s5 + $0x8c] sm:$0xff]
    %v2933 = vld [vmem:[%s5 + $0x94] sm:$0xff]
    %v2934 = vld [vmem:[%s5 + $0x9c] sm:$0xff]
    %v2935 = vld [vmem:[%s5 + $0xa4] sm:$0xff]
    %v2936 = vld [vmem:[%s5 + $0xac] sm:$0xff]
    %v2937 = vld [vmem:[%s5 + $0xb4] sm:$0xff]
    %v2938 = vld [vmem:[%s5 + $0xbc] sm:$0xff]
    %v2939 = vld [vmem:[%s5 + $0xc4] sm:$0xf]
    %v2940 = vld [vmem:[%s5 + $0xc8] sm:$0xff]
    %v2941 = vld [vmem:[%s5 + $0xd0] sm:$0xff]
    %v2942 = vld [vmem:[%s5 + $0xd8] sm:$0xff]
    %v2943 = vld [vmem:[%s5 + $0xe0] sm:$0xff]
    %v2944 = vld [vmem:[%s5 + $0xe8] sm:$0xff]
    %v2945 = vld [vmem:[%s5 + $0xf0] sm:$0xff]
    %v2946 = vld [vmem:[%s5 + $0xf8] sm:$0xff]
    %v2947 = vld [vmem:[%s5 + $0x100] sm:$0xff]
    %v2948 = vld [vmem:[%s5 + $0x108] sm:$0xff]
    %v2949 = vld [vmem:[%s5 + $0x110] sm:$0xff]
    %v2950 = vld [vmem:[%s5 + $0x118] sm:$0xff]
    %v2951 = vld [vmem:[%s5 + $0x120] sm:$0xff]
    %v2952 = vld [vmem:[%s5 + $0x128] sm:$0xf]
    %v2953 = vld [vmem:[%s5 + $0x12c] sm:$0xff]
    %v2954 = vld [vmem:[%s5 + $0x134] sm:$0xff]
    %v2955 = vld [vmem:[%s5 + $0x13c] sm:$0xff]
    %v2956 = vld [vmem:[%s5 + $0x144] sm:$0xff]
    %v2957 = vld [vmem:[%s5 + $0x14c] sm:$0xff]
    %v2958 = vld [vmem:[%s5 + $0x154] sm:$0xff]
    %v2959 = vld [vmem:[%s5 + $0x15c] sm:$0xff]
    %v2960 = vld [vmem:[%s5 + $0x164] sm:$0xff]
    %v2961 = vld [vmem:[%s5 + $0x16c] sm:$0xff]
    %v2962 = vld [vmem:[%s5 + $0x174] sm:$0xff]
    %v2963 = vld [vmem:[%s5 + $0x17c] sm:$0xff]
    %v2964 = vld [vmem:[%s5 + $0x184] sm:$0xff]
    %v2965 = vld [vmem:[%s5 + $0x18c] sm:$0xf]
    %v2966 = vld [vmem:[%s5 + $0x190] sm:$0xff]
    %v2967 = vld [vmem:[%s5 + $0x198] sm:$0xff]
    %v2968 = vld [vmem:[%s5 + $0x1a0] sm:$0xff]
    %v2969 = vld [vmem:[%s5 + $0x1a8] sm:$0xff]
    %v2970 = vld [vmem:[%s5 + $0x1b0] sm:$0xff]
    %v2971 = vld [vmem:[%s5 + $0x1b8] sm:$0xff]
    %v2972 = vld [vmem:[%s5 + $0x1c0] sm:$0xff]
    %v2973 = vld [vmem:[%s5 + $0x1c8] sm:$0xff]
    %v2974 = vld [vmem:[%s5 + $0x1d0] sm:$0xff]
    %v2975 = vld [vmem:[%s5 + $0x1d8] sm:$0xff]
    %v2976 = vld [vmem:[%s5 + $0x1e0] sm:$0xff]
    %v2977 = vld [vmem:[%s5 + $0x1e8] sm:$0xff]
    %v2978 = vld [vmem:[%s5 + $0x1f0] sm:$0xf]
    %v2979 = vld [vmem:[%s5 + $0x1f4] sm:$0xff]
    %v2980 = vld [vmem:[%s5 + $0x1fc] sm:$0xff]
    %v2981 = vld [vmem:[%s5 + $0x204] sm:$0xff]
    %v2982 = vld [vmem:[%s5 + $0x20c] sm:$0xff]
    %v2983 = vld [vmem:[%s5 + $0x214] sm:$0xff]
    %v2984 = vld [vmem:[%s5 + $0x21c] sm:$0xff]
    %v2985 = vld [vmem:[%s5 + $0x224] sm:$0xff]
    %v2986 = vld [vmem:[%s5 + $0x22c] sm:$0xff]
    %v2987 = vld [vmem:[%s5 + $0x234] sm:$0xff]
    %v2988 = vld [vmem:[%s5 + $0x23c] sm:$0xff]
    %v2989 = vld [vmem:[%s5 + $0x244] sm:$0xff]
    %v2990 = vld [vmem:[%s5 + $0x24c] sm:$0xff]
    %v2991 = vld [vmem:[%s5 + $0x254] sm:$0xf]
    %v2992 = vld [vmem:[%s5 + $0x258] sm:$0xff]
    %v2993 = vld [vmem:[%s5 + $0x260] sm:$0xff]
    %v2994 = vld [vmem:[%s5 + $0x268] sm:$0xff]
    %v2995 = vld [vmem:[%s5 + $0x270] sm:$0xff]
    %v2996 = vld [vmem:[%s5 + $0x278] sm:$0xff]
    %v2997 = vld [vmem:[%s5 + $0x280] sm:$0xff]
    %v2998 = vld [vmem:[%s5 + $0x288] sm:$0xff]
    %v2999 = vld [vmem:[%s5 + $0x290] sm:$0xff]
    %v3000 = vld [vmem:[%s5 + $0x298] sm:$0xff]
    %v3001 = vld [vmem:[%s5 + $0x2a0] sm:$0xff]
    %v3002 = vld [vmem:[%s5 + $0x2a8] sm:$0xff]
    %v3003 = vld [vmem:[%s5 + $0x2b0] sm:$0xff]
    %v3004 = vld [vmem:[%s5 + $0x2b8] sm:$0xf]
    %v3005 = vld [vmem:[%s5 + $0x2bc] sm:$0xff]
    %v3006 = vld [vmem:[%s5 + $0x2c4] sm:$0xff]
    %v3007 = vld [vmem:[%s5 + $0x2cc] sm:$0xff]
    %v3008 = vld [vmem:[%s5 + $0x2d4] sm:$0xff]
    %v3009 = vld [vmem:[%s5 + $0x2dc] sm:$0xff]
    %v3010 = vld [vmem:[%s5 + $0x2e4] sm:$0xff]
    %v3011 = vld [vmem:[%s5 + $0x2ec] sm:$0xff]
    %v3012 = vld [vmem:[%s5 + $0x2f4] sm:$0xff]
    %v3013 = vld [vmem:[%s5 + $0x2fc] sm:$0xff]
    %v3014 = vld [vmem:[%s5 + $0x304] sm:$0xff]
    %v3015 = vld [vmem:[%s5 + $0x30c] sm:$0xff]
    %v3016 = vld [vmem:[%s5 + $0x314] sm:$0xff]
    %v3017 = vld [vmem:[%s5 + $0x31c] sm:$0xf]
    %v3018 = vld [vmem:[%s5 + $0x320] sm:$0xff]
    %v3019 = vld [vmem:[%s5 + $0x328] sm:$0xff]
    %v3020 = vld [vmem:[%s5 + $0x330] sm:$0xff]
    %v3021 = vld [vmem:[%s5 + $0x338] sm:$0xff]
    %v3022 = vld [vmem:[%s5 + $0x340] sm:$0xff]
    %v3023 = vld [vmem:[%s5 + $0x348] sm:$0xff]
    %v3024 = vld [vmem:[%s5 + $0x350] sm:$0xff]
    %v3025 = vld [vmem:[%s5 + $0x358] sm:$0xff]
    %v3026 = vld [vmem:[%s5 + $0x360] sm:$0xff]
    %v3027 = vld [vmem:[%s5 + $0x368] sm:$0xff]
    %v3028 = vld [vmem:[%s5 + $0x370] sm:$0xff]
    %v3029 = vld [vmem:[%s5 + $0x378] sm:$0xff]
    %v3030 = vld [vmem:[%s5 + $0x380] sm:$0xf]
    %v3031 = vld [vmem:[%s5 + $0x384] sm:$0xff]
    %v3032 = vld [vmem:[%s5 + $0x38c] sm:$0xff]
    %v3033 = vld [vmem:[%s5 + $0x394] sm:$0xff]
    %v3034 = vld [vmem:[%s5 + $0x39c] sm:$0xff]
    %v3035 = vld [vmem:[%s5 + $0x3a4] sm:$0xff]
    %v3036 = vld [vmem:[%s5 + $0x3ac] sm:$0xff]
    %v3037 = vld [vmem:[%s5 + $0x3b4] sm:$0xff]
    %v3038 = vld [vmem:[%s5 + $0x3bc] sm:$0xff]
    %v3039 = vld [vmem:[%s5 + $0x3c4] sm:$0xff]
    %v3040 = vld [vmem:[%s5 + $0x3cc] sm:$0xff]
    %v3041 = vld [vmem:[%s5 + $0x3d4] sm:$0xff]
    %v3042 = vld [vmem:[%s5 + $0x3dc] sm:$0xff]
    %v3043 = vld [vmem:[%s5 + $0x3e4] sm:$0xf]
    %3048 = vrot.lane.b32.xlu0 %v1133, 48
    %v3049 = vpop.permute.xlu0 %3048
    %3050 = vrot.lane.b32.xlu0 %v2912, 48
    %v3051 = vpop.permute.xlu0 %3050
    %3052 = vrot.lane.b32.xlu0 %v1134, 48
    %v3053 = vpop.permute.xlu0 %3052
    %3054 = vrot.lane.b32.xlu0 %v2913, 48
    %v3055 = vpop.permute.xlu0 %3054
    %vm3056 = vcmask 392192
    %v3057 = vsel %vm3056, %v3049, %v3051
    %v3058 = vsel %vm3056, %v3053, %v3055
    %v3189 = vunpack.c.l.b16 %v2914
    %v3190 = vunpack.c.h.b16 %v2914
    %v3191 = vunpack.c.l.b16 %v2915
    %v3192 = vunpack.c.h.b16 %v2915
    %v3193 = vunpack.c.l.b16 %v2916
    %v3194 = vunpack.c.h.b16 %v2916
    %v3195 = vunpack.c.l.b16 %v2917
    %v3196 = vunpack.c.h.b16 %v2917
    %v3197 = vunpack.c.l.b16 %v2918
    %v3198 = vunpack.c.h.b16 %v2918
    %v3199 = vunpack.c.l.b16 %v2919
    %v3200 = vunpack.c.h.b16 %v2919
    %v3201 = vunpack.c.l.b16 %v2920
    %v3202 = vunpack.c.h.b16 %v2920
    %v3203 = vunpack.c.l.b16 %v2921
    %v3204 = vunpack.c.h.b16 %v2921
    %v3205 = vunpack.c.l.b16 %v2922
    %v3206 = vunpack.c.h.b16 %v2922
    %v3207 = vunpack.c.l.b16 %v2923
    %v3208 = vunpack.c.h.b16 %v2923
    %v3209 = vunpack.c.l.b16 %v2924
    %v3210 = vunpack.c.h.b16 %v2924
    %v3211 = vunpack.c.l.b16 %v2925
    %v3212 = vunpack.c.h.b16 %v2925
    %v3213 = vunpack.c.l.b16 %v2926
    %v3214 = vunpack.c.l.b16 %v2927
    %v3215 = vunpack.c.h.b16 %v2927
    %v3216 = vunpack.c.l.b16 %v2928
    %v3217 = vunpack.c.h.b16 %v2928
    %v3218 = vunpack.c.l.b16 %v2929
    %v3219 = vunpack.c.h.b16 %v2929
    %v3220 = vunpack.c.l.b16 %v2930
    %v3221 = vunpack.c.h.b16 %v2930
    %v3222 = vunpack.c.l.b16 %v2931
    %v3223 = vunpack.c.h.b16 %v2931
    %v3224 = vunpack.c.l.b16 %v2932
    %v3225 = vunpack.c.h.b16 %v2932
    %v3226 = vunpack.c.l.b16 %v2933
    %v3227 = vunpack.c.h.b16 %v2933
    %v3228 = vunpack.c.l.b16 %v2934
    %v3229 = vunpack.c.h.b16 %v2934
    %v3230 = vunpack.c.l.b16 %v2935
    %v3231 = vunpack.c.h.b16 %v2935
    %v3232 = vunpack.c.l.b16 %v2936
    %v3233 = vunpack.c.h.b16 %v2936
    %v3234 = vunpack.c.l.b16 %v2937
    %v3235 = vunpack.c.h.b16 %v2937
    %v3236 = vunpack.c.l.b16 %v2938
    %v3237 = vunpack.c.h.b16 %v2938
    %v3238 = vunpack.c.l.b16 %v2939
    %v3239 = vunpack.c.l.b16 %v2940
    %v3240 = vunpack.c.h.b16 %v2940
    %v3241 = vunpack.c.l.b16 %v2941
    %v3242 = vunpack.c.h.b16 %v2941
    %v3243 = vunpack.c.l.b16 %v2942
    %v3244 = vunpack.c.h.b16 %v2942
    %v3245 = vunpack.c.l.b16 %v2943
    %v3246 = vunpack.c.h.b16 %v2943
    %v3247 = vunpack.c.l.b16 %v2944
    %v3248 = vunpack.c.h.b16 %v2944
    %v3249 = vunpack.c.l.b16 %v2945
    %v3250 = vunpack.c.h.b16 %v2945
    %v3251 = vunpack.c.l.b16 %v2946
    %v3252 = vunpack.c.h.b16 %v2946
    %v3253 = vunpack.c.l.b16 %v2947
    %v3254 = vunpack.c.h.b16 %v2947
    %v3255 = vunpack.c.l.b16 %v2948
    %v3256 = vunpack.c.h.b16 %v2948
    %v3257 = vunpack.c.l.b16 %v2949
    %v3258 = vunpack.c.h.b16 %v2949
    %v3259 = vunpack.c.l.b16 %v2950
    %v3260 = vunpack.c.h.b16 %v2950
    %v3261 = vunpack.c.l.b16 %v2951
    %v3262 = vunpack.c.h.b16 %v2951
    %v3263 = vunpack.c.l.b16 %v2952
    %v3264 = vunpack.c.l.b16 %v2953
    %v3265 = vunpack.c.h.b16 %v2953
    %v3266 = vunpack.c.l.b16 %v2954
    %v3267 = vunpack.c.h.b16 %v2954
    %v3268 = vunpack.c.l.b16 %v2955
    %v3269 = vunpack.c.h.b16 %v2955
    %v3270 = vunpack.c.l.b16 %v2956
    %v3271 = vunpack.c.h.b16 %v2956
    %v3272 = vunpack.c.l.b16 %v2957
    %v3273 = vunpack.c.h.b16 %v2957
    %v3274 = vunpack.c.l.b16 %v2958
    %v3275 = vunpack.c.h.b16 %v2958
    %v3276 = vunpack.c.l.b16 %v2959
    %v3277 = vunpack.c.h.b16 %v2959
    %v3278 = vunpack.c.l.b16 %v2960
    %v3279 = vunpack.c.h.b16 %v2960
    %v3280 = vunpack.c.l.b16 %v2961
    %v3281 = vunpack.c.h.b16 %v2961
    %v3282 = vunpack.c.l.b16 %v2962
    %v3283 = vunpack.c.h.b16 %v2962
    %v3284 = vunpack.c.l.b16 %v2963
    %v3285 = vunpack.c.h.b16 %v2963
    %v3286 = vunpack.c.l.b16 %v2964
    %v3287 = vunpack.c.h.b16 %v2964
    %v3288 = vunpack.c.l.b16 %v2965
    %v3289 = vunpack.c.l.b16 %v2966
    %v3290 = vunpack.c.h.b16 %v2966
    %v3291 = vunpack.c.l.b16 %v2967
    %v3292 = vunpack.c.h.b16 %v2967
    %v3293 = vunpack.c.l.b16 %v2968
    %v3294 = vunpack.c.h.b16 %v2968
    %v3295 = vunpack.c.l.b16 %v2969
    %v3296 = vunpack.c.h.b16 %v2969
    %v3297 = vunpack.c.l.b16 %v2970
    %v3298 = vunpack.c.h.b16 %v2970
    %v3299 = vunpack.c.l.b16 %v2971
    %v3300 = vunpack.c.h.b16 %v2971
    %v3301 = vunpack.c.l.b16 %v2972
    %v3302 = vunpack.c.h.b16 %v2972
    %v3303 = vunpack.c.l.b16 %v2973
    %v3304 = vunpack.c.h.b16 %v2973
    %v3305 = vunpack.c.l.b16 %v2974
    %v3306 = vunpack.c.h.b16 %v2974
    %v3307 = vunpack.c.l.b16 %v2975
    %v3308 = vunpack.c.h.b16 %v2975
    %v3309 = vunpack.c.l.b16 %v2976
    %v3310 = vunpack.c.h.b16 %v2976
    %v3311 = vunpack.c.l.b16 %v2977
    %v3312 = vunpack.c.h.b16 %v2977
    %v3313 = vunpack.c.l.b16 %v2978
    %v3314 = vunpack.c.l.b16 %v2979
    %v3315 = vunpack.c.h.b16 %v2979
    %v3316 = vunpack.c.l.b16 %v2980
    %v3317 = vunpack.c.h.b16 %v2980
    %v3318 = vunpack.c.l.b16 %v2981
    %v3319 = vunpack.c.h.b16 %v2981
    %v3320 = vunpack.c.l.b16 %v2982
    %v3321 = vunpack.c.h.b16 %v2982
    %v3322 = vunpack.c.l.b16 %v2983
    %v3323 = vunpack.c.h.b16 %v2983
    %v3324 = vunpack.c.l.b16 %v2984
    %v3325 = vunpack.c.h.b16 %v2984
    %v3326 = vunpack.c.l.b16 %v2985
    %v3327 = vunpack.c.h.b16 %v2985
    %v3328 = vunpack.c.l.b16 %v2986
    %v3329 = vunpack.c.h.b16 %v2986
    %v3330 = vunpack.c.l.b16 %v2987
    %v3331 = vunpack.c.h.b16 %v2987
    %v3332 = vunpack.c.l.b16 %v2988
    %v3333 = vunpack.c.h.b16 %v2988
    %v3334 = vunpack.c.l.b16 %v2989
    %v3335 = vunpack.c.h.b16 %v2989
    %v3336 = vunpack.c.l.b16 %v2990
    %v3337 = vunpack.c.h.b16 %v2990
    %v3338 = vunpack.c.l.b16 %v2991
    %v3339 = vunpack.c.l.b16 %v2992
    %v3340 = vunpack.c.h.b16 %v2992
    %v3341 = vunpack.c.l.b16 %v2993
    %v3342 = vunpack.c.h.b16 %v2993
    %v3343 = vunpack.c.l.b16 %v2994
    %v3344 = vunpack.c.h.b16 %v2994
    %v3345 = vunpack.c.l.b16 %v2995
    %v3346 = vunpack.c.h.b16 %v2995
    %v3347 = vunpack.c.l.b16 %v2996
    %v3348 = vunpack.c.h.b16 %v2996
    %v3349 = vunpack.c.l.b16 %v2997
    %v3350 = vunpack.c.h.b16 %v2997
    %v3351 = vunpack.c.l.b16 %v2998
    %v3352 = vunpack.c.h.b16 %v2998
    %v3353 = vunpack.c.l.b16 %v2999
    %v3354 = vunpack.c.h.b16 %v2999
    %v3355 = vunpack.c.l.b16 %v3000
    %v3356 = vunpack.c.h.b16 %v3000
    %v3357 = vunpack.c.l.b16 %v3001
    %v3358 = vunpack.c.h.b16 %v3001
    %v3359 = vunpack.c.l.b16 %v3002
    %v3360 = vunpack.c.h.b16 %v3002
    %v3361 = vunpack.c.l.b16 %v3003
    %v3362 = vunpack.c.h.b16 %v3003
    %v3363 = vunpack.c.l.b16 %v3004
    %v3364 = vunpack.c.l.b16 %v3005
    %v3365 = vunpack.c.h.b16 %v3005
    %v3366 = vunpack.c.l.b16 %v3006
    %v3367 = vunpack.c.h.b16 %v3006
    %v3368 = vunpack.c.l.b16 %v3007
    %v3369 = vunpack.c.h.b16 %v3007
    %v3370 = vunpack.c.l.b16 %v3008
    %v3371 = vunpack.c.h.b16 %v3008
    %v3372 = vunpack.c.l.b16 %v3009
    %v3373 = vunpack.c.h.b16 %v3009
    %v3374 = vunpack.c.l.b16 %v3010
    %v3375 = vunpack.c.h.b16 %v3010
    %v3376 = vunpack.c.l.b16 %v3011
    %v3377 = vunpack.c.h.b16 %v3011
    %v3378 = vunpack.c.l.b16 %v3012
    %v3379 = vunpack.c.h.b16 %v3012
    %v3380 = vunpack.c.l.b16 %v3013
    %v3381 = vunpack.c.h.b16 %v3013
    %v3382 = vunpack.c.l.b16 %v3014
    %v3383 = vunpack.c.h.b16 %v3014
    %v3384 = vunpack.c.l.b16 %v3015
    %v3385 = vunpack.c.h.b16 %v3015
    %v3386 = vunpack.c.l.b16 %v3016
    %v3387 = vunpack.c.h.b16 %v3016
    %v3388 = vunpack.c.l.b16 %v3017
    %v3389 = vunpack.c.l.b16 %v3018
    %v3390 = vunpack.c.h.b16 %v3018
    %v3391 = vunpack.c.l.b16 %v3019
    %v3392 = vunpack.c.h.b16 %v3019
    %v3393 = vunpack.c.l.b16 %v3020
    %v3394 = vunpack.c.h.b16 %v3020
    %v3395 = vunpack.c.l.b16 %v3021
    %v3396 = vunpack.c.h.b16 %v3021
    %v3397 = vunpack.c.l.b16 %v3022
    %v3398 = vunpack.c.h.b16 %v3022
    %v3399 = vunpack.c.l.b16 %v3023
    %v3400 = vunpack.c.h.b16 %v3023
    %v3401 = vunpack.c.l.b16 %v3024
    %v3402 = vunpack.c.h.b16 %v3024
    %v3403 = vunpack.c.l.b16 %v3025
    %v3404 = vunpack.c.h.b16 %v3025
    %v3405 = vunpack.c.l.b16 %v3026
    %v3406 = vunpack.c.h.b16 %v3026
    %v3407 = vunpack.c.l.b16 %v3027
    %v3408 = vunpack.c.h.b16 %v3027
    %v3409 = vunpack.c.l.b16 %v3028
    %v3410 = vunpack.c.h.b16 %v3028
    %v3411 = vunpack.c.l.b16 %v3029
    %v3412 = vunpack.c.h.b16 %v3029
    %v3413 = vunpack.c.l.b16 %v3030
    %v3414 = vunpack.c.l.b16 %v3031
    %v3415 = vunpack.c.h.b16 %v3031
    %v3416 = vunpack.c.l.b16 %v3032
    %v3417 = vunpack.c.h.b16 %v3032
    %v3418 = vunpack.c.l.b16 %v3033
    %v3419 = vunpack.c.h.b16 %v3033
    %v3420 = vunpack.c.l.b16 %v3034
    %v3421 = vunpack.c.h.b16 %v3034
    %v3422 = vunpack.c.l.b16 %v3035
    %v3423 = vunpack.c.h.b16 %v3035
    %v3424 = vunpack.c.l.b16 %v3036
    %v3425 = vunpack.c.h.b16 %v3036
    %v3426 = vunpack.c.l.b16 %v3037
    %v3427 = vunpack.c.h.b16 %v3037
    %v3428 = vunpack.c.l.b16 %v3038
    %v3429 = vunpack.c.h.b16 %v3038
    %v3430 = vunpack.c.l.b16 %v3039
    %v3431 = vunpack.c.h.b16 %v3039
    %v3432 = vunpack.c.l.b16 %v3040
    %v3433 = vunpack.c.h.b16 %v3040
    %v3434 = vunpack.c.l.b16 %v3041
    %v3435 = vunpack.c.h.b16 %v3041
    %v3436 = vunpack.c.l.b16 %v3042
    %v3437 = vunpack.c.h.b16 %v3042
    %v3438 = vunpack.c.l.b16 %v3043
    %v3439 = vpack.c.b16 %v3214, %v3189
    %v3440 = vpack.c.b16 %v3215, %v3190
    %v3441 = vpack.c.b16 %v3216, %v3191
    %v3442 = vpack.c.b16 %v3217, %v3192
    %v3443 = vpack.c.b16 %v3218, %v3193
    %v3444 = vpack.c.b16 %v3219, %v3194
    %v3445 = vpack.c.b16 %v3220, %v3195
    %v3446 = vpack.c.b16 %v3221, %v3196
    %v3447 = vpack.c.b16 %v3222, %v3197
    %v3448 = vpack.c.b16 %v3223, %v3198
    %v3449 = vpack.c.b16 %v3224, %v3199
    %v3450 = vpack.c.b16 %v3225, %v3200
    %v3451 = vpack.c.b16 %v3226, %v3201
    %v3452 = vpack.c.b16 %v3227, %v3202
    %v3453 = vpack.c.b16 %v3228, %v3203
    %v3454 = vpack.c.b16 %v3229, %v3204
    %v3455 = vpack.c.b16 %v3230, %v3205
    %v3456 = vpack.c.b16 %v3231, %v3206
    %v3457 = vpack.c.b16 %v3232, %v3207
    %v3458 = vpack.c.b16 %v3233, %v3208
    %v3459 = vpack.c.b16 %v3234, %v3209
    %v3460 = vpack.c.b16 %v3235, %v3210
    %v3461 = vpack.c.b16 %v3236, %v3211
    %v3462 = vpack.c.b16 %v3237, %v3212
    %v3463 = vpack.c.b16 %v3238, %v3213
    %v3464 = vpack.c.b16 %v3264, %v3239
    %v3465 = vpack.c.b16 %v3265, %v3240
    %v3466 = vpack.c.b16 %v3266, %v3241
    %v3467 = vpack.c.b16 %v3267, %v3242
    %v3468 = vpack.c.b16 %v3268, %v3243
    %v3469 = vpack.c.b16 %v3269, %v3244
    %v3470 = vpack.c.b16 %v3270, %v3245
    %v3471 = vpack.c.b16 %v3271, %v3246
    %v3472 = vpack.c.b16 %v3272, %v3247
    %v3473 = vpack.c.b16 %v3273, %v3248
    %v3474 = vpack.c.b16 %v3274, %v3249
    %v3475 = vpack.c.b16 %v3275, %v3250
    %v3476 = vpack.c.b16 %v3276, %v3251
    %v3477 = vpack.c.b16 %v3277, %v3252
    %v3478 = vpack.c.b16 %v3278, %v3253
    %v3479 = vpack.c.b16 %v3279, %v3254
    %v3480 = vpack.c.b16 %v3280, %v3255
    %v3481 = vpack.c.b16 %v3281, %v3256
    %v3482 = vpack.c.b16 %v3282, %v3257
    %v3483 = vpack.c.b16 %v3283, %v3258
    %v3484 = vpack.c.b16 %v3284, %v3259
    %v3485 = vpack.c.b16 %v3285, %v3260
    %v3486 = vpack.c.b16 %v3286, %v3261
    %v3487 = vpack.c.b16 %v3287, %v3262
    %v3488 = vpack.c.b16 %v3288, %v3263
    %v3489 = vpack.c.b16 %v3314, %v3289
    %v3490 = vpack.c.b16 %v3315, %v3290
    %v3491 = vpack.c.b16 %v3316, %v3291
    %v3492 = vpack.c.b16 %v3317, %v3292
    %v3493 = vpack.c.b16 %v3318, %v3293
    %v3494 = vpack.c.b16 %v3319, %v3294
    %v3495 = vpack.c.b16 %v3320, %v3295
    %v3496 = vpack.c.b16 %v3321, %v3296
    %v3497 = vpack.c.b16 %v3322, %v3297
    %v3498 = vpack.c.b16 %v3323, %v3298
    %v3499 = vpack.c.b16 %v3324, %v3299
    %v3500 = vpack.c.b16 %v3325, %v3300
    %v3501 = vpack.c.b16 %v3326, %v3301
    %v3502 = vpack.c.b16 %v3327, %v3302
    %v3503 = vpack.c.b16 %v3328, %v3303
    %v3504 = vpack.c.b16 %v3329, %v3304
    %v3505 = vpack.c.b16 %v3330, %v3305
    %v3506 = vpack.c.b16 %v3331, %v3306
    %v3507 = vpack.c.b16 %v3332, %v3307
    %v3508 = vpack.c.b16 %v3333, %v3308
    %v3509 = vpack.c.b16 %v3334, %v3309
    %v3510 = vpack.c.b16 %v3335, %v3310
    %v3511 = vpack.c.b16 %v3336, %v3311
    %v3512 = vpack.c.b16 %v3337, %v3312
    %v3513 = vpack.c.b16 %v3338, %v3313
    %v3514 = vpack.c.b16 %v3364, %v3339
    %v3515 = vpack.c.b16 %v3365, %v3340
    %v3516 = vpack.c.b16 %v3366, %v3341
    %v3517 = vpack.c.b16 %v3367, %v3342
    %v3518 = vpack.c.b16 %v3368, %v3343
    %v3519 = vpack.c.b16 %v3369, %v3344
    %v3520 = vpack.c.b16 %v3370, %v3345
    %v3521 = vpack.c.b16 %v3371, %v3346
    %v3522 = vpack.c.b16 %v3372, %v3347
    %v3523 = vpack.c.b16 %v3373, %v3348
    %v3524 = vpack.c.b16 %v3374, %v3349
    %v3525 = vpack.c.b16 %v3375, %v3350
    %v3526 = vpack.c.b16 %v3376, %v3351
    %v3527 = vpack.c.b16 %v3377, %v3352
    %v3528 = vpack.c.b16 %v3378, %v3353
    %v3529 = vpack.c.b16 %v3379, %v3354
    %v3530 = vpack.c.b16 %v3380, %v3355
    %v3531 = vpack.c.b16 %v3381, %v3356
    %v3532 = vpack.c.b16 %v3382, %v3357
    %v3533 = vpack.c.b16 %v3383, %v3358
    %v3534 = vpack.c.b16 %v3384, %v3359
    %v3535 = vpack.c.b16 %v3385, %v3360
    %v3536 = vpack.c.b16 %v3386, %v3361
    %v3537 = vpack.c.b16 %v3387, %v3362
    %v3538 = vpack.c.b16 %v3388, %v3363
    %v3539 = vpack.c.b16 %v3414, %v3389
    %v3540 = vpack.c.b16 %v3415, %v3390
    %v3541 = vpack.c.b16 %v3416, %v3391
    %v3542 = vpack.c.b16 %v3417, %v3392
    %v3543 = vpack.c.b16 %v3418, %v3393
    %v3544 = vpack.c.b16 %v3419, %v3394
    %v3545 = vpack.c.b16 %v3420, %v3395
    %v3546 = vpack.c.b16 %v3421, %v3396
    %v3547 = vpack.c.b16 %v3422, %v3397
    %v3548 = vpack.c.b16 %v3423, %v3398
    %v3549 = vpack.c.b16 %v3424, %v3399
    %v3550 = vpack.c.b16 %v3425, %v3400
    %v3551 = vpack.c.b16 %v3426, %v3401
    %v3552 = vpack.c.b16 %v3427, %v3402
    %v3553 = vpack.c.b16 %v3428, %v3403
    %v3554 = vpack.c.b16 %v3429, %v3404
    %v3555 = vpack.c.b16 %v3430, %v3405
    %v3556 = vpack.c.b16 %v3431, %v3406
    %v3557 = vpack.c.b16 %v3432, %v3407
    %v3558 = vpack.c.b16 %v3433, %v3408
    %v3559 = vpack.c.b16 %v3434, %v3409
    %v3560 = vpack.c.b16 %v3435, %v3410
    %v3561 = vpack.c.b16 %v3436, %v3411
    %v3562 = vpack.c.b16 %v3437, %v3412
    %v3563 = vpack.c.b16 %v3438, %v3413
    %v3690 = vsel %vm1415, %v3057, 0
    %v3693 = vsel %vm1415, %v3058, 0
    %3695 = vmatprep.subr.bf16.mxu0 %v3440
    %3696 = vmatpush1.bf16.msra.mxu0 %v3439
    %3697 = vmatprep.subr.bf16.mxu0 %v3465
    %3698 = vmatpush1.bf16.msra.mxu0 %v3464
    %3699 = vmatprep.subr.bf16.mxu0 %v3490
    %3700 = vmatpush1.bf16.msra.mxu0 %v3489
    %3701 = vmatprep.subr.bf16.mxu0 %v3515
    %3702 = vmatpush1.bf16.msra.mxu0 %v3514
    %3703 = vmatprep.subr.bf16.mxu0 %v3540
    %3704 = vmatpush1.bf16.msra.mxu0 %v3539
    %3705 = vmatprep.subr.bf16.mxu0 0
    %3706 = vmatpush1.bf16.msra.mxu0 0
    %3707 = vmatprep.subr.bf16.mxu0 0
    %3708 = vmatpush1.bf16.msra.mxu0 0
    %3709 = vmatprep.subr.bf16.mxu0 0
    %3710 = vmatpush1.bf16.msra.mxu0 0
    %3711 = vmatprep.subr.bf16.mxu0 0
    %3712 = vmatpush1.bf16.msra.mxu0 0
    %3713 = vmatprep.subr.bf16.mxu0 0
    %3714 = vmatpush1.bf16.msra.mxu0 0
    %3715 = vmatprep.subr.bf16.mxu0 0
    %3716 = vmatpush1.bf16.msra.mxu0 0
    %3717 = vmatprep.subr.bf16.mxu0 0
    %3718 = vmatpush1.bf16.msra.mxu0 0
    %3719 = vmatprep.subr.bf16.mxu0 0
    %3720 = vmatpush1.bf16.msra.mxu0 0
    %3721 = vmatprep.subr.bf16.mxu0 0
    %3722 = vmatpush1.bf16.msra.mxu0 0
    %3723 = vmatprep.subr.bf16.mxu0 0
    %3724 = vmatpush1.bf16.msra.mxu0 0
    %3725 = vmatprep.subr.bf16.mxu0 0
    %3726 = vmatpush1.bf16.msra.mxu0 0
    %3727 = vmatprep.mubr.bf16.mxu0 0
    %3728 = vmatmul.mubr.bf16.gmra.mrb[0].mxu0 %v3690
    %v3729 = vpop.f32.mrb[0].mxu0
    %v3730 = vadd.f32 0.0, %v3729
    %v3731 = vpop.f32.mrb[0].mxu0
    %v3732 = vadd.f32 0.0, %v3731
    %v3733 = vpop.f32.mrb[0].mxu0
    %v3734 = vadd.f32 0.0, %v3733
    %v3735 = vpop.f32.mrb[0].mxu0
    %v3736 = vadd.f32 0.0, %v3735
    %3737 = vmatprep.mubr.bf16.mxu0 0
    %3738 = vmatmul.mubr.bf16.gmra.mrb[0].mxu0 %v3693
    %v3739 = vpop.f32.mrb[0].mxu0
    %v3740 = vadd.f32 0.0, %v3739
    %v3741 = vpop.f32.mrb[0].mxu0
    %v3742 = vadd.f32 0.0, %v3741
    %v3743 = vpop.f32.mrb[0].mxu0
    %v3744 = vadd.f32 0.0, %v3743
    %v3745 = vpop.f32.mrb[0].mxu0
    %v3746 = vadd.f32 0.0, %v3745
    %3747 = vdwg.mxu0
    %3748 = vmatprep.subr.bf16.mxu0 %v3442
    %3749 = vmatpush1.bf16.msra.mxu0 %v3441
    %3750 = vmatprep.subr.bf16.mxu0 %v3467
    %3751 = vmatpush1.bf16.msra.mxu0 %v3466
    %3752 = vmatprep.subr.bf16.mxu0 %v3492
    %3753 = vmatpush1.bf16.msra.mxu0 %v3491
    %3754 = vmatprep.subr.bf16.mxu0 %v3517
    %3755 = vmatpush1.bf16.msra.mxu0 %v3516
    %3756 = vmatprep.subr.bf16.mxu0 %v3542
    %3757 = vmatpush1.bf16.msra.mxu0 %v3541
    %3758 = vmatprep.subr.bf16.mxu0 0
    %3759 = vmatpush1.bf16.msra.mxu0 0
    %3760 = vmatprep.subr.bf16.mxu0 0
    %3761 = vmatpush1.bf16.msra.mxu0 0
    %3762 = vmatprep.subr.bf16.mxu0 0
    %3763 = vmatpush1.bf16.msra.mxu0 0
    %3764 = vmatprep.subr.bf16.mxu0 0
    %3765 = vmatpush1.bf16.msra.mxu0 0
    %3766 = vmatprep.subr.bf16.mxu0 0
    %3767 = vmatpush1.bf16.msra.mxu0 0
    %3768 = vmatprep.subr.bf16.mxu0 0
    %3769 = vmatpush1.bf16.msra.mxu0 0
    %3770 = vmatprep.subr.bf16.mxu0 0
    %3771 = vmatpush1.bf16.msra.mxu0 0
    %3772 = vmatprep.subr.bf16.mxu0 0
    %3773 = vmatpush1.bf16.msra.mxu0 0
    %3774 = vmatprep.subr.bf16.mxu0 0
    %3775 = vmatpush1.bf16.msra.mxu0 0
    %3776 = vmatprep.subr.bf16.mxu0 0
    %3777 = vmatpush1.bf16.msra.mxu0 0
    %3778 = vmatprep.subr.bf16.mxu0 0
    %3779 = vmatpush1.bf16.msra.mxu0 0
    %3780 = vmatprep.mubr.bf16.mxu0 0
    %3781 = vmatmul.mubr.bf16.gmra.mrb[0].mxu0 %v3690
    %v3782 = vpop.f32.mrb[0].mxu0
    %v3783 = vadd.f32 0.0, %v3782
    %v3784 = vpop.f32.mrb[0].mxu0
    %v3785 = vadd.f32 0.0, %v3784
    %v3786 = vpop.f32.mrb[0].mxu0
    %v3787 = vadd.f32 0.0, %v3786
    %v3788 = vpop.f32.mrb[0].mxu0
    %v3789 = vadd.f32 0.0, %v3788
    %3790 = vmatprep.mubr.bf16.mxu0 0
    %3791 = vmatmul.mubr.bf16.gmra.mrb[0].mxu0 %v3693
    %v3792 = vpop.f32.mrb[0].mxu0
    %v3793 = vadd.f32 0.0, %v3792
    %v3794 = vpop.f32.mrb[0].mxu0
    %v3795 = vadd.f32 0.0, %v3794
    %v3796 = vpop.f32.mrb[0].mxu0
    %v3797 = vadd.f32 0.0, %v3796
    %v3798 = vpop.f32.mrb[0].mxu0
    %v3799 = vadd.f32 0.0, %v3798
    %3800 = vdwg.mxu0
    %3801 = vmatprep.subr.bf16.mxu0 %v3444
    %3802 = vmatpush1.bf16.msra.mxu0 %v3443
    %3803 = vmatprep.subr.bf16.mxu0 %v3469
    %3804 = vmatpush1.bf16.msra.mxu0 %v3468
    %3805 = vmatprep.subr.bf16.mxu0 %v3494
    %3806 = vmatpush1.bf16.msra.mxu0 %v3493
    %3807 = vmatprep.subr.bf16.mxu0 %v3519
    %3808 = vmatpush1.bf16.msra.mxu0 %v3518
    %3809 = vmatprep.subr.bf16.mxu0 %v3544
    %3810 = vmatpush1.bf16.msra.mxu0 %v3543
    %3811 = vmatprep.subr.bf16.mxu0 0
    %3812 = vmatpush1.bf16.msra.mxu0 0
    %3813 = vmatprep.subr.bf16.mxu0 0
    %3814 = vmatpush1.bf16.msra.mxu0 0
    %3815 = vmatprep.subr.bf16.mxu0 0
    %3816 = vmatpush1.bf16.msra.mxu0 0
    %3817 = vmatprep.subr.bf16.mxu0 0
    %3818 = vmatpush1.bf16.msra.mxu0 0
    %3819 = vmatprep.subr.bf16.mxu0 0
    %3820 = vmatpush1.bf16.msra.mxu0 0
    %3821 = vmatprep.subr.bf16.mxu0 0
    %3822 = vmatpush1.bf16.msra.mxu0 0
    %3823 = vmatprep.subr.bf16.mxu0 0
    %3824 = vmatpush1.bf16.msra.mxu0 0
    %3825 = vmatprep.subr.bf16.mxu0 0
    %3826 = vmatpush1.bf16.msra.mxu0 0
    %3827 = vmatprep.subr.bf16.mxu0 0
    %3828 = vmatpush1.bf16.msra.mxu0 0
    %3829 = vmatprep.subr.bf16.mxu0 0
    %3830 = vmatpush1.bf16.msra.mxu0 0
    %3831 = vmatprep.subr.bf16.mxu0 0
    %3832 = vmatpush1.bf16.msra.mxu0 0
    %3833 = vmatprep.mubr.bf16.mxu0 0
    %3834 = vmatmul.mubr.bf16.gmra.mrb[0].mxu0 %v3690
    %v3835 = vpop.f32.mrb[0].mxu0
    %v3836 = vadd.f32 0.0, %v3835
    %v3837 = vpop.f32.mrb[0].mxu0
    %v3838 = vadd.f32 0.0, %v3837
    %v3839 = vpop.f32.mrb[0].mxu0
    %v3840 = vadd.f32 0.0, %v3839
    %v3841 = vpop.f32.mrb[0].mxu0
    %v3842 = vadd.f32 0.0, %v3841
    %3843 = vmatprep.mubr.bf16.mxu0 0
    %3844 = vmatmul.mubr.bf16.gmra.mrb[0].mxu0 %v3693
    %v3845 = vpop.f32.mrb[0].mxu0
    %v3846 = vadd.f32 0.0, %v3845
    %v3847 = vpop.f32.mrb[0].mxu0
    %v3848 = vadd.f32 0.0, %v3847
    %v3849 = vpop.f32.mrb[0].mxu0
    %v3850 = vadd.f32 0.0, %v3849
    %v3851 = vpop.f32.mrb[0].mxu0
    %v3852 = vadd.f32 0.0, %v3851
    %3853 = vdwg.mxu0
    %3854 = vmatprep.subr.bf16.mxu0 %v3446
    %3855 = vmatpush1.bf16.msra.mxu0 %v3445
    %3856 = vmatprep.subr.bf16.mxu0 %v3471
    %3857 = vmatpush1.bf16.msra.mxu0 %v3470
    %3858 = vmatprep.subr.bf16.mxu0 %v3496
    %3859 = vmatpush1.bf16.msra.mxu0 %v3495
    %3860 = vmatprep.subr.bf16.mxu0 %v3521
    %3861 = vmatpush1.bf16.msra.mxu0 %v3520
    %3862 = vmatprep.subr.bf16.mxu0 %v3546
    %3863 = vmatpush1.bf16.msra.mxu0 %v3545
    %3864 = vmatprep.subr.bf16.mxu0 0
    %3865 = vmatpush1.bf16.msra.mxu0 0
    %3866 = vmatprep.subr.bf16.mxu0 0
    %3867 = vmatpush1.bf16.msra.mxu0 0
    %3868 = vmatprep.subr.bf16.mxu0 0
    %3869 = vmatpush1.bf16.msra.mxu0 0
    %3870 = vmatprep.subr.bf16.mxu0 0
    %3871 = vmatpush1.bf16.msra.mxu0 0
    %3872 = vmatprep.subr.bf16.mxu0 0
    %3873 = vmatpush1.bf16.msra.mxu0 0
    %3874 = vmatprep.subr.bf16.mxu0 0
    %3875 = vmatpush1.bf16.msra.mxu0 0
    %3876 = vmatprep.subr.bf16.mxu0 0
    %3877 = vmatpush1.bf16.msra.mxu0 0
    %3878 = vmatprep.subr.bf16.mxu0 0
    %3879 = vmatpush1.bf16.msra.mxu0 0
    %3880 = vmatprep.subr.bf16.mxu0 0
    %3881 = vmatpush1.bf16.msra.mxu0 0
    %3882 = vmatprep.subr.bf16.mxu0 0
    %3883 = vmatpush1.bf16.msra.mxu0 0
    %3884 = vmatprep.subr.bf16.mxu0 0
    %3885 = vmatpush1.bf16.msra.mxu0 0
    %3886 = vmatprep.mubr.bf16.mxu0 0
    %3887 = vmatmul.mubr.bf16.gmra.mrb[0].mxu0 %v3690
    %v3888 = vpop.f32.mrb[0].mxu0
    %v3889 = vadd.f32 0.0, %v3888
    %v3890 = vpop.f32.mrb[0].mxu0
    %v3891 = vadd.f32 0.0, %v3890
    %v3892 = vpop.f32.mrb[0].mxu0
    %v3893 = vadd.f32 0.0, %v3892
    %v3894 = vpop.f32.mrb[0].mxu0
    %v3895 = vadd.f32 0.0, %v3894
    %3896 = vmatprep.mubr.bf16.mxu0 0
    %3897 = vmatmul.mubr.bf16.gmra.mrb[0].mxu0 %v3693
    %v3898 = vpop.f32.mrb[0].mxu0
    %v3899 = vadd.f32 0.0, %v3898
    %v3900 = vpop.f32.mrb[0].mxu0
    %v3901 = vadd.f32 0.0, %v3900
    %v3902 = vpop.f32.mrb[0].mxu0
    %v3903 = vadd.f32 0.0, %v3902
    %v3904 = vpop.f32.mrb[0].mxu0
    %v3905 = vadd.f32 0.0, %v3904
    %3906 = vdwg.mxu0
    %3907 = vmatprep.subr.bf16.mxu0 %v3448
    %3908 = vmatpush1.bf16.msra.mxu0 %v3447
    %3909 = vmatprep.subr.bf16.mxu0 %v3473
    %3910 = vmatpush1.bf16.msra.mxu0 %v3472
    %3911 = vmatprep.subr.bf16.mxu0 %v3498
    %3912 = vmatpush1.bf16.msra.mxu0 %v3497
    %3913 = vmatprep.subr.bf16.mxu0 %v3523
    %3914 = vmatpush1.bf16.msra.mxu0 %v3522
    %3915 = vmatprep.subr.bf16.mxu0 %v3548
    %3916 = vmatpush1.bf16.msra.mxu0 %v3547
    %3917 = vmatprep.subr.bf16.mxu0 0
    %3918 = vmatpush1.bf16.msra.mxu0 0
    %3919 = vmatprep.subr.bf16.mxu0 0
    %3920 = vmatpush1.bf16.msra.mxu0 0
    %3921 = vmatprep.subr.bf16.mxu0 0
    %3922 = vmatpush1.bf16.msra.mxu0 0
    %3923 = vmatprep.subr.bf16.mxu0 0
    %3924 = vmatpush1.bf16.msra.mxu0 0
    %3925 = vmatprep.subr.bf16.mxu0 0
    %3926 = vmatpush1.bf16.msra.mxu0 0
    %3927 = vmatprep.subr.bf16.mxu0 0
    %3928 = vmatpush1.bf16.msra.mxu0 0
    %3929 = vmatprep.subr.bf16.mxu0 0
    %3930 = vmatpush1.bf16.msra.mxu0 0
    %3931 = vmatprep.subr.bf16.mxu0 0
    %3932 = vmatpush1.bf16.msra.mxu0 0
    %3933 = vmatprep.subr.bf16.mxu0 0
    %3934 = vmatpush1.bf16.msra.mxu0 0
    %3935 = vmatprep.subr.bf16.mxu0 0
    %3936 = vmatpush1.bf16.msra.mxu0 0
    %3937 = vmatprep.subr.bf16.mxu0 0
    %3938 = vmatpush1.bf16.msra.mxu0 0
    %3939 = vmatprep.mubr.bf16.mxu0 0
    %3940 = vmatmul.mubr.bf16.gmra.mrb[0].mxu0 %v3690
    %v3941 = vpop.f32.mrb[0].mxu0
    %v3942 = vadd.f32 0.0, %v3941
    %v3943 = vpop.f32.mrb[0].mxu0
    %v3944 = vadd.f32 0.0, %v3943
    %v3945 = vpop.f32.mrb[0].mxu0
    %v3946 = vadd.f32 0.0, %v3945
    %v3947 = vpop.f32.mrb[0].mxu0
    %v3948 = vadd.f32 0.0, %v3947
    %3949 = vmatprep.mubr.bf16.mxu0 0
    %3950 = vmatmul.mubr.bf16.gmra.mrb[0].mxu0 %v3693
    %v3951 = vpop.f32.mrb[0].mxu0
    %v3952 = vadd.f32 0.0, %v3951
    %v3953 = vpop.f32.mrb[0].mxu0
    %v3954 = vadd.f32 0.0, %v3953
    %v3955 = vpop.f32.mrb[0].mxu0
    %v3956 = vadd.f32 0.0, %v3955
    %v3957 = vpop.f32.mrb[0].mxu0
    %v3958 = vadd.f32 0.0, %v3957
    %3959 = vdwg.mxu0
    %3960 = vmatprep.subr.bf16.mxu0 %v3450
    %3961 = vmatpush1.bf16.msra.mxu0 %v3449
    %3962 = vmatprep.subr.bf16.mxu0 %v3475
    %3963 = vmatpush1.bf16.msra.mxu0 %v3474
    %3964 = vmatprep.subr.bf16.mxu0 %v3500
    %3965 = vmatpush1.bf16.msra.mxu0 %v3499
    %3966 = vmatprep.subr.bf16.mxu0 %v3525
    %3967 = vmatpush1.bf16.msra.mxu0 %v3524
    %3968 = vmatprep.subr.bf16.mxu0 %v3550
    %3969 = vmatpush1.bf16.msra.mxu0 %v3549
    %3970 = vmatprep.subr.bf16.mxu0 0
    %3971 = vmatpush1.bf16.msra.mxu0 0
    %3972 = vmatprep.subr.bf16.mxu0 0
    %3973 = vmatpush1.bf16.msra.mxu0 0
    %3974 = vmatprep.subr.bf16.mxu0 0
    %3975 = vmatpush1.bf16.msra.mxu0 0
    %3976 = vmatprep.subr.bf16.mxu0 0
    %3977 = vmatpush1.bf16.msra.mxu0 0
    %3978 = vmatprep.subr.bf16.mxu0 0
    %3979 = vmatpush1.bf16.msra.mxu0 0
    %3980 = vmatprep.subr.bf16.mxu0 0
    %3981 = vmatpush1.bf16.msra.mxu0 0
    %3982 = vmatprep.subr.bf16.mxu0 0
    %3983 = vmatpush1.bf16.msra.mxu0 0
    %3984 = vmatprep.subr.bf16.mxu0 0
    %3985 = vmatpush1.bf16.msra.mxu0 0
    %3986 = vmatprep.subr.bf16.mxu0 0
    %3987 = vmatpush1.bf16.msra.mxu0 0
    %3988 = vmatprep.subr.bf16.mxu0 0
    %3989 = vmatpush1.bf16.msra.mxu0 0
    %3990 = vmatprep.subr.bf16.mxu0 0
    %3991 = vmatpush1.bf16.msra.mxu0 0
    %3992 = vmatprep.mubr.bf16.mxu0 0
    %3993 = vmatmul.mubr.bf16.gmra.mrb[0].mxu0 %v3690
    %v3994 = vpop.f32.mrb[0].mxu0
    %v3995 = vadd.f32 0.0, %v3994
    %v3996 = vpop.f32.mrb[0].mxu0
    %v3997 = vadd.f32 0.0, %v3996
    %v3998 = vpop.f32.mrb[0].mxu0
    %v3999 = vadd.f32 0.0, %v3998
    %v4000 = vpop.f32.mrb[0].mxu0
    %v4001 = vadd.f32 0.0, %v4000
    %4002 = vmatprep.mubr.bf16.mxu0 0
    %4003 = vmatmul.mubr.bf16.gmra.mrb[0].mxu0 %v3693
    %v4004 = vpop.f32.mrb[0].mxu0
    %v4005 = vadd.f32 0.0, %v4004
    %v4006 = vpop.f32.mrb[0].mxu0
    %v4007 = vadd.f32 0.0, %v4006
    %v4008 = vpop.f32.mrb[0].mxu0
    %v4009 = vadd.f32 0.0, %v4008
    %v4010 = vpop.f32.mrb[0].mxu0
    %v4011 = vadd.f32 0.0, %v4010
    %4012 = vdwg.mxu0
    %4013 = vmatprep.subr.bf16.mxu0 %v3452
    %4014 = vmatpush1.bf16.msra.mxu0 %v3451
    %4015 = vmatprep.subr.bf16.mxu0 %v3477
    %4016 = vmatpush1.bf16.msra.mxu0 %v3476
    %4017 = vmatprep.subr.bf16.mxu0 %v3502
    %4018 = vmatpush1.bf16.msra.mxu0 %v3501
    %4019 = vmatprep.subr.bf16.mxu0 %v3527
    %4020 = vmatpush1.bf16.msra.mxu0 %v3526
    %4021 = vmatprep.subr.bf16.mxu0 %v3552
    %4022 = vmatpush1.bf16.msra.mxu0 %v3551
    %4023 = vmatprep.subr.bf16.mxu0 0
    %4024 = vmatpush1.bf16.msra.mxu0 0
    %4025 = vmatprep.subr.bf16.mxu0 0
    %4026 = vmatpush1.bf16.msra.mxu0 0
    %4027 = vmatprep.subr.bf16.mxu0 0
    %4028 = vmatpush1.bf16.msra.mxu0 0
    %4029 = vmatprep.subr.bf16.mxu0 0
    %4030 = vmatpush1.bf16.msra.mxu0 0
    %4031 = vmatprep.subr.bf16.mxu0 0
    %4032 = vmatpush1.bf16.msra.mxu0 0
    %4033 = vmatprep.subr.bf16.mxu0 0
    %4034 = vmatpush1.bf16.msra.mxu0 0
    %4035 = vmatprep.subr.bf16.mxu0 0
    %4036 = vmatpush1.bf16.msra.mxu0 0
    %4037 = vmatprep.subr.bf16.mxu0 0
    %4038 = vmatpush1.bf16.msra.mxu0 0
    %4039 = vmatprep.subr.bf16.mxu0 0
    %4040 = vmatpush1.bf16.msra.mxu0 0
    %4041 = vmatprep.subr.bf16.mxu0 0
    %4042 = vmatpush1.bf16.msra.mxu0 0
    %4043 = vmatprep.subr.bf16.mxu0 0
    %4044 = vmatpush1.bf16.msra.mxu0 0
    %4045 = vmatprep.mubr.bf16.mxu0 0
    %4046 = vmatmul.mubr.bf16.gmra.mrb[0].mxu0 %v3690
    %v4047 = vpop.f32.mrb[0].mxu0
    %v4048 = vadd.f32 0.0, %v4047
    %v4049 = vpop.f32.mrb[0].mxu0
    %v4050 = vadd.f32 0.0, %v4049
    %v4051 = vpop.f32.mrb[0].mxu0
    %v4052 = vadd.f32 0.0, %v4051
    %v4053 = vpop.f32.mrb[0].mxu0
    %v4054 = vadd.f32 0.0, %v4053
    %4055 = vmatprep.mubr.bf16.mxu0 0
    %4056 = vmatmul.mubr.bf16.gmra.mrb[0].mxu0 %v3693
    %v4057 = vpop.f32.mrb[0].mxu0
    %v4058 = vadd.f32 0.0, %v4057
    %v4059 = vpop.f32.mrb[0].mxu0
    %v4060 = vadd.f32 0.0, %v4059
    %v4061 = vpop.f32.mrb[0].mxu0
    %v4062 = vadd.f32 0.0, %v4061
    %v4063 = vpop.f32.mrb[0].mxu0
    %v4064 = vadd.f32 0.0, %v4063
    %4065 = vdwg.mxu0
    %4066 = vmatprep.subr.bf16.mxu0 %v3454
    %4067 = vmatpush1.bf16.msra.mxu0 %v3453
    %4068 = vmatprep.subr.bf16.mxu0 %v3479
    %4069 = vmatpush1.bf16.msra.mxu0 %v3478
    %4070 = vmatprep.subr.bf16.mxu0 %v3504
    %4071 = vmatpush1.bf16.msra.mxu0 %v3503
    %4072 = vmatprep.subr.bf16.mxu0 %v3529
    %4073 = vmatpush1.bf16.msra.mxu0 %v3528
    %4074 = vmatprep.subr.bf16.mxu0 %v3554
    %4075 = vmatpush1.bf16.msra.mxu0 %v3553
    %4076 = vmatprep.subr.bf16.mxu0 0
    %4077 = vmatpush1.bf16.msra.mxu0 0
    %4078 = vmatprep.subr.bf16.mxu0 0
    %4079 = vmatpush1.bf16.msra.mxu0 0
    %4080 = vmatprep.subr.bf16.mxu0 0
    %4081 = vmatpush1.bf16.msra.mxu0 0
    %4082 = vmatprep.subr.bf16.mxu0 0
    %4083 = vmatpush1.bf16.msra.mxu0 0
    %4084 = vmatprep.subr.bf16.mxu0 0
    %4085 = vmatpush1.bf16.msra.mxu0 0
    %4086 = vmatprep.subr.bf16.mxu0 0
    %4087 = vmatpush1.bf16.msra.mxu0 0
    %4088 = vmatprep.subr.bf16.mxu0 0
    %4089 = vmatpush1.bf16.msra.mxu0 0
    %4090 = vmatprep.subr.bf16.mxu0 0
    %4091 = vmatpush1.bf16.msra.mxu0 0
    %4092 = vmatprep.subr.bf16.mxu0 0
    %4093 = vmatpush1.bf16.msra.mxu0 0
    %4094 = vmatprep.subr.bf16.mxu0 0
    %4095 = vmatpush1.bf16.msra.mxu0 0
    %4096 = vmatprep.subr.bf16.mxu0 0
    %4097 = vmatpush1.bf16.msra.mxu0 0
    %4098 = vmatprep.mubr.bf16.mxu0 0
    %4099 = vmatmul.mubr.bf16.gmra.mrb[0].mxu0 %v3690
    %v4100 = vpop.f32.mrb[0].mxu0
    %v4101 = vadd.f32 0.0, %v4100
    %v4102 = vpop.f32.mrb[0].mxu0
    %v4103 = vadd.f32 0.0, %v4102
    %v4104 = vpop.f32.mrb[0].mxu0
    %v4105 = vadd.f32 0.0, %v4104
    %v4106 = vpop.f32.mrb[0].mxu0
    %v4107 = vadd.f32 0.0, %v4106
    %4108 = vmatprep.mubr.bf16.mxu0 0
    %4109 = vmatmul.mubr.bf16.gmra.mrb[0].mxu0 %v3693
    %v4110 = vpop.f32.mrb[0].mxu0
    %v4111 = vadd.f32 0.0, %v4110
    %v4112 = vpop.f32.mrb[0].mxu0
    %v4113 = vadd.f32 0.0, %v4112
    %v4114 = vpop.f32.mrb[0].mxu0
    %v4115 = vadd.f32 0.0, %v4114
    %v4116 = vpop.f32.mrb[0].mxu0
    %v4117 = vadd.f32 0.0, %v4116
    %4118 = vdwg.mxu0
    %4119 = vmatprep.subr.bf16.mxu0 %v3456
    %4120 = vmatpush1.bf16.msra.mxu0 %v3455
    %4121 = vmatprep.subr.bf16.mxu0 %v3481
    %4122 = vmatpush1.bf16.msra.mxu0 %v3480
    %4123 = vmatprep.subr.bf16.mxu0 %v3506
    %4124 = vmatpush1.bf16.msra.mxu0 %v3505
    %4125 = vmatprep.subr.bf16.mxu0 %v3531
    %4126 = vmatpush1.bf16.msra.mxu0 %v3530
    %4127 = vmatprep.subr.bf16.mxu0 %v3556
    %4128 = vmatpush1.bf16.msra.mxu0 %v3555
    %4129 = vmatprep.subr.bf16.mxu0 0
    %4130 = vmatpush1.bf16.msra.mxu0 0
    %4131 = vmatprep.subr.bf16.mxu0 0
    %4132 = vmatpush1.bf16.msra.mxu0 0
    %4133 = vmatprep.subr.bf16.mxu0 0
    %4134 = vmatpush1.bf16.msra.mxu0 0
    %4135 = vmatprep.subr.bf16.mxu0 0
    %4136 = vmatpush1.bf16.msra.mxu0 0
    %4137 = vmatprep.subr.bf16.mxu0 0
    %4138 = vmatpush1.bf16.msra.mxu0 0
    %4139 = vmatprep.subr.bf16.mxu0 0
    %4140 = vmatpush1.bf16.msra.mxu0 0
    %4141 = vmatprep.subr.bf16.mxu0 0
    %4142 = vmatpush1.bf16.msra.mxu0 0
    %4143 = vmatprep.subr.bf16.mxu0 0
    %4144 = vmatpush1.bf16.msra.mxu0 0
    %4145 = vmatprep.subr.bf16.mxu0 0
    %4146 = vmatpush1.bf16.msra.mxu0 0
    %4147 = vmatprep.subr.bf16.mxu0 0
    %4148 = vmatpush1.bf16.msra.mxu0 0
    %4149 = vmatprep.subr.bf16.mxu0 0
    %4150 = vmatpush1.bf16.msra.mxu0 0
    %4151 = vmatprep.mubr.bf16.mxu0 0
    %4152 = vmatmul.mubr.bf16.gmra.mrb[0].mxu0 %v3690
    %v4153 = vpop.f32.mrb[0].mxu0
    %v4154 = vadd.f32 0.0, %v4153
    %v4155 = vpop.f32.mrb[0].mxu0
    %v4156 = vadd.f32 0.0, %v4155
    %v4157 = vpop.f32.mrb[0].mxu0
    %v4158 = vadd.f32 0.0, %v4157
    %v4159 = vpop.f32.mrb[0].mxu0
    %v4160 = vadd.f32 0.0, %v4159
    %4161 = vmatprep.mubr.bf16.mxu0 0
    %4162 = vmatmul.mubr.bf16.gmra.mrb[0].mxu0 %v3693
    %v4163 = vpop.f32.mrb[0].mxu0
    %v4164 = vadd.f32 0.0, %v4163
    %v4165 = vpop.f32.mrb[0].mxu0
    %v4166 = vadd.f32 0.0, %v4165
    %v4167 = vpop.f32.mrb[0].mxu0
    %v4168 = vadd.f32 0.0, %v4167
    %v4169 = vpop.f32.mrb[0].mxu0
    %v4170 = vadd.f32 0.0, %v4169
    %4171 = vdwg.mxu0
    %4172 = vmatprep.subr.bf16.mxu0 %v3458
    %4173 = vmatpush1.bf16.msra.mxu0 %v3457
    %4174 = vmatprep.subr.bf16.mxu0 %v3483
    %4175 = vmatpush1.bf16.msra.mxu0 %v3482
    %4176 = vmatprep.subr.bf16.mxu0 %v3508
    %4177 = vmatpush1.bf16.msra.mxu0 %v3507
    %4178 = vmatprep.subr.bf16.mxu0 %v3533
    %4179 = vmatpush1.bf16.msra.mxu0 %v3532
    %4180 = vmatprep.subr.bf16.mxu0 %v3558
    %4181 = vmatpush1.bf16.msra.mxu0 %v3557
    %4182 = vmatprep.subr.bf16.mxu0 0
    %4183 = vmatpush1.bf16.msra.mxu0 0
    %4184 = vmatprep.subr.bf16.mxu0 0
    %4185 = vmatpush1.bf16.msra.mxu0 0
    %4186 = vmatprep.subr.bf16.mxu0 0
    %4187 = vmatpush1.bf16.msra.mxu0 0
    %4188 = vmatprep.subr.bf16.mxu0 0
    %4189 = vmatpush1.bf16.msra.mxu0 0
    %4190 = vmatprep.subr.bf16.mxu0 0
    %4191 = vmatpush1.bf16.msra.mxu0 0
    %4192 = vmatprep.subr.bf16.mxu0 0
    %4193 = vmatpush1.bf16.msra.mxu0 0
    %4194 = vmatprep.subr.bf16.mxu0 0
    %4195 = vmatpush1.bf16.msra.mxu0 0
    %4196 = vmatprep.subr.bf16.mxu0 0
    %4197 = vmatpush1.bf16.msra.mxu0 0
    %4198 = vmatprep.subr.bf16.mxu0 0
    %4199 = vmatpush1.bf16.msra.mxu0 0
    %4200 = vmatprep.subr.bf16.mxu0 0
    %4201 = vmatpush1.bf16.msra.mxu0 0
    %4202 = vmatprep.subr.bf16.mxu0 0
    %4203 = vmatpush1.bf16.msra.mxu0 0
    %4204 = vmatprep.mubr.bf16.mxu0 0
    %4205 = vmatmul.mubr.bf16.gmra.mrb[0].mxu0 %v3690
    %v4206 = vpop.f32.mrb[0].mxu0
    %v4207 = vadd.f32 0.0, %v4206
    %v4208 = vpop.f32.mrb[0].mxu0
    %v4209 = vadd.f32 0.0, %v4208
    %v4210 = vpop.f32.mrb[0].mxu0
    %v4211 = vadd.f32 0.0, %v4210
    %v4212 = vpop.f32.mrb[0].mxu0
    %v4213 = vadd.f32 0.0, %v4212
    %4214 = vmatprep.mubr.bf16.mxu0 0
    %4215 = vmatmul.mubr.bf16.gmra.mrb[0].mxu0 %v3693
    %v4216 = vpop.f32.mrb[0].mxu0
    %v4217 = vadd.f32 0.0, %v4216
    %v4218 = vpop.f32.mrb[0].mxu0
    %v4219 = vadd.f32 0.0, %v4218
    %v4220 = vpop.f32.mrb[0].mxu0
    %v4221 = vadd.f32 0.0, %v4220
    %v4222 = vpop.f32.mrb[0].mxu0
    %v4223 = vadd.f32 0.0, %v4222
    %4224 = vdwg.mxu0
    %4225 = vmatprep.subr.bf16.mxu0 %v3460
    %4226 = vmatpush1.bf16.msra.mxu0 %v3459
    %4227 = vmatprep.subr.bf16.mxu0 %v3485
    %4228 = vmatpush1.bf16.msra.mxu0 %v3484
    %4229 = vmatprep.subr.bf16.mxu0 %v3510
    %4230 = vmatpush1.bf16.msra.mxu0 %v3509
    %4231 = vmatprep.subr.bf16.mxu0 %v3535
    %4232 = vmatpush1.bf16.msra.mxu0 %v3534
    %4233 = vmatprep.subr.bf16.mxu0 %v3560
    %4234 = vmatpush1.bf16.msra.mxu0 %v3559
    %4235 = vmatprep.subr.bf16.mxu0 0
    %4236 = vmatpush1.bf16.msra.mxu0 0
    %4237 = vmatprep.subr.bf16.mxu0 0
    %4238 = vmatpush1.bf16.msra.mxu0 0
    %4239 = vmatprep.subr.bf16.mxu0 0
    %4240 = vmatpush1.bf16.msra.mxu0 0
    %4241 = vmatprep.subr.bf16.mxu0 0
    %4242 = vmatpush1.bf16.msra.mxu0 0
    %4243 = vmatprep.subr.bf16.mxu0 0
    %4244 = vmatpush1.bf16.msra.mxu0 0
    %4245 = vmatprep.subr.bf16.mxu0 0
    %4246 = vmatpush1.bf16.msra.mxu0 0
    %4247 = vmatprep.subr.bf16.mxu0 0
    %4248 = vmatpush1.bf16.msra.mxu0 0
    %4249 = vmatprep.subr.bf16.mxu0 0
    %4250 = vmatpush1.bf16.msra.mxu0 0
    %4251 = vmatprep.subr.bf16.mxu0 0
    %4252 = vmatpush1.bf16.msra.mxu0 0
    %4253 = vmatprep.subr.bf16.mxu0 0
    %4254 = vmatpush1.bf16.msra.mxu0 0
    %4255 = vmatprep.subr.bf16.mxu0 0
    %4256 = vmatpush1.bf16.msra.mxu0 0
    %4257 = vmatprep.mubr.bf16.mxu0 0
    %4258 = vmatmul.mubr.bf16.gmra.mrb[0].mxu0 %v3690
    %v4259 = vpop.f32.mrb[0].mxu0
    %v4260 = vadd.f32 0.0, %v4259
    %v4261 = vpop.f32.mrb[0].mxu0
    %v4262 = vadd.f32 0.0, %v4261
    %v4263 = vpop.f32.mrb[0].mxu0
    %v4264 = vadd.f32 0.0, %v4263
    %v4265 = vpop.f32.mrb[0].mxu0
    %v4266 = vadd.f32 0.0, %v4265
    %4267 = vmatprep.mubr.bf16.mxu0 0
    %4268 = vmatmul.mubr.bf16.gmra.mrb[0].mxu0 %v3693
    %v4269 = vpop.f32.mrb[0].mxu0
    %v4270 = vadd.f32 0.0, %v4269
    %v4271 = vpop.f32.mrb[0].mxu0
    %v4272 = vadd.f32 0.0, %v4271
    %v4273 = vpop.f32.mrb[0].mxu0
    %v4274 = vadd.f32 0.0, %v4273
    %v4275 = vpop.f32.mrb[0].mxu0
    %v4276 = vadd.f32 0.0, %v4275
    %4277 = vdwg.mxu0
    %4278 = vmatprep.subr.bf16.mxu0 %v3462
    %4279 = vmatpush1.bf16.msra.mxu0 %v3461
    %4280 = vmatprep.subr.bf16.mxu0 %v3487
    %4281 = vmatpush1.bf16.msra.mxu0 %v3486
    %4282 = vmatprep.subr.bf16.mxu0 %v3512
    %4283 = vmatpush1.bf16.msra.mxu0 %v3511
    %4284 = vmatprep.subr.bf16.mxu0 %v3537
    %4285 = vmatpush1.bf16.msra.mxu0 %v3536
    %4286 = vmatprep.subr.bf16.mxu0 %v3562
    %4287 = vmatpush1.bf16.msra.mxu0 %v3561
    %4288 = vmatprep.subr.bf16.mxu0 0
    %4289 = vmatpush1.bf16.msra.mxu0 0
    %4290 = vmatprep.subr.bf16.mxu0 0
    %4291 = vmatpush1.bf16.msra.mxu0 0
    %4292 = vmatprep.subr.bf16.mxu0 0
    %4293 = vmatpush1.bf16.msra.mxu0 0
    %4294 = vmatprep.subr.bf16.mxu0 0
    %4295 = vmatpush1.bf16.msra.mxu0 0
    %4296 = vmatprep.subr.bf16.mxu0 0
    %4297 = vmatpush1.bf16.msra.mxu0 0
    %4298 = vmatprep.subr.bf16.mxu0 0
    %4299 = vmatpush1.bf16.msra.mxu0 0
    %4300 = vmatprep.subr.bf16.mxu0 0
    %4301 = vmatpush1.bf16.msra.mxu0 0
    %4302 = vmatprep.subr.bf16.mxu0 0
    %4303 = vmatpush1.bf16.msra.mxu0 0
    %4304 = vmatprep.subr.bf16.mxu0 0
    %4305 = vmatpush1.bf16.msra.mxu0 0
    %4306 = vmatprep.subr.bf16.mxu0 0
    %4307 = vmatpush1.bf16.msra.mxu0 0
    %4308 = vmatprep.subr.bf16.mxu0 0
    %4309 = vmatpush1.bf16.msra.mxu0 0
    %4310 = vmatprep.mubr.bf16.mxu0 0
    %4311 = vmatmul.mubr.bf16.gmra.mrb[0].mxu0 %v3690
    %v4312 = vpop.f32.mrb[0].mxu0
    %v4313 = vadd.f32 0.0, %v4312
    %v4314 = vpop.f32.mrb[0].mxu0
    %v4315 = vadd.f32 0.0, %v4314
    %v4316 = vpop.f32.mrb[0].mxu0
    %v4317 = vadd.f32 0.0, %v4316
    %v4318 = vpop.f32.mrb[0].mxu0
    %v4319 = vadd.f32 0.0, %v4318
    %4320 = vmatprep.mubr.bf16.mxu0 0
    %4321 = vmatmul.mubr.bf16.gmra.mrb[0].mxu0 %v3693
    %v4322 = vpop.f32.mrb[0].mxu0
    %v4323 = vadd.f32 0.0, %v4322
    %v4324 = vpop.f32.mrb[0].mxu0
    %v4325 = vadd.f32 0.0, %v4324
    %v4326 = vpop.f32.mrb[0].mxu0
    %v4327 = vadd.f32 0.0, %v4326
    %v4328 = vpop.f32.mrb[0].mxu0
    %v4329 = vadd.f32 0.0, %v4328
    %4330 = vdwg.mxu0
    %4331 = vmatprep.subr.bf16.mxu0 0
    %4332 = vmatpush1.bf16.msra.mxu0 %v3463
    %4333 = vmatprep.subr.bf16.mxu0 0
    %4334 = vmatpush1.bf16.msra.mxu0 %v3488
    %4335 = vmatprep.subr.bf16.mxu0 0
    %4336 = vmatpush1.bf16.msra.mxu0 %v3513
    %4337 = vmatprep.subr.bf16.mxu0 0
    %4338 = vmatpush1.bf16.msra.mxu0 %v3538
    %4339 = vmatprep.subr.bf16.mxu0 0
    %4340 = vmatpush1.bf16.msra.mxu0 %v3563
    %4341 = vmatprep.subr.bf16.mxu0 0
    %4342 = vmatpush1.bf16.msra.mxu0 0
    %4343 = vmatprep.subr.bf16.mxu0 0
    %4344 = vmatpush1.bf16.msra.mxu0 0
    %4345 = vmatprep.subr.bf16.mxu0 0
    %4346 = vmatpush1.bf16.msra.mxu0 0
    %4347 = vmatprep.subr.bf16.mxu0 0
    %4348 = vmatpush1.bf16.msra.mxu0 0
    %4349 = vmatprep.subr.bf16.mxu0 0
    %4350 = vmatpush1.bf16.msra.mxu0 0
    %4351 = vmatprep.subr.bf16.mxu0 0
    %4352 = vmatpush1.bf16.msra.mxu0 0
    %4353 = vmatprep.subr.bf16.mxu0 0
    %4354 = vmatpush1.bf16.msra.mxu0 0
    %4355 = vmatprep.subr.bf16.mxu0 0
    %4356 = vmatpush1.bf16.msra.mxu0 0
    %4357 = vmatprep.subr.bf16.mxu0 0
    %4358 = vmatpush1.bf16.msra.mxu0 0
    %4359 = vmatprep.subr.bf16.mxu0 0
    %4360 = vmatpush1.bf16.msra.mxu0 0
    %4361 = vmatprep.subr.bf16.mxu0 0
    %4362 = vmatpush1.bf16.msra.mxu0 0
    %4363 = vmatprep.mubr.bf16.mxu0 0
    %4364 = vmatmul.mubr.bf16.gmra.mrb[0].mxu0 %v3690
    %v4365 = vpop.f32.mrb[0].mxu0
    %v4366 = vadd.f32 0.0, %v4365
    %v4367 = vpop.f32.mrb[0].mxu0
    %v4368 = vpop.f32.mrb[0].mxu0
    %v4369 = vadd.f32 0.0, %v4368
    %v4370 = vpop.f32.mrb[0].mxu0
    %4371 = vmatprep.mubr.bf16.mxu0 0
    %4372 = vmatmul.mubr.bf16.gmra.mrb[0].mxu0 %v3693
    %v4373 = vpop.f32.mrb[0].mxu0
    %v4374 = vadd.f32 0.0, %v4373
    %v4375 = vpop.f32.mrb[0].mxu0
    %v4376 = vpop.f32.mrb[0].mxu0
    %v4377 = vadd.f32 0.0, %v4376
    %v4378 = vpop.f32.mrb[0].mxu0
    %4379 = vdwg.mxu0
    %v4380 = vld [vmem:[%s7 + $0x1] sm:$0x1]
    %v4381 = vlaneseq
    %v4382 = vshrl.u32 %v4381, 7
    %v4383 = vsub.s32 0, %v4382
    %v4384 = vrot.slane %v4380, %v4383
    %s4385 = scalar_lea.vmem %s1, 48
    %v4386 = vld [vmem:[%s4385] sm:$0xff]
    %v4387 = vld [vmem:[%s4385 + $0x8] sm:$0xff]
    %v4388 = vld [vmem:[%s4385 + $0x10] sm:$0x3f]
    %v4389 = vld [vmem:[%s4385 + $0x18] sm:$0xff]
    %v4390 = vld [vmem:[%s4385 + $0x20] sm:$0xff]
    %v4391 = vld [vmem:[%s4385 + $0x28] sm:$0x3f]
    %vm4396 = vcmask 1040384
    %v4397 = vrot.slane %v3730, 7
    %v4398 = vrot.slane %v3734, 7
    %v4399 = vsel %vm4396, %v4397, %v4398
    %v4400 = vrot.slane %v3740, 7
    %v4401 = vrot.slane %v3744, 7
    %v4402 = vsel %vm4396, %v4400, %v4401
    %v4409 = vmul.f32 %v4386, %v4397
    %v4410 = vmul.f32 %v4387, %v4399
    %v4411 = vmul.f32 %v4388, %v4398
    %v4412 = vmul.f32 %v4389, %v4400
    %v4413 = vmul.f32 %v4390, %v4402
    %v4414 = vmul.f32 %v4391, %v4401
    %v4415 = vadd.f32 %v4384, %v4409
    %v4416 = vadd.f32 %v4384, %v4410
    %v4417 = vadd.f32 %v4384, %v4411
    %v4418 = vadd.f32 %v4384, %v4412
    %v4419 = vadd.f32 %v4384, %v4413
    %v4420 = vadd.f32 %v4384, %v4414
    %v4425 = vrot.slane %v3838, 6
    %v4426 = vrot.slane %v3842, 6
    %v4427 = vsel %vm1699, %v4425, %v4426
    %v4428 = vrot.slane %v3848, 6
    %v4429 = vrot.slane %v3852, 6
    %v4430 = vsel %vm1699, %v4428, %v4429
    %v4437 = vmul.f32 %v4386, %v4425
    %v4438 = vmul.f32 %v4387, %v4427
    %v4439 = vmul.f32 %v4388, %v4426
    %v4440 = vmul.f32 %v4389, %v4428
    %v4441 = vmul.f32 %v4390, %v4430
    %v4442 = vmul.f32 %v4391, %v4429
    %v4449 = vrot.slane %v4437, 1
    %v4450 = vrot.slane %v4438, 1
    %v4451 = vsel %vm1753, %v4449, %v4450
    %v4452 = vrot.slane %v4439, 1
    %v4453 = vsel %vm1753, %v4450, %v4452
    %v4454 = vrot.slane %v4440, 1
    %v4455 = vrot.slane %v4441, 1
    %v4456 = vsel %vm1753, %v4454, %v4455
    %v4457 = vrot.slane %v4442, 1
    %v4458 = vsel %vm1753, %v4455, %v4457
    %v4465 = vadd.f32 %v4415, %v4451
    %v4466 = vadd.f32 %v4416, %v4453
    %v4467 = vadd.f32 %v4417, %v4452
    %v4468 = vadd.f32 %v4418, %v4456
    %v4469 = vadd.f32 %v4419, %v4458
    %v4470 = vadd.f32 %v4420, %v4457
    %v4475 = vrot.slane %v3995, 5
    %v4476 = vrot.slane %v3999, 5
    %v4477 = vsel %vm1728, %v4475, %v4476
    %v4478 = vrot.slane %v4005, 5
    %v4479 = vrot.slane %v4009, 5
    %v4480 = vsel %vm1728, %v4478, %v4479
    %v4487 = vmul.f32 %v4386, %v4475
    %v4488 = vmul.f32 %v4387, %v4477
    %v4489 = vmul.f32 %v4388, %v4476
    %v4490 = vmul.f32 %v4389, %v4478
    %v4491 = vmul.f32 %v4390, %v4480
    %v4492 = vmul.f32 %v4391, %v4479
    %v4499 = vrot.slane %v4487, 2
    %v4500 = vrot.slane %v4488, 2
    %v4501 = vsel %vm1805, %v4499, %v4500
    %v4502 = vrot.slane %v4489, 2
    %v4503 = vsel %vm1805, %v4500, %v4502
    %v4504 = vrot.slane %v4490, 2
    %v4505 = vrot.slane %v4491, 2
    %v4506 = vsel %vm1805, %v4504, %v4505
    %v4507 = vrot.slane %v4492, 2
    %v4508 = vsel %vm1805, %v4505, %v4507
    %v4515 = vadd.f32 %v4465, %v4501
    %v4516 = vadd.f32 %v4466, %v4503
    %v4517 = vadd.f32 %v4467, %v4502
    %v4518 = vadd.f32 %v4468, %v4506
    %v4519 = vadd.f32 %v4469, %v4508
    %v4520 = vadd.f32 %v4470, %v4507
    %v4525 = vrot.slane %v4103, 4
    %v4526 = vrot.slane %v4107, 4
    %v4527 = vsel %vm1780, %v4525, %v4526
    %v4528 = vrot.slane %v4113, 4
    %v4529 = vrot.slane %v4117, 4
    %v4530 = vsel %vm1780, %v4528, %v4529
    %v4537 = vmul.f32 %v4386, %v4525
    %v4538 = vmul.f32 %v4387, %v4527
    %v4539 = vmul.f32 %v4388, %v4526
    %v4540 = vmul.f32 %v4389, %v4528
    %v4541 = vmul.f32 %v4390, %v4530
    %v4542 = vmul.f32 %v4391, %v4529
    %vm4549 = vcmask 1044480
    %v4550 = vrot.slane %v4537, 3
    %v4551 = vrot.slane %v4538, 3
    %v4552 = vsel %vm4549, %v4550, %v4551
    %v4553 = vrot.slane %v4539, 3
    %v4554 = vsel %vm4549, %v4551, %v4553
    %v4555 = vrot.slane %v4540, 3
    %v4556 = vrot.slane %v4541, 3
    %v4557 = vsel %vm4549, %v4555, %v4556
    %v4558 = vrot.slane %v4542, 3
    %v4559 = vsel %vm4549, %v4556, %v4558
    %v4566 = vadd.f32 %v4515, %v4552
    %v4567 = vadd.f32 %v4516, %v4554
    %v4568 = vadd.f32 %v4517, %v4553
    %v4569 = vadd.f32 %v4518, %v4557
    %v4570 = vadd.f32 %v4519, %v4559
    %v4571 = vadd.f32 %v4520, %v4558
    %v4576 = vrot.slane %v4260, 3
    %v4577 = vrot.slane %v4264, 3
    %v4578 = vsel %vm4549, %v4576, %v4577
    %v4579 = vrot.slane %v4270, 3
    %v4580 = vrot.slane %v4274, 3
    %v4581 = vsel %vm4549, %v4579, %v4580
    %v4588 = vmul.f32 %v4386, %v4576
    %v4589 = vmul.f32 %v4387, %v4578
    %v4590 = vmul.f32 %v4388, %v4577
    %v4591 = vmul.f32 %v4389, %v4579
    %v4592 = vmul.f32 %v4390, %v4581
    %v4593 = vmul.f32 %v4391, %v4580
    %v4600 = vrot.slane %v4588, 4
    %v4601 = vrot.slane %v4589, 4
    %v4602 = vsel %vm1780, %v4600, %v4601
    %v4603 = vrot.slane %v4590, 4
    %v4604 = vsel %vm1780, %v4601, %v4603
    %v4605 = vrot.slane %v4591, 4
    %v4606 = vrot.slane %v4592, 4
    %v4607 = vsel %vm1780, %v4605, %v4606
    %v4608 = vrot.slane %v4593, 4
    %v4609 = vsel %vm1780, %v4606, %v4608
    %v4616 = vadd.f32 %v4566, %v4602
    %v4617 = vadd.f32 %v4567, %v4604
    %v4618 = vadd.f32 %v4568, %v4603
    %v4619 = vadd.f32 %v4569, %v4607
    %v4620 = vadd.f32 %v4570, %v4609
    %v4621 = vadd.f32 %v4571, %v4608
    %v4626 = vrot.slane %v3732, 7
    %v4627 = vrot.slane %v3736, 7
    %v4628 = vsel %vm4396, %v4626, %v4627
    %v4629 = vrot.slane %v3742, 7
    %v4630 = vrot.slane %v3746, 7
    %v4631 = vsel %vm4396, %v4629, %v4630
    %v4638 = vmul.f32 %v1689, %v4626
    %v4639 = vmul.f32 %v1690, %v4628
    %v4640 = vmul.f32 %v1691, %v4627
    %v4641 = vmul.f32 %v1692, %v4629
    %v4642 = vmul.f32 %v1693, %v4631
    %v4643 = vmul.f32 %v1694, %v4630
    %v4644 = vadd.f32 %v4616, %v4638
    %v4645 = vadd.f32 %v4617, %v4639
    %v4646 = vadd.f32 %v4618, %v4640
    %v4647 = vadd.f32 %v4619, %v4641
    %v4648 = vadd.f32 %v4620, %v4642
    %v4649 = vadd.f32 %v4621, %v4643
    %v4654 = vrot.slane %v3889, 6
    %v4655 = vrot.slane %v3893, 6
    %v4656 = vsel %vm1699, %v4654, %v4655
    %v4657 = vrot.slane %v3899, 6
    %v4658 = vrot.slane %v3903, 6
    %v4659 = vsel %vm1699, %v4657, %v4658
    %v4666 = vmul.f32 %v1689, %v4654
    %v4667 = vmul.f32 %v1690, %v4656
    %v4668 = vmul.f32 %v1691, %v4655
    %v4669 = vmul.f32 %v1692, %v4657
    %v4670 = vmul.f32 %v1693, %v4659
    %v4671 = vmul.f32 %v1694, %v4658
    %v4678 = vrot.slane %v4666, 1
    %v4679 = vrot.slane %v4667, 1
    %v4680 = vsel %vm1753, %v4678, %v4679
    %v4681 = vrot.slane %v4668, 1
    %v4682 = vsel %vm1753, %v4679, %v4681
    %v4683 = vrot.slane %v4669, 1
    %v4684 = vrot.slane %v4670, 1
    %v4685 = vsel %vm1753, %v4683, %v4684
    %v4686 = vrot.slane %v4671, 1
    %v4687 = vsel %vm1753, %v4684, %v4686
    %v4694 = vadd.f32 %v4644, %v4680
    %v4695 = vadd.f32 %v4645, %v4682
    %v4696 = vadd.f32 %v4646, %v4681
    %v4697 = vadd.f32 %v4647, %v4685
    %v4698 = vadd.f32 %v4648, %v4687
    %v4699 = vadd.f32 %v4649, %v4686
    %v4704 = vrot.slane %v3997, 5
    %v4705 = vrot.slane %v4001, 5
    %v4706 = vsel %vm1728, %v4704, %v4705
    %v4707 = vrot.slane %v4007, 5
    %v4708 = vrot.slane %v4011, 5
    %v4709 = vsel %vm1728, %v4707, %v4708
    %v4716 = vmul.f32 %v1689, %v4704
    %v4717 = vmul.f32 %v1690, %v4706
    %v4718 = vmul.f32 %v1691, %v4705
    %v4719 = vmul.f32 %v1692, %v4707
    %v4720 = vmul.f32 %v1693, %v4709
    %v4721 = vmul.f32 %v1694, %v4708
    %v4728 = vrot.slane %v4716, 2
    %v4729 = vrot.slane %v4717, 2
    %v4730 = vsel %vm1805, %v4728, %v4729
    %v4731 = vrot.slane %v4718, 2
    %v4732 = vsel %vm1805, %v4729, %v4731
    %v4733 = vrot.slane %v4719, 2
    %v4734 = vrot.slane %v4720, 2
    %v4735 = vsel %vm1805, %v4733, %v4734
    %v4736 = vrot.slane %v4721, 2
    %v4737 = vsel %vm1805, %v4734, %v4736
    %v4744 = vadd.f32 %v4694, %v4730
    %v4745 = vadd.f32 %v4695, %v4732
    %v4746 = vadd.f32 %v4696, %v4731
    %v4747 = vadd.f32 %v4697, %v4735
    %v4748 = vadd.f32 %v4698, %v4737
    %v4749 = vadd.f32 %v4699, %v4736
    %v4754 = vrot.slane %v4154, 4
    %v4755 = vrot.slane %v4158, 4
    %v4756 = vsel %vm1780, %v4754, %v4755
    %v4757 = vrot.slane %v4164, 4
    %v4758 = vrot.slane %v4168, 4
    %v4759 = vsel %vm1780, %v4757, %v4758
    %v4766 = vmul.f32 %v1689, %v4754
    %v4767 = vmul.f32 %v1690, %v4756
    %v4768 = vmul.f32 %v1691, %v4755
    %v4769 = vmul.f32 %v1692, %v4757
    %v4770 = vmul.f32 %v1693, %v4759
    %v4771 = vmul.f32 %v1694, %v4758
    %v4778 = vrot.slane %v4766, 3
    %v4779 = vrot.slane %v4767, 3
    %v4780 = vsel %vm4549, %v4778, %v4779
    %v4781 = vrot.slane %v4768, 3
    %v4782 = vsel %vm4549, %v4779, %v4781
    %v4783 = vrot.slane %v4769, 3
    %v4784 = vrot.slane %v4770, 3
    %v4785 = vsel %vm4549, %v4783, %v4784
    %v4786 = vrot.slane %v4771, 3
    %v4787 = vsel %vm4549, %v4784, %v4786
    %v4794 = vadd.f32 %v4744, %v4780
    %v4795 = vadd.f32 %v4745, %v4782
    %v4796 = vadd.f32 %v4746, %v4781
    %v4797 = vadd.f32 %v4747, %v4785
    %v4798 = vadd.f32 %v4748, %v4787
    %v4799 = vadd.f32 %v4749, %v4786
    %v4804 = vrot.slane %v4262, 3
    %v4805 = vrot.slane %v4266, 3
    %v4806 = vsel %vm4549, %v4804, %v4805
    %v4807 = vrot.slane %v4272, 3
    %v4808 = vrot.slane %v4276, 3
    %v4809 = vsel %vm4549, %v4807, %v4808
    %v4816 = vmul.f32 %v1689, %v4804
    %v4817 = vmul.f32 %v1690, %v4806
    %v4818 = vmul.f32 %v1691, %v4805
    %v4819 = vmul.f32 %v1692, %v4807
    %v4820 = vmul.f32 %v1693, %v4809
    %v4821 = vmul.f32 %v1694, %v4808
    %v4828 = vrot.slane %v4816, 4
    %v4829 = vrot.slane %v4817, 4
    %v4830 = vsel %vm1780, %v4828, %v4829
    %v4831 = vrot.slane %v4818, 4
    %v4832 = vsel %vm1780, %v4829, %v4831
    %v4833 = vrot.slane %v4819, 4
    %v4834 = vrot.slane %v4820, 4
    %v4835 = vsel %vm1780, %v4833, %v4834
    %v4836 = vrot.slane %v4821, 4
    %v4837 = vsel %vm1780, %v4834, %v4836
    %v4844 = vadd.f32 %v4794, %v4830
    %v4845 = vadd.f32 %v4795, %v4832
    %v4846 = vadd.f32 %v4796, %v4831
    %v4847 = vadd.f32 %v4797, %v4835
    %v4848 = vadd.f32 %v4798, %v4837
    %v4849 = vadd.f32 %v4799, %v4836
    %v4854 = vrot.slane %v3783, 7
    %v4855 = vrot.slane %v3787, 7
    %v4856 = vsel %vm4396, %v4854, %v4855
    %v4857 = vrot.slane %v3793, 7
    %v4858 = vrot.slane %v3797, 7
    %v4859 = vsel %vm4396, %v4857, %v4858
    %v4866 = vmul.f32 %v1829, %v4854
    %v4867 = vmul.f32 %v1830, %v4856
    %v4868 = vmul.f32 %v1831, %v4855
    %v4869 = vmul.f32 %v1832, %v4857
    %v4870 = vmul.f32 %v1833, %v4859
    %v4871 = vmul.f32 %v1834, %v4858
    %v4872 = vadd.f32 %v4844, %v4866
    %v4873 = vadd.f32 %v4845, %v4867
    %v4874 = vadd.f32 %v4846, %v4868
    %v4875 = vadd.f32 %v4847, %v4869
    %v4876 = vadd.f32 %v4848, %v4870
    %v4877 = vadd.f32 %v4849, %v4871
    %v4882 = vrot.slane %v3891, 6
    %v4883 = vrot.slane %v3895, 6
    %v4884 = vsel %vm1699, %v4882, %v4883
    %v4885 = vrot.slane %v3901, 6
    %v4886 = vrot.slane %v3905, 6
    %v4887 = vsel %vm1699, %v4885, %v4886
    %v4894 = vmul.f32 %v1829, %v4882
    %v4895 = vmul.f32 %v1830, %v4884
    %v4896 = vmul.f32 %v1831, %v4883
    %v4897 = vmul.f32 %v1832, %v4885
    %v4898 = vmul.f32 %v1833, %v4887
    %v4899 = vmul.f32 %v1834, %v4886
    %v4906 = vrot.slane %v4894, 1
    %v4907 = vrot.slane %v4895, 1
    %v4908 = vsel %vm1753, %v4906, %v4907
    %v4909 = vrot.slane %v4896, 1
    %v4910 = vsel %vm1753, %v4907, %v4909
    %v4911 = vrot.slane %v4897, 1
    %v4912 = vrot.slane %v4898, 1
    %v4913 = vsel %vm1753, %v4911, %v4912
    %v4914 = vrot.slane %v4899, 1
    %v4915 = vsel %vm1753, %v4912, %v4914
    %v4922 = vadd.f32 %v4872, %v4908
    %v4923 = vadd.f32 %v4873, %v4910
    %v4924 = vadd.f32 %v4874, %v4909
    %v4925 = vadd.f32 %v4875, %v4913
    %v4926 = vadd.f32 %v4876, %v4915
    %v4927 = vadd.f32 %v4877, %v4914
    %v4932 = vrot.slane %v4048, 5
    %v4933 = vrot.slane %v4052, 5
    %v4934 = vsel %vm1728, %v4932, %v4933
    %v4935 = vrot.slane %v4058, 5
    %v4936 = vrot.slane %v4062, 5
    %v4937 = vsel %vm1728, %v4935, %v4936
    %v4944 = vmul.f32 %v1829, %v4932
    %v4945 = vmul.f32 %v1830, %v4934
    %v4946 = vmul.f32 %v1831, %v4933
    %v4947 = vmul.f32 %v1832, %v4935
    %v4948 = vmul.f32 %v1833, %v4937
    %v4949 = vmul.f32 %v1834, %v4936
    %v4956 = vrot.slane %v4944, 2
    %v4957 = vrot.slane %v4945, 2
    %v4958 = vsel %vm1805, %v4956, %v4957
    %v4959 = vrot.slane %v4946, 2
    %v4960 = vsel %vm1805, %v4957, %v4959
    %v4961 = vrot.slane %v4947, 2
    %v4962 = vrot.slane %v4948, 2
    %v4963 = vsel %vm1805, %v4961, %v4962
    %v4964 = vrot.slane %v4949, 2
    %v4965 = vsel %vm1805, %v4962, %v4964
    %v4972 = vadd.f32 %v4922, %v4958
    %v4973 = vadd.f32 %v4923, %v4960
    %v4974 = vadd.f32 %v4924, %v4959
    %v4975 = vadd.f32 %v4925, %v4963
    %v4976 = vadd.f32 %v4926, %v4965
    %v4977 = vadd.f32 %v4927, %v4964
    %v4982 = vrot.slane %v4156, 4
    %v4983 = vrot.slane %v4160, 4
    %v4984 = vsel %vm1780, %v4982, %v4983
    %v4985 = vrot.slane %v4166, 4
    %v4986 = vrot.slane %v4170, 4
    %v4987 = vsel %vm1780, %v4985, %v4986
    %v4994 = vmul.f32 %v1829, %v4982
    %v4995 = vmul.f32 %v1830, %v4984
    %v4996 = vmul.f32 %v1831, %v4983
    %v4997 = vmul.f32 %v1832, %v4985
    %v4998 = vmul.f32 %v1833, %v4987
    %v4999 = vmul.f32 %v1834, %v4986
    %v5006 = vrot.slane %v4994, 3
    %v5007 = vrot.slane %v4995, 3
    %v5008 = vsel %vm4549, %v5006, %v5007
    %v5009 = vrot.slane %v4996, 3
    %v5010 = vsel %vm4549, %v5007, %v5009
    %v5011 = vrot.slane %v4997, 3
    %v5012 = vrot.slane %v4998, 3
    %v5013 = vsel %vm4549, %v5011, %v5012
    %v5014 = vrot.slane %v4999, 3
    %v5015 = vsel %vm4549, %v5012, %v5014
    %v5022 = vadd.f32 %v4972, %v5008
    %v5023 = vadd.f32 %v4973, %v5010
    %v5024 = vadd.f32 %v4974, %v5009
    %v5025 = vadd.f32 %v4975, %v5013
    %v5026 = vadd.f32 %v4976, %v5015
    %v5027 = vadd.f32 %v4977, %v5014
    %v5032 = vrot.slane %v4313, 3
    %v5033 = vrot.slane %v4317, 3
    %v5034 = vsel %vm4549, %v5032, %v5033
    %v5035 = vrot.slane %v4323, 3
    %v5036 = vrot.slane %v4327, 3
    %v5037 = vsel %vm4549, %v5035, %v5036
    %v5044 = vmul.f32 %v1829, %v5032
    %v5045 = vmul.f32 %v1830, %v5034
    %v5046 = vmul.f32 %v1831, %v5033
    %v5047 = vmul.f32 %v1832, %v5035
    %v5048 = vmul.f32 %v1833, %v5037
    %v5049 = vmul.f32 %v1834, %v5036
    %v5056 = vrot.slane %v5044, 4
    %v5057 = vrot.slane %v5045, 4
    %v5058 = vsel %vm1780, %v5056, %v5057
    %v5059 = vrot.slane %v5046, 4
    %v5060 = vsel %vm1780, %v5057, %v5059
    %v5061 = vrot.slane %v5047, 4
    %v5062 = vrot.slane %v5048, 4
    %v5063 = vsel %vm1780, %v5061, %v5062
    %v5064 = vrot.slane %v5049, 4
    %v5065 = vsel %vm1780, %v5062, %v5064
    %v5072 = vadd.f32 %v5022, %v5058
    %v5073 = vadd.f32 %v5023, %v5060
    %v5074 = vadd.f32 %v5024, %v5059
    %v5075 = vadd.f32 %v5025, %v5063
    %v5076 = vadd.f32 %v5026, %v5065
    %v5077 = vadd.f32 %v5027, %v5064
    %v5082 = vrot.slane %v3785, 7
    %v5083 = vrot.slane %v3789, 7
    %v5084 = vsel %vm4396, %v5082, %v5083
    %v5085 = vrot.slane %v3795, 7
    %v5086 = vrot.slane %v3799, 7
    %v5087 = vsel %vm4396, %v5085, %v5086
    %v5094 = vmul.f32 %v1964, %v5082
    %v5095 = vmul.f32 %v1965, %v5084
    %v5096 = vmul.f32 %v1966, %v5083
    %v5097 = vmul.f32 %v1967, %v5085
    %v5098 = vmul.f32 %v1968, %v5087
    %v5099 = vmul.f32 %v1969, %v5086
    %v5100 = vadd.f32 %v5072, %v5094
    %v5101 = vadd.f32 %v5073, %v5095
    %v5102 = vadd.f32 %v5074, %v5096
    %v5103 = vadd.f32 %v5075, %v5097
    %v5104 = vadd.f32 %v5076, %v5098
    %v5105 = vadd.f32 %v5077, %v5099
    %v5110 = vrot.slane %v3942, 6
    %v5111 = vrot.slane %v3946, 6
    %v5112 = vsel %vm1699, %v5110, %v5111
    %v5113 = vrot.slane %v3952, 6
    %v5114 = vrot.slane %v3956, 6
    %v5115 = vsel %vm1699, %v5113, %v5114
    %v5122 = vmul.f32 %v1964, %v5110
    %v5123 = vmul.f32 %v1965, %v5112
    %v5124 = vmul.f32 %v1966, %v5111
    %v5125 = vmul.f32 %v1967, %v5113
    %v5126 = vmul.f32 %v1968, %v5115
    %v5127 = vmul.f32 %v1969, %v5114
    %v5134 = vrot.slane %v5122, 1
    %v5135 = vrot.slane %v5123, 1
    %v5136 = vsel %vm1753, %v5134, %v5135
    %v5137 = vrot.slane %v5124, 1
    %v5138 = vsel %vm1753, %v5135, %v5137
    %v5139 = vrot.slane %v5125, 1
    %v5140 = vrot.slane %v5126, 1
    %v5141 = vsel %vm1753, %v5139, %v5140
    %v5142 = vrot.slane %v5127, 1
    %v5143 = vsel %vm1753, %v5140, %v5142
    %v5150 = vadd.f32 %v5100, %v5136
    %v5151 = vadd.f32 %v5101, %v5138
    %v5152 = vadd.f32 %v5102, %v5137
    %v5153 = vadd.f32 %v5103, %v5141
    %v5154 = vadd.f32 %v5104, %v5143
    %v5155 = vadd.f32 %v5105, %v5142
    %v5160 = vrot.slane %v4050, 5
    %v5161 = vrot.slane %v4054, 5
    %v5162 = vsel %vm1728, %v5160, %v5161
    %v5163 = vrot.slane %v4060, 5
    %v5164 = vrot.slane %v4064, 5
    %v5165 = vsel %vm1728, %v5163, %v5164
    %v5172 = vmul.f32 %v1964, %v5160
    %v5173 = vmul.f32 %v1965, %v5162
    %v5174 = vmul.f32 %v1966, %v5161
    %v5175 = vmul.f32 %v1967, %v5163
    %v5176 = vmul.f32 %v1968, %v5165
    %v5177 = vmul.f32 %v1969, %v5164
    %v5184 = vrot.slane %v5172, 2
    %v5185 = vrot.slane %v5173, 2
    %v5186 = vsel %vm1805, %v5184, %v5185
    %v5187 = vrot.slane %v5174, 2
    %v5188 = vsel %vm1805, %v5185, %v5187
    %v5189 = vrot.slane %v5175, 2
    %v5190 = vrot.slane %v5176, 2
    %v5191 = vsel %vm1805, %v5189, %v5190
    %v5192 = vrot.slane %v5177, 2
    %v5193 = vsel %vm1805, %v5190, %v5192
    %v5200 = vadd.f32 %v5150, %v5186
    %v5201 = vadd.f32 %v5151, %v5188
    %v5202 = vadd.f32 %v5152, %v5187
    %v5203 = vadd.f32 %v5153, %v5191
    %v5204 = vadd.f32 %v5154, %v5193
    %v5205 = vadd.f32 %v5155, %v5192
    %v5210 = vrot.slane %v4207, 4
    %v5211 = vrot.slane %v4211, 4
    %v5212 = vsel %vm1780, %v5210, %v5211
    %v5213 = vrot.slane %v4217, 4
    %v5214 = vrot.slane %v4221, 4
    %v5215 = vsel %vm1780, %v5213, %v5214
    %v5222 = vmul.f32 %v1964, %v5210
    %v5223 = vmul.f32 %v1965, %v5212
    %v5224 = vmul.f32 %v1966, %v5211
    %v5225 = vmul.f32 %v1967, %v5213
    %v5226 = vmul.f32 %v1968, %v5215
    %v5227 = vmul.f32 %v1969, %v5214
    %v5234 = vrot.slane %v5222, 3
    %v5235 = vrot.slane %v5223, 3
    %v5236 = vsel %vm4549, %v5234, %v5235
    %v5237 = vrot.slane %v5224, 3
    %v5238 = vsel %vm4549, %v5235, %v5237
    %v5239 = vrot.slane %v5225, 3
    %v5240 = vrot.slane %v5226, 3
    %v5241 = vsel %vm4549, %v5239, %v5240
    %v5242 = vrot.slane %v5227, 3
    %v5243 = vsel %vm4549, %v5240, %v5242
    %v5250 = vadd.f32 %v5200, %v5236
    %v5251 = vadd.f32 %v5201, %v5238
    %v5252 = vadd.f32 %v5202, %v5237
    %v5253 = vadd.f32 %v5203, %v5241
    %v5254 = vadd.f32 %v5204, %v5243
    %v5255 = vadd.f32 %v5205, %v5242
    %v5260 = vrot.slane %v4315, 3
    %v5261 = vrot.slane %v4319, 3
    %v5262 = vsel %vm4549, %v5260, %v5261
    %v5263 = vrot.slane %v4325, 3
    %v5264 = vrot.slane %v4329, 3
    %v5265 = vsel %vm4549, %v5263, %v5264
    %v5272 = vmul.f32 %v1964, %v5260
    %v5273 = vmul.f32 %v1965, %v5262
    %v5274 = vmul.f32 %v1966, %v5261
    %v5275 = vmul.f32 %v1967, %v5263
    %v5276 = vmul.f32 %v1968, %v5265
    %v5277 = vmul.f32 %v1969, %v5264
    %v5284 = vrot.slane %v5272, 4
    %v5285 = vrot.slane %v5273, 4
    %v5286 = vsel %vm1780, %v5284, %v5285
    %v5287 = vrot.slane %v5274, 4
    %v5288 = vsel %vm1780, %v5285, %v5287
    %v5289 = vrot.slane %v5275, 4
    %v5290 = vrot.slane %v5276, 4
    %v5291 = vsel %vm1780, %v5289, %v5290
    %v5292 = vrot.slane %v5277, 4
    %v5293 = vsel %vm1780, %v5290, %v5292
    %v5300 = vadd.f32 %v5250, %v5286
    %v5301 = vadd.f32 %v5251, %v5288
    %v5302 = vadd.f32 %v5252, %v5287
    %v5303 = vadd.f32 %v5253, %v5291
    %v5304 = vadd.f32 %v5254, %v5293
    %v5305 = vadd.f32 %v5255, %v5292
    %s5306 = scalar_lea.vmem %s1, 240
    %v5307 = vld [vmem:[%s5306] sm:$0xff]
    %v5308 = vld [vmem:[%s5306 + $0x8] sm:$0xff]
    %v5309 = vld [vmem:[%s5306 + $0x10] sm:$0x3f]
    %v5310 = vld [vmem:[%s5306 + $0x18] sm:$0xff]
    %v5311 = vld [vmem:[%s5306 + $0x20] sm:$0xff]
    %v5312 = vld [vmem:[%s5306 + $0x28] sm:$0x3f]
    %v5317 = vrot.slane %v3836, 7
    %v5318 = vrot.slane %v3840, 7
    %v5319 = vsel %vm4396, %v5317, %v5318
    %v5320 = vrot.slane %v3846, 7
    %v5321 = vrot.slane %v3850, 7
    %v5322 = vsel %vm4396, %v5320, %v5321
    %v5329 = vmul.f32 %v5307, %v5317
    %v5330 = vmul.f32 %v5308, %v5319
    %v5331 = vmul.f32 %v5309, %v5318
    %v5332 = vmul.f32 %v5310, %v5320
    %v5333 = vmul.f32 %v5311, %v5322
    %v5334 = vmul.f32 %v5312, %v5321
    %v5335 = vadd.f32 %v5300, %v5329
    %v5336 = vadd.f32 %v5301, %v5330
    %v5337 = vadd.f32 %v5302, %v5331
    %v5338 = vadd.f32 %v5303, %v5332
    %v5339 = vadd.f32 %v5304, %v5333
    %v5340 = vadd.f32 %v5305, %v5334
    %v5345 = vrot.slane %v3944, 6
    %v5346 = vrot.slane %v3948, 6
    %v5347 = vsel %vm1699, %v5345, %v5346
    %v5348 = vrot.slane %v3954, 6
    %v5349 = vrot.slane %v3958, 6
    %v5350 = vsel %vm1699, %v5348, %v5349
    %v5357 = vmul.f32 %v5307, %v5345
    %v5358 = vmul.f32 %v5308, %v5347
    %v5359 = vmul.f32 %v5309, %v5346
    %v5360 = vmul.f32 %v5310, %v5348
    %v5361 = vmul.f32 %v5311, %v5350
    %v5362 = vmul.f32 %v5312, %v5349
    %v5369 = vrot.slane %v5357, 1
    %v5370 = vrot.slane %v5358, 1
    %v5371 = vsel %vm1753, %v5369, %v5370
    %v5372 = vrot.slane %v5359, 1
    %v5373 = vsel %vm1753, %v5370, %v5372
    %v5374 = vrot.slane %v5360, 1
    %v5375 = vrot.slane %v5361, 1
    %v5376 = vsel %vm1753, %v5374, %v5375
    %v5377 = vrot.slane %v5362, 1
    %v5378 = vsel %vm1753, %v5375, %v5377
    %v5385 = vadd.f32 %v5335, %v5371
    %v5386 = vadd.f32 %v5336, %v5373
    %v5387 = vadd.f32 %v5337, %v5372
    %v5388 = vadd.f32 %v5338, %v5376
    %v5389 = vadd.f32 %v5339, %v5378
    %v5390 = vadd.f32 %v5340, %v5377
    %v5395 = vrot.slane %v4101, 5
    %v5396 = vrot.slane %v4105, 5
    %v5397 = vsel %vm1728, %v5395, %v5396
    %v5398 = vrot.slane %v4111, 5
    %v5399 = vrot.slane %v4115, 5
    %v5400 = vsel %vm1728, %v5398, %v5399
    %v5407 = vmul.f32 %v5307, %v5395
    %v5408 = vmul.f32 %v5308, %v5397
    %v5409 = vmul.f32 %v5309, %v5396
    %v5410 = vmul.f32 %v5310, %v5398
    %v5411 = vmul.f32 %v5311, %v5400
    %v5412 = vmul.f32 %v5312, %v5399
    %v5419 = vrot.slane %v5407, 2
    %v5420 = vrot.slane %v5408, 2
    %v5421 = vsel %vm1805, %v5419, %v5420
    %v5422 = vrot.slane %v5409, 2
    %v5423 = vsel %vm1805, %v5420, %v5422
    %v5424 = vrot.slane %v5410, 2
    %v5425 = vrot.slane %v5411, 2
    %v5426 = vsel %vm1805, %v5424, %v5425
    %v5427 = vrot.slane %v5412, 2
    %v5428 = vsel %vm1805, %v5425, %v5427
    %v5435 = vadd.f32 %v5385, %v5421
    %v5436 = vadd.f32 %v5386, %v5423
    %v5437 = vadd.f32 %v5387, %v5422
    %v5438 = vadd.f32 %v5388, %v5426
    %v5439 = vadd.f32 %v5389, %v5428
    %v5440 = vadd.f32 %v5390, %v5427
    %v5445 = vrot.slane %v4209, 4
    %v5446 = vrot.slane %v4213, 4
    %v5447 = vsel %vm1780, %v5445, %v5446
    %v5448 = vrot.slane %v4219, 4
    %v5449 = vrot.slane %v4223, 4
    %v5450 = vsel %vm1780, %v5448, %v5449
    %v5457 = vmul.f32 %v5307, %v5445
    %v5458 = vmul.f32 %v5308, %v5447
    %v5459 = vmul.f32 %v5309, %v5446
    %v5460 = vmul.f32 %v5310, %v5448
    %v5461 = vmul.f32 %v5311, %v5450
    %v5462 = vmul.f32 %v5312, %v5449
    %v5469 = vrot.slane %v5457, 3
    %v5470 = vrot.slane %v5458, 3
    %v5471 = vsel %vm4549, %v5469, %v5470
    %v5472 = vrot.slane %v5459, 3
    %v5473 = vsel %vm4549, %v5470, %v5472
    %v5474 = vrot.slane %v5460, 3
    %v5475 = vrot.slane %v5461, 3
    %v5476 = vsel %vm4549, %v5474, %v5475
    %v5477 = vrot.slane %v5462, 3
    %v5478 = vsel %vm4549, %v5475, %v5477
    %v5485 = vadd.f32 %v5435, %v5471
    %v5486 = vadd.f32 %v5436, %v5473
    %v5487 = vadd.f32 %v5437, %v5472
    %v5488 = vadd.f32 %v5438, %v5476
    %v5489 = vadd.f32 %v5439, %v5478
    %v5490 = vadd.f32 %v5440, %v5477
    %v5495 = vrot.slane %v4366, 3
    %v5496 = vrot.slane %v4369, 3
    %v5497 = vsel %vm4549, %v5495, %v5496
    %v5498 = vrot.slane %v4374, 3
    %v5499 = vrot.slane %v4377, 3
    %v5500 = vsel %vm4549, %v5498, %v5499
    %v5507 = vmul.f32 %v5307, %v5495
    %v5508 = vmul.f32 %v5308, %v5497
    %v5509 = vmul.f32 %v5309, %v5496
    %v5510 = vmul.f32 %v5310, %v5498
    %v5511 = vmul.f32 %v5311, %v5500
    %v5512 = vmul.f32 %v5312, %v5499
    %v5519 = vrot.slane %v5507, 4
    %v5520 = vrot.slane %v5508, 4
    %v5521 = vsel %vm1780, %v5519, %v5520
    %v5522 = vrot.slane %v5509, 4
    %v5523 = vsel %vm1780, %v5520, %v5522
    %v5524 = vrot.slane %v5510, 4
    %v5525 = vrot.slane %v5511, 4
    %v5526 = vsel %vm1780, %v5524, %v5525
    %v5527 = vrot.slane %v5512, 4
    %v5528 = vsel %vm1780, %v5525, %v5527
    %v5535 = vadd.f32 %v5485, %v5521
    %v5536 = vadd.f32 %v5486, %v5523
    %v5537 = vadd.f32 %v5487, %v5522
    %v5538 = vadd.f32 %v5488, %v5526
    %v5539 = vadd.f32 %v5489, %v5528
    %v5540 = vadd.f32 %v5490, %v5527
    %v5547 = vrot.slane %v5535, 1
    %v5548 = vrot.slane %v5536, 1
    %v5549 = vsel %vm1753, %v5547, %v5548
    %v5550 = vrot.slane %v5537, 1
    %v5551 = vsel %vm1753, %v5548, %v5550
    %v5552 = vrot.slane %v5538, 1
    %v5553 = vrot.slane %v5539, 1
    %v5554 = vsel %vm1753, %v5552, %v5553
    %v5555 = vrot.slane %v5540, 1
    %v5556 = vsel %vm1753, %v5553, %v5555
    %v5561 = vmax.f32 %v5549, 0.0
    %v5562 = vmax.f32 %v5551, 0.0
    %v5563 = vmax.f32 %v5554, 0.0
    %v5564 = vmax.f32 %v5556, 0.0
    %s5565 = scalar_lea.vmem [#allocation7], 128
    %v5566 = vld [vmem:[%s5565] sm:$0xff]
    %v5567 = vld [vmem:[%s5565 + $0x8] sm:$0xff]
    %v5568 = vld [vmem:[%s5565 + $0x10] sm:$0xff]
    %v5569 = vld [vmem:[%s5565 + $0x18] sm:$0xff]
    %v5570 = vld [vmem:[%s5565 + $0x20] sm:$0xff]
    %v5571 = vld [vmem:[%s5565 + $0x28] sm:$0xff]
    %v5572 = vld [vmem:[%s5565 + $0x30] sm:$0xff]
    %v5573 = vld [vmem:[%s5565 + $0x38] sm:$0xff]
    %v5574 = vld [vmem:[%s5565 + $0x40] sm:$0xff]
    %v5575 = vld [vmem:[%s5565 + $0x48] sm:$0xff]
    %v5576 = vld [vmem:[%s5565 + $0x50] sm:$0xff]
    %v5577 = vld [vmem:[%s5565 + $0x58] sm:$0xff]
    %v5578 = vld [vmem:[%s5565 + $0x60] sm:$0xff]
    %v5579 = vld [vmem:[%s5565 + $0x68] sm:$0xff]
    %v5580 = vld [vmem:[%s5565 + $0x70] sm:$0xff]
    %v5581 = vld [vmem:[%s5565 + $0x78] sm:$0xff]
    %5582 = vmatprep.subr.mxu0 0.0
    %v5583 = vand.u32 %v5566, 4294901760
    %5584 = vmatpush1.msra.mxu0 %v5583
    %5585 = vmatprep.subr.mxu0 0.0
    %v5586 = vand.u32 %v5567, 4294901760
    %5587 = vmatpush1.msra.mxu0 %v5586
    %5588 = vmatprep.subr.mxu0 0.0
    %v5589 = vand.u32 %v5568, 4294901760
    %5590 = vmatpush1.msra.mxu0 %v5589
    %5591 = vmatprep.subr.mxu0 0.0
    %v5592 = vand.u32 %v5569, 4294901760
    %5593 = vmatpush1.msra.mxu0 %v5592
    %5594 = vmatprep.subr.mxu0 0.0
    %v5595 = vand.u32 %v5570, 4294901760
    %5596 = vmatpush1.msra.mxu0 %v5595
    %5597 = vmatprep.subr.mxu0 0.0
    %v5598 = vand.u32 %v5571, 4294901760
    %5599 = vmatpush1.msra.mxu0 %v5598
    %5600 = vmatprep.subr.mxu0 0.0
    %v5601 = vand.u32 %v5572, 4294901760
    %5602 = vmatpush1.msra.mxu0 %v5601
    %5603 = vmatprep.subr.mxu0 0.0
    %v5604 = vand.u32 %v5573, 4294901760
    %5605 = vmatpush1.msra.mxu0 %v5604
    %5606 = vmatprep.subr.mxu0 0.0
    %v5607 = vand.u32 %v5574, 4294901760
    %5608 = vmatpush1.msra.mxu0 %v5607
    %5609 = vmatprep.subr.mxu0 0.0
    %v5610 = vand.u32 %v5575, 4294901760
    %5611 = vmatpush1.msra.mxu0 %v5610
    %5612 = vmatprep.subr.mxu0 0.0
    %v5613 = vand.u32 %v5576, 4294901760
    %5614 = vmatpush1.msra.mxu0 %v5613
    %5615 = vmatprep.subr.mxu0 0.0
    %v5616 = vand.u32 %v5577, 4294901760
    %5617 = vmatpush1.msra.mxu0 %v5616
    %5618 = vmatprep.subr.mxu0 0.0
    %v5619 = vand.u32 %v5578, 4294901760
    %5620 = vmatpush1.msra.mxu0 %v5619
    %5621 = vmatprep.subr.mxu0 0.0
    %v5622 = vand.u32 %v5579, 4294901760
    %5623 = vmatpush1.msra.mxu0 %v5622
    %5624 = vmatprep.subr.mxu0 0.0
    %v5625 = vand.u32 %v5580, 4294901760
    %5626 = vmatpush1.msra.mxu0 %v5625
    %5627 = vmatprep.subr.mxu0 0.0
    %v5628 = vand.u32 %v5581, 4294901760
    %5629 = vmatpush1.msra.mxu0 %v5628
    %5630 = vmatprep.subr.mxu0 0.0
    %5631 = vmatpush1.msra.mxu0 0.0
    %5632 = vmatprep.subr.mxu0 0.0
    %5633 = vmatpush1.msra.mxu0 0.0
    %5634 = vmatprep.subr.mxu0 0.0
    %5635 = vmatpush1.msra.mxu0 0.0
    %5636 = vmatprep.subr.mxu0 0.0
    %5637 = vmatpush1.msra.mxu0 0.0
    %5638 = vmatprep.subr.mxu0 0.0
    %5639 = vmatpush1.msra.mxu0 0.0
    %5640 = vmatprep.subr.mxu0 0.0
    %5641 = vmatpush1.msra.mxu0 0.0
    %5642 = vmatprep.subr.mxu0 0.0
    %5643 = vmatpush1.msra.mxu0 0.0
    %5644 = vmatprep.subr.mxu0 0.0
    %5645 = vmatpush1.msra.mxu0 0.0
    %5646 = vmatprep.subr.mxu0 0.0
    %5647 = vmatpush1.msra.mxu0 0.0
    %5648 = vmatprep.subr.mxu0 0.0
    %5649 = vmatpush1.msra.mxu0 0.0
    %5650 = vmatprep.subr.mxu0 0.0
    %5651 = vmatpush1.msra.mxu0 0.0
    %5652 = vmatprep.subr.mxu0 0.0
    %5653 = vmatpush1.msra.mxu0 0.0
    %5654 = vmatprep.subr.mxu0 0.0
    %5655 = vmatpush1.msra.mxu0 0.0
    %5656 = vmatprep.subr.mxu0 0.0
    %5657 = vmatpush1.msra.mxu0 0.0
    %5658 = vmatprep.subr.mxu0 0.0
    %5659 = vmatpush1.msra.mxu0 0.0
    %5660 = vmatprep.subr.mxu0 0.0
    %5661 = vmatpush1.msra.mxu0 0.0
    %5662 = vmatprep.mubr.f32.mxu0 0.0
    %v5663 = vand.u32 %v5561, 4294901760
    %v5664 = vsub.f32 %v5561, %v5663
    %v5665 = vand.u32 %v5664, 4294901760
    %v5666 = vsub.f32 %v5664, %v5665
    %v5667 = vand.u32 %v5666, 4294901760
    %5668 = vmatmul.mubr.f32.gmra.mrb[0].mxu0 %v5667
    %v5669 = vpop.f32.mrb[0].mxu0
    %v5670 = vadd.f32 0.0, %v5669
    %v5671 = vpop.f32.mrb[0].mxu0
    %5672 = vmatprep.mubr.f32.mxu0 0.0
    %v5673 = vand.u32 %v5562, 4294901760
    %v5674 = vsub.f32 %v5562, %v5673
    %v5675 = vand.u32 %v5674, 4294901760
    %v5676 = vsub.f32 %v5674, %v5675
    %v5677 = vand.u32 %v5676, 4294901760
    %5678 = vmatmul.mubr.f32.gmra.mrb[0].mxu0 %v5677
    %v5679 = vpop.f32.mrb[0].mxu0
    %v5680 = vadd.f32 0.0, %v5679
    %v5681 = vpop.f32.mrb[0].mxu0
    %5682 = vmatprep.mubr.f32.mxu0 0.0
    %v5683 = vand.u32 %v5563, 4294901760
    %v5684 = vsub.f32 %v5563, %v5683
    %v5685 = vand.u32 %v5684, 4294901760
    %v5686 = vsub.f32 %v5684, %v5685
    %v5687 = vand.u32 %v5686, 4294901760
    %5688 = vmatmul.mubr.f32.gmra.mrb[0].mxu0 %v5687
    %v5689 = vpop.f32.mrb[0].mxu0
    %v5690 = vadd.f32 0.0, %v5689
    %v5691 = vpop.f32.mrb[0].mxu0
    %5692 = vmatprep.mubr.f32.mxu0 0.0
    %v5693 = vand.u32 %v5564, 4294901760
    %v5694 = vsub.f32 %v5564, %v5693
    %v5695 = vand.u32 %v5694, 4294901760
    %v5696 = vsub.f32 %v5694, %v5695
    %v5697 = vand.u32 %v5696, 4294901760
    %5698 = vmatmul.mubr.f32.gmra.mrb[0].mxu0 %v5697
    %v5699 = vpop.f32.mrb[0].mxu0
    %v5700 = vadd.f32 0.0, %v5699
    %v5701 = vpop.f32.mrb[0].mxu0
    %5702 = vdwg.mxu0
    %5703 = vmatprep.subr.mxu0 0.0
    %v5704 = vand.u32 %v5566, 4294901760
    %v5705 = vsub.f32 %v5566, %v5704
    %v5706 = vand.u32 %v5705, 4294901760
    %v5707 = vsub.f32 %v5705, %v5706
    %v5708 = vand.u32 %v5707, 4294901760
    %5709 = vmatpush1.msra.mxu0 %v5708
    %5710 = vmatprep.subr.mxu0 0.0
    %v5711 = vand.u32 %v5567, 4294901760
    %v5712 = vsub.f32 %v5567, %v5711
    %v5713 = vand.u32 %v5712, 4294901760
    %v5714 = vsub.f32 %v5712, %v5713
    %v5715 = vand.u32 %v5714, 4294901760
    %5716 = vmatpush1.msra.mxu0 %v5715
    %5717 = vmatprep.subr.mxu0 0.0
    %v5718 = vand.u32 %v5568, 4294901760
    %v5719 = vsub.f32 %v5568, %v5718
    %v5720 = vand.u32 %v5719, 4294901760
    %v5721 = vsub.f32 %v5719, %v5720
    %v5722 = vand.u32 %v5721, 4294901760
    %5723 = vmatpush1.msra.mxu0 %v5722
    %5724 = vmatprep.subr.mxu0 0.0
    %v5725 = vand.u32 %v5569, 4294901760
    %v5726 = vsub.f32 %v5569, %v5725
    %v5727 = vand.u32 %v5726, 4294901760
    %v5728 = vsub.f32 %v5726, %v5727
    %v5729 = vand.u32 %v5728, 4294901760
    %5730 = vmatpush1.msra.mxu0 %v5729
    %5731 = vmatprep.subr.mxu0 0.0
    %v5732 = vand.u32 %v5570, 4294901760
    %v5733 = vsub.f32 %v5570, %v5732
    %v5734 = vand.u32 %v5733, 4294901760
    %v5735 = vsub.f32 %v5733, %v5734
    %v5736 = vand.u32 %v5735, 4294901760
    %5737 = vmatpush1.msra.mxu0 %v5736
    %5738 = vmatprep.subr.mxu0 0.0
    %v5739 = vand.u32 %v5571, 4294901760
    %v5740 = vsub.f32 %v5571, %v5739
    %v5741 = vand.u32 %v5740, 4294901760
    %v5742 = vsub.f32 %v5740, %v5741
    %v5743 = vand.u32 %v5742, 4294901760
    %5744 = vmatpush1.msra.mxu0 %v5743
    %5745 = vmatprep.subr.mxu0 0.0
    %v5746 = vand.u32 %v5572, 4294901760
    %v5747 = vsub.f32 %v5572, %v5746
    %v5748 = vand.u32 %v5747, 4294901760
    %v5749 = vsub.f32 %v5747, %v5748
    %v5750 = vand.u32 %v5749, 4294901760
    %5751 = vmatpush1.msra.mxu0 %v5750
    %5752 = vmatprep.subr.mxu0 0.0
    %v5753 = vand.u32 %v5573, 4294901760
    %v5754 = vsub.f32 %v5573, %v5753
    %v5755 = vand.u32 %v5754, 4294901760
    %v5756 = vsub.f32 %v5754, %v5755
    %v5757 = vand.u32 %v5756, 4294901760
    %5758 = vmatpush1.msra.mxu0 %v5757
    %5759 = vmatprep.subr.mxu0 0.0
    %v5760 = vand.u32 %v5574, 4294901760
    %v5761 = vsub.f32 %v5574, %v5760
    %v5762 = vand.u32 %v5761, 4294901760
    %v5763 = vsub.f32 %v5761, %v5762
    %v5764 = vand.u32 %v5763, 4294901760
    %5765 = vmatpush1.msra.mxu0 %v5764
    %5766 = vmatprep.subr.mxu0 0.0
    %v5767 = vand.u32 %v5575, 4294901760
    %v5768 = vsub.f32 %v5575, %v5767
    %v5769 = vand.u32 %v5768, 4294901760
    %v5770 = vsub.f32 %v5768, %v5769
    %v5771 = vand.u32 %v5770, 4294901760
    %5772 = vmatpush1.msra.mxu0 %v5771
    %5773 = vmatprep.subr.mxu0 0.0
    %v5774 = vand.u32 %v5576, 4294901760
    %v5775 = vsub.f32 %v5576, %v5774
    %v5776 = vand.u32 %v5775, 4294901760
    %v5777 = vsub.f32 %v5775, %v5776
    %v5778 = vand.u32 %v5777, 4294901760
    %5779 = vmatpush1.msra.mxu0 %v5778
    %5780 = vmatprep.subr.mxu0 0.0
    %v5781 = vand.u32 %v5577, 4294901760
    %v5782 = vsub.f32 %v5577, %v5781
    %v5783 = vand.u32 %v5782, 4294901760
    %v5784 = vsub.f32 %v5782, %v5783
    %v5785 = vand.u32 %v5784, 4294901760
    %5786 = vmatpush1.msra.mxu0 %v5785
    %5787 = vmatprep.subr.mxu0 0.0
    %v5788 = vand.u32 %v5578, 4294901760
    %v5789 = vsub.f32 %v5578, %v5788
    %v5790 = vand.u32 %v5789, 4294901760
    %v5791 = vsub.f32 %v5789, %v5790
    %v5792 = vand.u32 %v5791, 4294901760
    %5793 = vmatpush1.msra.mxu0 %v5792
    %5794 = vmatprep.subr.mxu0 0.0
    %v5795 = vand.u32 %v5579, 4294901760
    %v5796 = vsub.f32 %v5579, %v5795
    %v5797 = vand.u32 %v5796, 4294901760
    %v5798 = vsub.f32 %v5796, %v5797
    %v5799 = vand.u32 %v5798, 4294901760
    %5800 = vmatpush1.msra.mxu0 %v5799
    %5801 = vmatprep.subr.mxu0 0.0
    %v5802 = vand.u32 %v5580, 4294901760
    %v5803 = vsub.f32 %v5580, %v5802
    %v5804 = vand.u32 %v5803, 4294901760
    %v5805 = vsub.f32 %v5803, %v5804
    %v5806 = vand.u32 %v5805, 4294901760
    %5807 = vmatpush1.msra.mxu0 %v5806
    %5808 = vmatprep.subr.mxu0 0.0
    %v5809 = vand.u32 %v5581, 4294901760
    %v5810 = vsub.f32 %v5581, %v5809
    %v5811 = vand.u32 %v5810, 4294901760
    %v5812 = vsub.f32 %v5810, %v5811
    %v5813 = vand.u32 %v5812, 4294901760
    %5814 = vmatpush1.msra.mxu0 %v5813
    %5815 = vmatprep.subr.mxu0 0.0
    %5816 = vmatpush1.msra.mxu0 0.0
    %5817 = vmatprep.subr.mxu0 0.0
    %5818 = vmatpush1.msra.mxu0 0.0
    %5819 = vmatprep.subr.mxu0 0.0
    %5820 = vmatpush1.msra.mxu0 0.0
    %5821 = vmatprep.subr.mxu0 0.0
    %5822 = vmatpush1.msra.mxu0 0.0
    %5823 = vmatprep.subr.mxu0 0.0
    %5824 = vmatpush1.msra.mxu0 0.0
    %5825 = vmatprep.subr.mxu0 0.0
    %5826 = vmatpush1.msra.mxu0 0.0
    %5827 = vmatprep.subr.mxu0 0.0
    %5828 = vmatpush1.msra.mxu0 0.0
    %5829 = vmatprep.subr.mxu0 0.0
    %5830 = vmatpush1.msra.mxu0 0.0
    %5831 = vmatprep.subr.mxu0 0.0
    %5832 = vmatpush1.msra.mxu0 0.0
    %5833 = vmatprep.subr.mxu0 0.0
    %5834 = vmatpush1.msra.mxu0 0.0
    %5835 = vmatprep.subr.mxu0 0.0
    %5836 = vmatpush1.msra.mxu0 0.0
    %5837 = vmatprep.subr.mxu0 0.0
    %5838 = vmatpush1.msra.mxu0 0.0
    %5839 = vmatprep.subr.mxu0 0.0
    %5840 = vmatpush1.msra.mxu0 0.0
    %5841 = vmatprep.subr.mxu0 0.0
    %5842 = vmatpush1.msra.mxu0 0.0
    %5843 = vmatprep.subr.mxu0 0.0
    %5844 = vmatpush1.msra.mxu0 0.0
    %5845 = vmatprep.subr.mxu0 0.0
    %5846 = vmatpush1.msra.mxu0 0.0
    %5847 = vmatprep.mubr.f32.mxu0 0.0
    %v5848 = vand.u32 %v5561, 4294901760
    %5849 = vmatmul.mubr.f32.gmra.mrb[0].mxu0 %v5848
    %v5850 = vpop.f32.mrb[0].mxu0
    %v5851 = vadd.f32 %v5670, %v5850
    %v5852 = vpop.f32.mrb[0].mxu0
    %5853 = vmatprep.mubr.f32.mxu0 0.0
    %v5854 = vand.u32 %v5562, 4294901760
    %5855 = vmatmul.mubr.f32.gmra.mrb[0].mxu0 %v5854
    %v5856 = vpop.f32.mrb[0].mxu0
    %v5857 = vadd.f32 %v5680, %v5856
    %v5858 = vpop.f32.mrb[0].mxu0
    %5859 = vmatprep.mubr.f32.mxu0 0.0
    %v5860 = vand.u32 %v5563, 4294901760
    %5861 = vmatmul.mubr.f32.gmra.mrb[0].mxu0 %v5860
    %v5862 = vpop.f32.mrb[0].mxu0
    %v5863 = vadd.f32 %v5690, %v5862
    %v5864 = vpop.f32.mrb[0].mxu0
    %5865 = vmatprep.mubr.f32.mxu0 0.0
    %v5866 = vand.u32 %v5564, 4294901760
    %5867 = vmatmul.mubr.f32.gmra.mrb[0].mxu0 %v5866
    %v5868 = vpop.f32.mrb[0].mxu0
    %v5869 = vadd.f32 %v5700, %v5868
    %v5870 = vpop.f32.mrb[0].mxu0
    %5871 = vdwg.mxu0
    %5872 = vmatprep.subr.mxu0 0.0
    %v5873 = vand.u32 %v5566, 4294901760
    %v5874 = vsub.f32 %v5566, %v5873
    %5875 = vmatpush1.msra.mxu0 %v5874
    %5876 = vmatprep.subr.mxu0 0.0
    %v5877 = vand.u32 %v5567, 4294901760
    %v5878 = vsub.f32 %v5567, %v5877
    %5879 = vmatpush1.msra.mxu0 %v5878
    %5880 = vmatprep.subr.mxu0 0.0
    %v5881 = vand.u32 %v5568, 4294901760
    %v5882 = vsub.f32 %v5568, %v5881
    %5883 = vmatpush1.msra.mxu0 %v5882
    %5884 = vmatprep.subr.mxu0 0.0
    %v5885 = vand.u32 %v5569, 4294901760
    %v5886 = vsub.f32 %v5569, %v5885
    %5887 = vmatpush1.msra.mxu0 %v5886
    %5888 = vmatprep.subr.mxu0 0.0
    %v5889 = vand.u32 %v5570, 4294901760
    %v5890 = vsub.f32 %v5570, %v5889
    %5891 = vmatpush1.msra.mxu0 %v5890
    %5892 = vmatprep.subr.mxu0 0.0
    %v5893 = vand.u32 %v5571, 4294901760
    %v5894 = vsub.f32 %v5571, %v5893
    %5895 = vmatpush1.msra.mxu0 %v5894
    %5896 = vmatprep.subr.mxu0 0.0
    %v5897 = vand.u32 %v5572, 4294901760
    %v5898 = vsub.f32 %v5572, %v5897
    %5899 = vmatpush1.msra.mxu0 %v5898
    %5900 = vmatprep.subr.mxu0 0.0
    %v5901 = vand.u32 %v5573, 4294901760
    %v5902 = vsub.f32 %v5573, %v5901
    %5903 = vmatpush1.msra.mxu0 %v5902
    %5904 = vmatprep.subr.mxu0 0.0
    %v5905 = vand.u32 %v5574, 4294901760
    %v5906 = vsub.f32 %v5574, %v5905
    %5907 = vmatpush1.msra.mxu0 %v5906
    %5908 = vmatprep.subr.mxu0 0.0
    %v5909 = vand.u32 %v5575, 4294901760
    %v5910 = vsub.f32 %v5575, %v5909
    %5911 = vmatpush1.msra.mxu0 %v5910
    %5912 = vmatprep.subr.mxu0 0.0
    %v5913 = vand.u32 %v5576, 4294901760
    %v5914 = vsub.f32 %v5576, %v5913
    %5915 = vmatpush1.msra.mxu0 %v5914
    %5916 = vmatprep.subr.mxu0 0.0
    %v5917 = vand.u32 %v5577, 4294901760
    %v5918 = vsub.f32 %v5577, %v5917
    %5919 = vmatpush1.msra.mxu0 %v5918
    %5920 = vmatprep.subr.mxu0 0.0
    %v5921 = vand.u32 %v5578, 4294901760
    %v5922 = vsub.f32 %v5578, %v5921
    %5923 = vmatpush1.msra.mxu0 %v5922
    %5924 = vmatprep.subr.mxu0 0.0
    %v5925 = vand.u32 %v5579, 4294901760
    %v5926 = vsub.f32 %v5579, %v5925
    %5927 = vmatpush1.msra.mxu0 %v5926
    %5928 = vmatprep.subr.mxu0 0.0
    %v5929 = vand.u32 %v5580, 4294901760
    %v5930 = vsub.f32 %v5580, %v5929
    %5931 = vmatpush1.msra.mxu0 %v5930
    %5932 = vmatprep.subr.mxu0 0.0
    %v5933 = vand.u32 %v5581, 4294901760
    %v5934 = vsub.f32 %v5581, %v5933
    %5935 = vmatpush1.msra.mxu0 %v5934
    %5936 = vmatprep.subr.mxu0 0.0
    %5937 = vmatpush1.msra.mxu0 0.0
    %5938 = vmatprep.subr.mxu0 0.0
    %5939 = vmatpush1.msra.mxu0 0.0
    %5940 = vmatprep.subr.mxu0 0.0
    %5941 = vmatpush1.msra.mxu0 0.0
    %5942 = vmatprep.subr.mxu0 0.0
    %5943 = vmatpush1.msra.mxu0 0.0
    %5944 = vmatprep.subr.mxu0 0.0
    %5945 = vmatpush1.msra.mxu0 0.0
    %5946 = vmatprep.subr.mxu0 0.0
    %5947 = vmatpush1.msra.mxu0 0.0
    %5948 = vmatprep.subr.mxu0 0.0
    %5949 = vmatpush1.msra.mxu0 0.0
    %5950 = vmatprep.subr.mxu0 0.0
    %5951 = vmatpush1.msra.mxu0 0.0
    %5952 = vmatprep.subr.mxu0 0.0
    %5953 = vmatpush1.msra.mxu0 0.0
    %5954 = vmatprep.subr.mxu0 0.0
    %5955 = vmatpush1.msra.mxu0 0.0
    %5956 = vmatprep.subr.mxu0 0.0
    %5957 = vmatpush1.msra.mxu0 0.0
    %5958 = vmatprep.subr.mxu0 0.0
    %5959 = vmatpush1.msra.mxu0 0.0
    %5960 = vmatprep.subr.mxu0 0.0
    %5961 = vmatpush1.msra.mxu0 0.0
    %5962 = vmatprep.subr.mxu0 0.0
    %5963 = vmatpush1.msra.mxu0 0.0
    %5964 = vmatprep.subr.mxu0 0.0
    %5965 = vmatpush1.msra.mxu0 0.0
    %5966 = vmatprep.subr.mxu0 0.0
    %5967 = vmatpush1.msra.mxu0 0.0
    %5968 = vmatprep.mubr.f32.mxu0 0.0
    %v5969 = vand.u32 %v5561, 4294901760
    %v5970 = vsub.f32 %v5561, %v5969
    %5971 = vmatmul.mubr.f32.gmra.mrb[0].mxu0 %v5970
    %v5972 = vpop.f32.mrb[0].mxu0
    %v5973 = vadd.f32 %v5851, %v5972
    %v5974 = vpop.f32.mrb[0].mxu0
    %5975 = vmatprep.mubr.f32.mxu0 0.0
    %v5976 = vand.u32 %v5562, 4294901760
    %v5977 = vsub.f32 %v5562, %v5976
    %5978 = vmatmul.mubr.f32.gmra.mrb[0].mxu0 %v5977
    %v5979 = vpop.f32.mrb[0].mxu0
    %v5980 = vadd.f32 %v5857, %v5979
    %v5981 = vpop.f32.mrb[0].mxu0
    %5982 = vmatprep.mubr.f32.mxu0 0.0
    %v5983 = vand.u32 %v5563, 4294901760
    %v5984 = vsub.f32 %v5563, %v5983
    %5985 = vmatmul.mubr.f32.gmra.mrb[0].mxu0 %v5984
    %v5986 = vpop.f32.mrb[0].mxu0
    %v5987 = vadd.f32 %v5863, %v5986
    %v5988 = vpop.f32.mrb[0].mxu0
    %5989 = vmatprep.mubr.f32.mxu0 0.0
    %v5990 = vand.u32 %v5564, 4294901760
    %v5991 = vsub.f32 %v5564, %v5990
    %5992 = vmatmul.mubr.f32.gmra.mrb[0].mxu0 %v5991
    %v5993 = vpop.f32.mrb[0].mxu0
    %v5994 = vadd.f32 %v5869, %v5993
    %v5995 = vpop.f32.mrb[0].mxu0
    %5996 = vdwg.mxu0
    %5997 = vmatprep.subr.mxu0 0.0
    %v5998 = vand.u32 %v5566, 4294901760
    %5999 = vmatpush1.msra.mxu0 %v5998
    %6000 = vmatprep.subr.mxu0 0.0
    %v6001 = vand.u32 %v5567, 4294901760
    %6002 = vmatpush1.msra.mxu0 %v6001
    %6003 = vmatprep.subr.mxu0 0.0
    %v6004 = vand.u32 %v5568, 4294901760
    %6005 = vmatpush1.msra.mxu0 %v6004
    %6006 = vmatprep.subr.mxu0 0.0
    %v6007 = vand.u32 %v5569, 4294901760
    %6008 = vmatpush1.msra.mxu0 %v6007
    %6009 = vmatprep.subr.mxu0 0.0
    %v6010 = vand.u32 %v5570, 4294901760
    %6011 = vmatpush1.msra.mxu0 %v6010
    %6012 = vmatprep.subr.mxu0 0.0
    %v6013 = vand.u32 %v5571, 4294901760
    %6014 = vmatpush1.msra.mxu0 %v6013
    %6015 = vmatprep.subr.mxu0 0.0
    %v6016 = vand.u32 %v5572, 4294901760
    %6017 = vmatpush1.msra.mxu0 %v6016
    %6018 = vmatprep.subr.mxu0 0.0
    %v6019 = vand.u32 %v5573, 4294901760
    %6020 = vmatpush1.msra.mxu0 %v6019
    %6021 = vmatprep.subr.mxu0 0.0
    %v6022 = vand.u32 %v5574, 4294901760
    %6023 = vmatpush1.msra.mxu0 %v6022
    %6024 = vmatprep.subr.mxu0 0.0
    %v6025 = vand.u32 %v5575, 4294901760
    %6026 = vmatpush1.msra.mxu0 %v6025
    %6027 = vmatprep.subr.mxu0 0.0
    %v6028 = vand.u32 %v5576, 4294901760
    %6029 = vmatpush1.msra.mxu0 %v6028
    %6030 = vmatprep.subr.mxu0 0.0
    %v6031 = vand.u32 %v5577, 4294901760
    %6032 = vmatpush1.msra.mxu0 %v6031
    %6033 = vmatprep.subr.mxu0 0.0
    %v6034 = vand.u32 %v5578, 4294901760
    %6035 = vmatpush1.msra.mxu0 %v6034
    %6036 = vmatprep.subr.mxu0 0.0
    %v6037 = vand.u32 %v5579, 4294901760
    %6038 = vmatpush1.msra.mxu0 %v6037
    %6039 = vmatprep.subr.mxu0 0.0
    %v6040 = vand.u32 %v5580, 4294901760
    %6041 = vmatpush1.msra.mxu0 %v6040
    %6042 = vmatprep.subr.mxu0 0.0
    %v6043 = vand.u32 %v5581, 4294901760
    %6044 = vmatpush1.msra.mxu0 %v6043
    %6045 = vmatprep.subr.mxu0 0.0
    %6046 = vmatpush1.msra.mxu0 0.0
    %6047 = vmatprep.subr.mxu0 0.0
    %6048 = vmatpush1.msra.mxu0 0.0
    %6049 = vmatprep.subr.mxu0 0.0
    %6050 = vmatpush1.msra.mxu0 0.0
    %6051 = vmatprep.subr.mxu0 0.0
    %6052 = vmatpush1.msra.mxu0 0.0
    %6053 = vmatprep.subr.mxu0 0.0
    %6054 = vmatpush1.msra.mxu0 0.0
    %6055 = vmatprep.subr.mxu0 0.0
    %6056 = vmatpush1.msra.mxu0 0.0
    %6057 = vmatprep.subr.mxu0 0.0
    %6058 = vmatpush1.msra.mxu0 0.0
    %6059 = vmatprep.subr.mxu0 0.0
    %6060 = vmatpush1.msra.mxu0 0.0
    %6061 = vmatprep.subr.mxu0 0.0
    %6062 = vmatpush1.msra.mxu0 0.0
    %6063 = vmatprep.subr.mxu0 0.0
    %6064 = vmatpush1.msra.mxu0 0.0
    %6065 = vmatprep.subr.mxu0 0.0
    %6066 = vmatpush1.msra.mxu0 0.0
    %6067 = vmatprep.subr.mxu0 0.0
    %6068 = vmatpush1.msra.mxu0 0.0
    %6069 = vmatprep.subr.mxu0 0.0
    %6070 = vmatpush1.msra.mxu0 0.0
    %6071 = vmatprep.subr.mxu0 0.0
    %6072 = vmatpush1.msra.mxu0 0.0
    %6073 = vmatprep.subr.mxu0 0.0
    %6074 = vmatpush1.msra.mxu0 0.0
    %6075 = vmatprep.subr.mxu0 0.0
    %6076 = vmatpush1.msra.mxu0 0.0
    %6077 = vmatprep.mubr.f32.mxu0 0.0
    %v6078 = vand.u32 %v5561, 4294901760
    %v6079 = vsub.f32 %v5561, %v6078
    %v6080 = vand.u32 %v6079, 4294901760
    %6081 = vmatmul.mubr.f32.gmra.mrb[0].mxu0 %v6080
    %v6082 = vpop.f32.mrb[0].mxu0
    %v6083 = vadd.f32 %v5973, %v6082
    %v6084 = vpop.f32.mrb[0].mxu0
    %6085 = vmatprep.mubr.f32.mxu0 0.0
    %v6086 = vand.u32 %v5562, 4294901760
    %v6087 = vsub.f32 %v5562, %v6086
    %v6088 = vand.u32 %v6087, 4294901760
    %6089 = vmatmul.mubr.f32.gmra.mrb[0].mxu0 %v6088
    %v6090 = vpop.f32.mrb[0].mxu0
    %v6091 = vadd.f32 %v5980, %v6090
    %v6092 = vpop.f32.mrb[0].mxu0
    %6093 = vmatprep.mubr.f32.mxu0 0.0
    %v6094 = vand.u32 %v5563, 4294901760
    %v6095 = vsub.f32 %v5563, %v6094
    %v6096 = vand.u32 %v6095, 4294901760
    %6097 = vmatmul.mubr.f32.gmra.mrb[0].mxu0 %v6096
    %v6098 = vpop.f32.mrb[0].mxu0
    %v6099 = vadd.f32 %v5987, %v6098
    %v6100 = vpop.f32.mrb[0].mxu0
    %6101 = vmatprep.mubr.f32.mxu0 0.0
    %v6102 = vand.u32 %v5564, 4294901760
    %v6103 = vsub.f32 %v5564, %v6102
    %v6104 = vand.u32 %v6103, 4294901760
    %6105 = vmatmul.mubr.f32.gmra.mrb[0].mxu0 %v6104
    %v6106 = vpop.f32.mrb[0].mxu0
    %v6107 = vadd.f32 %v5994, %v6106
    %v6108 = vpop.f32.mrb[0].mxu0
    %6109 = vdwg.mxu0
    %6110 = vmatprep.subr.mxu0 0.0
    %v6111 = vand.u32 %v5566, 4294901760
    %v6112 = vsub.f32 %v5566, %v6111
    %v6113 = vand.u32 %v6112, 4294901760
    %6114 = vmatpush1.msra.mxu0 %v6113
    %6115 = vmatprep.subr.mxu0 0.0
    %v6116 = vand.u32 %v5567, 4294901760
    %v6117 = vsub.f32 %v5567, %v6116
    %v6118 = vand.u32 %v6117, 4294901760
    %6119 = vmatpush1.msra.mxu0 %v6118
    %6120 = vmatprep.subr.mxu0 0.0
    %v6121 = vand.u32 %v5568, 4294901760
    %v6122 = vsub.f32 %v5568, %v6121
    %v6123 = vand.u32 %v6122, 4294901760
    %6124 = vmatpush1.msra.mxu0 %v6123
    %6125 = vmatprep.subr.mxu0 0.0
    %v6126 = vand.u32 %v5569, 4294901760
    %v6127 = vsub.f32 %v5569, %v6126
    %v6128 = vand.u32 %v6127, 4294901760
    %6129 = vmatpush1.msra.mxu0 %v6128
    %6130 = vmatprep.subr.mxu0 0.0
    %v6131 = vand.u32 %v5570, 4294901760
    %v6132 = vsub.f32 %v5570, %v6131
    %v6133 = vand.u32 %v6132, 4294901760
    %6134 = vmatpush1.msra.mxu0 %v6133
    %6135 = vmatprep.subr.mxu0 0.0
    %v6136 = vand.u32 %v5571, 4294901760
    %v6137 = vsub.f32 %v5571, %v6136
    %v6138 = vand.u32 %v6137, 4294901760
    %6139 = vmatpush1.msra.mxu0 %v6138
    %6140 = vmatprep.subr.mxu0 0.0
    %v6141 = vand.u32 %v5572, 4294901760
    %v6142 = vsub.f32 %v5572, %v6141
    %v6143 = vand.u32 %v6142, 4294901760
    %6144 = vmatpush1.msra.mxu0 %v6143
    %6145 = vmatprep.subr.mxu0 0.0
    %v6146 = vand.u32 %v5573, 4294901760
    %v6147 = vsub.f32 %v5573, %v6146
    %v6148 = vand.u32 %v6147, 4294901760
    %6149 = vmatpush1.msra.mxu0 %v6148
    %6150 = vmatprep.subr.mxu0 0.0
    %v6151 = vand.u32 %v5574, 4294901760
    %v6152 = vsub.f32 %v5574, %v6151
    %v6153 = vand.u32 %v6152, 4294901760
    %6154 = vmatpush1.msra.mxu0 %v6153
    %6155 = vmatprep.subr.mxu0 0.0
    %v6156 = vand.u32 %v5575, 4294901760
    %v6157 = vsub.f32 %v5575, %v6156
    %v6158 = vand.u32 %v6157, 4294901760
    %6159 = vmatpush1.msra.mxu0 %v6158
    %6160 = vmatprep.subr.mxu0 0.0
    %v6161 = vand.u32 %v5576, 4294901760
    %v6162 = vsub.f32 %v5576, %v6161
    %v6163 = vand.u32 %v6162, 4294901760
    %6164 = vmatpush1.msra.mxu0 %v6163
    %6165 = vmatprep.subr.mxu0 0.0
    %v6166 = vand.u32 %v5577, 4294901760
    %v6167 = vsub.f32 %v5577, %v6166
    %v6168 = vand.u32 %v6167, 4294901760
    %6169 = vmatpush1.msra.mxu0 %v6168
    %6170 = vmatprep.subr.mxu0 0.0
    %v6171 = vand.u32 %v5578, 4294901760
    %v6172 = vsub.f32 %v5578, %v6171
    %v6173 = vand.u32 %v6172, 4294901760
    %6174 = vmatpush1.msra.mxu0 %v6173
    %6175 = vmatprep.subr.mxu0 0.0
    %v6176 = vand.u32 %v5579, 4294901760
    %v6177 = vsub.f32 %v5579, %v6176
    %v6178 = vand.u32 %v6177, 4294901760
    %6179 = vmatpush1.msra.mxu0 %v6178
    %6180 = vmatprep.subr.mxu0 0.0
    %v6181 = vand.u32 %v5580, 4294901760
    %v6182 = vsub.f32 %v5580, %v6181
    %v6183 = vand.u32 %v6182, 4294901760
    %6184 = vmatpush1.msra.mxu0 %v6183
    %6185 = vmatprep.subr.mxu0 0.0
    %v6186 = vand.u32 %v5581, 4294901760
    %v6187 = vsub.f32 %v5581, %v6186
    %v6188 = vand.u32 %v6187, 4294901760
    %6189 = vmatpush1.msra.mxu0 %v6188
    %6190 = vmatprep.subr.mxu0 0.0
    %6191 = vmatpush1.msra.mxu0 0.0
    %6192 = vmatprep.subr.mxu0 0.0
    %6193 = vmatpush1.msra.mxu0 0.0
    %6194 = vmatprep.subr.mxu0 0.0
    %6195 = vmatpush1.msra.mxu0 0.0
    %6196 = vmatprep.subr.mxu0 0.0
    %6197 = vmatpush1.msra.mxu0 0.0
    %6198 = vmatprep.subr.mxu0 0.0
    %6199 = vmatpush1.msra.mxu0 0.0
    %6200 = vmatprep.subr.mxu0 0.0
    %6201 = vmatpush1.msra.mxu0 0.0
    %6202 = vmatprep.subr.mxu0 0.0
    %6203 = vmatpush1.msra.mxu0 0.0
    %6204 = vmatprep.subr.mxu0 0.0
    %6205 = vmatpush1.msra.mxu0 0.0
    %6206 = vmatprep.subr.mxu0 0.0
    %6207 = vmatpush1.msra.mxu0 0.0
    %6208 = vmatprep.subr.mxu0 0.0
    %6209 = vmatpush1.msra.mxu0 0.0
    %6210 = vmatprep.subr.mxu0 0.0
    %6211 = vmatpush1.msra.mxu0 0.0
    %6212 = vmatprep.subr.mxu0 0.0
    %6213 = vmatpush1.msra.mxu0 0.0
    %6214 = vmatprep.subr.mxu0 0.0
    %6215 = vmatpush1.msra.mxu0 0.0
    %6216 = vmatprep.subr.mxu0 0.0
    %6217 = vmatpush1.msra.mxu0 0.0
    %6218 = vmatprep.subr.mxu0 0.0
    %6219 = vmatpush1.msra.mxu0 0.0
    %6220 = vmatprep.subr.mxu0 0.0
    %6221 = vmatpush1.msra.mxu0 0.0
    %6222 = vmatprep.mubr.f32.mxu0 0.0
    %v6223 = vand.u32 %v5561, 4294901760
    %6224 = vmatmul.mubr.f32.gmra.mrb[0].mxu0 %v6223
    %v6225 = vpop.f32.mrb[0].mxu0
    %v6226 = vadd.f32 %v6083, %v6225
    %v6227 = vpop.f32.mrb[0].mxu0
    %6228 = vmatprep.mubr.f32.mxu0 0.0
    %v6229 = vand.u32 %v5562, 4294901760
    %6230 = vmatmul.mubr.f32.gmra.mrb[0].mxu0 %v6229
    %v6231 = vpop.f32.mrb[0].mxu0
    %v6232 = vadd.f32 %v6091, %v6231
    %v6233 = vpop.f32.mrb[0].mxu0
    %6234 = vmatprep.mubr.f32.mxu0 0.0
    %v6235 = vand.u32 %v5563, 4294901760
    %6236 = vmatmul.mubr.f32.gmra.mrb[0].mxu0 %v6235
    %v6237 = vpop.f32.mrb[0].mxu0
    %v6238 = vadd.f32 %v6099, %v6237
    %v6239 = vpop.f32.mrb[0].mxu0
    %6240 = vmatprep.mubr.f32.mxu0 0.0
    %v6241 = vand.u32 %v5564, 4294901760
    %6242 = vmatmul.mubr.f32.gmra.mrb[0].mxu0 %v6241
    %v6243 = vpop.f32.mrb[0].mxu0
    %v6244 = vadd.f32 %v6107, %v6243
    %v6245 = vpop.f32.mrb[0].mxu0
    %6246 = vdwg.mxu0
    %6247 = vmatprep.subr.mxu0 0.0
    %v6248 = vand.u32 %v5566, 4294901760
    %6249 = vmatpush1.msra.mxu0 %v6248
    %6250 = vmatprep.subr.mxu0 0.0
    %v6251 = vand.u32 %v5567, 4294901760
    %6252 = vmatpush1.msra.mxu0 %v6251
    %6253 = vmatprep.subr.mxu0 0.0
    %v6254 = vand.u32 %v5568, 4294901760
    %6255 = vmatpush1.msra.mxu0 %v6254
    %6256 = vmatprep.subr.mxu0 0.0
    %v6257 = vand.u32 %v5569, 4294901760
    %6258 = vmatpush1.msra.mxu0 %v6257
    %6259 = vmatprep.subr.mxu0 0.0
    %v6260 = vand.u32 %v5570, 4294901760
    %6261 = vmatpush1.msra.mxu0 %v6260
    %6262 = vmatprep.subr.mxu0 0.0
    %v6263 = vand.u32 %v5571, 4294901760
    %6264 = vmatpush1.msra.mxu0 %v6263
    %6265 = vmatprep.subr.mxu0 0.0
    %v6266 = vand.u32 %v5572, 4294901760
    %6267 = vmatpush1.msra.mxu0 %v6266
    %6268 = vmatprep.subr.mxu0 0.0
    %v6269 = vand.u32 %v5573, 4294901760
    %6270 = vmatpush1.msra.mxu0 %v6269
    %6271 = vmatprep.subr.mxu0 0.0
    %v6272 = vand.u32 %v5574, 4294901760
    %6273 = vmatpush1.msra.mxu0 %v6272
    %6274 = vmatprep.subr.mxu0 0.0
    %v6275 = vand.u32 %v5575, 4294901760
    %6276 = vmatpush1.msra.mxu0 %v6275
    %6277 = vmatprep.subr.mxu0 0.0
    %v6278 = vand.u32 %v5576, 4294901760
    %6279 = vmatpush1.msra.mxu0 %v6278
    %6280 = vmatprep.subr.mxu0 0.0
    %v6281 = vand.u32 %v5577, 4294901760
    %6282 = vmatpush1.msra.mxu0 %v6281
    %6283 = vmatprep.subr.mxu0 0.0
    %v6284 = vand.u32 %v5578, 4294901760
    %6285 = vmatpush1.msra.mxu0 %v6284
    %6286 = vmatprep.subr.mxu0 0.0
    %v6287 = vand.u32 %v5579, 4294901760
    %6288 = vmatpush1.msra.mxu0 %v6287
    %6289 = vmatprep.subr.mxu0 0.0
    %v6290 = vand.u32 %v5580, 4294901760
    %6291 = vmatpush1.msra.mxu0 %v6290
    %6292 = vmatprep.subr.mxu0 0.0
    %v6293 = vand.u32 %v5581, 4294901760
    %6294 = vmatpush1.msra.mxu0 %v6293
    %6295 = vmatprep.subr.mxu0 0.0
    %6296 = vmatpush1.msra.mxu0 0.0
    %6297 = vmatprep.subr.mxu0 0.0
    %6298 = vmatpush1.msra.mxu0 0.0
    %6299 = vmatprep.subr.mxu0 0.0
    %6300 = vmatpush1.msra.mxu0 0.0
    %6301 = vmatprep.subr.mxu0 0.0
    %6302 = vmatpush1.msra.mxu0 0.0
    %6303 = vmatprep.subr.mxu0 0.0
    %6304 = vmatpush1.msra.mxu0 0.0
    %6305 = vmatprep.subr.mxu0 0.0
    %6306 = vmatpush1.msra.mxu0 0.0
    %6307 = vmatprep.subr.mxu0 0.0
    %6308 = vmatpush1.msra.mxu0 0.0
    %6309 = vmatprep.subr.mxu0 0.0
    %6310 = vmatpush1.msra.mxu0 0.0
    %6311 = vmatprep.subr.mxu0 0.0
    %6312 = vmatpush1.msra.mxu0 0.0
    %6313 = vmatprep.subr.mxu0 0.0
    %6314 = vmatpush1.msra.mxu0 0.0
    %6315 = vmatprep.subr.mxu0 0.0
    %6316 = vmatpush1.msra.mxu0 0.0
    %6317 = vmatprep.subr.mxu0 0.0
    %6318 = vmatpush1.msra.mxu0 0.0
    %6319 = vmatprep.subr.mxu0 0.0
    %6320 = vmatpush1.msra.mxu0 0.0
    %6321 = vmatprep.subr.mxu0 0.0
    %6322 = vmatpush1.msra.mxu0 0.0
    %6323 = vmatprep.subr.mxu0 0.0
    %6324 = vmatpush1.msra.mxu0 0.0
    %6325 = vmatprep.subr.mxu0 0.0
    %6326 = vmatpush1.msra.mxu0 0.0
    %6327 = vmatprep.mubr.f32.mxu0 0.0
    %v6328 = vand.u32 %v5561, 4294901760
    %6329 = vmatmul.mubr.f32.gmra.mrb[0].mxu0 %v6328
    %v6330 = vpop.f32.mrb[0].mxu0
    %v6331 = vadd.f32 %v6226, %v6330
    %v6332 = vpop.f32.mrb[0].mxu0
    %6333 = vmatprep.mubr.f32.mxu0 0.0
    %v6334 = vand.u32 %v5562, 4294901760
    %6335 = vmatmul.mubr.f32.gmra.mrb[0].mxu0 %v6334
    %v6336 = vpop.f32.mrb[0].mxu0
    %v6337 = vadd.f32 %v6232, %v6336
    %v6338 = vpop.f32.mrb[0].mxu0
    %6339 = vmatprep.mubr.f32.mxu0 0.0
    %v6340 = vand.u32 %v5563, 4294901760
    %6341 = vmatmul.mubr.f32.gmra.mrb[0].mxu0 %v6340
    %v6342 = vpop.f32.mrb[0].mxu0
    %v6343 = vadd.f32 %v6238, %v6342
    %v6344 = vpop.f32.mrb[0].mxu0
    %6345 = vmatprep.mubr.f32.mxu0 0.0
    %v6346 = vand.u32 %v5564, 4294901760
    %6347 = vmatmul.mubr.f32.gmra.mrb[0].mxu0 %v6346
    %v6348 = vpop.f32.mrb[0].mxu0
    %v6349 = vadd.f32 %v6244, %v6348
    %v6350 = vpop.f32.mrb[0].mxu0
    %6351 = vdwg.mxu0
    %v6352 = vadd.f32 %v2908, %v6331
    %v6353 = vadd.f32 %v2909, %v6337
    %v6354 = vadd.f32 %v2910, %v6343
    %v6355 = vadd.f32 %v2911, %v6349
    %v6356 = vld [vmem:[#allocation5] sm:$0xff]
    %v6357 = vld [vmem:[#allocation5 + $0x8] sm:$0xff]
    %v6358 = vld [vmem:[#allocation5 + $0x10] sm:$0xff]
    %v6359 = vld [vmem:[#allocation5 + $0x18] sm:$0xff]
    %v6360 = vld [vmem:[#allocation5 + $0x20] sm:$0xff]
    %v6361 = vld [vmem:[#allocation5 + $0x28] sm:$0xff]
    %v6362 = vld [vmem:[#allocation5 + $0x30] sm:$0xff]
    %v6363 = vld [vmem:[#allocation5 + $0x38] sm:$0xff]
    %v6364 = vld [vmem:[#allocation5 + $0x40] sm:$0xff]
    %v6365 = vld [vmem:[#allocation5 + $0x48] sm:$0xff]
    %v6366 = vld [vmem:[#allocation5 + $0x50] sm:$0xff]
    %v6367 = vld [vmem:[#allocation5 + $0x58] sm:$0xff]
    %v6368 = vld [vmem:[#allocation5 + $0x60] sm:$0xff]
    %v6369 = vld [vmem:[#allocation5 + $0x68] sm:$0xff]
    %v6370 = vld [vmem:[#allocation5 + $0x70] sm:$0xff]
    %v6371 = vld [vmem:[#allocation5 + $0x78] sm:$0xff]
    %v6372 = vld [vmem:[#allocation5 + $0x80] sm:$0xff]
    %v6373 = vld [vmem:[#allocation5 + $0x88] sm:$0xff]
    %v6374 = vld [vmem:[#allocation5 + $0x90] sm:$0xff]
    %v6375 = vld [vmem:[#allocation5 + $0x98] sm:$0xff]
    %v6376 = vld [vmem:[#allocation5 + $0xa0] sm:$0xff]
    %v6377 = vld [vmem:[#allocation5 + $0xa8] sm:$0xff]
    %v6378 = vld [vmem:[#allocation5 + $0xb0] sm:$0xff]
    %v6379 = vld [vmem:[#allocation5 + $0xb8] sm:$0xff]
    %v6380 = vld [vmem:[#allocation5 + $0xc0] sm:$0xf]
    %v6381 = vld [vmem:[#allocation5 + $0xc4] sm:$0xff]
    %v6382 = vld [vmem:[#allocation5 + $0xcc] sm:$0xff]
    %v6383 = vld [vmem:[#allocation5 + $0xd4] sm:$0xff]
    %v6384 = vld [vmem:[#allocation5 + $0xdc] sm:$0xff]
    %v6385 = vld [vmem:[#allocation5 + $0xe4] sm:$0xff]
    %v6386 = vld [vmem:[#allocation5 + $0xec] sm:$0xff]
    %v6387 = vld [vmem:[#allocation5 + $0xf4] sm:$0xff]
    %v6388 = vld [vmem:[#allocation5 + $0xfc] sm:$0xff]
    %v6389 = vld [vmem:[#allocation5 + $0x104] sm:$0xff]
    %v6390 = vld [vmem:[#allocation5 + $0x10c] sm:$0xff]
    %v6391 = vld [vmem:[#allocation5 + $0x114] sm:$0xff]
    %v6392 = vld [vmem:[#allocation5 + $0x11c] sm:$0xff]
    %v6393 = vld [vmem:[#allocation5 + $0x124] sm:$0xff]
    %v6394 = vld [vmem:[#allocation5 + $0x12c] sm:$0xff]
    %v6395 = vld [vmem:[#allocation5 + $0x134] sm:$0xff]
    %v6396 = vld [vmem:[#allocation5 + $0x13c] sm:$0xff]
    %v6397 = vld [vmem:[#allocation5 + $0x144] sm:$0xff]
    %v6398 = vld [vmem:[#allocation5 + $0x14c] sm:$0xff]
    %v6399 = vld [vmem:[#allocation5 + $0x154] sm:$0xff]
    %v6400 = vld [vmem:[#allocation5 + $0x15c] sm:$0xff]
    %v6401 = vld [vmem:[#allocation5 + $0x164] sm:$0xff]
    %v6402 = vld [vmem:[#allocation5 + $0x16c] sm:$0xff]
    %v6403 = vld [vmem:[#allocation5 + $0x174] sm:$0xff]
    %v6404 = vld [vmem:[#allocation5 + $0x17c] sm:$0xff]
    %v6405 = vld [vmem:[#allocation5 + $0x184] sm:$0xf]
    %v6406 = vld [vmem:[#allocation5 + $0x188] sm:$0xff]
    %v6407 = vld [vmem:[#allocation5 + $0x190] sm:$0xff]
    %v6408 = vld [vmem:[#allocation5 + $0x198] sm:$0xff]
    %v6409 = vld [vmem:[#allocation5 + $0x1a0] sm:$0xff]
    %v6410 = vld [vmem:[#allocation5 + $0x1a8] sm:$0xff]
    %v6411 = vld [vmem:[#allocation5 + $0x1b0] sm:$0xff]
    %v6412 = vld [vmem:[#allocation5 + $0x1b8] sm:$0xff]
    %v6413 = vld [vmem:[#allocation5 + $0x1c0] sm:$0xff]
    %v6414 = vld [vmem:[#allocation5 + $0x1c8] sm:$0xff]
    %v6415 = vld [vmem:[#allocation5 + $0x1d0] sm:$0xff]
    %v6416 = vld [vmem:[#allocation5 + $0x1d8] sm:$0xff]
    %v6417 = vld [vmem:[#allocation5 + $0x1e0] sm:$0xff]
    %v6418 = vld [vmem:[#allocation5 + $0x1e8] sm:$0xff]
    %v6419 = vld [vmem:[#allocation5 + $0x1f0] sm:$0xff]
    %v6420 = vld [vmem:[#allocation5 + $0x1f8] sm:$0xff]
    %v6421 = vld [vmem:[#allocation5 + $0x200] sm:$0xff]
    %v6422 = vld [vmem:[#allocation5 + $0x208] sm:$0xff]
    %v6423 = vld [vmem:[#allocation5 + $0x210] sm:$0xff]
    %v6424 = vld [vmem:[#allocation5 + $0x218] sm:$0xff]
    %v6425 = vld [vmem:[#allocation5 + $0x220] sm:$0xff]
    %v6426 = vld [vmem:[#allocation5 + $0x228] sm:$0xff]
    %v6427 = vld [vmem:[#allocation5 + $0x230] sm:$0xff]
    %v6428 = vld [vmem:[#allocation5 + $0x238] sm:$0xff]
    %v6429 = vld [vmem:[#allocation5 + $0x240] sm:$0xff]
    %v6430 = vld [vmem:[#allocation5 + $0x248] sm:$0xf]
    %v6431 = vld [vmem:[#allocation5 + $0x24c] sm:$0xff]
    %v6432 = vld [vmem:[#allocation5 + $0x254] sm:$0xff]
    %v6433 = vld [vmem:[#allocation5 + $0x25c] sm:$0xff]
    %v6434 = vld [vmem:[#allocation5 + $0x264] sm:$0xff]
    %v6435 = vld [vmem:[#allocation5 + $0x26c] sm:$0xff]
    %v6436 = vld [vmem:[#allocation5 + $0x274] sm:$0xff]
    %v6437 = vld [vmem:[#allocation5 + $0x27c] sm:$0xff]
    %v6438 = vld [vmem:[#allocation5 + $0x284] sm:$0xff]
    %v6439 = vld [vmem:[#allocation5 + $0x28c] sm:$0xff]
    %v6440 = vld [vmem:[#allocation5 + $0x294] sm:$0xff]
    %v6441 = vld [vmem:[#allocation5 + $0x29c] sm:$0xff]
    %v6442 = vld [vmem:[#allocation5 + $0x2a4] sm:$0xff]
    %v6443 = vld [vmem:[#allocation5 + $0x2ac] sm:$0xff]
    %v6444 = vld [vmem:[#allocation5 + $0x2b4] sm:$0xff]
    %v6445 = vld [vmem:[#allocation5 + $0x2bc] sm:$0xff]
    %v6446 = vld [vmem:[#allocation5 + $0x2c4] sm:$0xff]
    %v6447 = vld [vmem:[#allocation5 + $0x2cc] sm:$0xff]
    %v6448 = vld [vmem:[#allocation5 + $0x2d4] sm:$0xff]
    %v6449 = vld [vmem:[#allocation5 + $0x2dc] sm:$0xff]
    %v6450 = vld [vmem:[#allocation5 + $0x2e4] sm:$0xff]
    %v6451 = vld [vmem:[#allocation5 + $0x2ec] sm:$0xff]
    %v6452 = vld [vmem:[#allocation5 + $0x2f4] sm:$0xff]
    %v6453 = vld [vmem:[#allocation5 + $0x2fc] sm:$0xff]
    %v6454 = vld [vmem:[#allocation5 + $0x304] sm:$0xff]
    %v6455 = vld [vmem:[#allocation5 + $0x30c] sm:$0xf]
    %v6456 = vld [vmem:[#allocation5 + $0x310] sm:$0xff]
    %v6457 = vld [vmem:[#allocation5 + $0x318] sm:$0xff]
    %v6458 = vld [vmem:[#allocation5 + $0x320] sm:$0xff]
    %v6459 = vld [vmem:[#allocation5 + $0x328] sm:$0xff]
    %v6460 = vld [vmem:[#allocation5 + $0x330] sm:$0xff]
    %v6461 = vld [vmem:[#allocation5 + $0x338] sm:$0xff]
    %v6462 = vld [vmem:[#allocation5 + $0x340] sm:$0xff]
    %v6463 = vld [vmem:[#allocation5 + $0x348] sm:$0xff]
    %v6464 = vld [vmem:[#allocation5 + $0x350] sm:$0xff]
    %v6465 = vld [vmem:[#allocation5 + $0x358] sm:$0xff]
    %v6466 = vld [vmem:[#allocation5 + $0x360] sm:$0xff]
    %v6467 = vld [vmem:[#allocation5 + $0x368] sm:$0xff]
    %v6468 = vld [vmem:[#allocation5 + $0x370] sm:$0xff]
    %v6469 = vld [vmem:[#allocation5 + $0x378] sm:$0xff]
    %v6470 = vld [vmem:[#allocation5 + $0x380] sm:$0xff]
    %v6471 = vld [vmem:[#allocation5 + $0x388] sm:$0xff]
    %v6472 = vld [vmem:[#allocation5 + $0x390] sm:$0xff]
    %v6473 = vld [vmem:[#allocation5 + $0x398] sm:$0xff]
    %v6474 = vld [vmem:[#allocation5 + $0x3a0] sm:$0xff]
    %v6475 = vld [vmem:[#allocation5 + $0x3a8] sm:$0xff]
    %v6476 = vld [vmem:[#allocation5 + $0x3b0] sm:$0xff]
    %v6477 = vld [vmem:[#allocation5 + $0x3b8] sm:$0xff]
    %v6478 = vld [vmem:[#allocation5 + $0x3c0] sm:$0xff]
    %v6479 = vld [vmem:[#allocation5 + $0x3c8] sm:$0xff]
    %v6480 = vld [vmem:[#allocation5 + $0x3d0] sm:$0xf]
    %v6481 = vld [vmem:[#allocation5 + $0x3d4] sm:$0xff]
    %v6482 = vld [vmem:[#allocation5 + $0x3dc] sm:$0xff]
    %v6483 = vld [vmem:[#allocation5 + $0x3e4] sm:$0xff]
    %v6484 = vld [vmem:[#allocation5 + $0x3ec] sm:$0xff]
    %v6485 = vld [vmem:[#allocation5 + $0x3f4] sm:$0xff]
    %v6486 = vld [vmem:[#allocation5 + $0x3fc] sm:$0xff]
    %v6487 = vld [vmem:[#allocation5 + $0x404] sm:$0xff]
    %v6488 = vld [vmem:[#allocation5 + $0x40c] sm:$0xff]
    %v6489 = vld [vmem:[#allocation5 + $0x414] sm:$0xff]
    %v6490 = vld [vmem:[#allocation5 + $0x41c] sm:$0xff]
    %v6491 = vld [vmem:[#allocation5 + $0x424] sm:$0xff]
    %v6492 = vld [vmem:[#allocation5 + $0x42c] sm:$0xff]
    %v6493 = vld [vmem:[#allocation5 + $0x434] sm:$0xff]
    %v6494 = vld [vmem:[#allocation5 + $0x43c] sm:$0xff]
    %v6495 = vld [vmem:[#allocation5 + $0x444] sm:$0xff]
    %v6496 = vld [vmem:[#allocation5 + $0x44c] sm:$0xff]
    %v6497 = vld [vmem:[#allocation5 + $0x454] sm:$0xff]
    %v6498 = vld [vmem:[#allocation5 + $0x45c] sm:$0xff]
    %v6499 = vld [vmem:[#allocation5 + $0x464] sm:$0xff]
    %v6500 = vld [vmem:[#allocation5 + $0x46c] sm:$0xff]
    %v6501 = vld [vmem:[#allocation5 + $0x474] sm:$0xff]
    %v6502 = vld [vmem:[#allocation5 + $0x47c] sm:$0xff]
    %v6503 = vld [vmem:[#allocation5 + $0x484] sm:$0xff]
    %v6504 = vld [vmem:[#allocation5 + $0x48c] sm:$0xff]
    %v6505 = vld [vmem:[#allocation5 + $0x494] sm:$0xf]
    %v6506 = vld [vmem:[#allocation5 + $0x498] sm:$0xff]
    %v6507 = vld [vmem:[#allocation5 + $0x4a0] sm:$0xff]
    %v6508 = vld [vmem:[#allocation5 + $0x4a8] sm:$0xff]
    %v6509 = vld [vmem:[#allocation5 + $0x4b0] sm:$0xff]
    %v6510 = vld [vmem:[#allocation5 + $0x4b8] sm:$0xff]
    %v6511 = vld [vmem:[#allocation5 + $0x4c0] sm:$0xff]
    %v6512 = vld [vmem:[#allocation5 + $0x4c8] sm:$0xff]
    %v6513 = vld [vmem:[#allocation5 + $0x4d0] sm:$0xff]
    %v6514 = vld [vmem:[#allocation5 + $0x4d8] sm:$0xff]
    %v6515 = vld [vmem:[#allocation5 + $0x4e0] sm:$0xff]
    %v6516 = vld [vmem:[#allocation5 + $0x4e8] sm:$0xff]
    %v6517 = vld [vmem:[#allocation5 + $0x4f0] sm:$0xff]
    %v6518 = vld [vmem:[#allocation5 + $0x4f8] sm:$0xff]
    %v6519 = vld [vmem:[#allocation5 + $0x500] sm:$0xff]
    %v6520 = vld [vmem:[#allocation5 + $0x508] sm:$0xff]
    %v6521 = vld [vmem:[#allocation5 + $0x510] sm:$0xff]
    %v6522 = vld [vmem:[#allocation5 + $0x518] sm:$0xff]
    %v6523 = vld [vmem:[#allocation5 + $0x520] sm:$0xff]
    %v6524 = vld [vmem:[#allocation5 + $0x528] sm:$0xff]
    %v6525 = vld [vmem:[#allocation5 + $0x530] sm:$0xff]
    %v6526 = vld [vmem:[#allocation5 + $0x538] sm:$0xff]
    %v6527 = vld [vmem:[#allocation5 + $0x540] sm:$0xff]
    %v6528 = vld [vmem:[#allocation5 + $0x548] sm:$0xff]
    %v6529 = vld [vmem:[#allocation5 + $0x550] sm:$0xff]
    %v6530 = vld [vmem:[#allocation5 + $0x558] sm:$0xf]
    %v6531 = vld [vmem:[#allocation5 + $0x55c] sm:$0xff]
    %v6532 = vld [vmem:[#allocation5 + $0x564] sm:$0xff]
    %v6533 = vld [vmem:[#allocation5 + $0x56c] sm:$0xff]
    %v6534 = vld [vmem:[#allocation5 + $0x574] sm:$0xff]
    %v6535 = vld [vmem:[#allocation5 + $0x57c] sm:$0xff]
    %v6536 = vld [vmem:[#allocation5 + $0x584] sm:$0xff]
    %v6537 = vld [vmem:[#allocation5 + $0x58c] sm:$0xff]
    %v6538 = vld [vmem:[#allocation5 + $0x594] sm:$0xff]
    %v6539 = vld [vmem:[#allocation5 + $0x59c] sm:$0xff]
    %v6540 = vld [vmem:[#allocation5 + $0x5a4] sm:$0xff]
    %v6541 = vld [vmem:[#allocation5 + $0x5ac] sm:$0xff]
    %v6542 = vld [vmem:[#allocation5 + $0x5b4] sm:$0xff]
    %v6543 = vld [vmem:[#allocation5 + $0x5bc] sm:$0xff]
    %v6544 = vld [vmem:[#allocation5 + $0x5c4] sm:$0xff]
    %v6545 = vld [vmem:[#allocation5 + $0x5cc] sm:$0xff]
    %v6546 = vld [vmem:[#allocation5 + $0x5d4] sm:$0xff]
    %v6547 = vld [vmem:[#allocation5 + $0x5dc] sm:$0xff]
    %v6548 = vld [vmem:[#allocation5 + $0x5e4] sm:$0xff]
    %v6549 = vld [vmem:[#allocation5 + $0x5ec] sm:$0xff]
    %v6550 = vld [vmem:[#allocation5 + $0x5f4] sm:$0xff]
    %v6551 = vld [vmem:[#allocation5 + $0x5fc] sm:$0xff]
    %v6552 = vld [vmem:[#allocation5 + $0x604] sm:$0xff]
    %v6553 = vld [vmem:[#allocation5 + $0x60c] sm:$0xff]
    %v6554 = vld [vmem:[#allocation5 + $0x614] sm:$0xff]
    %v6555 = vld [vmem:[#allocation5 + $0x61c] sm:$0xf]
    %v6556 = vld [vmem:[#allocation5 + $0x620] sm:$0xff]
    %v6557 = vld [vmem:[#allocation5 + $0x628] sm:$0xff]
    %v6558 = vld [vmem:[#allocation5 + $0x630] sm:$0xff]
    %v6559 = vld [vmem:[#allocation5 + $0x638] sm:$0xff]
    %v6560 = vld [vmem:[#allocation5 + $0x640] sm:$0xff]
    %v6561 = vld [vmem:[#allocation5 + $0x648] sm:$0xff]
    %v6562 = vld [vmem:[#allocation5 + $0x650] sm:$0xff]
    %v6563 = vld [vmem:[#allocation5 + $0x658] sm:$0xff]
    %v6564 = vld [vmem:[#allocation5 + $0x660] sm:$0xff]
    %v6565 = vld [vmem:[#allocation5 + $0x668] sm:$0xff]
    %v6566 = vld [vmem:[#allocation5 + $0x670] sm:$0xff]
    %v6567 = vld [vmem:[#allocation5 + $0x678] sm:$0xff]
    %v6568 = vld [vmem:[#allocation5 + $0x680] sm:$0xff]
    %v6569 = vld [vmem:[#allocation5 + $0x688] sm:$0xff]
    %v6570 = vld [vmem:[#allocation5 + $0x690] sm:$0xff]
    %v6571 = vld [vmem:[#allocation5 + $0x698] sm:$0xff]
    %v6572 = vld [vmem:[#allocation5 + $0x6a0] sm:$0xff]
    %v6573 = vld [vmem:[#allocation5 + $0x6a8] sm:$0xff]
    %v6574 = vld [vmem:[#allocation5 + $0x6b0] sm:$0xff]
    %v6575 = vld [vmem:[#allocation5 + $0x6b8] sm:$0xff]
    %v6576 = vld [vmem:[#allocation5 + $0x6c0] sm:$0xff]
    %v6577 = vld [vmem:[#allocation5 + $0x6c8] sm:$0xff]
    %v6578 = vld [vmem:[#allocation5 + $0x6d0] sm:$0xff]
    %v6579 = vld [vmem:[#allocation5 + $0x6d8] sm:$0xff]
    %v6580 = vld [vmem:[#allocation5 + $0x6e0] sm:$0xf]
    %v6581 = vld [vmem:[#allocation5 + $0x6e4] sm:$0xff]
    %v6582 = vld [vmem:[#allocation5 + $0x6ec] sm:$0xff]
    %v6583 = vld [vmem:[#allocation5 + $0x6f4] sm:$0xff]
    %v6584 = vld [vmem:[#allocation5 + $0x6fc] sm:$0xff]
    %v6585 = vld [vmem:[#allocation5 + $0x704] sm:$0xff]
    %v6586 = vld [vmem:[#allocation5 + $0x70c] sm:$0xff]
    %v6587 = vld [vmem:[#allocation5 + $0x714] sm:$0xff]
    %v6588 = vld [vmem:[#allocation5 + $0x71c] sm:$0xff]
    %v6589 = vld [vmem:[#allocation5 + $0x724] sm:$0xff]
    %v6590 = vld [vmem:[#allocation5 + $0x72c] sm:$0xff]
    %v6591 = vld [vmem:[#allocation5 + $0x734] sm:$0xff]
    %v6592 = vld [vmem:[#allocation5 + $0x73c] sm:$0xff]
    %v6593 = vld [vmem:[#allocation5 + $0x744] sm:$0xff]
    %v6594 = vld [vmem:[#allocation5 + $0x74c] sm:$0xff]
    %v6595 = vld [vmem:[#allocation5 + $0x754] sm:$0xff]
    %v6596 = vld [vmem:[#allocation5 + $0x75c] sm:$0xff]
    %v6597 = vld [vmem:[#allocation5 + $0x764] sm:$0xff]
    %v6598 = vld [vmem:[#allocation5 + $0x76c] sm:$0xff]
    %v6599 = vld [vmem:[#allocation5 + $0x774] sm:$0xff]
    %v6600 = vld [vmem:[#allocation5 + $0x77c] sm:$0xff]
    %v6601 = vld [vmem:[#allocation5 + $0x784] sm:$0xff]
    %v6602 = vld [vmem:[#allocation5 + $0x78c] sm:$0xff]
    %v6603 = vld [vmem:[#allocation5 + $0x794] sm:$0xff]
    %v6604 = vld [vmem:[#allocation5 + $0x79c] sm:$0xff]
    %v6605 = vld [vmem:[#allocation5 + $0x7a4] sm:$0xf]
    %6606 = vrot.lane.b32.xlu0 %v2912, 96
    %v6607 = vpop.permute.xlu0 %6606
    %6608 = vrot.lane.b32.xlu0 %v2913, 96
    %v6609 = vpop.permute.xlu0 %6608
    %v6860 = vunpack.c.l.b16 %v6356
    %v6861 = vunpack.c.h.b16 %v6356
    %v6862 = vunpack.c.l.b16 %v6357
    %v6863 = vunpack.c.h.b16 %v6357
    %v6864 = vunpack.c.l.b16 %v6358
    %v6865 = vunpack.c.h.b16 %v6358
    %v6866 = vunpack.c.l.b16 %v6359
    %v6867 = vunpack.c.h.b16 %v6359
    %v6868 = vunpack.c.l.b16 %v6360
    %v6869 = vunpack.c.h.b16 %v6360
    %v6870 = vunpack.c.l.b16 %v6361
    %v6871 = vunpack.c.h.b16 %v6361
    %v6872 = vunpack.c.l.b16 %v6362
    %v6873 = vunpack.c.h.b16 %v6362
    %v6874 = vunpack.c.l.b16 %v6363
    %v6875 = vunpack.c.h.b16 %v6363
    %v6876 = vunpack.c.l.b16 %v6364
    %v6877 = vunpack.c.h.b16 %v6364
    %v6878 = vunpack.c.l.b16 %v6365
    %v6879 = vunpack.c.h.b16 %v6365
    %v6880 = vunpack.c.l.b16 %v6366
    %v6881 = vunpack.c.h.b16 %v6366
    %v6882 = vunpack.c.l.b16 %v6367
    %v6883 = vunpack.c.h.b16 %v6367
    %v6884 = vunpack.c.l.b16 %v6368
    %v6885 = vunpack.c.h.b16 %v6368
    %v6886 = vunpack.c.l.b16 %v6369
    %v6887 = vunpack.c.h.b16 %v6369
    %v6888 = vunpack.c.l.b16 %v6370
    %v6889 = vunpack.c.h.b16 %v6370
    %v6890 = vunpack.c.l.b16 %v6371
    %v6891 = vunpack.c.h.b16 %v6371
    %v6892 = vunpack.c.l.b16 %v6372
    %v6893 = vunpack.c.h.b16 %v6372
    %v6894 = vunpack.c.l.b16 %v6373
    %v6895 = vunpack.c.h.b16 %v6373
    %v6896 = vunpack.c.l.b16 %v6374
    %v6897 = vunpack.c.h.b16 %v6374
    %v6898 = vunpack.c.l.b16 %v6375
    %v6899 = vunpack.c.h.b16 %v6375
    %v6900 = vunpack.c.l.b16 %v6376
    %v6901 = vunpack.c.h.b16 %v6376
    %v6902 = vunpack.c.l.b16 %v6377
    %v6903 = vunpack.c.h.b16 %v6377
    %v6904 = vunpack.c.l.b16 %v6378
    %v6905 = vunpack.c.h.b16 %v6378
    %v6906 = vunpack.c.l.b16 %v6379
    %v6907 = vunpack.c.h.b16 %v6379
    %v6908 = vunpack.c.l.b16 %v6380
    %v6909 = vunpack.c.l.b16 %v6381
    %v6910 = vunpack.c.h.b16 %v6381
    %v6911 = vunpack.c.l.b16 %v6382
    %v6912 = vunpack.c.h.b16 %v6382
    %v6913 = vunpack.c.l.b16 %v6383
    %v6914 = vunpack.c.h.b16 %v6383
    %v6915 = vunpack.c.l.b16 %v6384
    %v6916 = vunpack.c.h.b16 %v6384
    %v6917 = vunpack.c.l.b16 %v6385
    %v6918 = vunpack.c.h.b16 %v6385
    %v6919 = vunpack.c.l.b16 %v6386
    %v6920 = vunpack.c.h.b16 %v6386
    %v6921 = vunpack.c.l.b16 %v6387
    %v6922 = vunpack.c.h.b16 %v6387
    %v6923 = vunpack.c.l.b16 %v6388
    %v6924 = vunpack.c.h.b16 %v6388
    %v6925 = vunpack.c.l.b16 %v6389
    %v6926 = vunpack.c.h.b16 %v6389
    %v6927 = vunpack.c.l.b16 %v6390
    %v6928 = vunpack.c.h.b16 %v6390
    %v6929 = vunpack.c.l.b16 %v6391
    %v6930 = vunpack.c.h.b16 %v6391
    %v6931 = vunpack.c.l.b16 %v6392
    %v6932 = vunpack.c.h.b16 %v6392
    %v6933 = vunpack.c.l.b16 %v6393
    %v6934 = vunpack.c.h.b16 %v6393
    %v6935 = vunpack.c.l.b16 %v6394
    %v6936 = vunpack.c.h.b16 %v6394
    %v6937 = vunpack.c.l.b16 %v6395
    %v6938 = vunpack.c.h.b16 %v6395
    %v6939 = vunpack.c.l.b16 %v6396
    %v6940 = vunpack.c.h.b16 %v6396
    %v6941 = vunpack.c.l.b16 %v6397
    %v6942 = vunpack.c.h.b16 %v6397
    %v6943 = vunpack.c.l.b16 %v6398
    %v6944 = vunpack.c.h.b16 %v6398
    %v6945 = vunpack.c.l.b16 %v6399
    %v6946 = vunpack.c.h.b16 %v6399
    %v6947 = vunpack.c.l.b16 %v6400
    %v6948 = vunpack.c.h.b16 %v6400
    %v6949 = vunpack.c.l.b16 %v6401
    %v6950 = vunpack.c.h.b16 %v6401
    %v6951 = vunpack.c.l.b16 %v6402
    %v6952 = vunpack.c.h.b16 %v6402
    %v6953 = vunpack.c.l.b16 %v6403
    %v6954 = vunpack.c.h.b16 %v6403
    %v6955 = vunpack.c.l.b16 %v6404
    %v6956 = vunpack.c.h.b16 %v6404
    %v6957 = vunpack.c.l.b16 %v6405
    %v6958 = vunpack.c.l.b16 %v6406
    %v6959 = vunpack.c.h.b16 %v6406
    %v6960 = vunpack.c.l.b16 %v6407
    %v6961 = vunpack.c.h.b16 %v6407
    %v6962 = vunpack.c.l.b16 %v6408
    %v6963 = vunpack.c.h.b16 %v6408
    %v6964 = vunpack.c.l.b16 %v6409
    %v6965 = vunpack.c.h.b16 %v6409
    %v6966 = vunpack.c.l.b16 %v6410
    %v6967 = vunpack.c.h.b16 %v6410
    %v6968 = vunpack.c.l.b16 %v6411
    %v6969 = vunpack.c.h.b16 %v6411
    %v6970 = vunpack.c.l.b16 %v6412
    %v6971 = vunpack.c.h.b16 %v6412
    %v6972 = vunpack.c.l.b16 %v6413
    %v6973 = vunpack.c.h.b16 %v6413
    %v6974 = vunpack.c.l.b16 %v6414
    %v6975 = vunpack.c.h.b16 %v6414
    %v6976 = vunpack.c.l.b16 %v6415
    %v6977 = vunpack.c.h.b16 %v6415
    %v6978 = vunpack.c.l.b16 %v6416
    %v6979 = vunpack.c.h.b16 %v6416
    %v6980 = vunpack.c.l.b16 %v6417
    %v6981 = vunpack.c.h.b16 %v6417
    %v6982 = vunpack.c.l.b16 %v6418
    %v6983 = vunpack.c.h.b16 %v6418
    %v6984 = vunpack.c.l.b16 %v6419
    %v6985 = vunpack.c.h.b16 %v6419
    %v6986 = vunpack.c.l.b16 %v6420
    %v6987 = vunpack.c.h.b16 %v6420
    %v6988 = vunpack.c.l.b16 %v6421
    %v6989 = vunpack.c.h.b16 %v6421
    %v6990 = vunpack.c.l.b16 %v6422
    %v6991 = vunpack.c.h.b16 %v6422
    %v6992 = vunpack.c.l.b16 %v6423
    %v6993 = vunpack.c.h.b16 %v6423
    %v6994 = vunpack.c.l.b16 %v6424
    %v6995 = vunpack.c.h.b16 %v6424
    %v6996 = vunpack.c.l.b16 %v6425
    %v6997 = vunpack.c.h.b16 %v6425
    %v6998 = vunpack.c.l.b16 %v6426
    %v6999 = vunpack.c.h.b16 %v6426
    %v7000 = vunpack.c.l.b16 %v6427
    %v7001 = vunpack.c.h.b16 %v6427
    %v7002 = vunpack.c.l.b16 %v6428
    %v7003 = vunpack.c.h.b16 %v6428
    %v7004 = vunpack.c.l.b16 %v6429
    %v7005 = vunpack.c.h.b16 %v6429
    %v7006 = vunpack.c.l.b16 %v6430
    %v7007 = vunpack.c.l.b16 %v6431
    %v7008 = vunpack.c.h.b16 %v6431
    %v7009 = vunpack.c.l.b16 %v6432
    %v7010 = vunpack.c.h.b16 %v6432
    %v7011 = vunpack.c.l.b16 %v6433
    %v7012 = vunpack.c.h.b16 %v6433
    %v7013 = vunpack.c.l.b16 %v6434
    %v7014 = vunpack.c.h.b16 %v6434
    %v7015 = vunpack.c.l.b16 %v6435
    %v7016 = vunpack.c.h.b16 %v6435
    %v7017 = vunpack.c.l.b16 %v6436
    %v7018 = vunpack.c.h.b16 %v6436
    %v7019 = vunpack.c.l.b16 %v6437
    %v7020 = vunpack.c.h.b16 %v6437
    %v7021 = vunpack.c.l.b16 %v6438
    %v7022 = vunpack.c.h.b16 %v6438
    %v7023 = vunpack.c.l.b16 %v6439
    %v7024 = vunpack.c.h.b16 %v6439
    %v7025 = vunpack.c.l.b16 %v6440
    %v7026 = vunpack.c.h.b16 %v6440
    %v7027 = vunpack.c.l.b16 %v6441
    %v7028 = vunpack.c.h.b16 %v6441
    %v7029 = vunpack.c.l.b16 %v6442
    %v7030 = vunpack.c.h.b16 %v6442
    %v7031 = vunpack.c.l.b16 %v6443
    %v7032 = vunpack.c.h.b16 %v6443
    %v7033 = vunpack.c.l.b16 %v6444
    %v7034 = vunpack.c.h.b16 %v6444
    %v7035 = vunpack.c.l.b16 %v6445
    %v7036 = vunpack.c.h.b16 %v6445
    %v7037 = vunpack.c.l.b16 %v6446
    %v7038 = vunpack.c.h.b16 %v6446
    %v7039 = vunpack.c.l.b16 %v6447
    %v7040 = vunpack.c.h.b16 %v6447
    %v7041 = vunpack.c.l.b16 %v6448
    %v7042 = vunpack.c.h.b16 %v6448
    %v7043 = vunpack.c.l.b16 %v6449
    %v7044 = vunpack.c.h.b16 %v6449
    %v7045 = vunpack.c.l.b16 %v6450
    %v7046 = vunpack.c.h.b16 %v6450
    %v7047 = vunpack.c.l.b16 %v6451
    %v7048 = vunpack.c.h.b16 %v6451
    %v7049 = vunpack.c.l.b16 %v6452
    %v7050 = vunpack.c.h.b16 %v6452
    %v7051 = vunpack.c.l.b16 %v6453
    %v7052 = vunpack.c.h.b16 %v6453
    %v7053 = vunpack.c.l.b16 %v6454
    %v7054 = vunpack.c.h.b16 %v6454
    %v7055 = vunpack.c.l.b16 %v6455
    %v7056 = vunpack.c.l.b16 %v6456
    %v7057 = vunpack.c.h.b16 %v6456
    %v7058 = vunpack.c.l.b16 %v6457
    %v7059 = vunpack.c.h.b16 %v6457
    %v7060 = vunpack.c.l.b16 %v6458
    %v7061 = vunpack.c.h.b16 %v6458
    %v7062 = vunpack.c.l.b16 %v6459
    %v7063 = vunpack.c.h.b16 %v6459
    %v7064 = vunpack.c.l.b16 %v6460
    %v7065 = vunpack.c.h.b16 %v6460
    %v7066 = vunpack.c.l.b16 %v6461
    %v7067 = vunpack.c.h.b16 %v6461
    %v7068 = vunpack.c.l.b16 %v6462
    %v7069 = vunpack.c.h.b16 %v6462
    %v7070 = vunpack.c.l.b16 %v6463
    %v7071 = vunpack.c.h.b16 %v6463
    %v7072 = vunpack.c.l.b16 %v6464
    %v7073 = vunpack.c.h.b16 %v6464
    %v7074 = vunpack.c.l.b16 %v6465
    %v7075 = vunpack.c.h.b16 %v6465
    %v7076 = vunpack.c.l.b16 %v6466
    %v7077 = vunpack.c.h.b16 %v6466
    %v7078 = vunpack.c.l.b16 %v6467
    %v7079 = vunpack.c.h.b16 %v6467
    %v7080 = vunpack.c.l.b16 %v6468
    %v7081 = vunpack.c.h.b16 %v6468
    %v7082 = vunpack.c.l.b16 %v6469
    %v7083 = vunpack.c.h.b16 %v6469
    %v7084 = vunpack.c.l.b16 %v6470
    %v7085 = vunpack.c.h.b16 %v6470
    %v7086 = vunpack.c.l.b16 %v6471
    %v7087 = vunpack.c.h.b16 %v6471
    %v7088 = vunpack.c.l.b16 %v6472
    %v7089 = vunpack.c.h.b16 %v6472
    %v7090 = vunpack.c.l.b16 %v6473
    %v7091 = vunpack.c.h.b16 %v6473
    %v7092 = vunpack.c.l.b16 %v6474
    %v7093 = vunpack.c.h.b16 %v6474
    %v7094 = vunpack.c.l.b16 %v6475
    %v7095 = vunpack.c.h.b16 %v6475
    %v7096 = vunpack.c.l.b16 %v6476
    %v7097 = vunpack.c.h.b16 %v6476
    %v7098 = vunpack.c.l.b16 %v6477
    %v7099 = vunpack.c.h.b16 %v6477
    %v7100 = vunpack.c.l.b16 %v6478
    %v7101 = vunpack.c.h.b16 %v6478
    %v7102 = vunpack.c.l.b16 %v6479
    %v7103 = vunpack.c.h.b16 %v6479
    %v7104 = vunpack.c.l.b16 %v6480
    %v7105 = vunpack.c.l.b16 %v6481
    %v7106 = vunpack.c.h.b16 %v6481
    %v7107 = vunpack.c.l.b16 %v6482
    %v7108 = vunpack.c.h.b16 %v6482
    %v7109 = vunpack.c.l.b16 %v6483
    %v7110 = vunpack.c.h.b16 %v6483
    %v7111 = vunpack.c.l.b16 %v6484
    %v7112 = vunpack.c.h.b16 %v6484
    %v7113 = vunpack.c.l.b16 %v6485
    %v7114 = vunpack.c.h.b16 %v6485
    %v7115 = vunpack.c.l.b16 %v6486
    %v7116 = vunpack.c.h.b16 %v6486
    %v7117 = vunpack.c.l.b16 %v6487
    %v7118 = vunpack.c.h.b16 %v6487
    %v7119 = vunpack.c.l.b16 %v6488
    %v7120 = vunpack.c.h.b16 %v6488
    %v7121 = vunpack.c.l.b16 %v6489
    %v7122 = vunpack.c.h.b16 %v6489
    %v7123 = vunpack.c.l.b16 %v6490
    %v7124 = vunpack.c.h.b16 %v6490
    %v7125 = vunpack.c.l.b16 %v6491
    %v7126 = vunpack.c.h.b16 %v6491
    %v7127 = vunpack.c.l.b16 %v6492
    %v7128 = vunpack.c.h.b16 %v6492
    %v7129 = vunpack.c.l.b16 %v6493
    %v7130 = vunpack.c.h.b16 %v6493
    %v7131 = vunpack.c.l.b16 %v6494
    %v7132 = vunpack.c.h.b16 %v6494
    %v7133 = vunpack.c.l.b16 %v6495
    %v7134 = vunpack.c.h.b16 %v6495
    %v7135 = vunpack.c.l.b16 %v6496
    %v7136 = vunpack.c.h.b16 %v6496
    %v7137 = vunpack.c.l.b16 %v6497
    %v7138 = vunpack.c.h.b16 %v6497
    %v7139 = vunpack.c.l.b16 %v6498
    %v7140 = vunpack.c.h.b16 %v6498
    %v7141 = vunpack.c.l.b16 %v6499
    %v7142 = vunpack.c.h.b16 %v6499
    %v7143 = vunpack.c.l.b16 %v6500
    %v7144 = vunpack.c.h.b16 %v6500
    %v7145 = vunpack.c.l.b16 %v6501
    %v7146 = vunpack.c.h.b16 %v6501
    %v7147 = vunpack.c.l.b16 %v6502
    %v7148 = vunpack.c.h.b16 %v6502
    %v7149 = vunpack.c.l.b16 %v6503
    %v7150 = vunpack.c.h.b16 %v6503
    %v7151 = vunpack.c.l.b16 %v6504
    %v7152 = vunpack.c.h.b16 %v6504
    %v7153 = vunpack.c.l.b16 %v6505
    %v7154 = vunpack.c.l.b16 %v6506
    %v7155 = vunpack.c.h.b16 %v6506
    %v7156 = vunpack.c.l.b16 %v6507
    %v7157 = vunpack.c.h.b16 %v6507
    %v7158 = vunpack.c.l.b16 %v6508
    %v7159 = vunpack.c.h.b16 %v6508
    %v7160 = vunpack.c.l.b16 %v6509
    %v7161 = vunpack.c.h.b16 %v6509
    %v7162 = vunpack.c.l.b16 %v6510
    %v7163 = vunpack.c.h.b16 %v6510
    %v7164 = vunpack.c.l.b16 %v6511
    %v7165 = vunpack.c.h.b16 %v6511
    %v7166 = vunpack.c.l.b16 %v6512
    %v7167 = vunpack.c.h.b16 %v6512
    %v7168 = vunpack.c.l.b16 %v6513
    %v7169 = vunpack.c.h.b16 %v6513
    %v7170 = vunpack.c.l.b16 %v6514
    %v7171 = vunpack.c.h.b16 %v6514
    %v7172 = vunpack.c.l.b16 %v6515
    %v7173 = vunpack.c.h.b16 %v6515
    %v7174 = vunpack.c.l.b16 %v6516
    %v7175 = vunpack.c.h.b16 %v6516
    %v7176 = vunpack.c.l.b16 %v6517
    %v7177 = vunpack.c.h.b16 %v6517
    %v7178 = vunpack.c.l.b16 %v6518
    %v7179 = vunpack.c.h.b16 %v6518
    %v7180 = vunpack.c.l.b16 %v6519
    %v7181 = vunpack.c.h.b16 %v6519
    %v7182 = vunpack.c.l.b16 %v6520
    %v7183 = vunpack.c.h.b16 %v6520
    %v7184 = vunpack.c.l.b16 %v6521
    %v7185 = vunpack.c.h.b16 %v6521
    %v7186 = vunpack.c.l.b16 %v6522
    %v7187 = vunpack.c.h.b16 %v6522
    %v7188 = vunpack.c.l.b16 %v6523
    %v7189 = vunpack.c.h.b16 %v6523
    %v7190 = vunpack.c.l.b16 %v6524
    %v7191 = vunpack.c.h.b16 %v6524
    %v7192 = vunpack.c.l.b16 %v6525
    %v7193 = vunpack.c.h.b16 %v6525
    %v7194 = vunpack.c.l.b16 %v6526
    %v7195 = vunpack.c.h.b16 %v6526
    %v7196 = vunpack.c.l.b16 %v6527
    %v7197 = vunpack.c.h.b16 %v6527
    %v7198 = vunpack.c.l.b16 %v6528
    %v7199 = vunpack.c.h.b16 %v6528
    %v7200 = vunpack.c.l.b16 %v6529
    %v7201 = vunpack.c.h.b16 %v6529
    %v7202 = vunpack.c.l.b16 %v6530
    %v7203 = vunpack.c.l.b16 %v6531
    %v7204 = vunpack.c.h.b16 %v6531
    %v7205 = vunpack.c.l.b16 %v6532
    %v7206 = vunpack.c.h.b16 %v6532
    %v7207 = vunpack.c.l.b16 %v6533
    %v7208 = vunpack.c.h.b16 %v6533
    %v7209 = vunpack.c.l.b16 %v6534
    %v7210 = vunpack.c.h.b16 %v6534
    %v7211 = vunpack.c.l.b16 %v6535
    %v7212 = vunpack.c.h.b16 %v6535
    %v7213 = vunpack.c.l.b16 %v6536
    %v7214 = vunpack.c.h.b16 %v6536
    %v7215 = vunpack.c.l.b16 %v6537
    %v7216 = vunpack.c.h.b16 %v6537
    %v7217 = vunpack.c.l.b16 %v6538
    %v7218 = vunpack.c.h.b16 %v6538
    %v7219 = vunpack.c.l.b16 %v6539
    %v7220 = vunpack.c.h.b16 %v6539
    %v7221 = vunpack.c.l.b16 %v6540
    %v7222 = vunpack.c.h.b16 %v6540
    %v7223 = vunpack.c.l.b16 %v6541
    %v7224 = vunpack.c.h.b16 %v6541
    %v7225 = vunpack.c.l.b16 %v6542
    %v7226 = vunpack.c.h.b16 %v6542
    %v7227 = vunpack.c.l.b16 %v6543
    %v7228 = vunpack.c.h.b16 %v6543
    %v7229 = vunpack.c.l.b16 %v6544
    %v7230 = vunpack.c.h.b16 %v6544
    %v7231 = vunpack.c.l.b16 %v6545
    %v7232 = vunpack.c.h.b16 %v6545
    %v7233 = vunpack.c.l.b16 %v6546
    %v7234 = vunpack.c.h.b16 %v6546
    %v7235 = vunpack.c.l.b16 %v6547
    %v7236 = vunpack.c.h.b16 %v6547
    %v7237 = vunpack.c.l.b16 %v6548
    %v7238 = vunpack.c.h.b16 %v6548
    %v7239 = vunpack.c.l.b16 %v6549
    %v7240 = vunpack.c.h.b16 %v6549
    %v7241 = vunpack.c.l.b16 %v6550
    %v7242 = vunpack.c.h.b16 %v6550
    %v7243 = vunpack.c.l.b16 %v6551
    %v7244 = vunpack.c.h.b16 %v6551
    %v7245 = vunpack.c.l.b16 %v6552
    %v7246 = vunpack.c.h.b16 %v6552
    %v7247 = vunpack.c.l.b16 %v6553
    %v7248 = vunpack.c.h.b16 %v6553
    %v7249 = vunpack.c.l.b16 %v6554
    %v7250 = vunpack.c.h.b16 %v6554
    %v7251 = vunpack.c.l.b16 %v6555
    %v7252 = vunpack.c.l.b16 %v6556
    %v7253 = vunpack.c.h.b16 %v6556
    %v7254 = vunpack.c.l.b16 %v6557
    %v7255 = vunpack.c.h.b16 %v6557
    %v7256 = vunpack.c.l.b16 %v6558
    %v7257 = vunpack.c.h.b16 %v6558
    %v7258 = vunpack.c.l.b16 %v6559
    %v7259 = vunpack.c.h.b16 %v6559
    %v7260 = vunpack.c.l.b16 %v6560
    %v7261 = vunpack.c.h.b16 %v6560
    %v7262 = vunpack.c.l.b16 %v6561
    %v7263 = vunpack.c.h.b16 %v6561
    %v7264 = vunpack.c.l.b16 %v6562
    %v7265 = vunpack.c.h.b16 %v6562
    %v7266 = vunpack.c.l.b16 %v6563
    %v7267 = vunpack.c.h.b16 %v6563
    %v7268 = vunpack.c.l.b16 %v6564
    %v7269 = vunpack.c.h.b16 %v6564
    %v7270 = vunpack.c.l.b16 %v6565
    %v7271 = vunpack.c.h.b16 %v6565
    %v7272 = vunpack.c.l.b16 %v6566
    %v7273 = vunpack.c.h.b16 %v6566
    %v7274 = vunpack.c.l.b16 %v6567
    %v7275 = vunpack.c.h.b16 %v6567
    %v7276 = vunpack.c.l.b16 %v6568
    %v7277 = vunpack.c.h.b16 %v6568
    %v7278 = vunpack.c.l.b16 %v6569
    %v7279 = vunpack.c.h.b16 %v6569
    %v7280 = vunpack.c.l.b16 %v6570
    %v7281 = vunpack.c.h.b16 %v6570
    %v7282 = vunpack.c.l.b16 %v6571
    %v7283 = vunpack.c.h.b16 %v6571
    %v7284 = vunpack.c.l.b16 %v6572
    %v7285 = vunpack.c.h.b16 %v6572
    %v7286 = vunpack.c.l.b16 %v6573
    %v7287 = vunpack.c.h.b16 %v6573
    %v7288 = vunpack.c.l.b16 %v6574
    %v7289 = vunpack.c.h.b16 %v6574
    %v7290 = vunpack.c.l.b16 %v6575
    %v7291 = vunpack.c.h.b16 %v6575
    %v7292 = vunpack.c.l.b16 %v6576
    %v7293 = vunpack.c.h.b16 %v6576
    %v7294 = vunpack.c.l.b16 %v6577
    %v7295 = vunpack.c.h.b16 %v6577
    %v7296 = vunpack.c.l.b16 %v6578
    %v7297 = vunpack.c.h.b16 %v6578
    %v7298 = vunpack.c.l.b16 %v6579
    %v7299 = vunpack.c.h.b16 %v6579
    %v7300 = vunpack.c.l.b16 %v6580
    %v7301 = vunpack.c.l.b16 %v6581
    %v7302 = vunpack.c.h.b16 %v6581
    %v7303 = vunpack.c.l.b16 %v6582
    %v7304 = vunpack.c.h.b16 %v6582
    %v7305 = vunpack.c.l.b16 %v6583
    %v7306 = vunpack.c.h.b16 %v6583
    %v7307 = vunpack.c.l.b16 %v6584
    %v7308 = vunpack.c.h.b16 %v6584
    %v7309 = vunpack.c.l.b16 %v6585
    %v7310 = vunpack.c.h.b16 %v6585
    %v7311 = vunpack.c.l.b16 %v6586
    %v7312 = vunpack.c.h.b16 %v6586
    %v7313 = vunpack.c.l.b16 %v6587
    %v7314 = vunpack.c.h.b16 %v6587
    %v7315 = vunpack.c.l.b16 %v6588
    %v7316 = vunpack.c.h.b16 %v6588
    %v7317 = vunpack.c.l.b16 %v6589
    %v7318 = vunpack.c.h.b16 %v6589
    %v7319 = vunpack.c.l.b16 %v6590
    %v7320 = vunpack.c.h.b16 %v6590
    %v7321 = vunpack.c.l.b16 %v6591
    %v7322 = vunpack.c.h.b16 %v6591
    %v7323 = vunpack.c.l.b16 %v6592
    %v7324 = vunpack.c.h.b16 %v6592
    %v7325 = vunpack.c.l.b16 %v6593
    %v7326 = vunpack.c.h.b16 %v6593
    %v7327 = vunpack.c.l.b16 %v6594
    %v7328 = vunpack.c.h.b16 %v6594
    %v7329 = vunpack.c.l.b16 %v6595
    %v7330 = vunpack.c.h.b16 %v6595
    %v7331 = vunpack.c.l.b16 %v6596
    %v7332 = vunpack.c.h.b16 %v6596
    %v7333 = vunpack.c.l.b16 %v6597
    %v7334 = vunpack.c.h.b16 %v6597
    %v7335 = vunpack.c.l.b16 %v6598
    %v7336 = vunpack.c.h.b16 %v6598
    %v7337 = vunpack.c.l.b16 %v6599
    %v7338 = vunpack.c.h.b16 %v6599
    %v7339 = vunpack.c.l.b16 %v6600
    %v7340 = vunpack.c.h.b16 %v6600
    %v7341 = vunpack.c.l.b16 %v6601
    %v7342 = vunpack.c.h.b16 %v6601
    %v7343 = vunpack.c.l.b16 %v6602
    %v7344 = vunpack.c.h.b16 %v6602
    %v7345 = vunpack.c.l.b16 %v6603
    %v7346 = vunpack.c.h.b16 %v6603
    %v7347 = vunpack.c.l.b16 %v6604
    %v7348 = vunpack.c.h.b16 %v6604
    %v7349 = vunpack.c.l.b16 %v6605
    %v7350 = vpack.c.b16 %v6909, %v6860
    %v7351 = vpack.c.b16 %v6910, %v6861
    %v7352 = vpack.c.b16 %v6911, %v6862
    %v7353 = vpack.c.b16 %v6912, %v6863
    %v7354 = vpack.c.b16 %v6913, %v6864
    %v7355 = vpack.c.b16 %v6914, %v6865
    %v7356 = vpack.c.b16 %v6915, %v6866
    %v7357 = vpack.c.b16 %v6916, %v6867
    %v7358 = vpack.c.b16 %v6917, %v6868
    %v7359 = vpack.c.b16 %v6918, %v6869
    %v7360 = vpack.c.b16 %v6919, %v6870
    %v7361 = vpack.c.b16 %v6920, %v6871
    %v7362 = vpack.c.b16 %v6921, %v6872
    %v7363 = vpack.c.b16 %v6922, %v6873
    %v7364 = vpack.c.b16 %v6923, %v6874
    %v7365 = vpack.c.b16 %v6924, %v6875
    %v7366 = vpack.c.b16 %v6925, %v6876
    %v7367 = vpack.c.b16 %v6926, %v6877
    %v7368 = vpack.c.b16 %v6927, %v6878
    %v7369 = vpack.c.b16 %v6928, %v6879
    %v7370 = vpack.c.b16 %v6929, %v6880
    %v7371 = vpack.c.b16 %v6930, %v6881
    %v7372 = vpack.c.b16 %v6931, %v6882
    %v7373 = vpack.c.b16 %v6932, %v6883
    %v7374 = vpack.c.b16 %v6933, %v6884
    %v7375 = vpack.c.b16 %v6934, %v6885
    %v7376 = vpack.c.b16 %v6935, %v6886
    %v7377 = vpack.c.b16 %v6936, %v6887
    %v7378 = vpack.c.b16 %v6937, %v6888
    %v7379 = vpack.c.b16 %v6938, %v6889
    %v7380 = vpack.c.b16 %v6939, %v6890
    %v7381 = vpack.c.b16 %v6940, %v6891
    %v7382 = vpack.c.b16 %v6941, %v6892
    %v7383 = vpack.c.b16 %v6942, %v6893
    %v7384 = vpack.c.b16 %v6943, %v6894
    %v7385 = vpack.c.b16 %v6944, %v6895
    %v7386 = vpack.c.b16 %v6945, %v6896
    %v7387 = vpack.c.b16 %v6946, %v6897
    %v7388 = vpack.c.b16 %v6947, %v6898
    %v7389 = vpack.c.b16 %v6948, %v6899
    %v7390 = vpack.c.b16 %v6949, %v6900
    %v7391 = vpack.c.b16 %v6950, %v6901
    %v7392 = vpack.c.b16 %v6951, %v6902
    %v7393 = vpack.c.b16 %v6952, %v6903
    %v7394 = vpack.c.b16 %v6953, %v6904
    %v7395 = vpack.c.b16 %v6954, %v6905
    %v7396 = vpack.c.b16 %v6955, %v6906
    %v7397 = vpack.c.b16 %v6956, %v6907
    %v7398 = vpack.c.b16 %v6957, %v6908
    %v7399 = vpack.c.b16 %v7007, %v6958
    %v7400 = vpack.c.b16 %v7008, %v6959
    %v7401 = vpack.c.b16 %v7009, %v6960
    %v7402 = vpack.c.b16 %v7010, %v6961
    %v7403 = vpack.c.b16 %v7011, %v6962
    %v7404 = vpack.c.b16 %v7012, %v6963
    %v7405 = vpack.c.b16 %v7013, %v6964
    %v7406 = vpack.c.b16 %v7014, %v6965
    %v7407 = vpack.c.b16 %v7015, %v6966
    %v7408 = vpack.c.b16 %v7016, %v6967
    %v7409 = vpack.c.b16 %v7017, %v6968
    %v7410 = vpack.c.b16 %v7018, %v6969
    %v7411 = vpack.c.b16 %v7019, %v6970
    %v7412 = vpack.c.b16 %v7020, %v6971
    %v7413 = vpack.c.b16 %v7021, %v6972
    %v7414 = vpack.c.b16 %v7022, %v6973
    %v7415 = vpack.c.b16 %v7023, %v6974
    %v7416 = vpack.c.b16 %v7024, %v6975
    %v7417 = vpack.c.b16 %v7025, %v6976
    %v7418 = vpack.c.b16 %v7026, %v6977
    %v7419 = vpack.c.b16 %v7027, %v6978
    %v7420 = vpack.c.b16 %v7028, %v6979
    %v7421 = vpack.c.b16 %v7029, %v6980
    %v7422 = vpack.c.b16 %v7030, %v6981
    %v7423 = vpack.c.b16 %v7031, %v6982
    %v7424 = vpack.c.b16 %v7032, %v6983
    %v7425 = vpack.c.b16 %v7033, %v6984
    %v7426 = vpack.c.b16 %v7034, %v6985
    %v7427 = vpack.c.b16 %v7035, %v6986
    %v7428 = vpack.c.b16 %v7036, %v6987
    %v7429 = vpack.c.b16 %v7037, %v6988
    %v7430 = vpack.c.b16 %v7038, %v6989
    %v7431 = vpack.c.b16 %v7039, %v6990
    %v7432 = vpack.c.b16 %v7040, %v6991
    %v7433 = vpack.c.b16 %v7041, %v6992
    %v7434 = vpack.c.b16 %v7042, %v6993
    %v7435 = vpack.c.b16 %v7043, %v6994
    %v7436 = vpack.c.b16 %v7044, %v6995
    %v7437 = vpack.c.b16 %v7045, %v6996
    %v7438 = vpack.c.b16 %v7046, %v6997
    %v7439 = vpack.c.b16 %v7047, %v6998
    %v7440 = vpack.c.b16 %v7048, %v6999
    %v7441 = vpack.c.b16 %v7049, %v7000
    %v7442 = vpack.c.b16 %v7050, %v7001
    %v7443 = vpack.c.b16 %v7051, %v7002
    %v7444 = vpack.c.b16 %v7052, %v7003
    %v7445 = vpack.c.b16 %v7053, %v7004
    %v7446 = vpack.c.b16 %v7054, %v7005
    %v7447 = vpack.c.b16 %v7055, %v7006
    %v7448 = vpack.c.b16 %v7105, %v7056
    %v7449 = vpack.c.b16 %v7106, %v7057
    %v7450 = vpack.c.b16 %v7107, %v7058
    %v7451 = vpack.c.b16 %v7108, %v7059
    %v7452 = vpack.c.b16 %v7109, %v7060
    %v7453 = vpack.c.b16 %v7110, %v7061
    %v7454 = vpack.c.b16 %v7111, %v7062
    %v7455 = vpack.c.b16 %v7112, %v7063
    %v7456 = vpack.c.b16 %v7113, %v7064
    %v7457 = vpack.c.b16 %v7114, %v7065
    %v7458 = vpack.c.b16 %v7115, %v7066
    %v7459 = vpack.c.b16 %v7116, %v7067
    %v7460 = vpack.c.b16 %v7117, %v7068
    %v7461 = vpack.c.b16 %v7118, %v7069
    %v7462 = vpack.c.b16 %v7119, %v7070
    %v7463 = vpack.c.b16 %v7120, %v7071
    %v7464 = vpack.c.b16 %v7121, %v7072
    %v7465 = vpack.c.b16 %v7122, %v7073
    %v7466 = vpack.c.b16 %v7123, %v7074
    %v7467 = vpack.c.b16 %v7124, %v7075
    %v7468 = vpack.c.b16 %v7125, %v7076
    %v7469 = vpack.c.b16 %v7126, %v7077
    %v7470 = vpack.c.b16 %v7127, %v7078
    %v7471 = vpack.c.b16 %v7128, %v7079
    %v7472 = vpack.c.b16 %v7129, %v7080
    %v7473 = vpack.c.b16 %v7130, %v7081
    %v7474 = vpack.c.b16 %v7131, %v7082
    %v7475 = vpack.c.b16 %v7132, %v7083
    %v7476 = vpack.c.b16 %v7133, %v7084
    %v7477 = vpack.c.b16 %v7134, %v7085
    %v7478 = vpack.c.b16 %v7135, %v7086
    %v7479 = vpack.c.b16 %v7136, %v7087
    %v7480 = vpack.c.b16 %v7137, %v7088
    %v7481 = vpack.c.b16 %v7138, %v7089
    %v7482 = vpack.c.b16 %v7139, %v7090
    %v7483 = vpack.c.b16 %v7140, %v7091
    %v7484 = vpack.c.b16 %v7141, %v7092
    %v7485 = vpack.c.b16 %v7142, %v7093
    %v7486 = vpack.c.b16 %v7143, %v7094
    %v7487 = vpack.c.b16 %v7144, %v7095
    %v7488 = vpack.c.b16 %v7145, %v7096
    %v7489 = vpack.c.b16 %v7146, %v7097
    %v7490 = vpack.c.b16 %v7147, %v7098
    %v7491 = vpack.c.b16 %v7148, %v7099
    %v7492 = vpack.c.b16 %v7149, %v7100
    %v7493 = vpack.c.b16 %v7150, %v7101
    %v7494 = vpack.c.b16 %v7151, %v7102
    %v7495 = vpack.c.b16 %v7152, %v7103
    %v7496 = vpack.c.b16 %v7153, %v7104
    %v7497 = vpack.c.b16 %v7203, %v7154
    %v7498 = vpack.c.b16 %v7204, %v7155
    %v7499 = vpack.c.b16 %v7205, %v7156
    %v7500 = vpack.c.b16 %v7206, %v7157
    %v7501 = vpack.c.b16 %v7207, %v7158
    %v7502 = vpack.c.b16 %v7208, %v7159
    %v7503 = vpack.c.b16 %v7209, %v7160
    %v7504 = vpack.c.b16 %v7210, %v7161
    %v7505 = vpack.c.b16 %v7211, %v7162
    %v7506 = vpack.c.b16 %v7212, %v7163
    %v7507 = vpack.c.b16 %v7213, %v7164
    %v7508 = vpack.c.b16 %v7214, %v7165
    %v7509 = vpack.c.b16 %v7215, %v7166
    %v7510 = vpack.c.b16 %v7216, %v7167
    %v7511 = vpack.c.b16 %v7217, %v7168
    %v7512 = vpack.c.b16 %v7218, %v7169
    %v7513 = vpack.c.b16 %v7219, %v7170
    %v7514 = vpack.c.b16 %v7220, %v7171
    %v7515 = vpack.c.b16 %v7221, %v7172
    %v7516 = vpack.c.b16 %v7222, %v7173
    %v7517 = vpack.c.b16 %v7223, %v7174
    %v7518 = vpack.c.b16 %v7224, %v7175
    %v7519 = vpack.c.b16 %v7225, %v7176
    %v7520 = vpack.c.b16 %v7226, %v7177
    %v7521 = vpack.c.b16 %v7227, %v7178
    %v7522 = vpack.c.b16 %v7228, %v7179
    %v7523 = vpack.c.b16 %v7229, %v7180
    %v7524 = vpack.c.b16 %v7230, %v7181
    %v7525 = vpack.c.b16 %v7231, %v7182
    %v7526 = vpack.c.b16 %v7232, %v7183
    %v7527 = vpack.c.b16 %v7233, %v7184
    %v7528 = vpack.c.b16 %v7234, %v7185
    %v7529 = vpack.c.b16 %v7235, %v7186
    %v7530 = vpack.c.b16 %v7236, %v7187
    %v7531 = vpack.c.b16 %v7237, %v7188
    %v7532 = vpack.c.b16 %v7238, %v7189
    %v7533 = vpack.c.b16 %v7239, %v7190
    %v7534 = vpack.c.b16 %v7240, %v7191
    %v7535 = vpack.c.b16 %v7241, %v7192
    %v7536 = vpack.c.b16 %v7242, %v7193
    %v7537 = vpack.c.b16 %v7243, %v7194
    %v7538 = vpack.c.b16 %v7244, %v7195
    %v7539 = vpack.c.b16 %v7245, %v7196
    %v7540 = vpack.c.b16 %v7246, %v7197
    %v7541 = vpack.c.b16 %v7247, %v7198
    %v7542 = vpack.c.b16 %v7248, %v7199
    %v7543 = vpack.c.b16 %v7249, %v7200
    %v7544 = vpack.c.b16 %v7250, %v7201
    %v7545 = vpack.c.b16 %v7251, %v7202
    %v7546 = vpack.c.b16 %v7301, %v7252
    %v7547 = vpack.c.b16 %v7302, %v7253
    %v7548 = vpack.c.b16 %v7303, %v7254
    %v7549 = vpack.c.b16 %v7304, %v7255
    %v7550 = vpack.c.b16 %v7305, %v7256
    %v7551 = vpack.c.b16 %v7306, %v7257
    %v7552 = vpack.c.b16 %v7307, %v7258
    %v7553 = vpack.c.b16 %v7308, %v7259
    %v7554 = vpack.c.b16 %v7309, %v7260
    %v7555 = vpack.c.b16 %v7310, %v7261
    %v7556 = vpack.c.b16 %v7311, %v7262
    %v7557 = vpack.c.b16 %v7312, %v7263
    %v7558 = vpack.c.b16 %v7313, %v7264
    %v7559 = vpack.c.b16 %v7314, %v7265
    %v7560 = vpack.c.b16 %v7315, %v7266
    %v7561 = vpack.c.b16 %v7316, %v7267
    %v7562 = vpack.c.b16 %v7317, %v7268
    %v7563 = vpack.c.b16 %v7318, %v7269
    %v7564 = vpack.c.b16 %v7319, %v7270
    %v7565 = vpack.c.b16 %v7320, %v7271
    %v7566 = vpack.c.b16 %v7321, %v7272
    %v7567 = vpack.c.b16 %v7322, %v7273
    %v7568 = vpack.c.b16 %v7323, %v7274
    %v7569 = vpack.c.b16 %v7324, %v7275
    %v7570 = vpack.c.b16 %v7325, %v7276
    %v7571 = vpack.c.b16 %v7326, %v7277
    %v7572 = vpack.c.b16 %v7327, %v7278
    %v7573 = vpack.c.b16 %v7328, %v7279
    %v7574 = vpack.c.b16 %v7329, %v7280
    %v7575 = vpack.c.b16 %v7330, %v7281
    %v7576 = vpack.c.b16 %v7331, %v7282
    %v7577 = vpack.c.b16 %v7332, %v7283
    %v7578 = vpack.c.b16 %v7333, %v7284
    %v7579 = vpack.c.b16 %v7334, %v7285
    %v7580 = vpack.c.b16 %v7335, %v7286
    %v7581 = vpack.c.b16 %v7336, %v7287
    %v7582 = vpack.c.b16 %v7337, %v7288
    %v7583 = vpack.c.b16 %v7338, %v7289
    %v7584 = vpack.c.b16 %v7339, %v7290
    %v7585 = vpack.c.b16 %v7340, %v7291
    %v7586 = vpack.c.b16 %v7341, %v7292
    %v7587 = vpack.c.b16 %v7342, %v7293
    %v7588 = vpack.c.b16 %v7343, %v7294
    %v7589 = vpack.c.b16 %v7344, %v7295
    %v7590 = vpack.c.b16 %v7345, %v7296
    %v7591 = vpack.c.b16 %v7346, %v7297
    %v7592 = vpack.c.b16 %v7347, %v7298
    %v7593 = vpack.c.b16 %v7348, %v7299
    %v7594 = vpack.c.b16 %v7349, %v7300
    %v7841 = vsel %vm1415, %v6607, 0
    %v7844 = vsel %vm1415, %v6609, 0
    %7846 = vmatprep.subr.bf16.mxu0 %v7351
    %7847 = vmatpush1.bf16.msra.mxu0 %v7350
    %7848 = vmatprep.subr.bf16.mxu0 %v7400
    %7849 = vmatpush1.bf16.msra.mxu0 %v7399
    %7850 = vmatprep.subr.bf16.mxu0 %v7449
    %7851 = vmatpush1.bf16.msra.mxu0 %v7448
    %7852 = vmatprep.subr.bf16.mxu0 %v7498
    %7853 = vmatpush1.bf16.msra.mxu0 %v7497
    %7854 = vmatprep.subr.bf16.mxu0 %v7547
    %7855 = vmatpush1.bf16.msra.mxu0 %v7546
    %7856 = vmatprep.subr.bf16.mxu0 0
    %7857 = vmatpush1.bf16.msra.mxu0 0
    %7858 = vmatprep.subr.bf16.mxu0 0
    %7859 = vmatpush1.bf16.msra.mxu0 0
    %7860 = vmatprep.subr.bf16.mxu0 0
    %7861 = vmatpush1.bf16.msra.mxu0 0
    %7862 = vmatprep.subr.bf16.mxu0 0
    %7863 = vmatpush1.bf16.msra.mxu0 0
    %7864 = vmatprep.subr.bf16.mxu0 0
    %7865 = vmatpush1.bf16.msra.mxu0 0
    %7866 = vmatprep.subr.bf16.mxu0 0
    %7867 = vmatpush1.bf16.msra.mxu0 0
    %7868 = vmatprep.subr.bf16.mxu0 0
    %7869 = vmatpush1.bf16.msra.mxu0 0
    %7870 = vmatprep.subr.bf16.mxu0 0
    %7871 = vmatpush1.bf16.msra.mxu0 0
    %7872 = vmatprep.subr.bf16.mxu0 0
    %7873 = vmatpush1.bf16.msra.mxu0 0
    %7874 = vmatprep.subr.bf16.mxu0 0
    %7875 = vmatpush1.bf16.msra.mxu0 0
    %7876 = vmatprep.subr.bf16.mxu0 0
    %7877 = vmatpush1.bf16.msra.mxu0 0
    %7878 = vmatprep.mubr.bf16.mxu0 0
    %7879 = vmatmul.mubr.bf16.gmra.mrb[0].mxu0 %v7841
    %v7880 = vpop.f32.mrb[0].mxu0
    %v7881 = vadd.f32 0.0, %v7880
    %v7882 = vpop.f32.mrb[0].mxu0
    %v7883 = vadd.f32 0.0, %v7882
    %v7884 = vpop.f32.mrb[0].mxu0
    %v7885 = vadd.f32 0.0, %v7884
    %v7886 = vpop.f32.mrb[0].mxu0
    %v7887 = vadd.f32 0.0, %v7886
    %7888 = vmatprep.mubr.bf16.mxu0 0
    %7889 = vmatmul.mubr.bf16.gmra.mrb[0].mxu0 %v7844
    %v7890 = vpop.f32.mrb[0].mxu0
    %v7891 = vadd.f32 0.0, %v7890
    %v7892 = vpop.f32.mrb[0].mxu0
    %v7893 = vadd.f32 0.0, %v7892
    %v7894 = vpop.f32.mrb[0].mxu0
    %v7895 = vadd.f32 0.0, %v7894
    %v7896 = vpop.f32.mrb[0].mxu0
    %v7897 = vadd.f32 0.0, %v7896
    %7898 = vdwg.mxu0
    %7899 = vmatprep.subr.bf16.mxu0 %v7353
    %7900 = vmatpush1.bf16.msra.mxu0 %v7352
    %7901 = vmatprep.subr.bf16.mxu0 %v7402
    %7902 = vmatpush1.bf16.msra.mxu0 %v7401
    %7903 = vmatprep.subr.bf16.mxu0 %v7451
    %7904 = vmatpush1.bf16.msra.mxu0 %v7450
    %7905 = vmatprep.subr.bf16.mxu0 %v7500
    %7906 = vmatpush1.bf16.msra.mxu0 %v7499
    %7907 = vmatprep.subr.bf16.mxu0 %v7549
    %7908 = vmatpush1.bf16.msra.mxu0 %v7548
    %7909 = vmatprep.subr.bf16.mxu0 0
    %7910 = vmatpush1.bf16.msra.mxu0 0
    %7911 = vmatprep.subr.bf16.mxu0 0
    %7912 = vmatpush1.bf16.msra.mxu0 0
    %7913 = vmatprep.subr.bf16.mxu0 0
    %7914 = vmatpush1.bf16.msra.mxu0 0
    %7915 = vmatprep.subr.bf16.mxu0 0
    %7916 = vmatpush1.bf16.msra.mxu0 0
    %7917 = vmatprep.subr.bf16.mxu0 0
    %7918 = vmatpush1.bf16.msra.mxu0 0
    %7919 = vmatprep.subr.bf16.mxu0 0
    %7920 = vmatpush1.bf16.msra.mxu0 0
    %7921 = vmatprep.subr.bf16.mxu0 0
    %7922 = vmatpush1.bf16.msra.mxu0 0
    %7923 = vmatprep.subr.bf16.mxu0 0
    %7924 = vmatpush1.bf16.msra.mxu0 0
    %7925 = vmatprep.subr.bf16.mxu0 0
    %7926 = vmatpush1.bf16.msra.mxu0 0
    %7927 = vmatprep.subr.bf16.mxu0 0
    %7928 = vmatpush1.bf16.msra.mxu0 0
    %7929 = vmatprep.subr.bf16.mxu0 0
    %7930 = vmatpush1.bf16.msra.mxu0 0
    %7931 = vmatprep.mubr.bf16.mxu0 0
    %7932 = vmatmul.mubr.bf16.gmra.mrb[0].mxu0 %v7841
    %v7933 = vpop.f32.mrb[0].mxu0
    %v7934 = vadd.f32 0.0, %v7933
    %v7935 = vpop.f32.mrb[0].mxu0
    %v7936 = vadd.f32 0.0, %v7935
    %v7937 = vpop.f32.mrb[0].mxu0
    %v7938 = vadd.f32 0.0, %v7937
    %v7939 = vpop.f32.mrb[0].mxu0
    %v7940 = vadd.f32 0.0, %v7939
    %7941 = vmatprep.mubr.bf16.mxu0 0
    %7942 = vmatmul.mubr.bf16.gmra.mrb[0].mxu0 %v7844
    %v7943 = vpop.f32.mrb[0].mxu0
    %v7944 = vadd.f32 0.0, %v7943
    %v7945 = vpop.f32.mrb[0].mxu0
    %v7946 = vadd.f32 0.0, %v7945
    %v7947 = vpop.f32.mrb[0].mxu0
    %v7948 = vadd.f32 0.0, %v7947
    %v7949 = vpop.f32.mrb[0].mxu0
    %v7950 = vadd.f32 0.0, %v7949
    %7951 = vdwg.mxu0
    %7952 = vmatprep.subr.bf16.mxu0 %v7355
    %7953 = vmatpush1.bf16.msra.mxu0 %v7354
    %7954 = vmatprep.subr.bf16.mxu0 %v7404
    %7955 = vmatpush1.bf16.msra.mxu0 %v7403
    %7956 = vmatprep.subr.bf16.mxu0 %v7453
    %7957 = vmatpush1.bf16.msra.mxu0 %v7452
    %7958 = vmatprep.subr.bf16.mxu0 %v7502
    %7959 = vmatpush1.bf16.msra.mxu0 %v7501
    %7960 = vmatprep.subr.bf16.mxu0 %v7551
    %7961 = vmatpush1.bf16.msra.mxu0 %v7550
    %7962 = vmatprep.subr.bf16.mxu0 0
    %7963 = vmatpush1.bf16.msra.mxu0 0
    %7964 = vmatprep.subr.bf16.mxu0 0
    %7965 = vmatpush1.bf16.msra.mxu0 0
    %7966 = vmatprep.subr.bf16.mxu0 0
    %7967 = vmatpush1.bf16.msra.mxu0 0
    %7968 = vmatprep.subr.bf16.mxu0 0
    %7969 = vmatpush1.bf16.msra.mxu0 0
    %7970 = vmatprep.subr.bf16.mxu0 0
    %7971 = vmatpush1.bf16.msra.mxu0 0
    %7972 = vmatprep.subr.bf16.mxu0 0
    %7973 = vmatpush1.bf16.msra.mxu0 0
    %7974 = vmatprep.subr.bf16.mxu0 0
    %7975 = vmatpush1.bf16.msra.mxu0 0
    %7976 = vmatprep.subr.bf16.mxu0 0
    %7977 = vmatpush1.bf16.msra.mxu0 0
    %7978 = vmatprep.subr.bf16.mxu0 0
    %7979 = vmatpush1.bf16.msra.mxu0 0
    %7980 = vmatprep.subr.bf16.mxu0 0
    %7981 = vmatpush1.bf16.msra.mxu0 0
    %7982 = vmatprep.subr.bf16.mxu0 0
    %7983 = vmatpush1.bf16.msra.mxu0 0
    %7984 = vmatprep.mubr.bf16.mxu0 0
    %7985 = vmatmul.mubr.bf16.gmra.mrb[0].mxu0 %v7841
    %v7986 = vpop.f32.mrb[0].mxu0
    %v7987 = vadd.f32 0.0, %v7986
    %v7988 = vpop.f32.mrb[0].mxu0
    %v7989 = vadd.f32 0.0, %v7988
    %v7990 = vpop.f32.mrb[0].mxu0
    %v7991 = vadd.f32 0.0, %v7990
    %v7992 = vpop.f32.mrb[0].mxu0
    %v7993 = vadd.f32 0.0, %v7992
    %7994 = vmatprep.mubr.bf16.mxu0 0
    %7995 = vmatmul.mubr.bf16.gmra.mrb[0].mxu0 %v7844
    %v7996 = vpop.f32.mrb[0].mxu0
    %v7997 = vadd.f32 0.0, %v7996
    %v7998 = vpop.f32.mrb[0].mxu0
    %v7999 = vadd.f32 0.0, %v7998
    %v8000 = vpop.f32.mrb[0].mxu0
    %v8001 = vadd.f32 0.0, %v8000
    %v8002 = vpop.f32.mrb[0].mxu0
    %v8003 = vadd.f32 0.0, %v8002
    %8004 = vdwg.mxu0
    %8005 = vmatprep.subr.bf16.mxu0 %v7357
    %8006 = vmatpush1.bf16.msra.mxu0 %v7356
    %8007 = vmatprep.subr.bf16.mxu0 %v7406
    %8008 = vmatpush1.bf16.msra.mxu0 %v7405
    %8009 = vmatprep.subr.bf16.mxu0 %v7455
    %8010 = vmatpush1.bf16.msra.mxu0 %v7454
    %8011 = vmatprep.subr.bf16.mxu0 %v7504
    %8012 = vmatpush1.bf16.msra.mxu0 %v7503
    %8013 = vmatprep.subr.bf16.mxu0 %v7553
    %8014 = vmatpush1.bf16.msra.mxu0 %v7552
    %8015 = vmatprep.subr.bf16.mxu0 0
    %8016 = vmatpush1.bf16.msra.mxu0 0
    %8017 = vmatprep.subr.bf16.mxu0 0
    %8018 = vmatpush1.bf16.msra.mxu0 0
    %8019 = vmatprep.subr.bf16.mxu0 0
    %8020 = vmatpush1.bf16.msra.mxu0 0
    %8021 = vmatprep.subr.bf16.mxu0 0
    %8022 = vmatpush1.bf16.msra.mxu0 0
    %8023 = vmatprep.subr.bf16.mxu0 0
    %8024 = vmatpush1.bf16.msra.mxu0 0
    %8025 = vmatprep.subr.bf16.mxu0 0
    %8026 = vmatpush1.bf16.msra.mxu0 0
    %8027 = vmatprep.subr.bf16.mxu0 0
    %8028 = vmatpush1.bf16.msra.mxu0 0
    %8029 = vmatprep.subr.bf16.mxu0 0
    %8030 = vmatpush1.bf16.msra.mxu0 0
    %8031 = vmatprep.subr.bf16.mxu0 0
    %8032 = vmatpush1.bf16.msra.mxu0 0
    %8033 = vmatprep.subr.bf16.mxu0 0
    %8034 = vmatpush1.bf16.msra.mxu0 0
    %8035 = vmatprep.subr.bf16.mxu0 0
    %8036 = vmatpush1.bf16.msra.mxu0 0
    %8037 = vmatprep.mubr.bf16.mxu0 0
    %8038 = vmatmul.mubr.bf16.gmra.mrb[0].mxu0 %v7841
    %v8039 = vpop.f32.mrb[0].mxu0
    %v8040 = vadd.f32 0.0, %v8039
    %v8041 = vpop.f32.mrb[0].mxu0
    %v8042 = vadd.f32 0.0, %v8041
    %v8043 = vpop.f32.mrb[0].mxu0
    %v8044 = vadd.f32 0.0, %v8043
    %v8045 = vpop.f32.mrb[0].mxu0
    %v8046 = vadd.f32 0.0, %v8045
    %8047 = vmatprep.mubr.bf16.mxu0 0
    %8048 = vmatmul.mubr.bf16.gmra.mrb[0].mxu0 %v7844
    %v8049 = vpop.f32.mrb[0].mxu0
    %v8050 = vadd.f32 0.0, %v8049
    %v8051 = vpop.f32.mrb[0].mxu0
    %v8052 = vadd.f32 0.0, %v8051
    %v8053 = vpop.f32.mrb[0].mxu0
    %v8054 = vadd.f32 0.0, %v8053
    %v8055 = vpop.f32.mrb[0].mxu0
    %v8056 = vadd.f32 0.0, %v8055
    %8057 = vdwg.mxu0
    %8058 = vmatprep.subr.bf16.mxu0 %v7359
    %8059 = vmatpush1.bf16.msra.mxu0 %v7358
    %8060 = vmatprep.subr.bf16.mxu0 %v7408
    %8061 = vmatpush1.bf16.msra.mxu0 %v7407
    %8062 = vmatprep.subr.bf16.mxu0 %v7457
    %8063 = vmatpush1.bf16.msra.mxu0 %v7456
    %8064 = vmatprep.subr.bf16.mxu0 %v7506
    %8065 = vmatpush1.bf16.msra.mxu0 %v7505
    %8066 = vmatprep.subr.bf16.mxu0 %v7555
    %8067 = vmatpush1.bf16.msra.mxu0 %v7554
    %8068 = vmatprep.subr.bf16.mxu0 0
    %8069 = vmatpush1.bf16.msra.mxu0 0
    %8070 = vmatprep.subr.bf16.mxu0 0
    %8071 = vmatpush1.bf16.msra.mxu0 0
    %8072 = vmatprep.subr.bf16.mxu0 0
    %8073 = vmatpush1.bf16.msra.mxu0 0
    %8074 = vmatprep.subr.bf16.mxu0 0
    %8075 = vmatpush1.bf16.msra.mxu0 0
    %8076 = vmatprep.subr.bf16.mxu0 0
    %8077 = vmatpush1.bf16.msra.mxu0 0
    %8078 = vmatprep.subr.bf16.mxu0 0
    %8079 = vmatpush1.bf16.msra.mxu0 0
    %8080 = vmatprep.subr.bf16.mxu0 0
    %8081 = vmatpush1.bf16.msra.mxu0 0
    %8082 = vmatprep.subr.bf16.mxu0 0
    %8083 = vmatpush1.bf16.msra.mxu0 0
    %8084 = vmatprep.subr.bf16.mxu0 0
    %8085 = vmatpush1.bf16.msra.mxu0 0
    %8086 = vmatprep.subr.bf16.mxu0 0
    %8087 = vmatpush1.bf16.msra.mxu0 0
    %8088 = vmatprep.subr.bf16.mxu0 0
    %8089 = vmatpush1.bf16.msra.mxu0 0
    %8090 = vmatprep.mubr.bf16.mxu0 0
    %8091 = vmatmul.mubr.bf16.gmra.mrb[0].mxu0 %v7841
    %v8092 = vpop.f32.mrb[0].mxu0
    %v8093 = vadd.f32 0.0, %v8092
    %v8094 = vpop.f32.mrb[0].mxu0
    %v8095 = vadd.f32 0.0, %v8094
    %v8096 = vpop.f32.mrb[0].mxu0
    %v8097 = vadd.f32 0.0, %v8096
    %v8098 = vpop.f32.mrb[0].mxu0
    %v8099 = vadd.f32 0.0, %v8098
    %8100 = vmatprep.mubr.bf16.mxu0 0
    %8101 = vmatmul.mubr.bf16.gmra.mrb[0].mxu0 %v7844
    %v8102 = vpop.f32.mrb[0].mxu0
    %v8103 = vadd.f32 0.0, %v8102
    %v8104 = vpop.f32.mrb[0].mxu0
    %v8105 = vadd.f32 0.0, %v8104
    %v8106 = vpop.f32.mrb[0].mxu0
    %v8107 = vadd.f32 0.0, %v8106
    %v8108 = vpop.f32.mrb[0].mxu0
    %v8109 = vadd.f32 0.0, %v8108
    %8110 = vdwg.mxu0
    %8111 = vmatprep.subr.bf16.mxu0 %v7361
    %8112 = vmatpush1.bf16.msra.mxu0 %v7360
    %8113 = vmatprep.subr.bf16.mxu0 %v7410
    %8114 = vmatpush1.bf16.msra.mxu0 %v7409
    %8115 = vmatprep.subr.bf16.mxu0 %v7459
    %8116 = vmatpush1.bf16.msra.mxu0 %v7458
    %8117 = vmatprep.subr.bf16.mxu0 %v7508
    %8118 = vmatpush1.bf16.msra.mxu0 %v7507
    %8119 = vmatprep.subr.bf16.mxu0 %v7557
    %8120 = vmatpush1.bf16.msra.mxu0 %v7556
    %8121 = vmatprep.subr.bf16.mxu0 0
    %8122 = vmatpush1.bf16.msra.mxu0 0
    %8123 = vmatprep.subr.bf16.mxu0 0
    %8124 = vmatpush1.bf16.msra.mxu0 0
    %8125 = vmatprep.subr.bf16.mxu0 0
    %8126 = vmatpush1.bf16.msra.mxu0 0
    %8127 = vmatprep.subr.bf16.mxu0 0
    %8128 = vmatpush1.bf16.msra.mxu0 0
    %8129 = vmatprep.subr.bf16.mxu0 0
    %8130 = vmatpush1.bf16.msra.mxu0 0
    %8131 = vmatprep.subr.bf16.mxu0 0
    %8132 = vmatpush1.bf16.msra.mxu0 0
    %8133 = vmatprep.subr.bf16.mxu0 0
    %8134 = vmatpush1.bf16.msra.mxu0 0
    %8135 = vmatprep.subr.bf16.mxu0 0
    %8136 = vmatpush1.bf16.msra.mxu0 0
    %8137 = vmatprep.subr.bf16.mxu0 0
    %8138 = vmatpush1.bf16.msra.mxu0 0
    %8139 = vmatprep.subr.bf16.mxu0 0
    %8140 = vmatpush1.bf16.msra.mxu0 0
    %8141 = vmatprep.subr.bf16.mxu0 0
    %8142 = vmatpush1.bf16.msra.mxu0 0
    %8143 = vmatprep.mubr.bf16.mxu0 0
    %8144 = vmatmul.mubr.bf16.gmra.mrb[0].mxu0 %v7841
    %v8145 = vpop.f32.mrb[0].mxu0
    %v8146 = vadd.f32 0.0, %v8145
    %v8147 = vpop.f32.mrb[0].mxu0
    %v8148 = vadd.f32 0.0, %v8147
    %v8149 = vpop.f32.mrb[0].mxu0
    %v8150 = vadd.f32 0.0, %v8149
    %v8151 = vpop.f32.mrb[0].mxu0
    %v8152 = vadd.f32 0.0, %v8151
    %8153 = vmatprep.mubr.bf16.mxu0 0
    %8154 = vmatmul.mubr.bf16.gmra.mrb[0].mxu0 %v7844
    %v8155 = vpop.f32.mrb[0].mxu0
    %v8156 = vadd.f32 0.0, %v8155
    %v8157 = vpop.f32.mrb[0].mxu0
    %v8158 = vadd.f32 0.0, %v8157
    %v8159 = vpop.f32.mrb[0].mxu0
    %v8160 = vadd.f32 0.0, %v8159
    %v8161 = vpop.f32.mrb[0].mxu0
    %v8162 = vadd.f32 0.0, %v8161
    %8163 = vdwg.mxu0
    %8164 = vmatprep.subr.bf16.mxu0 %v7363
    %8165 = vmatpush1.bf16.msra.mxu0 %v7362
    %8166 = vmatprep.subr.bf16.mxu0 %v7412
    %8167 = vmatpush1.bf16.msra.mxu0 %v7411
    %8168 = vmatprep.subr.bf16.mxu0 %v7461
    %8169 = vmatpush1.bf16.msra.mxu0 %v7460
    %8170 = vmatprep.subr.bf16.mxu0 %v7510
    %8171 = vmatpush1.bf16.msra.mxu0 %v7509
    %8172 = vmatprep.subr.bf16.mxu0 %v7559
    %8173 = vmatpush1.bf16.msra.mxu0 %v7558
    %8174 = vmatprep.subr.bf16.mxu0 0
    %8175 = vmatpush1.bf16.msra.mxu0 0
    %8176 = vmatprep.subr.bf16.mxu0 0
    %8177 = vmatpush1.bf16.msra.mxu0 0
    %8178 = vmatprep.subr.bf16.mxu0 0
    %8179 = vmatpush1.bf16.msra.mxu0 0
    %8180 = vmatprep.subr.bf16.mxu0 0
    %8181 = vmatpush1.bf16.msra.mxu0 0
    %8182 = vmatprep.subr.bf16.mxu0 0
    %8183 = vmatpush1.bf16.msra.mxu0 0
    %8184 = vmatprep.subr.bf16.mxu0 0
    %8185 = vmatpush1.bf16.msra.mxu0 0
    %8186 = vmatprep.subr.bf16.mxu0 0
    %8187 = vmatpush1.bf16.msra.mxu0 0
    %8188 = vmatprep.subr.bf16.mxu0 0
    %8189 = vmatpush1.bf16.msra.mxu0 0
    %8190 = vmatprep.subr.bf16.mxu0 0
    %8191 = vmatpush1.bf16.msra.mxu0 0
    %8192 = vmatprep.subr.bf16.mxu0 0
    %8193 = vmatpush1.bf16.msra.mxu0 0
    %8194 = vmatprep.subr.bf16.mxu0 0
    %8195 = vmatpush1.bf16.msra.mxu0 0
    %8196 = vmatprep.mubr.bf16.mxu0 0
    %8197 = vmatmul.mubr.bf16.gmra.mrb[0].mxu0 %v7841
    %v8198 = vpop.f32.mrb[0].mxu0
    %v8199 = vadd.f32 0.0, %v8198
    %v8200 = vpop.f32.mrb[0].mxu0
    %v8201 = vadd.f32 0.0, %v8200
    %v8202 = vpop.f32.mrb[0].mxu0
    %v8203 = vadd.f32 0.0, %v8202
    %v8204 = vpop.f32.mrb[0].mxu0
    %v8205 = vadd.f32 0.0, %v8204
    %8206 = vmatprep.mubr.bf16.mxu0 0
    %8207 = vmatmul.mubr.bf16.gmra.mrb[0].mxu0 %v7844
    %v8208 = vpop.f32.mrb[0].mxu0
    %v8209 = vadd.f32 0.0, %v8208
    %v8210 = vpop.f32.mrb[0].mxu0
    %v8211 = vadd.f32 0.0, %v8210
    %v8212 = vpop.f32.mrb[0].mxu0
    %v8213 = vadd.f32 0.0, %v8212
    %v8214 = vpop.f32.mrb[0].mxu0
    %v8215 = vadd.f32 0.0, %v8214
    %8216 = vdwg.mxu0
    %8217 = vmatprep.subr.bf16.mxu0 %v7365
    %8218 = vmatpush1.bf16.msra.mxu0 %v7364
    %8219 = vmatprep.subr.bf16.mxu0 %v7414
    %8220 = vmatpush1.bf16.msra.mxu0 %v7413
    %8221 = vmatprep.subr.bf16.mxu0 %v7463
    %8222 = vmatpush1.bf16.msra.mxu0 %v7462
    %8223 = vmatprep.subr.bf16.mxu0 %v7512
    %8224 = vmatpush1.bf16.msra.mxu0 %v7511
    %8225 = vmatprep.subr.bf16.mxu0 %v7561
    %8226 = vmatpush1.bf16.msra.mxu0 %v7560
    %8227 = vmatprep.subr.bf16.mxu0 0
    %8228 = vmatpush1.bf16.msra.mxu0 0
    %8229 = vmatprep.subr.bf16.mxu0 0
    %8230 = vmatpush1.bf16.msra.mxu0 0
    %8231 = vmatprep.subr.bf16.mxu0 0
    %8232 = vmatpush1.bf16.msra.mxu0 0
    %8233 = vmatprep.subr.bf16.mxu0 0
    %8234 = vmatpush1.bf16.msra.mxu0 0
    %8235 = vmatprep.subr.bf16.mxu0 0
    %8236 = vmatpush1.bf16.msra.mxu0 0
    %8237 = vmatprep.subr.bf16.mxu0 0
    %8238 = vmatpush1.bf16.msra.mxu0 0
    %8239 = vmatprep.subr.bf16.mxu0 0
    %8240 = vmatpush1.bf16.msra.mxu0 0
    %8241 = vmatprep.subr.bf16.mxu0 0
    %8242 = vmatpush1.bf16.msra.mxu0 0
    %8243 = vmatprep.subr.bf16.mxu0 0
    %8244 = vmatpush1.bf16.msra.mxu0 0
    %8245 = vmatprep.subr.bf16.mxu0 0
    %8246 = vmatpush1.bf16.msra.mxu0 0
    %8247 = vmatprep.subr.bf16.mxu0 0
    %8248 = vmatpush1.bf16.msra.mxu0 0
    %8249 = vmatprep.mubr.bf16.mxu0 0
    %8250 = vmatmul.mubr.bf16.gmra.mrb[0].mxu0 %v7841
    %v8251 = vpop.f32.mrb[0].mxu0
    %v8252 = vadd.f32 0.0, %v8251
    %v8253 = vpop.f32.mrb[0].mxu0
    %v8254 = vadd.f32 0.0, %v8253
    %v8255 = vpop.f32.mrb[0].mxu0
    %v8256 = vadd.f32 0.0, %v8255
    %v8257 = vpop.f32.mrb[0].mxu0
    %v8258 = vadd.f32 0.0, %v8257
    %8259 = vmatprep.mubr.bf16.mxu0 0
    %8260 = vmatmul.mubr.bf16.gmra.mrb[0].mxu0 %v7844
    %v8261 = vpop.f32.mrb[0].mxu0
    %v8262 = vadd.f32 0.0, %v8261
    %v8263 = vpop.f32.mrb[0].mxu0
    %v8264 = vadd.f32 0.0, %v8263
    %v8265 = vpop.f32.mrb[0].mxu0
    %v8266 = vadd.f32 0.0, %v8265
    %v8267 = vpop.f32.mrb[0].mxu0
    %v8268 = vadd.f32 0.0, %v8267
    %8269 = vdwg.mxu0
    %8270 = vmatprep.subr.bf16.mxu0 %v7367
    %8271 = vmatpush1.bf16.msra.mxu0 %v7366
    %8272 = vmatprep.subr.bf16.mxu0 %v7416
    %8273 = vmatpush1.bf16.msra.mxu0 %v7415
    %8274 = vmatprep.subr.bf16.mxu0 %v7465
    %8275 = vmatpush1.bf16.msra.mxu0 %v7464
    %8276 = vmatprep.subr.bf16.mxu0 %v7514
    %8277 = vmatpush1.bf16.msra.mxu0 %v7513
    %8278 = vmatprep.subr.bf16.mxu0 %v7563
    %8279 = vmatpush1.bf16.msra.mxu0 %v7562
    %8280 = vmatprep.subr.bf16.mxu0 0
    %8281 = vmatpush1.bf16.msra.mxu0 0
    %8282 = vmatprep.subr.bf16.mxu0 0
    %8283 = vmatpush1.bf16.msra.mxu0 0
    %8284 = vmatprep.subr.bf16.mxu0 0
    %8285 = vmatpush1.bf16.msra.mxu0 0
    %8286 = vmatprep.subr.bf16.mxu0 0
    %8287 = vmatpush1.bf16.msra.mxu0 0
    %8288 = vmatprep.subr.bf16.mxu0 0
    %8289 = vmatpush1.bf16.msra.mxu0 0
    %8290 = vmatprep.subr.bf16.mxu0 0
    %8291 = vmatpush1.bf16.msra.mxu0 0
    %8292 = vmatprep.subr.bf16.mxu0 0
    %8293 = vmatpush1.bf16.msra.mxu0 0
    %8294 = vmatprep.subr.bf16.mxu0 0
    %8295 = vmatpush1.bf16.msra.mxu0 0
    %8296 = vmatprep.subr.bf16.mxu0 0
    %8297 = vmatpush1.bf16.msra.mxu0 0
    %8298 = vmatprep.subr.bf16.mxu0 0
    %8299 = vmatpush1.bf16.msra.mxu0 0
    %8300 = vmatprep.subr.bf16.mxu0 0
    %8301 = vmatpush1.bf16.msra.mxu0 0
    %8302 = vmatprep.mubr.bf16.mxu0 0
    %8303 = vmatmul.mubr.bf16.gmra.mrb[0].mxu0 %v7841
    %v8304 = vpop.f32.mrb[0].mxu0
    %v8305 = vadd.f32 0.0, %v8304
    %v8306 = vpop.f32.mrb[0].mxu0
    %v8307 = vadd.f32 0.0, %v8306
    %v8308 = vpop.f32.mrb[0].mxu0
    %v8309 = vadd.f32 0.0, %v8308
    %v8310 = vpop.f32.mrb[0].mxu0
    %v8311 = vadd.f32 0.0, %v8310
    %8312 = vmatprep.mubr.bf16.mxu0 0
    %8313 = vmatmul.mubr.bf16.gmra.mrb[0].mxu0 %v7844
    %v8314 = vpop.f32.mrb[0].mxu0
    %v8315 = vadd.f32 0.0, %v8314
    %v8316 = vpop.f32.mrb[0].mxu0
    %v8317 = vadd.f32 0.0, %v8316
    %v8318 = vpop.f32.mrb[0].mxu0
    %v8319 = vadd.f32 0.0, %v8318
    %v8320 = vpop.f32.mrb[0].mxu0
    %v8321 = vadd.f32 0.0, %v8320
    %8322 = vdwg.mxu0
    %8323 = vmatprep.subr.bf16.mxu0 %v7369
    %8324 = vmatpush1.bf16.msra.mxu0 %v7368
    %8325 = vmatprep.subr.bf16.mxu0 %v7418
    %8326 = vmatpush1.bf16.msra.mxu0 %v7417
    %8327 = vmatprep.subr.bf16.mxu0 %v7467
    %8328 = vmatpush1.bf16.msra.mxu0 %v7466
    %8329 = vmatprep.subr.bf16.mxu0 %v7516
    %8330 = vmatpush1.bf16.msra.mxu0 %v7515
    %8331 = vmatprep.subr.bf16.mxu0 %v7565
    %8332 = vmatpush1.bf16.msra.mxu0 %v7564
    %8333 = vmatprep.subr.bf16.mxu0 0
    %8334 = vmatpush1.bf16.msra.mxu0 0
    %8335 = vmatprep.subr.bf16.mxu0 0
    %8336 = vmatpush1.bf16.msra.mxu0 0
    %8337 = vmatprep.subr.bf16.mxu0 0
    %8338 = vmatpush1.bf16.msra.mxu0 0
    %8339 = vmatprep.subr.bf16.mxu0 0
    %8340 = vmatpush1.bf16.msra.mxu0 0
    %8341 = vmatprep.subr.bf16.mxu0 0
    %8342 = vmatpush1.bf16.msra.mxu0 0
    %8343 = vmatprep.subr.bf16.mxu0 0
    %8344 = vmatpush1.bf16.msra.mxu0 0
    %8345 = vmatprep.subr.bf16.mxu0 0
    %8346 = vmatpush1.bf16.msra.mxu0 0
    %8347 = vmatprep.subr.bf16.mxu0 0
    %8348 = vmatpush1.bf16.msra.mxu0 0
    %8349 = vmatprep.subr.bf16.mxu0 0
    %8350 = vmatpush1.bf16.msra.mxu0 0
    %8351 = vmatprep.subr.bf16.mxu0 0
    %8352 = vmatpush1.bf16.msra.mxu0 0
    %8353 = vmatprep.subr.bf16.mxu0 0
    %8354 = vmatpush1.bf16.msra.mxu0 0
    %8355 = vmatprep.mubr.bf16.mxu0 0
    %8356 = vmatmul.mubr.bf16.gmra.mrb[0].mxu0 %v7841
    %v8357 = vpop.f32.mrb[0].mxu0
    %v8358 = vadd.f32 0.0, %v8357
    %v8359 = vpop.f32.mrb[0].mxu0
    %v8360 = vadd.f32 0.0, %v8359
    %v8361 = vpop.f32.mrb[0].mxu0
    %v8362 = vadd.f32 0.0, %v8361
    %v8363 = vpop.f32.mrb[0].mxu0
    %v8364 = vadd.f32 0.0, %v8363
    %8365 = vmatprep.mubr.bf16.mxu0 0
    %8366 = vmatmul.mubr.bf16.gmra.mrb[0].mxu0 %v7844
    %v8367 = vpop.f32.mrb[0].mxu0
    %v8368 = vadd.f32 0.0, %v8367
    %v8369 = vpop.f32.mrb[0].mxu0
    %v8370 = vadd.f32 0.0, %v8369
    %v8371 = vpop.f32.mrb[0].mxu0
    %v8372 = vadd.f32 0.0, %v8371
    %v8373 = vpop.f32.mrb[0].mxu0
    %v8374 = vadd.f32 0.0, %v8373
    %8375 = vdwg.mxu0
    %8376 = vmatprep.subr.bf16.mxu0 %v7371
    %8377 = vmatpush1.bf16.msra.mxu0 %v7370
    %8378 = vmatprep.subr.bf16.mxu0 %v7420
    %8379 = vmatpush1.bf16.msra.mxu0 %v7419
    %8380 = vmatprep.subr.bf16.mxu0 %v7469
    %8381 = vmatpush1.bf16.msra.mxu0 %v7468
    %8382 = vmatprep.subr.bf16.mxu0 %v7518
    %8383 = vmatpush1.bf16.msra.mxu0 %v7517
    %8384 = vmatprep.subr.bf16.mxu0 %v7567
    %8385 = vmatpush1.bf16.msra.mxu0 %v7566
    %8386 = vmatprep.subr.bf16.mxu0 0
    %8387 = vmatpush1.bf16.msra.mxu0 0
    %8388 = vmatprep.subr.bf16.mxu0 0
    %8389 = vmatpush1.bf16.msra.mxu0 0
    %8390 = vmatprep.subr.bf16.mxu0 0
    %8391 = vmatpush1.bf16.msra.mxu0 0
    %8392 = vmatprep.subr.bf16.mxu0 0
    %8393 = vmatpush1.bf16.msra.mxu0 0
    %8394 = vmatprep.subr.bf16.mxu0 0
    %8395 = vmatpush1.bf16.msra.mxu0 0
    %8396 = vmatprep.subr.bf16.mxu0 0
    %8397 = vmatpush1.bf16.msra.mxu0 0
    %8398 = vmatprep.subr.bf16.mxu0 0
    %8399 = vmatpush1.bf16.msra.mxu0 0
    %8400 = vmatprep.subr.bf16.mxu0 0
    %8401 = vmatpush1.bf16.msra.mxu0 0
    %8402 = vmatprep.subr.bf16.mxu0 0
    %8403 = vmatpush1.bf16.msra.mxu0 0
    %8404 = vmatprep.subr.bf16.mxu0 0
    %8405 = vmatpush1.bf16.msra.mxu0 0
    %8406 = vmatprep.subr.bf16.mxu0 0
    %8407 = vmatpush1.bf16.msra.mxu0 0
    %8408 = vmatprep.mubr.bf16.mxu0 0
    %8409 = vmatmul.mubr.bf16.gmra.mrb[0].mxu0 %v7841
    %v8410 = vpop.f32.mrb[0].mxu0
    %v8411 = vadd.f32 0.0, %v8410
    %v8412 = vpop.f32.mrb[0].mxu0
    %v8413 = vadd.f32 0.0, %v8412
    %v8414 = vpop.f32.mrb[0].mxu0
    %v8415 = vadd.f32 0.0, %v8414
    %v8416 = vpop.f32.mrb[0].mxu0
    %v8417 = vadd.f32 0.0, %v8416
    %8418 = vmatprep.mubr.bf16.mxu0 0
    %8419 = vmatmul.mubr.bf16.gmra.mrb[0].mxu0 %v7844
    %v8420 = vpop.f32.mrb[0].mxu0
    %v8421 = vadd.f32 0.0, %v8420
    %v8422 = vpop.f32.mrb[0].mxu0
    %v8423 = vadd.f32 0.0, %v8422
    %v8424 = vpop.f32.mrb[0].mxu0
    %v8425 = vadd.f32 0.0, %v8424
    %v8426 = vpop.f32.mrb[0].mxu0
    %v8427 = vadd.f32 0.0, %v8426
    %8428 = vdwg.mxu0
    %8429 = vmatprep.subr.bf16.mxu0 %v7373
    %8430 = vmatpush1.bf16.msra.mxu0 %v7372
    %8431 = vmatprep.subr.bf16.mxu0 %v7422
    %8432 = vmatpush1.bf16.msra.mxu0 %v7421
    %8433 = vmatprep.subr.bf16.mxu0 %v7471
    %8434 = vmatpush1.bf16.msra.mxu0 %v7470
    %8435 = vmatprep.subr.bf16.mxu0 %v7520
    %8436 = vmatpush1.bf16.msra.mxu0 %v7519
    %8437 = vmatprep.subr.bf16.mxu0 %v7569
    %8438 = vmatpush1.bf16.msra.mxu0 %v7568
    %8439 = vmatprep.subr.bf16.mxu0 0
    %8440 = vmatpush1.bf16.msra.mxu0 0
    %8441 = vmatprep.subr.bf16.mxu0 0
    %8442 = vmatpush1.bf16.msra.mxu0 0
    %8443 = vmatprep.subr.bf16.mxu0 0
    %8444 = vmatpush1.bf16.msra.mxu0 0
    %8445 = vmatprep.subr.bf16.mxu0 0
    %8446 = vmatpush1.bf16.msra.mxu0 0
    %8447 = vmatprep.subr.bf16.mxu0 0
    %8448 = vmatpush1.bf16.msra.mxu0 0
    %8449 = vmatprep.subr.bf16.mxu0 0
    %8450 = vmatpush1.bf16.msra.mxu0 0
    %8451 = vmatprep.subr.bf16.mxu0 0
    %8452 = vmatpush1.bf16.msra.mxu0 0
    %8453 = vmatprep.subr.bf16.mxu0 0
    %8454 = vmatpush1.bf16.msra.mxu0 0
    %8455 = vmatprep.subr.bf16.mxu0 0
    %8456 = vmatpush1.bf16.msra.mxu0 0
    %8457 = vmatprep.subr.bf16.mxu0 0
    %8458 = vmatpush1.bf16.msra.mxu0 0
    %8459 = vmatprep.subr.bf16.mxu0 0
    %8460 = vmatpush1.bf16.msra.mxu0 0
    %8461 = vmatprep.mubr.bf16.mxu0 0
    %8462 = vmatmul.mubr.bf16.gmra.mrb[0].mxu0 %v7841
    %v8463 = vpop.f32.mrb[0].mxu0
    %v8464 = vadd.f32 0.0, %v8463
    %v8465 = vpop.f32.mrb[0].mxu0
    %v8466 = vadd.f32 0.0, %v8465
    %v8467 = vpop.f32.mrb[0].mxu0
    %v8468 = vadd.f32 0.0, %v8467
    %v8469 = vpop.f32.mrb[0].mxu0
    %v8470 = vadd.f32 0.0, %v8469
    %8471 = vmatprep.mubr.bf16.mxu0 0
    %8472 = vmatmul.mubr.bf16.gmra.mrb[0].mxu0 %v7844
    %v8473 = vpop.f32.mrb[0].mxu0
    %v8474 = vadd.f32 0.0, %v8473
    %v8475 = vpop.f32.mrb[0].mxu0
    %v8476 = vadd.f32 0.0, %v8475
    %v8477 = vpop.f32.mrb[0].mxu0
    %v8478 = vadd.f32 0.0, %v8477
    %v8479 = vpop.f32.mrb[0].mxu0
    %v8480 = vadd.f32 0.0, %v8479
    %8481 = vdwg.mxu0
    %8482 = vmatprep.subr.bf16.mxu0 %v7375
    %8483 = vmatpush1.bf16.msra.mxu0 %v7374
    %8484 = vmatprep.subr.bf16.mxu0 %v7424
    %8485 = vmatpush1.bf16.msra.mxu0 %v7423
    %8486 = vmatprep.subr.bf16.mxu0 %v7473
    %8487 = vmatpush1.bf16.msra.mxu0 %v7472
    %8488 = vmatprep.subr.bf16.mxu0 %v7522
    %8489 = vmatpush1.bf16.msra.mxu0 %v7521
    %8490 = vmatprep.subr.bf16.mxu0 %v7571
    %8491 = vmatpush1.bf16.msra.mxu0 %v7570
    %8492 = vmatprep.subr.bf16.mxu0 0
    %8493 = vmatpush1.bf16.msra.mxu0 0
    %8494 = vmatprep.subr.bf16.mxu0 0
    %8495 = vmatpush1.bf16.msra.mxu0 0
    %8496 = vmatprep.subr.bf16.mxu0 0
    %8497 = vmatpush1.bf16.msra.mxu0 0
    %8498 = vmatprep.subr.bf16.mxu0 0
    %8499 = vmatpush1.bf16.msra.mxu0 0
    %8500 = vmatprep.subr.bf16.mxu0 0
    %8501 = vmatpush1.bf16.msra.mxu0 0
    %8502 = vmatprep.subr.bf16.mxu0 0
    %8503 = vmatpush1.bf16.msra.mxu0 0
    %8504 = vmatprep.subr.bf16.mxu0 0
    %8505 = vmatpush1.bf16.msra.mxu0 0
    %8506 = vmatprep.subr.bf16.mxu0 0
    %8507 = vmatpush1.bf16.msra.mxu0 0
    %8508 = vmatprep.subr.bf16.mxu0 0
    %8509 = vmatpush1.bf16.msra.mxu0 0
    %8510 = vmatprep.subr.bf16.mxu0 0
    %8511 = vmatpush1.bf16.msra.mxu0 0
    %8512 = vmatprep.subr.bf16.mxu0 0
    %8513 = vmatpush1.bf16.msra.mxu0 0
    %8514 = vmatprep.mubr.bf16.mxu0 0
    %8515 = vmatmul.mubr.bf16.gmra.mrb[0].mxu0 %v7841
    %v8516 = vpop.f32.mrb[0].mxu0
    %v8517 = vadd.f32 0.0, %v8516
    %v8518 = vpop.f32.mrb[0].mxu0
    %v8519 = vadd.f32 0.0, %v8518
    %v8520 = vpop.f32.mrb[0].mxu0
    %v8521 = vadd.f32 0.0, %v8520
    %v8522 = vpop.f32.mrb[0].mxu0
    %v8523 = vadd.f32 0.0, %v8522
    %8524 = vmatprep.mubr.bf16.mxu0 0
    %8525 = vmatmul.mubr.bf16.gmra.mrb[0].mxu0 %v7844
    %v8526 = vpop.f32.mrb[0].mxu0
    %v8527 = vadd.f32 0.0, %v8526
    %v8528 = vpop.f32.mrb[0].mxu0
    %v8529 = vadd.f32 0.0, %v8528
    %v8530 = vpop.f32.mrb[0].mxu0
    %v8531 = vadd.f32 0.0, %v8530
    %v8532 = vpop.f32.mrb[0].mxu0
    %v8533 = vadd.f32 0.0, %v8532
    %8534 = vdwg.mxu0
    %8535 = vmatprep.subr.bf16.mxu0 %v7377
    %8536 = vmatpush1.bf16.msra.mxu0 %v7376
    %8537 = vmatprep.subr.bf16.mxu0 %v7426
    %8538 = vmatpush1.bf16.msra.mxu0 %v7425
    %8539 = vmatprep.subr.bf16.mxu0 %v7475
    %8540 = vmatpush1.bf16.msra.mxu0 %v7474
    %8541 = vmatprep.subr.bf16.mxu0 %v7524
    %8542 = vmatpush1.bf16.msra.mxu0 %v7523
    %8543 = vmatprep.subr.bf16.mxu0 %v7573
    %8544 = vmatpush1.bf16.msra.mxu0 %v7572
    %8545 = vmatprep.subr.bf16.mxu0 0
    %8546 = vmatpush1.bf16.msra.mxu0 0
    %8547 = vmatprep.subr.bf16.mxu0 0
    %8548 = vmatpush1.bf16.msra.mxu0 0
    %8549 = vmatprep.subr.bf16.mxu0 0
    %8550 = vmatpush1.bf16.msra.mxu0 0
    %8551 = vmatprep.subr.bf16.mxu0 0
    %8552 = vmatpush1.bf16.msra.mxu0 0
    %8553 = vmatprep.subr.bf16.mxu0 0
    %8554 = vmatpush1.bf16.msra.mxu0 0
    %8555 = vmatprep.subr.bf16.mxu0 0
    %8556 = vmatpush1.bf16.msra.mxu0 0
    %8557 = vmatprep.subr.bf16.mxu0 0
    %8558 = vmatpush1.bf16.msra.mxu0 0
    %8559 = vmatprep.subr.bf16.mxu0 0
    %8560 = vmatpush1.bf16.msra.mxu0 0
    %8561 = vmatprep.subr.bf16.mxu0 0
    %8562 = vmatpush1.bf16.msra.mxu0 0
    %8563 = vmatprep.subr.bf16.mxu0 0
    %8564 = vmatpush1.bf16.msra.mxu0 0
    %8565 = vmatprep.subr.bf16.mxu0 0
    %8566 = vmatpush1.bf16.msra.mxu0 0
    %8567 = vmatprep.mubr.bf16.mxu0 0
    %8568 = vmatmul.mubr.bf16.gmra.mrb[0].mxu0 %v7841
    %v8569 = vpop.f32.mrb[0].mxu0
    %v8570 = vadd.f32 0.0, %v8569
    %v8571 = vpop.f32.mrb[0].mxu0
    %v8572 = vadd.f32 0.0, %v8571
    %v8573 = vpop.f32.mrb[0].mxu0
    %v8574 = vadd.f32 0.0, %v8573
    %v8575 = vpop.f32.mrb[0].mxu0
    %v8576 = vadd.f32 0.0, %v8575
    %8577 = vmatprep.mubr.bf16.mxu0 0
    %8578 = vmatmul.mubr.bf16.gmra.mrb[0].mxu0 %v7844
    %v8579 = vpop.f32.mrb[0].mxu0
    %v8580 = vadd.f32 0.0, %v8579
    %v8581 = vpop.f32.mrb[0].mxu0
    %v8582 = vadd.f32 0.0, %v8581
    %v8583 = vpop.f32.mrb[0].mxu0
    %v8584 = vadd.f32 0.0, %v8583
    %v8585 = vpop.f32.mrb[0].mxu0
    %v8586 = vadd.f32 0.0, %v8585
    %8587 = vdwg.mxu0
    %8588 = vmatprep.subr.bf16.mxu0 %v7379
    %8589 = vmatpush1.bf16.msra.mxu0 %v7378
    %8590 = vmatprep.subr.bf16.mxu0 %v7428
    %8591 = vmatpush1.bf16.msra.mxu0 %v7427
    %8592 = vmatprep.subr.bf16.mxu0 %v7477
    %8593 = vmatpush1.bf16.msra.mxu0 %v7476
    %8594 = vmatprep.subr.bf16.mxu0 %v7526
    %8595 = vmatpush1.bf16.msra.mxu0 %v7525
    %8596 = vmatprep.subr.bf16.mxu0 %v7575
    %8597 = vmatpush1.bf16.msra.mxu0 %v7574
    %8598 = vmatprep.subr.bf16.mxu0 0
    %8599 = vmatpush1.bf16.msra.mxu0 0
    %8600 = vmatprep.subr.bf16.mxu0 0
    %8601 = vmatpush1.bf16.msra.mxu0 0
    %8602 = vmatprep.subr.bf16.mxu0 0
    %8603 = vmatpush1.bf16.msra.mxu0 0
    %8604 = vmatprep.subr.bf16.mxu0 0
    %8605 = vmatpush1.bf16.msra.mxu0 0
    %8606 = vmatprep.subr.bf16.mxu0 0
    %8607 = vmatpush1.bf16.msra.mxu0 0
    %8608 = vmatprep.subr.bf16.mxu0 0
    %8609 = vmatpush1.bf16.msra.mxu0 0
    %8610 = vmatprep.subr.bf16.mxu0 0
    %8611 = vmatpush1.bf16.msra.mxu0 0
    %8612 = vmatprep.subr.bf16.mxu0 0
    %8613 = vmatpush1.bf16.msra.mxu0 0
    %8614 = vmatprep.subr.bf16.mxu0 0
    %8615 = vmatpush1.bf16.msra.mxu0 0
    %8616 = vmatprep.subr.bf16.mxu0 0
    %8617 = vmatpush1.bf16.msra.mxu0 0
    %8618 = vmatprep.subr.bf16.mxu0 0
    %8619 = vmatpush1.bf16.msra.mxu0 0
    %8620 = vmatprep.mubr.bf16.mxu0 0
    %8621 = vmatmul.mubr.bf16.gmra.mrb[0].mxu0 %v7841
    %v8622 = vpop.f32.mrb[0].mxu0
    %v8623 = vadd.f32 0.0, %v8622
    %v8624 = vpop.f32.mrb[0].mxu0
    %v8625 = vadd.f32 0.0, %v8624
    %v8626 = vpop.f32.mrb[0].mxu0
    %v8627 = vadd.f32 0.0, %v8626
    %v8628 = vpop.f32.mrb[0].mxu0
    %v8629 = vadd.f32 0.0, %v8628
    %8630 = vmatprep.mubr.bf16.mxu0 0
    %8631 = vmatmul.mubr.bf16.gmra.mrb[0].mxu0 %v7844
    %v8632 = vpop.f32.mrb[0].mxu0
    %v8633 = vadd.f32 0.0, %v8632
    %v8634 = vpop.f32.mrb[0].mxu0
    %v8635 = vadd.f32 0.0, %v8634
    %v8636 = vpop.f32.mrb[0].mxu0
    %v8637 = vadd.f32 0.0, %v8636
    %v8638 = vpop.f32.mrb[0].mxu0
    %v8639 = vadd.f32 0.0, %v8638
    %8640 = vdwg.mxu0
    %8641 = vmatprep.subr.bf16.mxu0 %v7381
    %8642 = vmatpush1.bf16.msra.mxu0 %v7380
    %8643 = vmatprep.subr.bf16.mxu0 %v7430
    %8644 = vmatpush1.bf16.msra.mxu0 %v7429
    %8645 = vmatprep.subr.bf16.mxu0 %v7479
    %8646 = vmatpush1.bf16.msra.mxu0 %v7478
    %8647 = vmatprep.subr.bf16.mxu0 %v7528
    %8648 = vmatpush1.bf16.msra.mxu0 %v7527
    %8649 = vmatprep.subr.bf16.mxu0 %v7577
    %8650 = vmatpush1.bf16.msra.mxu0 %v7576
    %8651 = vmatprep.subr.bf16.mxu0 0
    %8652 = vmatpush1.bf16.msra.mxu0 0
    %8653 = vmatprep.subr.bf16.mxu0 0
    %8654 = vmatpush1.bf16.msra.mxu0 0
    %8655 = vmatprep.subr.bf16.mxu0 0
    %8656 = vmatpush1.bf16.msra.mxu0 0
    %8657 = vmatprep.subr.bf16.mxu0 0
    %8658 = vmatpush1.bf16.msra.mxu0 0
    %8659 = vmatprep.subr.bf16.mxu0 0
    %8660 = vmatpush1.bf16.msra.mxu0 0
    %8661 = vmatprep.subr.bf16.mxu0 0
    %8662 = vmatpush1.bf16.msra.mxu0 0
    %8663 = vmatprep.subr.bf16.mxu0 0
    %8664 = vmatpush1.bf16.msra.mxu0 0
    %8665 = vmatprep.subr.bf16.mxu0 0
    %8666 = vmatpush1.bf16.msra.mxu0 0
    %8667 = vmatprep.subr.bf16.mxu0 0
    %8668 = vmatpush1.bf16.msra.mxu0 0
    %8669 = vmatprep.subr.bf16.mxu0 0
    %8670 = vmatpush1.bf16.msra.mxu0 0
    %8671 = vmatprep.subr.bf16.mxu0 0
    %8672 = vmatpush1.bf16.msra.mxu0 0
    %8673 = vmatprep.mubr.bf16.mxu0 0
    %8674 = vmatmul.mubr.bf16.gmra.mrb[0].mxu0 %v7841
    %v8675 = vpop.f32.mrb[0].mxu0
    %v8676 = vadd.f32 0.0, %v8675
    %v8677 = vpop.f32.mrb[0].mxu0
    %v8678 = vadd.f32 0.0, %v8677
    %v8679 = vpop.f32.mrb[0].mxu0
    %v8680 = vadd.f32 0.0, %v8679
    %v8681 = vpop.f32.mrb[0].mxu0
    %v8682 = vadd.f32 0.0, %v8681
    %8683 = vmatprep.mubr.bf16.mxu0 0
    %8684 = vmatmul.mubr.bf16.gmra.mrb[0].mxu0 %v7844
    %v8685 = vpop.f32.mrb[0].mxu0
    %v8686 = vadd.f32 0.0, %v8685
    %v8687 = vpop.f32.mrb[0].mxu0
    %v8688 = vadd.f32 0.0, %v8687
    %v8689 = vpop.f32.mrb[0].mxu0
    %v8690 = vadd.f32 0.0, %v8689
    %v8691 = vpop.f32.mrb[0].mxu0
    %v8692 = vadd.f32 0.0, %v8691
    %8693 = vdwg.mxu0
    %8694 = vmatprep.subr.bf16.mxu0 %v7383
    %8695 = vmatpush1.bf16.msra.mxu0 %v7382
    %8696 = vmatprep.subr.bf16.mxu0 %v7432
    %8697 = vmatpush1.bf16.msra.mxu0 %v7431
    %8698 = vmatprep.subr.bf16.mxu0 %v7481
    %8699 = vmatpush1.bf16.msra.mxu0 %v7480
    %8700 = vmatprep.subr.bf16.mxu0 %v7530
    %8701 = vmatpush1.bf16.msra.mxu0 %v7529
    %8702 = vmatprep.subr.bf16.mxu0 %v7579
    %8703 = vmatpush1.bf16.msra.mxu0 %v7578
    %8704 = vmatprep.subr.bf16.mxu0 0
    %8705 = vmatpush1.bf16.msra.mxu0 0
    %8706 = vmatprep.subr.bf16.mxu0 0
    %8707 = vmatpush1.bf16.msra.mxu0 0
    %8708 = vmatprep.subr.bf16.mxu0 0
    %8709 = vmatpush1.bf16.msra.mxu0 0
    %8710 = vmatprep.subr.bf16.mxu0 0
    %8711 = vmatpush1.bf16.msra.mxu0 0
    %8712 = vmatprep.subr.bf16.mxu0 0
    %8713 = vmatpush1.bf16.msra.mxu0 0
    %8714 = vmatprep.subr.bf16.mxu0 0
    %8715 = vmatpush1.bf16.msra.mxu0 0
    %8716 = vmatprep.subr.bf16.mxu0 0
    %8717 = vmatpush1.bf16.msra.mxu0 0
    %8718 = vmatprep.subr.bf16.mxu0 0
    %8719 = vmatpush1.bf16.msra.mxu0 0
    %8720 = vmatprep.subr.bf16.mxu0 0
    %8721 = vmatpush1.bf16.msra.mxu0 0
    %8722 = vmatprep.subr.bf16.mxu0 0
    %8723 = vmatpush1.bf16.msra.mxu0 0
    %8724 = vmatprep.subr.bf16.mxu0 0
    %8725 = vmatpush1.bf16.msra.mxu0 0
    %8726 = vmatprep.mubr.bf16.mxu0 0
    %8727 = vmatmul.mubr.bf16.gmra.mrb[0].mxu0 %v7841
    %v8728 = vpop.f32.mrb[0].mxu0
    %v8729 = vadd.f32 0.0, %v8728
    %v8730 = vpop.f32.mrb[0].mxu0
    %v8731 = vadd.f32 0.0, %v8730
    %v8732 = vpop.f32.mrb[0].mxu0
    %v8733 = vadd.f32 0.0, %v8732
    %v8734 = vpop.f32.mrb[0].mxu0
    %v8735 = vadd.f32 0.0, %v8734
    %8736 = vmatprep.mubr.bf16.mxu0 0
    %8737 = vmatmul.mubr.bf16.gmra.mrb[0].mxu0 %v7844
    %v8738 = vpop.f32.mrb[0].mxu0
    %v8739 = vadd.f32 0.0, %v8738
    %v8740 = vpop.f32.mrb[0].mxu0
    %v8741 = vadd.f32 0.0, %v8740
    %v8742 = vpop.f32.mrb[0].mxu0
    %v8743 = vadd.f32 0.0, %v8742
    %v8744 = vpop.f32.mrb[0].mxu0
    %v8745 = vadd.f32 0.0, %v8744
    %8746 = vdwg.mxu0
    %8747 = vmatprep.subr.bf16.mxu0 %v7385
    %8748 = vmatpush1.bf16.msra.mxu0 %v7384
    %8749 = vmatprep.subr.bf16.mxu0 %v7434
    %8750 = vmatpush1.bf16.msra.mxu0 %v7433
    %8751 = vmatprep.subr.bf16.mxu0 %v7483
    %8752 = vmatpush1.bf16.msra.mxu0 %v7482
    %8753 = vmatprep.subr.bf16.mxu0 %v7532
    %8754 = vmatpush1.bf16.msra.mxu0 %v7531
    %8755 = vmatprep.subr.bf16.mxu0 %v7581
    %8756 = vmatpush1.bf16.msra.mxu0 %v7580
    %8757 = vmatprep.subr.bf16.mxu0 0
    %8758 = vmatpush1.bf16.msra.mxu0 0
    %8759 = vmatprep.subr.bf16.mxu0 0
    %8760 = vmatpush1.bf16.msra.mxu0 0
    %8761 = vmatprep.subr.bf16.mxu0 0
    %8762 = vmatpush1.bf16.msra.mxu0 0
    %8763 = vmatprep.subr.bf16.mxu0 0
    %8764 = vmatpush1.bf16.msra.mxu0 0
    %8765 = vmatprep.subr.bf16.mxu0 0
    %8766 = vmatpush1.bf16.msra.mxu0 0
    %8767 = vmatprep.subr.bf16.mxu0 0
    %8768 = vmatpush1.bf16.msra.mxu0 0
    %8769 = vmatprep.subr.bf16.mxu0 0
    %8770 = vmatpush1.bf16.msra.mxu0 0
    %8771 = vmatprep.subr.bf16.mxu0 0
    %8772 = vmatpush1.bf16.msra.mxu0 0
    %8773 = vmatprep.subr.bf16.mxu0 0
    %8774 = vmatpush1.bf16.msra.mxu0 0
    %8775 = vmatprep.subr.bf16.mxu0 0
    %8776 = vmatpush1.bf16.msra.mxu0 0
    %8777 = vmatprep.subr.bf16.mxu0 0
    %8778 = vmatpush1.bf16.msra.mxu0 0
    %8779 = vmatprep.mubr.bf16.mxu0 0
    %8780 = vmatmul.mubr.bf16.gmra.mrb[0].mxu0 %v7841
    %v8781 = vpop.f32.mrb[0].mxu0
    %v8782 = vadd.f32 0.0, %v8781
    %v8783 = vpop.f32.mrb[0].mxu0
    %v8784 = vadd.f32 0.0, %v8783
    %v8785 = vpop.f32.mrb[0].mxu0
    %v8786 = vadd.f32 0.0, %v8785
    %v8787 = vpop.f32.mrb[0].mxu0
    %v8788 = vadd.f32 0.0, %v8787
    %8789 = vmatprep.mubr.bf16.mxu0 0
    %8790 = vmatmul.mubr.bf16.gmra.mrb[0].mxu0 %v7844
    %v8791 = vpop.f32.mrb[0].mxu0
    %v8792 = vadd.f32 0.0, %v8791
    %v8793 = vpop.f32.mrb[0].mxu0
    %v8794 = vadd.f32 0.0, %v8793
    %v8795 = vpop.f32.mrb[0].mxu0
    %v8796 = vadd.f32 0.0, %v8795
    %v8797 = vpop.f32.mrb[0].mxu0
    %v8798 = vadd.f32 0.0, %v8797
    %8799 = vdwg.mxu0
    %8800 = vmatprep.subr.bf16.mxu0 %v7387
    %8801 = vmatpush1.bf16.msra.mxu0 %v7386
    %8802 = vmatprep.subr.bf16.mxu0 %v7436
    %8803 = vmatpush1.bf16.msra.mxu0 %v7435
    %8804 = vmatprep.subr.bf16.mxu0 %v7485
    %8805 = vmatpush1.bf16.msra.mxu0 %v7484
    %8806 = vmatprep.subr.bf16.mxu0 %v7534
    %8807 = vmatpush1.bf16.msra.mxu0 %v7533
    %8808 = vmatprep.subr.bf16.mxu0 %v7583
    %8809 = vmatpush1.bf16.msra.mxu0 %v7582
    %8810 = vmatprep.subr.bf16.mxu0 0
    %8811 = vmatpush1.bf16.msra.mxu0 0
    %8812 = vmatprep.subr.bf16.mxu0 0
    %8813 = vmatpush1.bf16.msra.mxu0 0
    %8814 = vmatprep.subr.bf16.mxu0 0
    %8815 = vmatpush1.bf16.msra.mxu0 0
    %8816 = vmatprep.subr.bf16.mxu0 0
    %8817 = vmatpush1.bf16.msra.mxu0 0
    %8818 = vmatprep.subr.bf16.mxu0 0
    %8819 = vmatpush1.bf16.msra.mxu0 0
    %8820 = vmatprep.subr.bf16.mxu0 0
    %8821 = vmatpush1.bf16.msra.mxu0 0
    %8822 = vmatprep.subr.bf16.mxu0 0
    %8823 = vmatpush1.bf16.msra.mxu0 0
    %8824 = vmatprep.subr.bf16.mxu0 0
    %8825 = vmatpush1.bf16.msra.mxu0 0
    %8826 = vmatprep.subr.bf16.mxu0 0
    %8827 = vmatpush1.bf16.msra.mxu0 0
    %8828 = vmatprep.subr.bf16.mxu0 0
    %8829 = vmatpush1.bf16.msra.mxu0 0
    %8830 = vmatprep.subr.bf16.mxu0 0
    %8831 = vmatpush1.bf16.msra.mxu0 0
    %8832 = vmatprep.mubr.bf16.mxu0 0
    %8833 = vmatmul.mubr.bf16.gmra.mrb[0].mxu0 %v7841
    %v8834 = vpop.f32.mrb[0].mxu0
    %v8835 = vadd.f32 0.0, %v8834
    %v8836 = vpop.f32.mrb[0].mxu0
    %v8837 = vadd.f32 0.0, %v8836
    %v8838 = vpop.f32.mrb[0].mxu0
    %v8839 = vadd.f32 0.0, %v8838
    %v8840 = vpop.f32.mrb[0].mxu0
    %v8841 = vadd.f32 0.0, %v8840
    %8842 = vmatprep.mubr.bf16.mxu0 0
    %8843 = vmatmul.mubr.bf16.gmra.mrb[0].mxu0 %v7844
    %v8844 = vpop.f32.mrb[0].mxu0
    %v8845 = vadd.f32 0.0, %v8844
    %v8846 = vpop.f32.mrb[0].mxu0
    %v8847 = vadd.f32 0.0, %v8846
    %v8848 = vpop.f32.mrb[0].mxu0
    %v8849 = vadd.f32 0.0, %v8848
    %v8850 = vpop.f32.mrb[0].mxu0
    %v8851 = vadd.f32 0.0, %v8850
    %8852 = vdwg.mxu0
    %8853 = vmatprep.subr.bf16.mxu0 %v7389
    %8854 = vmatpush1.bf16.msra.mxu0 %v7388
    %8855 = vmatprep.subr.bf16.mxu0 %v7438
    %8856 = vmatpush1.bf16.msra.mxu0 %v7437
    %8857 = vmatprep.subr.bf16.mxu0 %v7487
    %8858 = vmatpush1.bf16.msra.mxu0 %v7486
    %8859 = vmatprep.subr.bf16.mxu0 %v7536
    %8860 = vmatpush1.bf16.msra.mxu0 %v7535
    %8861 = vmatprep.subr.bf16.mxu0 %v7585
    %8862 = vmatpush1.bf16.msra.mxu0 %v7584
    %8863 = vmatprep.subr.bf16.mxu0 0
    %8864 = vmatpush1.bf16.msra.mxu0 0
    %8865 = vmatprep.subr.bf16.mxu0 0
    %8866 = vmatpush1.bf16.msra.mxu0 0
    %8867 = vmatprep.subr.bf16.mxu0 0
    %8868 = vmatpush1.bf16.msra.mxu0 0
    %8869 = vmatprep.subr.bf16.mxu0 0
    %8870 = vmatpush1.bf16.msra.mxu0 0
    %8871 = vmatprep.subr.bf16.mxu0 0
    %8872 = vmatpush1.bf16.msra.mxu0 0
    %8873 = vmatprep.subr.bf16.mxu0 0
    %8874 = vmatpush1.bf16.msra.mxu0 0
    %8875 = vmatprep.subr.bf16.mxu0 0
    %8876 = vmatpush1.bf16.msra.mxu0 0
    %8877 = vmatprep.subr.bf16.mxu0 0
    %8878 = vmatpush1.bf16.msra.mxu0 0
    %8879 = vmatprep.subr.bf16.mxu0 0
    %8880 = vmatpush1.bf16.msra.mxu0 0
    %8881 = vmatprep.subr.bf16.mxu0 0
    %8882 = vmatpush1.bf16.msra.mxu0 0
    %8883 = vmatprep.subr.bf16.mxu0 0
    %8884 = vmatpush1.bf16.msra.mxu0 0
    %8885 = vmatprep.mubr.bf16.mxu0 0
    %8886 = vmatmul.mubr.bf16.gmra.mrb[0].mxu0 %v7841
    %v8887 = vpop.f32.mrb[0].mxu0
    %v8888 = vadd.f32 0.0, %v8887
    %v8889 = vpop.f32.mrb[0].mxu0
    %v8890 = vadd.f32 0.0, %v8889
    %v8891 = vpop.f32.mrb[0].mxu0
    %v8892 = vadd.f32 0.0, %v8891
    %v8893 = vpop.f32.mrb[0].mxu0
    %v8894 = vadd.f32 0.0, %v8893
    %8895 = vmatprep.mubr.bf16.mxu0 0
    %8896 = vmatmul.mubr.bf16.gmra.mrb[0].mxu0 %v7844
    %v8897 = vpop.f32.mrb[0].mxu0
    %v8898 = vadd.f32 0.0, %v8897
    %v8899 = vpop.f32.mrb[0].mxu0
    %v8900 = vadd.f32 0.0, %v8899
    %v8901 = vpop.f32.mrb[0].mxu0
    %v8902 = vadd.f32 0.0, %v8901
    %v8903 = vpop.f32.mrb[0].mxu0
    %v8904 = vadd.f32 0.0, %v8903
    %8905 = vdwg.mxu0
    %8906 = vmatprep.subr.bf16.mxu0 %v7391
    %8907 = vmatpush1.bf16.msra.mxu0 %v7390
    %8908 = vmatprep.subr.bf16.mxu0 %v7440
    %8909 = vmatpush1.bf16.msra.mxu0 %v7439
    %8910 = vmatprep.subr.bf16.mxu0 %v7489
    %8911 = vmatpush1.bf16.msra.mxu0 %v7488
    %8912 = vmatprep.subr.bf16.mxu0 %v7538
    %8913 = vmatpush1.bf16.msra.mxu0 %v7537
    %8914 = vmatprep.subr.bf16.mxu0 %v7587
    %8915 = vmatpush1.bf16.msra.mxu0 %v7586
    %8916 = vmatprep.subr.bf16.mxu0 0
    %8917 = vmatpush1.bf16.msra.mxu0 0
    %8918 = vmatprep.subr.bf16.mxu0 0
    %8919 = vmatpush1.bf16.msra.mxu0 0
    %8920 = vmatprep.subr.bf16.mxu0 0
    %8921 = vmatpush1.bf16.msra.mxu0 0
    %8922 = vmatprep.subr.bf16.mxu0 0
    %8923 = vmatpush1.bf16.msra.mxu0 0
    %8924 = vmatprep.subr.bf16.mxu0 0
    %8925 = vmatpush1.bf16.msra.mxu0 0
    %8926 = vmatprep.subr.bf16.mxu0 0
    %8927 = vmatpush1.bf16.msra.mxu0 0
    %8928 = vmatprep.subr.bf16.mxu0 0
    %8929 = vmatpush1.bf16.msra.mxu0 0
    %8930 = vmatprep.subr.bf16.mxu0 0
    %8931 = vmatpush1.bf16.msra.mxu0 0
    %8932 = vmatprep.subr.bf16.mxu0 0
    %8933 = vmatpush1.bf16.msra.mxu0 0
    %8934 = vmatprep.subr.bf16.mxu0 0
    %8935 = vmatpush1.bf16.msra.mxu0 0
    %8936 = vmatprep.subr.bf16.mxu0 0
    %8937 = vmatpush1.bf16.msra.mxu0 0
    %8938 = vmatprep.mubr.bf16.mxu0 0
    %8939 = vmatmul.mubr.bf16.gmra.mrb[0].mxu0 %v7841
    %v8940 = vpop.f32.mrb[0].mxu0
    %v8941 = vadd.f32 0.0, %v8940
    %v8942 = vpop.f32.mrb[0].mxu0
    %v8943 = vadd.f32 0.0, %v8942
    %v8944 = vpop.f32.mrb[0].mxu0
    %v8945 = vadd.f32 0.0, %v8944
    %v8946 = vpop.f32.mrb[0].mxu0
    %v8947 = vadd.f32 0.0, %v8946
    %8948 = vmatprep.mubr.bf16.mxu0 0
    %8949 = vmatmul.mubr.bf16.gmra.mrb[0].mxu0 %v7844
    %v8950 = vpop.f32.mrb[0].mxu0
    %v8951 = vadd.f32 0.0, %v8950
    %v8952 = vpop.f32.mrb[0].mxu0
    %v8953 = vadd.f32 0.0, %v8952
    %v8954 = vpop.f32.mrb[0].mxu0
    %v8955 = vadd.f32 0.0, %v8954
    %v8956 = vpop.f32.mrb[0].mxu0
    %v8957 = vadd.f32 0.0, %v8956
    %8958 = vdwg.mxu0
    %8959 = vmatprep.subr.bf16.mxu0 %v7393
    %8960 = vmatpush1.bf16.msra.mxu0 %v7392
    %8961 = vmatprep.subr.bf16.mxu0 %v7442
    %8962 = vmatpush1.bf16.msra.mxu0 %v7441
    %8963 = vmatprep.subr.bf16.mxu0 %v7491
    %8964 = vmatpush1.bf16.msra.mxu0 %v7490
    %8965 = vmatprep.subr.bf16.mxu0 %v7540
    %8966 = vmatpush1.bf16.msra.mxu0 %v7539
    %8967 = vmatprep.subr.bf16.mxu0 %v7589
    %8968 = vmatpush1.bf16.msra.mxu0 %v7588
    %8969 = vmatprep.subr.bf16.mxu0 0
    %8970 = vmatpush1.bf16.msra.mxu0 0
    %8971 = vmatprep.subr.bf16.mxu0 0
    %8972 = vmatpush1.bf16.msra.mxu0 0
    %8973 = vmatprep.subr.bf16.mxu0 0
    %8974 = vmatpush1.bf16.msra.mxu0 0
    %8975 = vmatprep.subr.bf16.mxu0 0
    %8976 = vmatpush1.bf16.msra.mxu0 0
    %8977 = vmatprep.subr.bf16.mxu0 0
    %8978 = vmatpush1.bf16.msra.mxu0 0
    %8979 = vmatprep.subr.bf16.mxu0 0
    %8980 = vmatpush1.bf16.msra.mxu0 0
    %8981 = vmatprep.subr.bf16.mxu0 0
    %8982 = vmatpush1.bf16.msra.mxu0 0
    %8983 = vmatprep.subr.bf16.mxu0 0
    %8984 = vmatpush1.bf16.msra.mxu0 0
    %8985 = vmatprep.subr.bf16.mxu0 0
    %8986 = vmatpush1.bf16.msra.mxu0 0
    %8987 = vmatprep.subr.bf16.mxu0 0
    %8988 = vmatpush1.bf16.msra.mxu0 0
    %8989 = vmatprep.subr.bf16.mxu0 0
    %8990 = vmatpush1.bf16.msra.mxu0 0
    %8991 = vmatprep.mubr.bf16.mxu0 0
    %8992 = vmatmul.mubr.bf16.gmra.mrb[0].mxu0 %v7841
    %v8993 = vpop.f32.mrb[0].mxu0
    %v8994 = vadd.f32 0.0, %v8993
    %v8995 = vpop.f32.mrb[0].mxu0
    %v8996 = vadd.f32 0.0, %v8995
    %v8997 = vpop.f32.mrb[0].mxu0
    %v8998 = vadd.f32 0.0, %v8997
    %v8999 = vpop.f32.mrb[0].mxu0
    %v9000 = vadd.f32 0.0, %v8999
    %9001 = vmatprep.mubr.bf16.mxu0 0
    %9002 = vmatmul.mubr.bf16.gmra.mrb[0].mxu0 %v7844
    %v9003 = vpop.f32.mrb[0].mxu0
    %v9004 = vadd.f32 0.0, %v9003
    %v9005 = vpop.f32.mrb[0].mxu0
    %v9006 = vadd.f32 0.0, %v9005
    %v9007 = vpop.f32.mrb[0].mxu0
    %v9008 = vadd.f32 0.0, %v9007
    %v9009 = vpop.f32.mrb[0].mxu0
    %v9010 = vadd.f32 0.0, %v9009
    %9011 = vdwg.mxu0
    %9012 = vmatprep.subr.bf16.mxu0 %v7395
    %9013 = vmatpush1.bf16.msra.mxu0 %v7394
    %9014 = vmatprep.subr.bf16.mxu0 %v7444
    %9015 = vmatpush1.bf16.msra.mxu0 %v7443
    %9016 = vmatprep.subr.bf16.mxu0 %v7493
    %9017 = vmatpush1.bf16.msra.mxu0 %v7492
    %9018 = vmatprep.subr.bf16.mxu0 %v7542
    %9019 = vmatpush1.bf16.msra.mxu0 %v7541
    %9020 = vmatprep.subr.bf16.mxu0 %v7591
    %9021 = vmatpush1.bf16.msra.mxu0 %v7590
    %9022 = vmatprep.subr.bf16.mxu0 0
    %9023 = vmatpush1.bf16.msra.mxu0 0
    %9024 = vmatprep.subr.bf16.mxu0 0
    %9025 = vmatpush1.bf16.msra.mxu0 0
    %9026 = vmatprep.subr.bf16.mxu0 0
    %9027 = vmatpush1.bf16.msra.mxu0 0
    %9028 = vmatprep.subr.bf16.mxu0 0
    %9029 = vmatpush1.bf16.msra.mxu0 0
    %9030 = vmatprep.subr.bf16.mxu0 0
    %9031 = vmatpush1.bf16.msra.mxu0 0
    %9032 = vmatprep.subr.bf16.mxu0 0
    %9033 = vmatpush1.bf16.msra.mxu0 0
    %9034 = vmatprep.subr.bf16.mxu0 0
    %9035 = vmatpush1.bf16.msra.mxu0 0
    %9036 = vmatprep.subr.bf16.mxu0 0
    %9037 = vmatpush1.bf16.msra.mxu0 0
    %9038 = vmatprep.subr.bf16.mxu0 0
    %9039 = vmatpush1.bf16.msra.mxu0 0
    %9040 = vmatprep.subr.bf16.mxu0 0
    %9041 = vmatpush1.bf16.msra.mxu0 0
    %9042 = vmatprep.subr.bf16.mxu0 0
    %9043 = vmatpush1.bf16.msra.mxu0 0
    %9044 = vmatprep.mubr.bf16.mxu0 0
    %9045 = vmatmul.mubr.bf16.gmra.mrb[0].mxu0 %v7841
    %v9046 = vpop.f32.mrb[0].mxu0
    %v9047 = vadd.f32 0.0, %v9046
    %v9048 = vpop.f32.mrb[0].mxu0
    %v9049 = vadd.f32 0.0, %v9048
    %v9050 = vpop.f32.mrb[0].mxu0
    %v9051 = vadd.f32 0.0, %v9050
    %v9052 = vpop.f32.mrb[0].mxu0
    %v9053 = vadd.f32 0.0, %v9052
    %9054 = vmatprep.mubr.bf16.mxu0 0
    %9055 = vmatmul.mubr.bf16.gmra.mrb[0].mxu0 %v7844
    %v9056 = vpop.f32.mrb[0].mxu0
    %v9057 = vadd.f32 0.0, %v9056
    %v9058 = vpop.f32.mrb[0].mxu0
    %v9059 = vadd.f32 0.0, %v9058
    %v9060 = vpop.f32.mrb[0].mxu0
    %v9061 = vadd.f32 0.0, %v9060
    %v9062 = vpop.f32.mrb[0].mxu0
    %v9063 = vadd.f32 0.0, %v9062
    %9064 = vdwg.mxu0
    %9065 = vmatprep.subr.bf16.mxu0 %v7397
    %9066 = vmatpush1.bf16.msra.mxu0 %v7396
    %9067 = vmatprep.subr.bf16.mxu0 %v7446
    %9068 = vmatpush1.bf16.msra.mxu0 %v7445
    %9069 = vmatprep.subr.bf16.mxu0 %v7495
    %9070 = vmatpush1.bf16.msra.mxu0 %v7494
    %9071 = vmatprep.subr.bf16.mxu0 %v7544
    %9072 = vmatpush1.bf16.msra.mxu0 %v7543
    %9073 = vmatprep.subr.bf16.mxu0 %v7593
    %9074 = vmatpush1.bf16.msra.mxu0 %v7592
    %9075 = vmatprep.subr.bf16.mxu0 0
    %9076 = vmatpush1.bf16.msra.mxu0 0
    %9077 = vmatprep.subr.bf16.mxu0 0
    %9078 = vmatpush1.bf16.msra.mxu0 0
    %9079 = vmatprep.subr.bf16.mxu0 0
    %9080 = vmatpush1.bf16.msra.mxu0 0
    %9081 = vmatprep.subr.bf16.mxu0 0
    %9082 = vmatpush1.bf16.msra.mxu0 0
    %9083 = vmatprep.subr.bf16.mxu0 0
    %9084 = vmatpush1.bf16.msra.mxu0 0
    %9085 = vmatprep.subr.bf16.mxu0 0
    %9086 = vmatpush1.bf16.msra.mxu0 0
    %9087 = vmatprep.subr.bf16.mxu0 0
    %9088 = vmatpush1.bf16.msra.mxu0 0
    %9089 = vmatprep.subr.bf16.mxu0 0
    %9090 = vmatpush1.bf16.msra.mxu0 0
    %9091 = vmatprep.subr.bf16.mxu0 0
    %9092 = vmatpush1.bf16.msra.mxu0 0
    %9093 = vmatprep.subr.bf16.mxu0 0
    %9094 = vmatpush1.bf16.msra.mxu0 0
    %9095 = vmatprep.subr.bf16.mxu0 0
    %9096 = vmatpush1.bf16.msra.mxu0 0
    %9097 = vmatprep.mubr.bf16.mxu0 0
    %9098 = vmatmul.mubr.bf16.gmra.mrb[0].mxu0 %v7841
    %v9099 = vpop.f32.mrb[0].mxu0
    %v9100 = vadd.f32 0.0, %v9099
    %v9101 = vpop.f32.mrb[0].mxu0
    %v9102 = vadd.f32 0.0, %v9101
    %v9103 = vpop.f32.mrb[0].mxu0
    %v9104 = vadd.f32 0.0, %v9103
    %v9105 = vpop.f32.mrb[0].mxu0
    %v9106 = vadd.f32 0.0, %v9105
    %9107 = vmatprep.mubr.bf16.mxu0 0
    %9108 = vmatmul.mubr.bf16.gmra.mrb[0].mxu0 %v7844
    %v9109 = vpop.f32.mrb[0].mxu0
    %v9110 = vadd.f32 0.0, %v9109
    %v9111 = vpop.f32.mrb[0].mxu0
    %v9112 = vadd.f32 0.0, %v9111
    %v9113 = vpop.f32.mrb[0].mxu0
    %v9114 = vadd.f32 0.0, %v9113
    %v9115 = vpop.f32.mrb[0].mxu0
    %v9116 = vadd.f32 0.0, %v9115
    %9117 = vdwg.mxu0
    %9118 = vmatprep.subr.bf16.mxu0 0
    %9119 = vmatpush1.bf16.msra.mxu0 %v7398
    %9120 = vmatprep.subr.bf16.mxu0 0
    %9121 = vmatpush1.bf16.msra.mxu0 %v7447
    %9122 = vmatprep.subr.bf16.mxu0 0
    %9123 = vmatpush1.bf16.msra.mxu0 %v7496
    %9124 = vmatprep.subr.bf16.mxu0 0
    %9125 = vmatpush1.bf16.msra.mxu0 %v7545
    %9126 = vmatprep.subr.bf16.mxu0 0
    %9127 = vmatpush1.bf16.msra.mxu0 %v7594
    %9128 = vmatprep.subr.bf16.mxu0 0
    %9129 = vmatpush1.bf16.msra.mxu0 0
    %9130 = vmatprep.subr.bf16.mxu0 0
    %9131 = vmatpush1.bf16.msra.mxu0 0
    %9132 = vmatprep.subr.bf16.mxu0 0
    %9133 = vmatpush1.bf16.msra.mxu0 0
    %9134 = vmatprep.subr.bf16.mxu0 0
    %9135 = vmatpush1.bf16.msra.mxu0 0
    %9136 = vmatprep.subr.bf16.mxu0 0
    %9137 = vmatpush1.bf16.msra.mxu0 0
    %9138 = vmatprep.subr.bf16.mxu0 0
    %9139 = vmatpush1.bf16.msra.mxu0 0
    %9140 = vmatprep.subr.bf16.mxu0 0
    %9141 = vmatpush1.bf16.msra.mxu0 0
    %9142 = vmatprep.subr.bf16.mxu0 0
    %9143 = vmatpush1.bf16.msra.mxu0 0
    %9144 = vmatprep.subr.bf16.mxu0 0
    %9145 = vmatpush1.bf16.msra.mxu0 0
    %9146 = vmatprep.subr.bf16.mxu0 0
    %9147 = vmatpush1.bf16.msra.mxu0 0
    %9148 = vmatprep.subr.bf16.mxu0 0
    %9149 = vmatpush1.bf16.msra.mxu0 0
    %9150 = vmatprep.mubr.bf16.mxu0 0
    %9151 = vmatmul.mubr.bf16.gmra.mrb[0].mxu0 %v7841
    %v9152 = vpop.f32.mrb[0].mxu0
    %v9153 = vadd.f32 0.0, %v9152
    %v9154 = vpop.f32.mrb[0].mxu0
    %v9155 = vpop.f32.mrb[0].mxu0
    %v9156 = vadd.f32 0.0, %v9155
    %v9157 = vpop.f32.mrb[0].mxu0
    %9158 = vmatprep.mubr.bf16.mxu0 0
    %9159 = vmatmul.mubr.bf16.gmra.mrb[0].mxu0 %v7844
    %v9160 = vpop.f32.mrb[0].mxu0
    %v9161 = vadd.f32 0.0, %v9160
    %v9162 = vpop.f32.mrb[0].mxu0
    %v9163 = vpop.f32.mrb[0].mxu0
    %v9164 = vadd.f32 0.0, %v9163
    %v9165 = vpop.f32.mrb[0].mxu0
    %9166 = vdwg.mxu0
    %v9167 = vld [vmem:[%s7 + $0x2] sm:$0x1]
    %v9168 = vlaneseq
    %v9169 = vshrl.u32 %v9168, 7
    %v9170 = vsub.s32 0, %v9169
    %v9171 = vrot.slane %v9167, %v9170
    %v9172 = vld [vmem:[%s1] sm:$0xff]
    %v9173 = vld [vmem:[%s1 + $0x8] sm:$0xff]
    %v9174 = vld [vmem:[%s1 + $0x10] sm:$0x3f]
    %v9175 = vld [vmem:[%s1 + $0x18] sm:$0xff]
    %v9176 = vld [vmem:[%s1 + $0x20] sm:$0xff]
    %v9177 = vld [vmem:[%s1 + $0x28] sm:$0x3f]
    %v9178 = vmul.f32 %v9172, %v7881
    %v9179 = vmul.f32 %v9173, %v7885
    %v9180 = vmul.f32 %v9175, %v7891
    %v9181 = vmul.f32 %v9176, %v7895
    %v9182 = vadd.f32 %v9171, %v9178
    %v9183 = vadd.f32 %v9171, %v9179
    %v9184 = vadd.f32 %v9171, %v9180
    %v9185 = vadd.f32 %v9171, %v9181
    %v9190 = vrot.slane %v8042, 7
    %v9191 = vrot.slane %v8046, 7
    %v9192 = vsel %vm4396, %v9190, %v9191
    %v9193 = vrot.slane %v8052, 7
    %v9194 = vrot.slane %v8056, 7
    %v9195 = vsel %vm4396, %v9193, %v9194
    %v9202 = vmul.f32 %v9172, %v9190
    %v9203 = vmul.f32 %v9173, %v9192
    %v9204 = vmul.f32 %v9174, %v9191
    %v9205 = vmul.f32 %v9175, %v9193
    %v9206 = vmul.f32 %v9176, %v9195
    %v9207 = vmul.f32 %v9177, %v9194
    %v9214 = vrot.slane %v9202, 1
    %v9215 = vrot.slane %v9203, 1
    %v9216 = vsel %vm1753, %v9214, %v9215
    %v9217 = vrot.slane %v9204, 1
    %v9218 = vsel %vm1753, %v9215, %v9217
    %v9219 = vrot.slane %v9205, 1
    %v9220 = vrot.slane %v9206, 1
    %v9221 = vsel %vm1753, %v9219, %v9220
    %v9222 = vrot.slane %v9207, 1
    %v9223 = vsel %vm1753, %v9220, %v9222
    %v9228 = vadd.f32 %v9182, %v9216
    %v9229 = vadd.f32 %v9183, %v9218
    %v9230 = vadd.f32 %v9184, %v9221
    %v9231 = vadd.f32 %v9185, %v9223
    %v9236 = vrot.slane %v8252, 6
    %v9237 = vrot.slane %v8256, 6
    %v9238 = vsel %vm1699, %v9236, %v9237
    %v9239 = vrot.slane %v8262, 6
    %v9240 = vrot.slane %v8266, 6
    %v9241 = vsel %vm1699, %v9239, %v9240
    %v9248 = vmul.f32 %v9172, %v9236
    %v9249 = vmul.f32 %v9173, %v9238
    %v9250 = vmul.f32 %v9174, %v9237
    %v9251 = vmul.f32 %v9175, %v9239
    %v9252 = vmul.f32 %v9176, %v9241
    %v9253 = vmul.f32 %v9177, %v9240
    %v9260 = vrot.slane %v9248, 2
    %v9261 = vrot.slane %v9249, 2
    %v9262 = vsel %vm1805, %v9260, %v9261
    %v9263 = vrot.slane %v9250, 2
    %v9264 = vsel %vm1805, %v9261, %v9263
    %v9265 = vrot.slane %v9251, 2
    %v9266 = vrot.slane %v9252, 2
    %v9267 = vsel %vm1805, %v9265, %v9266
    %v9268 = vrot.slane %v9253, 2
    %v9269 = vsel %vm1805, %v9266, %v9268
    %v9274 = vadd.f32 %v9228, %v9262
    %v9275 = vadd.f32 %v9229, %v9264
    %v9276 = vadd.f32 %v9230, %v9267
    %v9277 = vadd.f32 %v9231, %v9269
    %v9282 = vrot.slane %v8413, 5
    %v9283 = vrot.slane %v8417, 5
    %v9284 = vsel %vm1728, %v9282, %v9283
    %v9285 = vrot.slane %v8423, 5
    %v9286 = vrot.slane %v8427, 5
    %v9287 = vsel %vm1728, %v9285, %v9286
    %v9294 = vmul.f32 %v9172, %v9282
    %v9295 = vmul.f32 %v9173, %v9284
    %v9296 = vmul.f32 %v9174, %v9283
    %v9297 = vmul.f32 %v9175, %v9285
    %v9298 = vmul.f32 %v9176, %v9287
    %v9299 = vmul.f32 %v9177, %v9286
    %v9306 = vrot.slane %v9294, 3
    %v9307 = vrot.slane %v9295, 3
    %v9308 = vsel %vm4549, %v9306, %v9307
    %v9309 = vrot.slane %v9296, 3
    %v9310 = vsel %vm4549, %v9307, %v9309
    %v9311 = vrot.slane %v9297, 3
    %v9312 = vrot.slane %v9298, 3
    %v9313 = vsel %vm4549, %v9311, %v9312
    %v9314 = vrot.slane %v9299, 3
    %v9315 = vsel %vm4549, %v9312, %v9314
    %v9320 = vadd.f32 %v9274, %v9308
    %v9321 = vadd.f32 %v9275, %v9310
    %v9322 = vadd.f32 %v9276, %v9313
    %v9323 = vadd.f32 %v9277, %v9315
    %v9328 = vrot.slane %v8623, 4
    %v9329 = vrot.slane %v8627, 4
    %v9330 = vsel %vm1780, %v9328, %v9329
    %v9331 = vrot.slane %v8633, 4
    %v9332 = vrot.slane %v8637, 4
    %v9333 = vsel %vm1780, %v9331, %v9332
    %v9340 = vmul.f32 %v9172, %v9328
    %v9341 = vmul.f32 %v9173, %v9330
    %v9342 = vmul.f32 %v9174, %v9329
    %v9343 = vmul.f32 %v9175, %v9331
    %v9344 = vmul.f32 %v9176, %v9333
    %v9345 = vmul.f32 %v9177, %v9332
    %v9352 = vrot.slane %v9340, 4
    %v9353 = vrot.slane %v9341, 4
    %v9354 = vsel %vm1780, %v9352, %v9353
    %v9355 = vrot.slane %v9342, 4
    %v9356 = vsel %vm1780, %v9353, %v9355
    %v9357 = vrot.slane %v9343, 4
    %v9358 = vrot.slane %v9344, 4
    %v9359 = vsel %vm1780, %v9357, %v9358
    %v9360 = vrot.slane %v9345, 4
    %v9361 = vsel %vm1780, %v9358, %v9360
    %v9366 = vadd.f32 %v9320, %v9354
    %v9367 = vadd.f32 %v9321, %v9356
    %v9368 = vadd.f32 %v9322, %v9359
    %v9369 = vadd.f32 %v9323, %v9361
    %v9374 = vrot.slane %v8784, 3
    %v9375 = vrot.slane %v8788, 3
    %v9376 = vsel %vm4549, %v9374, %v9375
    %v9377 = vrot.slane %v8794, 3
    %v9378 = vrot.slane %v8798, 3
    %v9379 = vsel %vm4549, %v9377, %v9378
    %v9386 = vmul.f32 %v9172, %v9374
    %v9387 = vmul.f32 %v9173, %v9376
    %v9388 = vmul.f32 %v9174, %v9375
    %v9389 = vmul.f32 %v9175, %v9377
    %v9390 = vmul.f32 %v9176, %v9379
    %v9391 = vmul.f32 %v9177, %v9378
    %v9398 = vrot.slane %v9386, 5
    %v9399 = vrot.slane %v9387, 5
    %v9400 = vsel %vm1728, %v9398, %v9399
    %v9401 = vrot.slane %v9388, 5
    %v9402 = vsel %vm1728, %v9399, %v9401
    %v9403 = vrot.slane %v9389, 5
    %v9404 = vrot.slane %v9390, 5
    %v9405 = vsel %vm1728, %v9403, %v9404
    %v9406 = vrot.slane %v9391, 5
    %v9407 = vsel %vm1728, %v9404, %v9406
    %v9412 = vadd.f32 %v9366, %v9400
    %v9413 = vadd.f32 %v9367, %v9402
    %v9414 = vadd.f32 %v9368, %v9405
    %v9415 = vadd.f32 %v9369, %v9407
    %v9420 = vrot.slane %v8994, 2
    %v9421 = vrot.slane %v8998, 2
    %v9422 = vsel %vm1805, %v9420, %v9421
    %v9423 = vrot.slane %v9004, 2
    %v9424 = vrot.slane %v9008, 2
    %v9425 = vsel %vm1805, %v9423, %v9424
    %v9432 = vmul.f32 %v9172, %v9420
    %v9433 = vmul.f32 %v9173, %v9422
    %v9434 = vmul.f32 %v9174, %v9421
    %v9435 = vmul.f32 %v9175, %v9423
    %v9436 = vmul.f32 %v9176, %v9425
    %v9437 = vmul.f32 %v9177, %v9424
    %v9444 = vrot.slane %v9432, 6
    %v9445 = vrot.slane %v9433, 6
    %v9446 = vsel %vm1699, %v9444, %v9445
    %v9447 = vrot.slane %v9434, 6
    %v9448 = vsel %vm1699, %v9445, %v9447
    %v9449 = vrot.slane %v9435, 6
    %v9450 = vrot.slane %v9436, 6
    %v9451 = vsel %vm1699, %v9449, %v9450
    %v9452 = vrot.slane %v9437, 6
    %v9453 = vsel %vm1699, %v9450, %v9452
    %v9458 = vadd.f32 %v9412, %v9446
    %v9459 = vadd.f32 %v9413, %v9448
    %v9460 = vadd.f32 %v9414, %v9451
    %v9461 = vadd.f32 %v9415, %v9453
    %v9462 = vmul.f32 %v4386, %v7883
    %v9463 = vmul.f32 %v4387, %v7887
    %v9464 = vmul.f32 %v4389, %v7893
    %v9465 = vmul.f32 %v4390, %v7897
    %v9466 = vadd.f32 %v9458, %v9462
    %v9467 = vadd.f32 %v9459, %v9463
    %v9468 = vadd.f32 %v9460, %v9464
    %v9469 = vadd.f32 %v9461, %v9465
    %v9474 = vrot.slane %v8093, 7
    %v9475 = vrot.slane %v8097, 7
    %v9476 = vsel %vm4396, %v9474, %v9475
    %v9477 = vrot.slane %v8103, 7
    %v9478 = vrot.slane %v8107, 7
    %v9479 = vsel %vm4396, %v9477, %v9478
    %v9486 = vmul.f32 %v4386, %v9474
    %v9487 = vmul.f32 %v4387, %v9476
    %v9488 = vmul.f32 %v4388, %v9475
    %v9489 = vmul.f32 %v4389, %v9477
    %v9490 = vmul.f32 %v4390, %v9479
    %v9491 = vmul.f32 %v4391, %v9478
    %v9498 = vrot.slane %v9486, 1
    %v9499 = vrot.slane %v9487, 1
    %v9500 = vsel %vm1753, %v9498, %v9499
    %v9501 = vrot.slane %v9488, 1
    %v9502 = vsel %vm1753, %v9499, %v9501
    %v9503 = vrot.slane %v9489, 1
    %v9504 = vrot.slane %v9490, 1
    %v9505 = vsel %vm1753, %v9503, %v9504
    %v9506 = vrot.slane %v9491, 1
    %v9507 = vsel %vm1753, %v9504, %v9506
    %v9512 = vadd.f32 %v9466, %v9500
    %v9513 = vadd.f32 %v9467, %v9502
    %v9514 = vadd.f32 %v9468, %v9505
    %v9515 = vadd.f32 %v9469, %v9507
    %v9520 = vrot.slane %v8254, 6
    %v9521 = vrot.slane %v8258, 6
    %v9522 = vsel %vm1699, %v9520, %v9521
    %v9523 = vrot.slane %v8264, 6
    %v9524 = vrot.slane %v8268, 6
    %v9525 = vsel %vm1699, %v9523, %v9524
    %v9532 = vmul.f32 %v4386, %v9520
    %v9533 = vmul.f32 %v4387, %v9522
    %v9534 = vmul.f32 %v4388, %v9521
    %v9535 = vmul.f32 %v4389, %v9523
    %v9536 = vmul.f32 %v4390, %v9525
    %v9537 = vmul.f32 %v4391, %v9524
    %v9544 = vrot.slane %v9532, 2
    %v9545 = vrot.slane %v9533, 2
    %v9546 = vsel %vm1805, %v9544, %v9545
    %v9547 = vrot.slane %v9534, 2
    %v9548 = vsel %vm1805, %v9545, %v9547
    %v9549 = vrot.slane %v9535, 2
    %v9550 = vrot.slane %v9536, 2
    %v9551 = vsel %vm1805, %v9549, %v9550
    %v9552 = vrot.slane %v9537, 2
    %v9553 = vsel %vm1805, %v9550, %v9552
    %v9558 = vadd.f32 %v9512, %v9546
    %v9559 = vadd.f32 %v9513, %v9548
    %v9560 = vadd.f32 %v9514, %v9551
    %v9561 = vadd.f32 %v9515, %v9553
    %v9566 = vrot.slane %v8464, 5
    %v9567 = vrot.slane %v8468, 5
    %v9568 = vsel %vm1728, %v9566, %v9567
    %v9569 = vrot.slane %v8474, 5
    %v9570 = vrot.slane %v8478, 5
    %v9571 = vsel %vm1728, %v9569, %v9570
    %v9578 = vmul.f32 %v4386, %v9566
    %v9579 = vmul.f32 %v4387, %v9568
    %v9580 = vmul.f32 %v4388, %v9567
    %v9581 = vmul.f32 %v4389, %v9569
    %v9582 = vmul.f32 %v4390, %v9571
    %v9583 = vmul.f32 %v4391, %v9570
    %v9590 = vrot.slane %v9578, 3
    %v9591 = vrot.slane %v9579, 3
    %v9592 = vsel %vm4549, %v9590, %v9591
    %v9593 = vrot.slane %v9580, 3
    %v9594 = vsel %vm4549, %v9591, %v9593
    %v9595 = vrot.slane %v9581, 3
    %v9596 = vrot.slane %v9582, 3
    %v9597 = vsel %vm4549, %v9595, %v9596
    %v9598 = vrot.slane %v9583, 3
    %v9599 = vsel %vm4549, %v9596, %v9598
    %v9604 = vadd.f32 %v9558, %v9592
    %v9605 = vadd.f32 %v9559, %v9594
    %v9606 = vadd.f32 %v9560, %v9597
    %v9607 = vadd.f32 %v9561, %v9599
    %v9612 = vrot.slane %v8625, 4
    %v9613 = vrot.slane %v8629, 4
    %v9614 = vsel %vm1780, %v9612, %v9613
    %v9615 = vrot.slane %v8635, 4
    %v9616 = vrot.slane %v8639, 4
    %v9617 = vsel %vm1780, %v9615, %v9616
    %v9624 = vmul.f32 %v4386, %v9612
    %v9625 = vmul.f32 %v4387, %v9614
    %v9626 = vmul.f32 %v4388, %v9613
    %v9627 = vmul.f32 %v4389, %v9615
    %v9628 = vmul.f32 %v4390, %v9617
    %v9629 = vmul.f32 %v4391, %v9616
    %v9636 = vrot.slane %v9624, 4
    %v9637 = vrot.slane %v9625, 4
    %v9638 = vsel %vm1780, %v9636, %v9637
    %v9639 = vrot.slane %v9626, 4
    %v9640 = vsel %vm1780, %v9637, %v9639
    %v9641 = vrot.slane %v9627, 4
    %v9642 = vrot.slane %v9628, 4
    %v9643 = vsel %vm1780, %v9641, %v9642
    %v9644 = vrot.slane %v9629, 4
    %v9645 = vsel %vm1780, %v9642, %v9644
    %v9650 = vadd.f32 %v9604, %v9638
    %v9651 = vadd.f32 %v9605, %v9640
    %v9652 = vadd.f32 %v9606, %v9643
    %v9653 = vadd.f32 %v9607, %v9645
    %v9658 = vrot.slane %v8835, 3
    %v9659 = vrot.slane %v8839, 3
    %v9660 = vsel %vm4549, %v9658, %v9659
    %v9661 = vrot.slane %v8845, 3
    %v9662 = vrot.slane %v8849, 3
    %v9663 = vsel %vm4549, %v9661, %v9662
    %v9670 = vmul.f32 %v4386, %v9658
    %v9671 = vmul.f32 %v4387, %v9660
    %v9672 = vmul.f32 %v4388, %v9659
    %v9673 = vmul.f32 %v4389, %v9661
    %v9674 = vmul.f32 %v4390, %v9663
    %v9675 = vmul.f32 %v4391, %v9662
    %v9682 = vrot.slane %v9670, 5
    %v9683 = vrot.slane %v9671, 5
    %v9684 = vsel %vm1728, %v9682, %v9683
    %v9685 = vrot.slane %v9672, 5
    %v9686 = vsel %vm1728, %v9683, %v9685
    %v9687 = vrot.slane %v9673, 5
    %v9688 = vrot.slane %v9674, 5
    %v9689 = vsel %vm1728, %v9687, %v9688
    %v9690 = vrot.slane %v9675, 5
    %v9691 = vsel %vm1728, %v9688, %v9690
    %v9696 = vadd.f32 %v9650, %v9684
    %v9697 = vadd.f32 %v9651, %v9686
    %v9698 = vadd.f32 %v9652, %v9689
    %v9699 = vadd.f32 %v9653, %v9691
    %v9704 = vrot.slane %v8996, 2
    %v9705 = vrot.slane %v9000, 2
    %v9706 = vsel %vm1805, %v9704, %v9705
    %v9707 = vrot.slane %v9006, 2
    %v9708 = vrot.slane %v9010, 2
    %v9709 = vsel %vm1805, %v9707, %v9708
    %v9716 = vmul.f32 %v4386, %v9704
    %v9717 = vmul.f32 %v4387, %v9706
    %v9718 = vmul.f32 %v4388, %v9705
    %v9719 = vmul.f32 %v4389, %v9707
    %v9720 = vmul.f32 %v4390, %v9709
    %v9721 = vmul.f32 %v4391, %v9708
    %v9728 = vrot.slane %v9716, 6
    %v9729 = vrot.slane %v9717, 6
    %v9730 = vsel %vm1699, %v9728, %v9729
    %v9731 = vrot.slane %v9718, 6
    %v9732 = vsel %vm1699, %v9729, %v9731
    %v9733 = vrot.slane %v9719, 6
    %v9734 = vrot.slane %v9720, 6
    %v9735 = vsel %vm1699, %v9733, %v9734
    %v9736 = vrot.slane %v9721, 6
    %v9737 = vsel %vm1699, %v9734, %v9736
    %v9742 = vadd.f32 %v9696, %v9730
    %v9743 = vadd.f32 %v9697, %v9732
    %v9744 = vadd.f32 %v9698, %v9735
    %v9745 = vadd.f32 %v9699, %v9737
    %v9746 = vmul.f32 %v1689, %v7934
    %v9747 = vmul.f32 %v1690, %v7938
    %v9748 = vmul.f32 %v1692, %v7944
    %v9749 = vmul.f32 %v1693, %v7948
    %v9750 = vadd.f32 %v9742, %v9746
    %v9751 = vadd.f32 %v9743, %v9747
    %v9752 = vadd.f32 %v9744, %v9748
    %v9753 = vadd.f32 %v9745, %v9749
    %v9758 = vrot.slane %v8095, 7
    %v9759 = vrot.slane %v8099, 7
    %v9760 = vsel %vm4396, %v9758, %v9759
    %v9761 = vrot.slane %v8105, 7
    %v9762 = vrot.slane %v8109, 7
    %v9763 = vsel %vm4396, %v9761, %v9762
    %v9770 = vmul.f32 %v1689, %v9758
    %v9771 = vmul.f32 %v1690, %v9760
    %v9772 = vmul.f32 %v1691, %v9759
    %v9773 = vmul.f32 %v1692, %v9761
    %v9774 = vmul.f32 %v1693, %v9763
    %v9775 = vmul.f32 %v1694, %v9762
    %v9782 = vrot.slane %v9770, 1
    %v9783 = vrot.slane %v9771, 1
    %v9784 = vsel %vm1753, %v9782, %v9783
    %v9785 = vrot.slane %v9772, 1
    %v9786 = vsel %vm1753, %v9783, %v9785
    %v9787 = vrot.slane %v9773, 1
    %v9788 = vrot.slane %v9774, 1
    %v9789 = vsel %vm1753, %v9787, %v9788
    %v9790 = vrot.slane %v9775, 1
    %v9791 = vsel %vm1753, %v9788, %v9790
    %v9796 = vadd.f32 %v9750, %v9784
    %v9797 = vadd.f32 %v9751, %v9786
    %v9798 = vadd.f32 %v9752, %v9789
    %v9799 = vadd.f32 %v9753, %v9791
    %v9804 = vrot.slane %v8305, 6
    %v9805 = vrot.slane %v8309, 6
    %v9806 = vsel %vm1699, %v9804, %v9805
    %v9807 = vrot.slane %v8315, 6
    %v9808 = vrot.slane %v8319, 6
    %v9809 = vsel %vm1699, %v9807, %v9808
    %v9816 = vmul.f32 %v1689, %v9804
    %v9817 = vmul.f32 %v1690, %v9806
    %v9818 = vmul.f32 %v1691, %v9805
    %v9819 = vmul.f32 %v1692, %v9807
    %v9820 = vmul.f32 %v1693, %v9809
    %v9821 = vmul.f32 %v1694, %v9808
    %v9828 = vrot.slane %v9816, 2
    %v9829 = vrot.slane %v9817, 2
    %v9830 = vsel %vm1805, %v9828, %v9829
    %v9831 = vrot.slane %v9818, 2
    %v9832 = vsel %vm1805, %v9829, %v9831
    %v9833 = vrot.slane %v9819, 2
    %v9834 = vrot.slane %v9820, 2
    %v9835 = vsel %vm1805, %v9833, %v9834
    %v9836 = vrot.slane %v9821, 2
    %v9837 = vsel %vm1805, %v9834, %v9836
    %v9842 = vadd.f32 %v9796, %v9830
    %v9843 = vadd.f32 %v9797, %v9832
    %v9844 = vadd.f32 %v9798, %v9835
    %v9845 = vadd.f32 %v9799, %v9837
    %v9850 = vrot.slane %v8466, 5
    %v9851 = vrot.slane %v8470, 5
    %v9852 = vsel %vm1728, %v9850, %v9851
    %v9853 = vrot.slane %v8476, 5
    %v9854 = vrot.slane %v8480, 5
    %v9855 = vsel %vm1728, %v9853, %v9854
    %v9862 = vmul.f32 %v1689, %v9850
    %v9863 = vmul.f32 %v1690, %v9852
    %v9864 = vmul.f32 %v1691, %v9851
    %v9865 = vmul.f32 %v1692, %v9853
    %v9866 = vmul.f32 %v1693, %v9855
    %v9867 = vmul.f32 %v1694, %v9854
    %v9874 = vrot.slane %v9862, 3
    %v9875 = vrot.slane %v9863, 3
    %v9876 = vsel %vm4549, %v9874, %v9875
    %v9877 = vrot.slane %v9864, 3
    %v9878 = vsel %vm4549, %v9875, %v9877
    %v9879 = vrot.slane %v9865, 3
    %v9880 = vrot.slane %v9866, 3
    %v9881 = vsel %vm4549, %v9879, %v9880
    %v9882 = vrot.slane %v9867, 3
    %v9883 = vsel %vm4549, %v9880, %v9882
    %v9888 = vadd.f32 %v9842, %v9876
    %v9889 = vadd.f32 %v9843, %v9878
    %v9890 = vadd.f32 %v9844, %v9881
    %v9891 = vadd.f32 %v9845, %v9883
    %v9896 = vrot.slane %v8676, 4
    %v9897 = vrot.slane %v8680, 4
    %v9898 = vsel %vm1780, %v9896, %v9897
    %v9899 = vrot.slane %v8686, 4
    %v9900 = vrot.slane %v8690, 4
    %v9901 = vsel %vm1780, %v9899, %v9900
    %v9908 = vmul.f32 %v1689, %v9896
    %v9909 = vmul.f32 %v1690, %v9898
    %v9910 = vmul.f32 %v1691, %v9897
    %v9911 = vmul.f32 %v1692, %v9899
    %v9912 = vmul.f32 %v1693, %v9901
    %v9913 = vmul.f32 %v1694, %v9900
    %v9920 = vrot.slane %v9908, 4
    %v9921 = vrot.slane %v9909, 4
    %v9922 = vsel %vm1780, %v9920, %v9921
    %v9923 = vrot.slane %v9910, 4
    %v9924 = vsel %vm1780, %v9921, %v9923
    %v9925 = vrot.slane %v9911, 4
    %v9926 = vrot.slane %v9912, 4
    %v9927 = vsel %vm1780, %v9925, %v9926
    %v9928 = vrot.slane %v9913, 4
    %v9929 = vsel %vm1780, %v9926, %v9928
    %v9934 = vadd.f32 %v9888, %v9922
    %v9935 = vadd.f32 %v9889, %v9924
    %v9936 = vadd.f32 %v9890, %v9927
    %v9937 = vadd.f32 %v9891, %v9929
    %v9942 = vrot.slane %v8837, 3
    %v9943 = vrot.slane %v8841, 3
    %v9944 = vsel %vm4549, %v9942, %v9943
    %v9945 = vrot.slane %v8847, 3
    %v9946 = vrot.slane %v8851, 3
    %v9947 = vsel %vm4549, %v9945, %v9946
    %v9954 = vmul.f32 %v1689, %v9942
    %v9955 = vmul.f32 %v1690, %v9944
    %v9956 = vmul.f32 %v1691, %v9943
    %v9957 = vmul.f32 %v1692, %v9945
    %v9958 = vmul.f32 %v1693, %v9947
    %v9959 = vmul.f32 %v1694, %v9946
    %v9966 = vrot.slane %v9954, 5
    %v9967 = vrot.slane %v9955, 5
    %v9968 = vsel %vm1728, %v9966, %v9967
    %v9969 = vrot.slane %v9956, 5
    %v9970 = vsel %vm1728, %v9967, %v9969
    %v9971 = vrot.slane %v9957, 5
    %v9972 = vrot.slane %v9958, 5
    %v9973 = vsel %vm1728, %v9971, %v9972
    %v9974 = vrot.slane %v9959, 5
    %v9975 = vsel %vm1728, %v9972, %v9974
    %v9980 = vadd.f32 %v9934, %v9968
    %v9981 = vadd.f32 %v9935, %v9970
    %v9982 = vadd.f32 %v9936, %v9973
    %v9983 = vadd.f32 %v9937, %v9975
    %v9988 = vrot.slane %v9047, 2
    %v9989 = vrot.slane %v9051, 2
    %v9990 = vsel %vm1805, %v9988, %v9989
    %v9991 = vrot.slane %v9057, 2
    %v9992 = vrot.slane %v9061, 2
    %v9993 = vsel %vm1805, %v9991, %v9992
    %v10000 = vmul.f32 %v1689, %v9988
    %v10001 = vmul.f32 %v1690, %v9990
    %v10002 = vmul.f32 %v1691, %v9989
    %v10003 = vmul.f32 %v1692, %v9991
    %v10004 = vmul.f32 %v1693, %v9993
    %v10005 = vmul.f32 %v1694, %v9992
    %v10012 = vrot.slane %v10000, 6
    %v10013 = vrot.slane %v10001, 6
    %v10014 = vsel %vm1699, %v10012, %v10013
    %v10015 = vrot.slane %v10002, 6
    %v10016 = vsel %vm1699, %v10013, %v10015
    %v10017 = vrot.slane %v10003, 6
    %v10018 = vrot.slane %v10004, 6
    %v10019 = vsel %vm1699, %v10017, %v10018
    %v10020 = vrot.slane %v10005, 6
    %v10021 = vsel %vm1699, %v10018, %v10020
    %v10026 = vadd.f32 %v9980, %v10014
    %v10027 = vadd.f32 %v9981, %v10016
    %v10028 = vadd.f32 %v9982, %v10019
    %v10029 = vadd.f32 %v9983, %v10021
    %v10030 = vmul.f32 %v1829, %v7936
    %v10031 = vmul.f32 %v1830, %v7940
    %v10032 = vmul.f32 %v1832, %v7946
    %v10033 = vmul.f32 %v1833, %v7950
    %v10034 = vadd.f32 %v10026, %v10030
    %v10035 = vadd.f32 %v10027, %v10031
    %v10036 = vadd.f32 %v10028, %v10032
    %v10037 = vadd.f32 %v10029, %v10033
    %v10042 = vrot.slane %v8146, 7
    %v10043 = vrot.slane %v8150, 7
    %v10044 = vsel %vm4396, %v10042, %v10043
    %v10045 = vrot.slane %v8156, 7
    %v10046 = vrot.slane %v8160, 7
    %v10047 = vsel %vm4396, %v10045, %v10046
    %v10054 = vmul.f32 %v1829, %v10042
    %v10055 = vmul.f32 %v1830, %v10044
    %v10056 = vmul.f32 %v1831, %v10043
    %v10057 = vmul.f32 %v1832, %v10045
    %v10058 = vmul.f32 %v1833, %v10047
    %v10059 = vmul.f32 %v1834, %v10046
    %v10066 = vrot.slane %v10054, 1
    %v10067 = vrot.slane %v10055, 1
    %v10068 = vsel %vm1753, %v10066, %v10067
    %v10069 = vrot.slane %v10056, 1
    %v10070 = vsel %vm1753, %v10067, %v10069
    %v10071 = vrot.slane %v10057, 1
    %v10072 = vrot.slane %v10058, 1
    %v10073 = vsel %vm1753, %v10071, %v10072
    %v10074 = vrot.slane %v10059, 1
    %v10075 = vsel %vm1753, %v10072, %v10074
    %v10080 = vadd.f32 %v10034, %v10068
    %v10081 = vadd.f32 %v10035, %v10070
    %v10082 = vadd.f32 %v10036, %v10073
    %v10083 = vadd.f32 %v10037, %v10075
    %v10088 = vrot.slane %v8307, 6
    %v10089 = vrot.slane %v8311, 6
    %v10090 = vsel %vm1699, %v10088, %v10089
    %v10091 = vrot.slane %v8317, 6
    %v10092 = vrot.slane %v8321, 6
    %v10093 = vsel %vm1699, %v10091, %v10092
    %v10100 = vmul.f32 %v1829, %v10088
    %v10101 = vmul.f32 %v1830, %v10090
    %v10102 = vmul.f32 %v1831, %v10089
    %v10103 = vmul.f32 %v1832, %v10091
    %v10104 = vmul.f32 %v1833, %v10093
    %v10105 = vmul.f32 %v1834, %v10092
    %v10112 = vrot.slane %v10100, 2
    %v10113 = vrot.slane %v10101, 2
    %v10114 = vsel %vm1805, %v10112, %v10113
    %v10115 = vrot.slane %v10102, 2
    %v10116 = vsel %vm1805, %v10113, %v10115
    %v10117 = vrot.slane %v10103, 2
    %v10118 = vrot.slane %v10104, 2
    %v10119 = vsel %vm1805, %v10117, %v10118
    %v10120 = vrot.slane %v10105, 2
    %v10121 = vsel %vm1805, %v10118, %v10120
    %v10126 = vadd.f32 %v10080, %v10114
    %v10127 = vadd.f32 %v10081, %v10116
    %v10128 = vadd.f32 %v10082, %v10119
    %v10129 = vadd.f32 %v10083, %v10121
    %v10134 = vrot.slane %v8517, 5
    %v10135 = vrot.slane %v8521, 5
    %v10136 = vsel %vm1728, %v10134, %v10135
    %v10137 = vrot.slane %v8527, 5
    %v10138 = vrot.slane %v8531, 5
    %v10139 = vsel %vm1728, %v10137, %v10138
    %v10146 = vmul.f32 %v1829, %v10134
    %v10147 = vmul.f32 %v1830, %v10136
    %v10148 = vmul.f32 %v1831, %v10135
    %v10149 = vmul.f32 %v1832, %v10137
    %v10150 = vmul.f32 %v1833, %v10139
    %v10151 = vmul.f32 %v1834, %v10138
    %v10158 = vrot.slane %v10146, 3
    %v10159 = vrot.slane %v10147, 3
    %v10160 = vsel %vm4549, %v10158, %v10159
    %v10161 = vrot.slane %v10148, 3
    %v10162 = vsel %vm4549, %v10159, %v10161
    %v10163 = vrot.slane %v10149, 3
    %v10164 = vrot.slane %v10150, 3
    %v10165 = vsel %vm4549, %v10163, %v10164
    %v10166 = vrot.slane %v10151, 3
    %v10167 = vsel %vm4549, %v10164, %v10166
    %v10172 = vadd.f32 %v10126, %v10160
    %v10173 = vadd.f32 %v10127, %v10162
    %v10174 = vadd.f32 %v10128, %v10165
    %v10175 = vadd.f32 %v10129, %v10167
    %v10180 = vrot.slane %v8678, 4
    %v10181 = vrot.slane %v8682, 4
    %v10182 = vsel %vm1780, %v10180, %v10181
    %v10183 = vrot.slane %v8688, 4
    %v10184 = vrot.slane %v8692, 4
    %v10185 = vsel %vm1780, %v10183, %v10184
    %v10192 = vmul.f32 %v1829, %v10180
    %v10193 = vmul.f32 %v1830, %v10182
    %v10194 = vmul.f32 %v1831, %v10181
    %v10195 = vmul.f32 %v1832, %v10183
    %v10196 = vmul.f32 %v1833, %v10185
    %v10197 = vmul.f32 %v1834, %v10184
    %v10204 = vrot.slane %v10192, 4
    %v10205 = vrot.slane %v10193, 4
    %v10206 = vsel %vm1780, %v10204, %v10205
    %v10207 = vrot.slane %v10194, 4
    %v10208 = vsel %vm1780, %v10205, %v10207
    %v10209 = vrot.slane %v10195, 4
    %v10210 = vrot.slane %v10196, 4
    %v10211 = vsel %vm1780, %v10209, %v10210
    %v10212 = vrot.slane %v10197, 4
    %v10213 = vsel %vm1780, %v10210, %v10212
    %v10218 = vadd.f32 %v10172, %v10206
    %v10219 = vadd.f32 %v10173, %v10208
    %v10220 = vadd.f32 %v10174, %v10211
    %v10221 = vadd.f32 %v10175, %v10213
    %v10226 = vrot.slane %v8888, 3
    %v10227 = vrot.slane %v8892, 3
    %v10228 = vsel %vm4549, %v10226, %v10227
    %v10229 = vrot.slane %v8898, 3
    %v10230 = vrot.slane %v8902, 3
    %v10231 = vsel %vm4549, %v10229, %v10230
    %v10238 = vmul.f32 %v1829, %v10226
    %v10239 = vmul.f32 %v1830, %v10228
    %v10240 = vmul.f32 %v1831, %v10227
    %v10241 = vmul.f32 %v1832, %v10229
    %v10242 = vmul.f32 %v1833, %v10231
    %v10243 = vmul.f32 %v1834, %v10230
    %v10250 = vrot.slane %v10238, 5
    %v10251 = vrot.slane %v10239, 5
    %v10252 = vsel %vm1728, %v10250, %v10251
    %v10253 = vrot.slane %v10240, 5
    %v10254 = vsel %vm1728, %v10251, %v10253
    %v10255 = vrot.slane %v10241, 5
    %v10256 = vrot.slane %v10242, 5
    %v10257 = vsel %vm1728, %v10255, %v10256
    %v10258 = vrot.slane %v10243, 5
    %v10259 = vsel %vm1728, %v10256, %v10258
    %v10264 = vadd.f32 %v10218, %v10252
    %v10265 = vadd.f32 %v10219, %v10254
    %v10266 = vadd.f32 %v10220, %v10257
    %v10267 = vadd.f32 %v10221, %v10259
    %v10272 = vrot.slane %v9049, 2
    %v10273 = vrot.slane %v9053, 2
    %v10274 = vsel %vm1805, %v10272, %v10273
    %v10275 = vrot.slane %v9059, 2
    %v10276 = vrot.slane %v9063, 2
    %v10277 = vsel %vm1805, %v10275, %v10276
    %v10284 = vmul.f32 %v1829, %v10272
    %v10285 = vmul.f32 %v1830, %v10274
    %v10286 = vmul.f32 %v1831, %v10273
    %v10287 = vmul.f32 %v1832, %v10275
    %v10288 = vmul.f32 %v1833, %v10277
    %v10289 = vmul.f32 %v1834, %v10276
    %v10296 = vrot.slane %v10284, 6
    %v10297 = vrot.slane %v10285, 6
    %v10298 = vsel %vm1699, %v10296, %v10297
    %v10299 = vrot.slane %v10286, 6
    %v10300 = vsel %vm1699, %v10297, %v10299
    %v10301 = vrot.slane %v10287, 6
    %v10302 = vrot.slane %v10288, 6
    %v10303 = vsel %vm1699, %v10301, %v10302
    %v10304 = vrot.slane %v10289, 6
    %v10305 = vsel %vm1699, %v10302, %v10304
    %v10310 = vadd.f32 %v10264, %v10298
    %v10311 = vadd.f32 %v10265, %v10300
    %v10312 = vadd.f32 %v10266, %v10303
    %v10313 = vadd.f32 %v10267, %v10305
    %v10314 = vmul.f32 %v1964, %v7987
    %v10315 = vmul.f32 %v1965, %v7991
    %v10316 = vmul.f32 %v1967, %v7997
    %v10317 = vmul.f32 %v1968, %v8001
    %v10318 = vadd.f32 %v10310, %v10314
    %v10319 = vadd.f32 %v10311, %v10315
    %v10320 = vadd.f32 %v10312, %v10316
    %v10321 = vadd.f32 %v10313, %v10317
    %v10326 = vrot.slane %v8148, 7
    %v10327 = vrot.slane %v8152, 7
    %v10328 = vsel %vm4396, %v10326, %v10327
    %v10329 = vrot.slane %v8158, 7
    %v10330 = vrot.slane %v8162, 7
    %v10331 = vsel %vm4396, %v10329, %v10330
    %v10338 = vmul.f32 %v1964, %v10326
    %v10339 = vmul.f32 %v1965, %v10328
    %v10340 = vmul.f32 %v1966, %v10327
    %v10341 = vmul.f32 %v1967, %v10329
    %v10342 = vmul.f32 %v1968, %v10331
    %v10343 = vmul.f32 %v1969, %v10330
    %v10350 = vrot.slane %v10338, 1
    %v10351 = vrot.slane %v10339, 1
    %v10352 = vsel %vm1753, %v10350, %v10351
    %v10353 = vrot.slane %v10340, 1
    %v10354 = vsel %vm1753, %v10351, %v10353
    %v10355 = vrot.slane %v10341, 1
    %v10356 = vrot.slane %v10342, 1
    %v10357 = vsel %vm1753, %v10355, %v10356
    %v10358 = vrot.slane %v10343, 1
    %v10359 = vsel %vm1753, %v10356, %v10358
    %v10364 = vadd.f32 %v10318, %v10352
    %v10365 = vadd.f32 %v10319, %v10354
    %v10366 = vadd.f32 %v10320, %v10357
    %v10367 = vadd.f32 %v10321, %v10359
    %v10372 = vrot.slane %v8358, 6
    %v10373 = vrot.slane %v8362, 6
    %v10374 = vsel %vm1699, %v10372, %v10373
    %v10375 = vrot.slane %v8368, 6
    %v10376 = vrot.slane %v8372, 6
    %v10377 = vsel %vm1699, %v10375, %v10376
    %v10384 = vmul.f32 %v1964, %v10372
    %v10385 = vmul.f32 %v1965, %v10374
    %v10386 = vmul.f32 %v1966, %v10373
    %v10387 = vmul.f32 %v1967, %v10375
    %v10388 = vmul.f32 %v1968, %v10377
    %v10389 = vmul.f32 %v1969, %v10376
    %v10396 = vrot.slane %v10384, 2
    %v10397 = vrot.slane %v10385, 2
    %v10398 = vsel %vm1805, %v10396, %v10397
    %v10399 = vrot.slane %v10386, 2
    %v10400 = vsel %vm1805, %v10397, %v10399
    %v10401 = vrot.slane %v10387, 2
    %v10402 = vrot.slane %v10388, 2
    %v10403 = vsel %vm1805, %v10401, %v10402
    %v10404 = vrot.slane %v10389, 2
    %v10405 = vsel %vm1805, %v10402, %v10404
    %v10410 = vadd.f32 %v10364, %v10398
    %v10411 = vadd.f32 %v10365, %v10400
    %v10412 = vadd.f32 %v10366, %v10403
    %v10413 = vadd.f32 %v10367, %v10405
    %v10418 = vrot.slane %v8519, 5
    %v10419 = vrot.slane %v8523, 5
    %v10420 = vsel %vm1728, %v10418, %v10419
    %v10421 = vrot.slane %v8529, 5
    %v10422 = vrot.slane %v8533, 5
    %v10423 = vsel %vm1728, %v10421, %v10422
    %v10430 = vmul.f32 %v1964, %v10418
    %v10431 = vmul.f32 %v1965, %v10420
    %v10432 = vmul.f32 %v1966, %v10419
    %v10433 = vmul.f32 %v1967, %v10421
    %v10434 = vmul.f32 %v1968, %v10423
    %v10435 = vmul.f32 %v1969, %v10422
    %v10442 = vrot.slane %v10430, 3
    %v10443 = vrot.slane %v10431, 3
    %v10444 = vsel %vm4549, %v10442, %v10443
    %v10445 = vrot.slane %v10432, 3
    %v10446 = vsel %vm4549, %v10443, %v10445
    %v10447 = vrot.slane %v10433, 3
    %v10448 = vrot.slane %v10434, 3
    %v10449 = vsel %vm4549, %v10447, %v10448
    %v10450 = vrot.slane %v10435, 3
    %v10451 = vsel %vm4549, %v10448, %v10450
    %v10456 = vadd.f32 %v10410, %v10444
    %v10457 = vadd.f32 %v10411, %v10446
    %v10458 = vadd.f32 %v10412, %v10449
    %v10459 = vadd.f32 %v10413, %v10451
    %v10464 = vrot.slane %v8729, 4
    %v10465 = vrot.slane %v8733, 4
    %v10466 = vsel %vm1780, %v10464, %v10465
    %v10467 = vrot.slane %v8739, 4
    %v10468 = vrot.slane %v8743, 4
    %v10469 = vsel %vm1780, %v10467, %v10468
    %v10476 = vmul.f32 %v1964, %v10464
    %v10477 = vmul.f32 %v1965, %v10466
    %v10478 = vmul.f32 %v1966, %v10465
    %v10479 = vmul.f32 %v1967, %v10467
    %v10480 = vmul.f32 %v1968, %v10469
    %v10481 = vmul.f32 %v1969, %v10468
    %v10488 = vrot.slane %v10476, 4
    %v10489 = vrot.slane %v10477, 4
    %v10490 = vsel %vm1780, %v10488, %v10489
    %v10491 = vrot.slane %v10478, 4
    %v10492 = vsel %vm1780, %v10489, %v10491
    %v10493 = vrot.slane %v10479, 4
    %v10494 = vrot.slane %v10480, 4
    %v10495 = vsel %vm1780, %v10493, %v10494
    %v10496 = vrot.slane %v10481, 4
    %v10497 = vsel %vm1780, %v10494, %v10496
    %v10502 = vadd.f32 %v10456, %v10490
    %v10503 = vadd.f32 %v10457, %v10492
    %v10504 = vadd.f32 %v10458, %v10495
    %v10505 = vadd.f32 %v10459, %v10497
    %v10510 = vrot.slane %v8890, 3
    %v10511 = vrot.slane %v8894, 3
    %v10512 = vsel %vm4549, %v10510, %v10511
    %v10513 = vrot.slane %v8900, 3
    %v10514 = vrot.slane %v8904, 3
    %v10515 = vsel %vm4549, %v10513, %v10514
    %v10522 = vmul.f32 %v1964, %v10510
    %v10523 = vmul.f32 %v1965, %v10512
    %v10524 = vmul.f32 %v1966, %v10511
    %v10525 = vmul.f32 %v1967, %v10513
    %v10526 = vmul.f32 %v1968, %v10515
    %v10527 = vmul.f32 %v1969, %v10514
    %v10534 = vrot.slane %v10522, 5
    %v10535 = vrot.slane %v10523, 5
    %v10536 = vsel %vm1728, %v10534, %v10535
    %v10537 = vrot.slane %v10524, 5
    %v10538 = vsel %vm1728, %v10535, %v10537
    %v10539 = vrot.slane %v10525, 5
    %v10540 = vrot.slane %v10526, 5
    %v10541 = vsel %vm1728, %v10539, %v10540
    %v10542 = vrot.slane %v10527, 5
    %v10543 = vsel %vm1728, %v10540, %v10542
    %v10548 = vadd.f32 %v10502, %v10536
    %v10549 = vadd.f32 %v10503, %v10538
    %v10550 = vadd.f32 %v10504, %v10541
    %v10551 = vadd.f32 %v10505, %v10543
    %v10556 = vrot.slane %v9100, 2
    %v10557 = vrot.slane %v9104, 2
    %v10558 = vsel %vm1805, %v10556, %v10557
    %v10559 = vrot.slane %v9110, 2
    %v10560 = vrot.slane %v9114, 2
    %v10561 = vsel %vm1805, %v10559, %v10560
    %v10568 = vmul.f32 %v1964, %v10556
    %v10569 = vmul.f32 %v1965, %v10558
    %v10570 = vmul.f32 %v1966, %v10557
    %v10571 = vmul.f32 %v1967, %v10559
    %v10572 = vmul.f32 %v1968, %v10561
    %v10573 = vmul.f32 %v1969, %v10560
    %v10580 = vrot.slane %v10568, 6
    %v10581 = vrot.slane %v10569, 6
    %v10582 = vsel %vm1699, %v10580, %v10581
    %v10583 = vrot.slane %v10570, 6
    %v10584 = vsel %vm1699, %v10581, %v10583
    %v10585 = vrot.slane %v10571, 6
    %v10586 = vrot.slane %v10572, 6
    %v10587 = vsel %vm1699, %v10585, %v10586
    %v10588 = vrot.slane %v10573, 6
    %v10589 = vsel %vm1699, %v10586, %v10588
    %v10594 = vadd.f32 %v10548, %v10582
    %v10595 = vadd.f32 %v10549, %v10584
    %v10596 = vadd.f32 %v10550, %v10587
    %v10597 = vadd.f32 %v10551, %v10589
    %v10598 = vmul.f32 %v5307, %v7989
    %v10599 = vmul.f32 %v5308, %v7993
    %v10600 = vmul.f32 %v5310, %v7999
    %v10601 = vmul.f32 %v5311, %v8003
    %v10602 = vadd.f32 %v10594, %v10598
    %v10603 = vadd.f32 %v10595, %v10599
    %v10604 = vadd.f32 %v10596, %v10600
    %v10605 = vadd.f32 %v10597, %v10601
    %v10610 = vrot.slane %v8199, 7
    %v10611 = vrot.slane %v8203, 7
    %v10612 = vsel %vm4396, %v10610, %v10611
    %v10613 = vrot.slane %v8209, 7
    %v10614 = vrot.slane %v8213, 7
    %v10615 = vsel %vm4396, %v10613, %v10614
    %v10622 = vmul.f32 %v5307, %v10610
    %v10623 = vmul.f32 %v5308, %v10612
    %v10624 = vmul.f32 %v5309, %v10611
    %v10625 = vmul.f32 %v5310, %v10613
    %v10626 = vmul.f32 %v5311, %v10615
    %v10627 = vmul.f32 %v5312, %v10614
    %v10634 = vrot.slane %v10622, 1
    %v10635 = vrot.slane %v10623, 1
    %v10636 = vsel %vm1753, %v10634, %v10635
    %v10637 = vrot.slane %v10624, 1
    %v10638 = vsel %vm1753, %v10635, %v10637
    %v10639 = vrot.slane %v10625, 1
    %v10640 = vrot.slane %v10626, 1
    %v10641 = vsel %vm1753, %v10639, %v10640
    %v10642 = vrot.slane %v10627, 1
    %v10643 = vsel %vm1753, %v10640, %v10642
    %v10648 = vadd.f32 %v10602, %v10636
    %v10649 = vadd.f32 %v10603, %v10638
    %v10650 = vadd.f32 %v10604, %v10641
    %v10651 = vadd.f32 %v10605, %v10643
    %v10656 = vrot.slane %v8360, 6
    %v10657 = vrot.slane %v8364, 6
    %v10658 = vsel %vm1699, %v10656, %v10657
    %v10659 = vrot.slane %v8370, 6
    %v10660 = vrot.slane %v8374, 6
    %v10661 = vsel %vm1699, %v10659, %v10660
    %v10668 = vmul.f32 %v5307, %v10656
    %v10669 = vmul.f32 %v5308, %v10658
    %v10670 = vmul.f32 %v5309, %v10657
    %v10671 = vmul.f32 %v5310, %v10659
    %v10672 = vmul.f32 %v5311, %v10661
    %v10673 = vmul.f32 %v5312, %v10660
    %v10680 = vrot.slane %v10668, 2
    %v10681 = vrot.slane %v10669, 2
    %v10682 = vsel %vm1805, %v10680, %v10681
    %v10683 = vrot.slane %v10670, 2
    %v10684 = vsel %vm1805, %v10681, %v10683
    %v10685 = vrot.slane %v10671, 2
    %v10686 = vrot.slane %v10672, 2
    %v10687 = vsel %vm1805, %v10685, %v10686
    %v10688 = vrot.slane %v10673, 2
    %v10689 = vsel %vm1805, %v10686, %v10688
    %v10694 = vadd.f32 %v10648, %v10682
    %v10695 = vadd.f32 %v10649, %v10684
    %v10696 = vadd.f32 %v10650, %v10687
    %v10697 = vadd.f32 %v10651, %v10689
    %v10702 = vrot.slane %v8570, 5
    %v10703 = vrot.slane %v8574, 5
    %v10704 = vsel %vm1728, %v10702, %v10703
    %v10705 = vrot.slane %v8580, 5
    %v10706 = vrot.slane %v8584, 5
    %v10707 = vsel %vm1728, %v10705, %v10706
    %v10714 = vmul.f32 %v5307, %v10702
    %v10715 = vmul.f32 %v5308, %v10704
    %v10716 = vmul.f32 %v5309, %v10703
    %v10717 = vmul.f32 %v5310, %v10705
    %v10718 = vmul.f32 %v5311, %v10707
    %v10719 = vmul.f32 %v5312, %v10706
    %v10726 = vrot.slane %v10714, 3
    %v10727 = vrot.slane %v10715, 3
    %v10728 = vsel %vm4549, %v10726, %v10727
    %v10729 = vrot.slane %v10716, 3
    %v10730 = vsel %vm4549, %v10727, %v10729
    %v10731 = vrot.slane %v10717, 3
    %v10732 = vrot.slane %v10718, 3
    %v10733 = vsel %vm4549, %v10731, %v10732
    %v10734 = vrot.slane %v10719, 3
    %v10735 = vsel %vm4549, %v10732, %v10734
    %v10740 = vadd.f32 %v10694, %v10728
    %v10741 = vadd.f32 %v10695, %v10730
    %v10742 = vadd.f32 %v10696, %v10733
    %v10743 = vadd.f32 %v10697, %v10735
    %v10748 = vrot.slane %v8731, 4
    %v10749 = vrot.slane %v8735, 4
    %v10750 = vsel %vm1780, %v10748, %v10749
    %v10751 = vrot.slane %v8741, 4
    %v10752 = vrot.slane %v8745, 4
    %v10753 = vsel %vm1780, %v10751, %v10752
    %v10760 = vmul.f32 %v5307, %v10748
    %v10761 = vmul.f32 %v5308, %v10750
    %v10762 = vmul.f32 %v5309, %v10749
    %v10763 = vmul.f32 %v5310, %v10751
    %v10764 = vmul.f32 %v5311, %v10753
    %v10765 = vmul.f32 %v5312, %v10752
    %v10772 = vrot.slane %v10760, 4
    %v10773 = vrot.slane %v10761, 4
    %v10774 = vsel %vm1780, %v10772, %v10773
    %v10775 = vrot.slane %v10762, 4
    %v10776 = vsel %vm1780, %v10773, %v10775
    %v10777 = vrot.slane %v10763, 4
    %v10778 = vrot.slane %v10764, 4
    %v10779 = vsel %vm1780, %v10777, %v10778
    %v10780 = vrot.slane %v10765, 4
    %v10781 = vsel %vm1780, %v10778, %v10780
    %v10786 = vadd.f32 %v10740, %v10774
    %v10787 = vadd.f32 %v10741, %v10776
    %v10788 = vadd.f32 %v10742, %v10779
    %v10789 = vadd.f32 %v10743, %v10781
    %v10794 = vrot.slane %v8941, 3
    %v10795 = vrot.slane %v8945, 3
    %v10796 = vsel %vm4549, %v10794, %v10795
    %v10797 = vrot.slane %v8951, 3
    %v10798 = vrot.slane %v8955, 3
    %v10799 = vsel %vm4549, %v10797, %v10798
    %v10806 = vmul.f32 %v5307, %v10794
    %v10807 = vmul.f32 %v5308, %v10796
    %v10808 = vmul.f32 %v5309, %v10795
    %v10809 = vmul.f32 %v5310, %v10797
    %v10810 = vmul.f32 %v5311, %v10799
    %v10811 = vmul.f32 %v5312, %v10798
    %v10818 = vrot.slane %v10806, 5
    %v10819 = vrot.slane %v10807, 5
    %v10820 = vsel %vm1728, %v10818, %v10819
    %v10821 = vrot.slane %v10808, 5
    %v10822 = vsel %vm1728, %v10819, %v10821
    %v10823 = vrot.slane %v10809, 5
    %v10824 = vrot.slane %v10810, 5
    %v10825 = vsel %vm1728, %v10823, %v10824
    %v10826 = vrot.slane %v10811, 5
    %v10827 = vsel %vm1728, %v10824, %v10826
    %v10832 = vadd.f32 %v10786, %v10820
    %v10833 = vadd.f32 %v10787, %v10822
    %v10834 = vadd.f32 %v10788, %v10825
    %v10835 = vadd.f32 %v10789, %v10827
    %v10840 = vrot.slane %v9102, 2
    %v10841 = vrot.slane %v9106, 2
    %v10842 = vsel %vm1805, %v10840, %v10841
    %v10843 = vrot.slane %v9112, 2
    %v10844 = vrot.slane %v9116, 2
    %v10845 = vsel %vm1805, %v10843, %v10844
    %v10852 = vmul.f32 %v5307, %v10840
    %v10853 = vmul.f32 %v5308, %v10842
    %v10854 = vmul.f32 %v5309, %v10841
    %v10855 = vmul.f32 %v5310, %v10843
    %v10856 = vmul.f32 %v5311, %v10845
    %v10857 = vmul.f32 %v5312, %v10844
    %v10864 = vrot.slane %v10852, 6
    %v10865 = vrot.slane %v10853, 6
    %v10866 = vsel %vm1699, %v10864, %v10865
    %v10867 = vrot.slane %v10854, 6
    %v10868 = vsel %vm1699, %v10865, %v10867
    %v10869 = vrot.slane %v10855, 6
    %v10870 = vrot.slane %v10856, 6
    %v10871 = vsel %vm1699, %v10869, %v10870
    %v10872 = vrot.slane %v10857, 6
    %v10873 = vsel %vm1699, %v10870, %v10872
    %v10878 = vadd.f32 %v10832, %v10866
    %v10879 = vadd.f32 %v10833, %v10868
    %v10880 = vadd.f32 %v10834, %v10871
    %v10881 = vadd.f32 %v10835, %v10873
    %s10882 = scalar_lea.vmem %s1, 288
    %v10883 = vld [vmem:[%s10882] sm:$0xff]
    %v10884 = vld [vmem:[%s10882 + $0x8] sm:$0xff]
    %v10885 = vld [vmem:[%s10882 + $0x10] sm:$0x3f]
    %v10886 = vld [vmem:[%s10882 + $0x18] sm:$0xff]
    %v10887 = vld [vmem:[%s10882 + $0x20] sm:$0xff]
    %v10888 = vld [vmem:[%s10882 + $0x28] sm:$0x3f]
    %v10889 = vmul.f32 %v10883, %v8040
    %v10890 = vmul.f32 %v10884, %v8044
    %v10891 = vmul.f32 %v10886, %v8050
    %v10892 = vmul.f32 %v10887, %v8054
    %v10893 = vadd.f32 %v10878, %v10889
    %v10894 = vadd.f32 %v10879, %v10890
    %v10895 = vadd.f32 %v10880, %v10891
    %v10896 = vadd.f32 %v10881, %v10892
    %v10901 = vrot.slane %v8201, 7
    %v10902 = vrot.slane %v8205, 7
    %v10903 = vsel %vm4396, %v10901, %v10902
    %v10904 = vrot.slane %v8211, 7
    %v10905 = vrot.slane %v8215, 7
    %v10906 = vsel %vm4396, %v10904, %v10905
    %v10913 = vmul.f32 %v10883, %v10901
    %v10914 = vmul.f32 %v10884, %v10903
    %v10915 = vmul.f32 %v10885, %v10902
    %v10916 = vmul.f32 %v10886, %v10904
    %v10917 = vmul.f32 %v10887, %v10906
    %v10918 = vmul.f32 %v10888, %v10905
    %v10925 = vrot.slane %v10913, 1
    %v10926 = vrot.slane %v10914, 1
    %v10927 = vsel %vm1753, %v10925, %v10926
    %v10928 = vrot.slane %v10915, 1
    %v10929 = vsel %vm1753, %v10926, %v10928
    %v10930 = vrot.slane %v10916, 1
    %v10931 = vrot.slane %v10917, 1
    %v10932 = vsel %vm1753, %v10930, %v10931
    %v10933 = vrot.slane %v10918, 1
    %v10934 = vsel %vm1753, %v10931, %v10933
    %v10939 = vadd.f32 %v10893, %v10927
    %v10940 = vadd.f32 %v10894, %v10929
    %v10941 = vadd.f32 %v10895, %v10932
    %v10942 = vadd.f32 %v10896, %v10934
    %v10947 = vrot.slane %v8411, 6
    %v10948 = vrot.slane %v8415, 6
    %v10949 = vsel %vm1699, %v10947, %v10948
    %v10950 = vrot.slane %v8421, 6
    %v10951 = vrot.slane %v8425, 6
    %v10952 = vsel %vm1699, %v10950, %v10951
    %v10959 = vmul.f32 %v10883, %v10947
    %v10960 = vmul.f32 %v10884, %v10949
    %v10961 = vmul.f32 %v10885, %v10948
    %v10962 = vmul.f32 %v10886, %v10950
    %v10963 = vmul.f32 %v10887, %v10952
    %v10964 = vmul.f32 %v10888, %v10951
    %v10971 = vrot.slane %v10959, 2
    %v10972 = vrot.slane %v10960, 2
    %v10973 = vsel %vm1805, %v10971, %v10972
    %v10974 = vrot.slane %v10961, 2
    %v10975 = vsel %vm1805, %v10972, %v10974
    %v10976 = vrot.slane %v10962, 2
    %v10977 = vrot.slane %v10963, 2
    %v10978 = vsel %vm1805, %v10976, %v10977
    %v10979 = vrot.slane %v10964, 2
    %v10980 = vsel %vm1805, %v10977, %v10979
    %v10985 = vadd.f32 %v10939, %v10973
    %v10986 = vadd.f32 %v10940, %v10975
    %v10987 = vadd.f32 %v10941, %v10978
    %v10988 = vadd.f32 %v10942, %v10980
    %v10993 = vrot.slane %v8572, 5
    %v10994 = vrot.slane %v8576, 5
    %v10995 = vsel %vm1728, %v10993, %v10994
    %v10996 = vrot.slane %v8582, 5
    %v10997 = vrot.slane %v8586, 5
    %v10998 = vsel %vm1728, %v10996, %v10997
    %v11005 = vmul.f32 %v10883, %v10993
    %v11006 = vmul.f32 %v10884, %v10995
    %v11007 = vmul.f32 %v10885, %v10994
    %v11008 = vmul.f32 %v10886, %v10996
    %v11009 = vmul.f32 %v10887, %v10998
    %v11010 = vmul.f32 %v10888, %v10997
    %v11017 = vrot.slane %v11005, 3
    %v11018 = vrot.slane %v11006, 3
    %v11019 = vsel %vm4549, %v11017, %v11018
    %v11020 = vrot.slane %v11007, 3
    %v11021 = vsel %vm4549, %v11018, %v11020
    %v11022 = vrot.slane %v11008, 3
    %v11023 = vrot.slane %v11009, 3
    %v11024 = vsel %vm4549, %v11022, %v11023
    %v11025 = vrot.slane %v11010, 3
    %v11026 = vsel %vm4549, %v11023, %v11025
    %v11031 = vadd.f32 %v10985, %v11019
    %v11032 = vadd.f32 %v10986, %v11021
    %v11033 = vadd.f32 %v10987, %v11024
    %v11034 = vadd.f32 %v10988, %v11026
    %v11039 = vrot.slane %v8782, 4
    %v11040 = vrot.slane %v8786, 4
    %v11041 = vsel %vm1780, %v11039, %v11040
    %v11042 = vrot.slane %v8792, 4
    %v11043 = vrot.slane %v8796, 4
    %v11044 = vsel %vm1780, %v11042, %v11043
    %v11051 = vmul.f32 %v10883, %v11039
    %v11052 = vmul.f32 %v10884, %v11041
    %v11053 = vmul.f32 %v10885, %v11040
    %v11054 = vmul.f32 %v10886, %v11042
    %v11055 = vmul.f32 %v10887, %v11044
    %v11056 = vmul.f32 %v10888, %v11043
    %v11063 = vrot.slane %v11051, 4
    %v11064 = vrot.slane %v11052, 4
    %v11065 = vsel %vm1780, %v11063, %v11064
    %v11066 = vrot.slane %v11053, 4
    %v11067 = vsel %vm1780, %v11064, %v11066
    %v11068 = vrot.slane %v11054, 4
    %v11069 = vrot.slane %v11055, 4
    %v11070 = vsel %vm1780, %v11068, %v11069
    %v11071 = vrot.slane %v11056, 4
    %v11072 = vsel %vm1780, %v11069, %v11071
    %v11077 = vadd.f32 %v11031, %v11065
    %v11078 = vadd.f32 %v11032, %v11067
    %v11079 = vadd.f32 %v11033, %v11070
    %v11080 = vadd.f32 %v11034, %v11072
    %v11085 = vrot.slane %v8943, 3
    %v11086 = vrot.slane %v8947, 3
    %v11087 = vsel %vm4549, %v11085, %v11086
    %v11088 = vrot.slane %v8953, 3
    %v11089 = vrot.slane %v8957, 3
    %v11090 = vsel %vm4549, %v11088, %v11089
    %v11097 = vmul.f32 %v10883, %v11085
    %v11098 = vmul.f32 %v10884, %v11087
    %v11099 = vmul.f32 %v10885, %v11086
    %v11100 = vmul.f32 %v10886, %v11088
    %v11101 = vmul.f32 %v10887, %v11090
    %v11102 = vmul.f32 %v10888, %v11089
    %v11109 = vrot.slane %v11097, 5
    %v11110 = vrot.slane %v11098, 5
    %v11111 = vsel %vm1728, %v11109, %v11110
    %v11112 = vrot.slane %v11099, 5
    %v11113 = vsel %vm1728, %v11110, %v11112
    %v11114 = vrot.slane %v11100, 5
    %v11115 = vrot.slane %v11101, 5
    %v11116 = vsel %vm1728, %v11114, %v11115
    %v11117 = vrot.slane %v11102, 5
    %v11118 = vsel %vm1728, %v11115, %v11117
    %v11123 = vadd.f32 %v11077, %v11111
    %v11124 = vadd.f32 %v11078, %v11113
    %v11125 = vadd.f32 %v11079, %v11116
    %v11126 = vadd.f32 %v11080, %v11118
    %v11131 = vrot.slane %v9153, 2
    %v11132 = vrot.slane %v9156, 2
    %v11133 = vsel %vm1805, %v11131, %v11132
    %v11134 = vrot.slane %v9161, 2
    %v11135 = vrot.slane %v9164, 2
    %v11136 = vsel %vm1805, %v11134, %v11135
    %v11143 = vmul.f32 %v10883, %v11131
    %v11144 = vmul.f32 %v10884, %v11133
    %v11145 = vmul.f32 %v10885, %v11132
    %v11146 = vmul.f32 %v10886, %v11134
    %v11147 = vmul.f32 %v10887, %v11136
    %v11148 = vmul.f32 %v10888, %v11135
    %v11155 = vrot.slane %v11143, 6
    %v11156 = vrot.slane %v11144, 6
    %v11157 = vsel %vm1699, %v11155, %v11156
    %v11158 = vrot.slane %v11145, 6
    %v11159 = vsel %vm1699, %v11156, %v11158
    %v11160 = vrot.slane %v11146, 6
    %v11161 = vrot.slane %v11147, 6
    %v11162 = vsel %vm1699, %v11160, %v11161
    %v11163 = vrot.slane %v11148, 6
    %v11164 = vsel %vm1699, %v11161, %v11163
    %v11169 = vadd.f32 %v11123, %v11157
    %v11170 = vadd.f32 %v11124, %v11159
    %v11171 = vadd.f32 %v11125, %v11162
    %v11172 = vadd.f32 %v11126, %v11164
    %v11173 = vmax.f32 %v11169, 0.0
    %v11174 = vmax.f32 %v11170, 0.0
    %v11175 = vmax.f32 %v11171, 0.0
    %v11176 = vmax.f32 %v11172, 0.0
    %s11177 = scalar_lea.vmem [#allocation7], 256
    %v11178 = vld [vmem:[%s11177] sm:$0xff]
    %v11179 = vld [vmem:[%s11177 + $0x8] sm:$0xff]
    %v11180 = vld [vmem:[%s11177 + $0x10] sm:$0xff]
    %v11181 = vld [vmem:[%s11177 + $0x18] sm:$0xff]
    %v11182 = vld [vmem:[%s11177 + $0x20] sm:$0xff]
    %v11183 = vld [vmem:[%s11177 + $0x28] sm:$0xff]
    %v11184 = vld [vmem:[%s11177 + $0x30] sm:$0xff]
    %v11185 = vld [vmem:[%s11177 + $0x38] sm:$0xff]
    %v11186 = vld [vmem:[%s11177 + $0x40] sm:$0xff]
    %v11187 = vld [vmem:[%s11177 + $0x48] sm:$0xff]
    %v11188 = vld [vmem:[%s11177 + $0x50] sm:$0xff]
    %v11189 = vld [vmem:[%s11177 + $0x58] sm:$0xff]
    %v11190 = vld [vmem:[%s11177 + $0x60] sm:$0xff]
    %v11191 = vld [vmem:[%s11177 + $0x68] sm:$0xff]
    %v11192 = vld [vmem:[%s11177 + $0x70] sm:$0xff]
    %v11193 = vld [vmem:[%s11177 + $0x78] sm:$0xff]
    %11194 = vmatprep.subr.mxu0 0.0
    %v11195 = vand.u32 %v11178, 4294901760
    %11196 = vmatpush1.msra.mxu0 %v11195
    %11197 = vmatprep.subr.mxu0 0.0
    %v11198 = vand.u32 %v11179, 4294901760
    %11199 = vmatpush1.msra.mxu0 %v11198
    %11200 = vmatprep.subr.mxu0 0.0
    %v11201 = vand.u32 %v11180, 4294901760
    %11202 = vmatpush1.msra.mxu0 %v11201
    %11203 = vmatprep.subr.mxu0 0.0
    %v11204 = vand.u32 %v11181, 4294901760
    %11205 = vmatpush1.msra.mxu0 %v11204
    %11206 = vmatprep.subr.mxu0 0.0
    %v11207 = vand.u32 %v11182, 4294901760
    %11208 = vmatpush1.msra.mxu0 %v11207
    %11209 = vmatprep.subr.mxu0 0.0
    %v11210 = vand.u32 %v11183, 4294901760
    %11211 = vmatpush1.msra.mxu0 %v11210
    %11212 = vmatprep.subr.mxu0 0.0
    %v11213 = vand.u32 %v11184, 4294901760
    %11214 = vmatpush1.msra.mxu0 %v11213
    %11215 = vmatprep.subr.mxu0 0.0
    %v11216 = vand.u32 %v11185, 4294901760
    %11217 = vmatpush1.msra.mxu0 %v11216
    %11218 = vmatprep.subr.mxu0 0.0
    %v11219 = vand.u32 %v11186, 4294901760
    %11220 = vmatpush1.msra.mxu0 %v11219
    %11221 = vmatprep.subr.mxu0 0.0
    %v11222 = vand.u32 %v11187, 4294901760
    %11223 = vmatpush1.msra.mxu0 %v11222
    %11224 = vmatprep.subr.mxu0 0.0
    %v11225 = vand.u32 %v11188, 4294901760
    %11226 = vmatpush1.msra.mxu0 %v11225
    %11227 = vmatprep.subr.mxu0 0.0
    %v11228 = vand.u32 %v11189, 4294901760
    %11229 = vmatpush1.msra.mxu0 %v11228
    %11230 = vmatprep.subr.mxu0 0.0
    %v11231 = vand.u32 %v11190, 4294901760
    %11232 = vmatpush1.msra.mxu0 %v11231
    %11233 = vmatprep.subr.mxu0 0.0
    %v11234 = vand.u32 %v11191, 4294901760
    %11235 = vmatpush1.msra.mxu0 %v11234
    %11236 = vmatprep.subr.mxu0 0.0
    %v11237 = vand.u32 %v11192, 4294901760
    %11238 = vmatpush1.msra.mxu0 %v11237
    %11239 = vmatprep.subr.mxu0 0.0
    %v11240 = vand.u32 %v11193, 4294901760
    %11241 = vmatpush1.msra.mxu0 %v11240
    %11242 = vmatprep.subr.mxu0 0.0
    %11243 = vmatpush1.msra.mxu0 0.0
    %11244 = vmatprep.subr.mxu0 0.0
    %11245 = vmatpush1.msra.mxu0 0.0
    %11246 = vmatprep.subr.mxu0 0.0
    %11247 = vmatpush1.msra.mxu0 0.0
    %11248 = vmatprep.subr.mxu0 0.0
    %11249 = vmatpush1.msra.mxu0 0.0
    %11250 = vmatprep.subr.mxu0 0.0
    %11251 = vmatpush1.msra.mxu0 0.0
    %11252 = vmatprep.subr.mxu0 0.0
    %11253 = vmatpush1.msra.mxu0 0.0
    %11254 = vmatprep.subr.mxu0 0.0
    %11255 = vmatpush1.msra.mxu0 0.0
    %11256 = vmatprep.subr.mxu0 0.0
    %11257 = vmatpush1.msra.mxu0 0.0
    %11258 = vmatprep.subr.mxu0 0.0
    %11259 = vmatpush1.msra.mxu0 0.0
    %11260 = vmatprep.subr.mxu0 0.0
    %11261 = vmatpush1.msra.mxu0 0.0
    %11262 = vmatprep.subr.mxu0 0.0
    %11263 = vmatpush1.msra.mxu0 0.0
    %11264 = vmatprep.subr.mxu0 0.0
    %11265 = vmatpush1.msra.mxu0 0.0
    %11266 = vmatprep.subr.mxu0 0.0
    %11267 = vmatpush1.msra.mxu0 0.0
    %11268 = vmatprep.subr.mxu0 0.0
    %11269 = vmatpush1.msra.mxu0 0.0
    %11270 = vmatprep.subr.mxu0 0.0
    %11271 = vmatpush1.msra.mxu0 0.0
    %11272 = vmatprep.subr.mxu0 0.0
    %11273 = vmatpush1.msra.mxu0 0.0
    %11274 = vmatprep.mubr.f32.mxu0 0.0
    %v11275 = vand.u32 %v11173, 4294901760
    %v11276 = vsub.f32 %v11173, %v11275
    %v11277 = vand.u32 %v11276, 4294901760
    %v11278 = vsub.f32 %v11276, %v11277
    %v11279 = vand.u32 %v11278, 4294901760
    %11280 = vmatmul.mubr.f32.gmra.mrb[0].mxu0 %v11279
    %v11281 = vpop.f32.mrb[0].mxu0
    %v11282 = vadd.f32 0.0, %v11281
    %v11283 = vpop.f32.mrb[0].mxu0
    %11284 = vmatprep.mubr.f32.mxu0 0.0
    %v11285 = vand.u32 %v11174, 4294901760
    %v11286 = vsub.f32 %v11174, %v11285
    %v11287 = vand.u32 %v11286, 4294901760
    %v11288 = vsub.f32 %v11286, %v11287
    %v11289 = vand.u32 %v11288, 4294901760
    %11290 = vmatmul.mubr.f32.gmra.mrb[0].mxu0 %v11289
    %v11291 = vpop.f32.mrb[0].mxu0
    %v11292 = vadd.f32 0.0, %v11291
    %v11293 = vpop.f32.mrb[0].mxu0
    %11294 = vmatprep.mubr.f32.mxu0 0.0
    %v11295 = vand.u32 %v11175, 4294901760
    %v11296 = vsub.f32 %v11175, %v11295
    %v11297 = vand.u32 %v11296, 4294901760
    %v11298 = vsub.f32 %v11296, %v11297
    %v11299 = vand.u32 %v11298, 4294901760
    %11300 = vmatmul.mubr.f32.gmra.mrb[0].mxu0 %v11299
    %v11301 = vpop.f32.mrb[0].mxu0
    %v11302 = vadd.f32 0.0, %v11301
    %v11303 = vpop.f32.mrb[0].mxu0
    %11304 = vmatprep.mubr.f32.mxu0 0.0
    %v11305 = vand.u32 %v11176, 4294901760
    %v11306 = vsub.f32 %v11176, %v11305
    %v11307 = vand.u32 %v11306, 4294901760
    %v11308 = vsub.f32 %v11306, %v11307
    %v11309 = vand.u32 %v11308, 4294901760
    %11310 = vmatmul.mubr.f32.gmra.mrb[0].mxu0 %v11309
    %v11311 = vpop.f32.mrb[0].mxu0
    %v11312 = vadd.f32 0.0, %v11311
    %v11313 = vpop.f32.mrb[0].mxu0
    %11314 = vdwg.mxu0
    %11315 = vmatprep.subr.mxu0 0.0
    %v11316 = vand.u32 %v11178, 4294901760
    %v11317 = vsub.f32 %v11178, %v11316
    %v11318 = vand.u32 %v11317, 4294901760
    %v11319 = vsub.f32 %v11317, %v11318
    %v11320 = vand.u32 %v11319, 4294901760
    %11321 = vmatpush1.msra.mxu0 %v11320
    %11322 = vmatprep.subr.mxu0 0.0
    %v11323 = vand.u32 %v11179, 4294901760
    %v11324 = vsub.f32 %v11179, %v11323
    %v11325 = vand.u32 %v11324, 4294901760
    %v11326 = vsub.f32 %v11324, %v11325
    %v11327 = vand.u32 %v11326, 4294901760
    %11328 = vmatpush1.msra.mxu0 %v11327
    %11329 = vmatprep.subr.mxu0 0.0
    %v11330 = vand.u32 %v11180, 4294901760
    %v11331 = vsub.f32 %v11180, %v11330
    %v11332 = vand.u32 %v11331, 4294901760
    %v11333 = vsub.f32 %v11331, %v11332
    %v11334 = vand.u32 %v11333, 4294901760
    %11335 = vmatpush1.msra.mxu0 %v11334
    %11336 = vmatprep.subr.mxu0 0.0
    %v11337 = vand.u32 %v11181, 4294901760
    %v11338 = vsub.f32 %v11181, %v11337
    %v11339 = vand.u32 %v11338, 4294901760
    %v11340 = vsub.f32 %v11338, %v11339
    %v11341 = vand.u32 %v11340, 4294901760
    %11342 = vmatpush1.msra.mxu0 %v11341
    %11343 = vmatprep.subr.mxu0 0.0
    %v11344 = vand.u32 %v11182, 4294901760
    %v11345 = vsub.f32 %v11182, %v11344
    %v11346 = vand.u32 %v11345, 4294901760
    %v11347 = vsub.f32 %v11345, %v11346
    %v11348 = vand.u32 %v11347, 4294901760
    %11349 = vmatpush1.msra.mxu0 %v11348
    %11350 = vmatprep.subr.mxu0 0.0
    %v11351 = vand.u32 %v11183, 4294901760
    %v11352 = vsub.f32 %v11183, %v11351
    %v11353 = vand.u32 %v11352, 4294901760
    %v11354 = vsub.f32 %v11352, %v11353
    %v11355 = vand.u32 %v11354, 4294901760
    %11356 = vmatpush1.msra.mxu0 %v11355
    %11357 = vmatprep.subr.mxu0 0.0
    %v11358 = vand.u32 %v11184, 4294901760
    %v11359 = vsub.f32 %v11184, %v11358
    %v11360 = vand.u32 %v11359, 4294901760
    %v11361 = vsub.f32 %v11359, %v11360
    %v11362 = vand.u32 %v11361, 4294901760
    %11363 = vmatpush1.msra.mxu0 %v11362
    %11364 = vmatprep.subr.mxu0 0.0
    %v11365 = vand.u32 %v11185, 4294901760
    %v11366 = vsub.f32 %v11185, %v11365
    %v11367 = vand.u32 %v11366, 4294901760
    %v11368 = vsub.f32 %v11366, %v11367
    %v11369 = vand.u32 %v11368, 4294901760
    %11370 = vmatpush1.msra.mxu0 %v11369
    %11371 = vmatprep.subr.mxu0 0.0
    %v11372 = vand.u32 %v11186, 4294901760
    %v11373 = vsub.f32 %v11186, %v11372
    %v11374 = vand.u32 %v11373, 4294901760
    %v11375 = vsub.f32 %v11373, %v11374
    %v11376 = vand.u32 %v11375, 4294901760
    %11377 = vmatpush1.msra.mxu0 %v11376
    %11378 = vmatprep.subr.mxu0 0.0
    %v11379 = vand.u32 %v11187, 4294901760
    %v11380 = vsub.f32 %v11187, %v11379
    %v11381 = vand.u32 %v11380, 4294901760
    %v11382 = vsub.f32 %v11380, %v11381
    %v11383 = vand.u32 %v11382, 4294901760
    %11384 = vmatpush1.msra.mxu0 %v11383
    %11385 = vmatprep.subr.mxu0 0.0
    %v11386 = vand.u32 %v11188, 4294901760
    %v11387 = vsub.f32 %v11188, %v11386
    %v11388 = vand.u32 %v11387, 4294901760
    %v11389 = vsub.f32 %v11387, %v11388
    %v11390 = vand.u32 %v11389, 4294901760
    %11391 = vmatpush1.msra.mxu0 %v11390
    %11392 = vmatprep.subr.mxu0 0.0
    %v11393 = vand.u32 %v11189, 4294901760
    %v11394 = vsub.f32 %v11189, %v11393
    %v11395 = vand.u32 %v11394, 4294901760
    %v11396 = vsub.f32 %v11394, %v11395
    %v11397 = vand.u32 %v11396, 4294901760
    %11398 = vmatpush1.msra.mxu0 %v11397
    %11399 = vmatprep.subr.mxu0 0.0
    %v11400 = vand.u32 %v11190, 4294901760
    %v11401 = vsub.f32 %v11190, %v11400
    %v11402 = vand.u32 %v11401, 4294901760
    %v11403 = vsub.f32 %v11401, %v11402
    %v11404 = vand.u32 %v11403, 4294901760
    %11405 = vmatpush1.msra.mxu0 %v11404
    %11406 = vmatprep.subr.mxu0 0.0
    %v11407 = vand.u32 %v11191, 4294901760
    %v11408 = vsub.f32 %v11191, %v11407
    %v11409 = vand.u32 %v11408, 4294901760
    %v11410 = vsub.f32 %v11408, %v11409
    %v11411 = vand.u32 %v11410, 4294901760
    %11412 = vmatpush1.msra.mxu0 %v11411
    %11413 = vmatprep.subr.mxu0 0.0
    %v11414 = vand.u32 %v11192, 4294901760
    %v11415 = vsub.f32 %v11192, %v11414
    %v11416 = vand.u32 %v11415, 4294901760
    %v11417 = vsub.f32 %v11415, %v11416
    %v11418 = vand.u32 %v11417, 4294901760
    %11419 = vmatpush1.msra.mxu0 %v11418
    %11420 = vmatprep.subr.mxu0 0.0
    %v11421 = vand.u32 %v11193, 4294901760
    %v11422 = vsub.f32 %v11193, %v11421
    %v11423 = vand.u32 %v11422, 4294901760
    %v11424 = vsub.f32 %v11422, %v11423
    %v11425 = vand.u32 %v11424, 4294901760
    %11426 = vmatpush1.msra.mxu0 %v11425
    %11427 = vmatprep.subr.mxu0 0.0
    %11428 = vmatpush1.msra.mxu0 0.0
    %11429 = vmatprep.subr.mxu0 0.0
    %11430 = vmatpush1.msra.mxu0 0.0
    %11431 = vmatprep.subr.mxu0 0.0
    %11432 = vmatpush1.msra.mxu0 0.0
    %11433 = vmatprep.subr.mxu0 0.0
    %11434 = vmatpush1.msra.mxu0 0.0
    %11435 = vmatprep.subr.mxu0 0.0
    %11436 = vmatpush1.msra.mxu0 0.0
    %11437 = vmatprep.subr.mxu0 0.0
    %11438 = vmatpush1.msra.mxu0 0.0
    %11439 = vmatprep.subr.mxu0 0.0
    %11440 = vmatpush1.msra.mxu0 0.0
    %11441 = vmatprep.subr.mxu0 0.0
    %11442 = vmatpush1.msra.mxu0 0.0
    %11443 = vmatprep.subr.mxu0 0.0
    %11444 = vmatpush1.msra.mxu0 0.0
    %11445 = vmatprep.subr.mxu0 0.0
    %11446 = vmatpush1.msra.mxu0 0.0
    %11447 = vmatprep.subr.mxu0 0.0
    %11448 = vmatpush1.msra.mxu0 0.0
    %11449 = vmatprep.subr.mxu0 0.0
    %11450 = vmatpush1.msra.mxu0 0.0
    %11451 = vmatprep.subr.mxu0 0.0
    %11452 = vmatpush1.msra.mxu0 0.0
    %11453 = vmatprep.subr.mxu0 0.0
    %11454 = vmatpush1.msra.mxu0 0.0
    %11455 = vmatprep.subr.mxu0 0.0
    %11456 = vmatpush1.msra.mxu0 0.0
    %11457 = vmatprep.subr.mxu0 0.0
    %11458 = vmatpush1.msra.mxu0 0.0
    %11459 = vmatprep.mubr.f32.mxu0 0.0
    %v11460 = vand.u32 %v11173, 4294901760
    %11461 = vmatmul.mubr.f32.gmra.mrb[0].mxu0 %v11460
    %v11462 = vpop.f32.mrb[0].mxu0
    %v11463 = vadd.f32 %v11282, %v11462
    %v11464 = vpop.f32.mrb[0].mxu0
    %11465 = vmatprep.mubr.f32.mxu0 0.0
    %v11466 = vand.u32 %v11174, 4294901760
    %11467 = vmatmul.mubr.f32.gmra.mrb[0].mxu0 %v11466
    %v11468 = vpop.f32.mrb[0].mxu0
    %v11469 = vadd.f32 %v11292, %v11468
    %v11470 = vpop.f32.mrb[0].mxu0
    %11471 = vmatprep.mubr.f32.mxu0 0.0
    %v11472 = vand.u32 %v11175, 4294901760
    %11473 = vmatmul.mubr.f32.gmra.mrb[0].mxu0 %v11472
    %v11474 = vpop.f32.mrb[0].mxu0
    %v11475 = vadd.f32 %v11302, %v11474
    %v11476 = vpop.f32.mrb[0].mxu0
    %11477 = vmatprep.mubr.f32.mxu0 0.0
    %v11478 = vand.u32 %v11176, 4294901760
    %11479 = vmatmul.mubr.f32.gmra.mrb[0].mxu0 %v11478
    %v11480 = vpop.f32.mrb[0].mxu0
    %v11481 = vadd.f32 %v11312, %v11480
    %v11482 = vpop.f32.mrb[0].mxu0
    %11483 = vdwg.mxu0
    %11484 = vmatprep.subr.mxu0 0.0
    %v11485 = vand.u32 %v11178, 4294901760
    %v11486 = vsub.f32 %v11178, %v11485
    %11487 = vmatpush1.msra.mxu0 %v11486
    %11488 = vmatprep.subr.mxu0 0.0
    %v11489 = vand.u32 %v11179, 4294901760
    %v11490 = vsub.f32 %v11179, %v11489
    %11491 = vmatpush1.msra.mxu0 %v11490
    %11492 = vmatprep.subr.mxu0 0.0
    %v11493 = vand.u32 %v11180, 4294901760
    %v11494 = vsub.f32 %v11180, %v11493
    %11495 = vmatpush1.msra.mxu0 %v11494
    %11496 = vmatprep.subr.mxu0 0.0
    %v11497 = vand.u32 %v11181, 4294901760
    %v11498 = vsub.f32 %v11181, %v11497
    %11499 = vmatpush1.msra.mxu0 %v11498
    %11500 = vmatprep.subr.mxu0 0.0
    %v11501 = vand.u32 %v11182, 4294901760
    %v11502 = vsub.f32 %v11182, %v11501
    %11503 = vmatpush1.msra.mxu0 %v11502
    %11504 = vmatprep.subr.mxu0 0.0
    %v11505 = vand.u32 %v11183, 4294901760
    %v11506 = vsub.f32 %v11183, %v11505
    %11507 = vmatpush1.msra.mxu0 %v11506
    %11508 = vmatprep.subr.mxu0 0.0
    %v11509 = vand.u32 %v11184, 4294901760
    %v11510 = vsub.f32 %v11184, %v11509
    %11511 = vmatpush1.msra.mxu0 %v11510
    %11512 = vmatprep.subr.mxu0 0.0
    %v11513 = vand.u32 %v11185, 4294901760
    %v11514 = vsub.f32 %v11185, %v11513
    %11515 = vmatpush1.msra.mxu0 %v11514
    %11516 = vmatprep.subr.mxu0 0.0
    %v11517 = vand.u32 %v11186, 4294901760
    %v11518 = vsub.f32 %v11186, %v11517
    %11519 = vmatpush1.msra.mxu0 %v11518
    %11520 = vmatprep.subr.mxu0 0.0
    %v11521 = vand.u32 %v11187, 4294901760
    %v11522 = vsub.f32 %v11187, %v11521
    %11523 = vmatpush1.msra.mxu0 %v11522
    %11524 = vmatprep.subr.mxu0 0.0
    %v11525 = vand.u32 %v11188, 4294901760
    %v11526 = vsub.f32 %v11188, %v11525
    %11527 = vmatpush1.msra.mxu0 %v11526
    %11528 = vmatprep.subr.mxu0 0.0
    %v11529 = vand.u32 %v11189, 4294901760
    %v11530 = vsub.f32 %v11189, %v11529
    %11531 = vmatpush1.msra.mxu0 %v11530
    %11532 = vmatprep.subr.mxu0 0.0
    %v11533 = vand.u32 %v11190, 4294901760
    %v11534 = vsub.f32 %v11190, %v11533
    %11535 = vmatpush1.msra.mxu0 %v11534
    %11536 = vmatprep.subr.mxu0 0.0
    %v11537 = vand.u32 %v11191, 4294901760
    %v11538 = vsub.f32 %v11191, %v11537
    %11539 = vmatpush1.msra.mxu0 %v11538
    %11540 = vmatprep.subr.mxu0 0.0
    %v11541 = vand.u32 %v11192, 4294901760
    %v11542 = vsub.f32 %v11192, %v11541
    %11543 = vmatpush1.msra.mxu0 %v11542
    %11544 = vmatprep.subr.mxu0 0.0
    %v11545 = vand.u32 %v11193, 4294901760
    %v11546 = vsub.f32 %v11193, %v11545
    %11547 = vmatpush1.msra.mxu0 %v11546
    %11548 = vmatprep.subr.mxu0 0.0
    %11549 = vmatpush1.msra.mxu0 0.0
    %11550 = vmatprep.subr.mxu0 0.0
    %11551 = vmatpush1.msra.mxu0 0.0
    %11552 = vmatprep.subr.mxu0 0.0
    %11553 = vmatpush1.msra.mxu0 0.0
    %11554 = vmatprep.subr.mxu0 0.0
    %11555 = vmatpush1.msra.mxu0 0.0
    %11556 = vmatprep.subr.mxu0 0.0
    %11557 = vmatpush1.msra.mxu0 0.0
    %11558 = vmatprep.subr.mxu0 0.0
    %11559 = vmatpush1.msra.mxu0 0.0
    %11560 = vmatprep.subr.mxu0 0.0
    %11561 = vmatpush1.msra.mxu0 0.0
    %11562 = vmatprep.subr.mxu0 0.0
    %11563 = vmatpush1.msra.mxu0 0.0
    %11564 = vmatprep.subr.mxu0 0.0
    %11565 = vmatpush1.msra.mxu0 0.0
    %11566 = vmatprep.subr.mxu0 0.0
    %11567 = vmatpush1.msra.mxu0 0.0
    %11568 = vmatprep.subr.mxu0 0.0
    %11569 = vmatpush1.msra.mxu0 0.0
    %11570 = vmatprep.subr.mxu0 0.0
    %11571 = vmatpush1.msra.mxu0 0.0
    %11572 = vmatprep.subr.mxu0 0.0
    %11573 = vmatpush1.msra.mxu0 0.0
    %11574 = vmatprep.subr.mxu0 0.0
    %11575 = vmatpush1.msra.mxu0 0.0
    %11576 = vmatprep.subr.mxu0 0.0
    %11577 = vmatpush1.msra.mxu0 0.0
    %11578 = vmatprep.subr.mxu0 0.0
    %11579 = vmatpush1.msra.mxu0 0.0
    %11580 = vmatprep.mubr.f32.mxu0 0.0
    %v11581 = vand.u32 %v11173, 4294901760
    %v11582 = vsub.f32 %v11173, %v11581
    %11583 = vmatmul.mubr.f32.gmra.mrb[0].mxu0 %v11582
    %v11584 = vpop.f32.mrb[0].mxu0
    %v11585 = vadd.f32 %v11463, %v11584
    %v11586 = vpop.f32.mrb[0].mxu0
    %11587 = vmatprep.mubr.f32.mxu0 0.0
    %v11588 = vand.u32 %v11174, 4294901760
    %v11589 = vsub.f32 %v11174, %v11588
    %11590 = vmatmul.mubr.f32.gmra.mrb[0].mxu0 %v11589
    %v11591 = vpop.f32.mrb[0].mxu0
    %v11592 = vadd.f32 %v11469, %v11591
    %v11593 = vpop.f32.mrb[0].mxu0
    %11594 = vmatprep.mubr.f32.mxu0 0.0
    %v11595 = vand.u32 %v11175, 4294901760
    %v11596 = vsub.f32 %v11175, %v11595
    %11597 = vmatmul.mubr.f32.gmra.mrb[0].mxu0 %v11596
    %v11598 = vpop.f32.mrb[0].mxu0
    %v11599 = vadd.f32 %v11475, %v11598
    %v11600 = vpop.f32.mrb[0].mxu0
    %11601 = vmatprep.mubr.f32.mxu0 0.0
    %v11602 = vand.u32 %v11176, 4294901760
    %v11603 = vsub.f32 %v11176, %v11602
    %11604 = vmatmul.mubr.f32.gmra.mrb[0].mxu0 %v11603
    %v11605 = vpop.f32.mrb[0].mxu0
    %v11606 = vadd.f32 %v11481, %v11605
    %v11607 = vpop.f32.mrb[0].mxu0
    %11608 = vdwg.mxu0
    %11609 = vmatprep.subr.mxu0 0.0
    %v11610 = vand.u32 %v11178, 4294901760
    %11611 = vmatpush1.msra.mxu0 %v11610
    %11612 = vmatprep.subr.mxu0 0.0
    %v11613 = vand.u32 %v11179, 4294901760
    %11614 = vmatpush1.msra.mxu0 %v11613
    %11615 = vmatprep.subr.mxu0 0.0
    %v11616 = vand.u32 %v11180, 4294901760
    %11617 = vmatpush1.msra.mxu0 %v11616
    %11618 = vmatprep.subr.mxu0 0.0
    %v11619 = vand.u32 %v11181, 4294901760
    %11620 = vmatpush1.msra.mxu0 %v11619
    %11621 = vmatprep.subr.mxu0 0.0
    %v11622 = vand.u32 %v11182, 4294901760
    %11623 = vmatpush1.msra.mxu0 %v11622
    %11624 = vmatprep.subr.mxu0 0.0
    %v11625 = vand.u32 %v11183, 4294901760
    %11626 = vmatpush1.msra.mxu0 %v11625
    %11627 = vmatprep.subr.mxu0 0.0
    %v11628 = vand.u32 %v11184, 4294901760
    %11629 = vmatpush1.msra.mxu0 %v11628
    %11630 = vmatprep.subr.mxu0 0.0
    %v11631 = vand.u32 %v11185, 4294901760
    %11632 = vmatpush1.msra.mxu0 %v11631
    %11633 = vmatprep.subr.mxu0 0.0
    %v11634 = vand.u32 %v11186, 4294901760
    %11635 = vmatpush1.msra.mxu0 %v11634
    %11636 = vmatprep.subr.mxu0 0.0
    %v11637 = vand.u32 %v11187, 4294901760
    %11638 = vmatpush1.msra.mxu0 %v11637
    %11639 = vmatprep.subr.mxu0 0.0
    %v11640 = vand.u32 %v11188, 4294901760
    %11641 = vmatpush1.msra.mxu0 %v11640
    %11642 = vmatprep.subr.mxu0 0.0
    %v11643 = vand.u32 %v11189, 4294901760
    %11644 = vmatpush1.msra.mxu0 %v11643
    %11645 = vmatprep.subr.mxu0 0.0
    %v11646 = vand.u32 %v11190, 4294901760
    %11647 = vmatpush1.msra.mxu0 %v11646
    %11648 = vmatprep.subr.mxu0 0.0
    %v11649 = vand.u32 %v11191, 4294901760
    %11650 = vmatpush1.msra.mxu0 %v11649
    %11651 = vmatprep.subr.mxu0 0.0
    %v11652 = vand.u32 %v11192, 4294901760
    %11653 = vmatpush1.msra.mxu0 %v11652
    %11654 = vmatprep.subr.mxu0 0.0
    %v11655 = vand.u32 %v11193, 4294901760
    %11656 = vmatpush1.msra.mxu0 %v11655
    %11657 = vmatprep.subr.mxu0 0.0
    %11658 = vmatpush1.msra.mxu0 0.0
    %11659 = vmatprep.subr.mxu0 0.0
    %11660 = vmatpush1.msra.mxu0 0.0
    %11661 = vmatprep.subr.mxu0 0.0
    %11662 = vmatpush1.msra.mxu0 0.0
    %11663 = vmatprep.subr.mxu0 0.0
    %11664 = vmatpush1.msra.mxu0 0.0
    %11665 = vmatprep.subr.mxu0 0.0
    %11666 = vmatpush1.msra.mxu0 0.0
    %11667 = vmatprep.subr.mxu0 0.0
    %11668 = vmatpush1.msra.mxu0 0.0
    %11669 = vmatprep.subr.mxu0 0.0
    %11670 = vmatpush1.msra.mxu0 0.0
    %11671 = vmatprep.subr.mxu0 0.0
    %11672 = vmatpush1.msra.mxu0 0.0
    %11673 = vmatprep.subr.mxu0 0.0
    %11674 = vmatpush1.msra.mxu0 0.0
    %11675 = vmatprep.subr.mxu0 0.0
    %11676 = vmatpush1.msra.mxu0 0.0
    %11677 = vmatprep.subr.mxu0 0.0
    %11678 = vmatpush1.msra.mxu0 0.0
    %11679 = vmatprep.subr.mxu0 0.0
    %11680 = vmatpush1.msra.mxu0 0.0
    %11681 = vmatprep.subr.mxu0 0.0
    %11682 = vmatpush1.msra.mxu0 0.0
    %11683 = vmatprep.subr.mxu0 0.0
    %11684 = vmatpush1.msra.mxu0 0.0
    %11685 = vmatprep.subr.mxu0 0.0
    %11686 = vmatpush1.msra.mxu0 0.0
    %11687 = vmatprep.subr.mxu0 0.0
    %11688 = vmatpush1.msra.mxu0 0.0
    %11689 = vmatprep.mubr.f32.mxu0 0.0
    %v11690 = vand.u32 %v11173, 4294901760
    %v11691 = vsub.f32 %v11173, %v11690
    %v11692 = vand.u32 %v11691, 4294901760
    %11693 = vmatmul.mubr.f32.gmra.mrb[0].mxu0 %v11692
    %v11694 = vpop.f32.mrb[0].mxu0
    %v11695 = vadd.f32 %v11585, %v11694
    %v11696 = vpop.f32.mrb[0].mxu0
    %11697 = vmatprep.mubr.f32.mxu0 0.0
    %v11698 = vand.u32 %v11174, 4294901760
    %v11699 = vsub.f32 %v11174, %v11698
    %v11700 = vand.u32 %v11699, 4294901760
    %11701 = vmatmul.mubr.f32.gmra.mrb[0].mxu0 %v11700
    %v11702 = vpop.f32.mrb[0].mxu0
    %v11703 = vadd.f32 %v11592, %v11702
    %v11704 = vpop.f32.mrb[0].mxu0
    %11705 = vmatprep.mubr.f32.mxu0 0.0
    %v11706 = vand.u32 %v11175, 4294901760
    %v11707 = vsub.f32 %v11175, %v11706
    %v11708 = vand.u32 %v11707, 4294901760
    %11709 = vmatmul.mubr.f32.gmra.mrb[0].mxu0 %v11708
    %v11710 = vpop.f32.mrb[0].mxu0
    %v11711 = vadd.f32 %v11599, %v11710
    %v11712 = vpop.f32.mrb[0].mxu0
    %11713 = vmatprep.mubr.f32.mxu0 0.0
    %v11714 = vand.u32 %v11176, 4294901760
    %v11715 = vsub.f32 %v11176, %v11714
    %v11716 = vand.u32 %v11715, 4294901760
    %11717 = vmatmul.mubr.f32.gmra.mrb[0].mxu0 %v11716
    %v11718 = vpop.f32.mrb[0].mxu0
    %v11719 = vadd.f32 %v11606, %v11718
    %v11720 = vpop.f32.mrb[0].mxu0
    %11721 = vdwg.mxu0
    %11722 = vmatprep.subr.mxu0 0.0
    %v11723 = vand.u32 %v11178, 4294901760
    %v11724 = vsub.f32 %v11178, %v11723
    %v11725 = vand.u32 %v11724, 4294901760
    %11726 = vmatpush1.msra.mxu0 %v11725
    %11727 = vmatprep.subr.mxu0 0.0
    %v11728 = vand.u32 %v11179, 4294901760
    %v11729 = vsub.f32 %v11179, %v11728
    %v11730 = vand.u32 %v11729, 4294901760
    %11731 = vmatpush1.msra.mxu0 %v11730
    %11732 = vmatprep.subr.mxu0 0.0
    %v11733 = vand.u32 %v11180, 4294901760
    %v11734 = vsub.f32 %v11180, %v11733
    %v11735 = vand.u32 %v11734, 4294901760
    %11736 = vmatpush1.msra.mxu0 %v11735
    %11737 = vmatprep.subr.mxu0 0.0
    %v11738 = vand.u32 %v11181, 4294901760
    %v11739 = vsub.f32 %v11181, %v11738
    %v11740 = vand.u32 %v11739, 4294901760
    %11741 = vmatpush1.msra.mxu0 %v11740
    %11742 = vmatprep.subr.mxu0 0.0
    %v11743 = vand.u32 %v11182, 4294901760
    %v11744 = vsub.f32 %v11182, %v11743
    %v11745 = vand.u32 %v11744, 4294901760
    %11746 = vmatpush1.msra.mxu0 %v11745
    %11747 = vmatprep.subr.mxu0 0.0
    %v11748 = vand.u32 %v11183, 4294901760
    %v11749 = vsub.f32 %v11183, %v11748
    %v11750 = vand.u32 %v11749, 4294901760
    %11751 = vmatpush1.msra.mxu0 %v11750
    %11752 = vmatprep.subr.mxu0 0.0
    %v11753 = vand.u32 %v11184, 4294901760
    %v11754 = vsub.f32 %v11184, %v11753
    %v11755 = vand.u32 %v11754, 4294901760
    %11756 = vmatpush1.msra.mxu0 %v11755
    %11757 = vmatprep.subr.mxu0 0.0
    %v11758 = vand.u32 %v11185, 4294901760
    %v11759 = vsub.f32 %v11185, %v11758
    %v11760 = vand.u32 %v11759, 4294901760
    %11761 = vmatpush1.msra.mxu0 %v11760
    %11762 = vmatprep.subr.mxu0 0.0
    %v11763 = vand.u32 %v11186, 4294901760
    %v11764 = vsub.f32 %v11186, %v11763
    %v11765 = vand.u32 %v11764, 4294901760
    %11766 = vmatpush1.msra.mxu0 %v11765
    %11767 = vmatprep.subr.mxu0 0.0
    %v11768 = vand.u32 %v11187, 4294901760
    %v11769 = vsub.f32 %v11187, %v11768
    %v11770 = vand.u32 %v11769, 4294901760
    %11771 = vmatpush1.msra.mxu0 %v11770
    %11772 = vmatprep.subr.mxu0 0.0
    %v11773 = vand.u32 %v11188, 4294901760
    %v11774 = vsub.f32 %v11188, %v11773
    %v11775 = vand.u32 %v11774, 4294901760
    %11776 = vmatpush1.msra.mxu0 %v11775
    %11777 = vmatprep.subr.mxu0 0.0
    %v11778 = vand.u32 %v11189, 4294901760
    %v11779 = vsub.f32 %v11189, %v11778
    %v11780 = vand.u32 %v11779, 4294901760
    %11781 = vmatpush1.msra.mxu0 %v11780
    %11782 = vmatprep.subr.mxu0 0.0
    %v11783 = vand.u32 %v11190, 4294901760
    %v11784 = vsub.f32 %v11190, %v11783
    %v11785 = vand.u32 %v11784, 4294901760
    %11786 = vmatpush1.msra.mxu0 %v11785
    %11787 = vmatprep.subr.mxu0 0.0
    %v11788 = vand.u32 %v11191, 4294901760
    %v11789 = vsub.f32 %v11191, %v11788
    %v11790 = vand.u32 %v11789, 4294901760
    %11791 = vmatpush1.msra.mxu0 %v11790
    %11792 = vmatprep.subr.mxu0 0.0
    %v11793 = vand.u32 %v11192, 4294901760
    %v11794 = vsub.f32 %v11192, %v11793
    %v11795 = vand.u32 %v11794, 4294901760
    %11796 = vmatpush1.msra.mxu0 %v11795
    %11797 = vmatprep.subr.mxu0 0.0
    %v11798 = vand.u32 %v11193, 4294901760
    %v11799 = vsub.f32 %v11193, %v11798
    %v11800 = vand.u32 %v11799, 4294901760
    %11801 = vmatpush1.msra.mxu0 %v11800
    %11802 = vmatprep.subr.mxu0 0.0
    %11803 = vmatpush1.msra.mxu0 0.0
    %11804 = vmatprep.subr.mxu0 0.0
    %11805 = vmatpush1.msra.mxu0 0.0
    %11806 = vmatprep.subr.mxu0 0.0
    %11807 = vmatpush1.msra.mxu0 0.0
    %11808 = vmatprep.subr.mxu0 0.0
    %11809 = vmatpush1.msra.mxu0 0.0
    %11810 = vmatprep.subr.mxu0 0.0
    %11811 = vmatpush1.msra.mxu0 0.0
    %11812 = vmatprep.subr.mxu0 0.0
    %11813 = vmatpush1.msra.mxu0 0.0
    %11814 = vmatprep.subr.mxu0 0.0
    %11815 = vmatpush1.msra.mxu0 0.0
    %11816 = vmatprep.subr.mxu0 0.0
    %11817 = vmatpush1.msra.mxu0 0.0
    %11818 = vmatprep.subr.mxu0 0.0
    %11819 = vmatpush1.msra.mxu0 0.0
    %11820 = vmatprep.subr.mxu0 0.0
    %11821 = vmatpush1.msra.mxu0 0.0
    %11822 = vmatprep.subr.mxu0 0.0
    %11823 = vmatpush1.msra.mxu0 0.0
    %11824 = vmatprep.subr.mxu0 0.0
    %11825 = vmatpush1.msra.mxu0 0.0
    %11826 = vmatprep.subr.mxu0 0.0
    %11827 = vmatpush1.msra.mxu0 0.0
    %11828 = vmatprep.subr.mxu0 0.0
    %11829 = vmatpush1.msra.mxu0 0.0
    %11830 = vmatprep.subr.mxu0 0.0
    %11831 = vmatpush1.msra.mxu0 0.0
    %11832 = vmatprep.subr.mxu0 0.0
    %11833 = vmatpush1.msra.mxu0 0.0
    %11834 = vmatprep.mubr.f32.mxu0 0.0
    %v11835 = vand.u32 %v11173, 4294901760
    %11836 = vmatmul.mubr.f32.gmra.mrb[0].mxu0 %v11835
    %v11837 = vpop.f32.mrb[0].mxu0
    %v11838 = vadd.f32 %v11695, %v11837
    %v11839 = vpop.f32.mrb[0].mxu0
    %11840 = vmatprep.mubr.f32.mxu0 0.0
    %v11841 = vand.u32 %v11174, 4294901760
    %11842 = vmatmul.mubr.f32.gmra.mrb[0].mxu0 %v11841
    %v11843 = vpop.f32.mrb[0].mxu0
    %v11844 = vadd.f32 %v11703, %v11843
    %v11845 = vpop.f32.mrb[0].mxu0
    %11846 = vmatprep.mubr.f32.mxu0 0.0
    %v11847 = vand.u32 %v11175, 4294901760
    %11848 = vmatmul.mubr.f32.gmra.mrb[0].mxu0 %v11847
    %v11849 = vpop.f32.mrb[0].mxu0
    %v11850 = vadd.f32 %v11711, %v11849
    %v11851 = vpop.f32.mrb[0].mxu0
    %11852 = vmatprep.mubr.f32.mxu0 0.0
    %v11853 = vand.u32 %v11176, 4294901760
    %11854 = vmatmul.mubr.f32.gmra.mrb[0].mxu0 %v11853
    %v11855 = vpop.f32.mrb[0].mxu0
    %v11856 = vadd.f32 %v11719, %v11855
    %v11857 = vpop.f32.mrb[0].mxu0
    %11858 = vdwg.mxu0
    %11859 = vmatprep.subr.mxu0 0.0
    %v11860 = vand.u32 %v11178, 4294901760
    %11861 = vmatpush1.msra.mxu0 %v11860
    %11862 = vmatprep.subr.mxu0 0.0
    %v11863 = vand.u32 %v11179, 4294901760
    %11864 = vmatpush1.msra.mxu0 %v11863
    %11865 = vmatprep.subr.mxu0 0.0
    %v11866 = vand.u32 %v11180, 4294901760
    %11867 = vmatpush1.msra.mxu0 %v11866
    %11868 = vmatprep.subr.mxu0 0.0
    %v11869 = vand.u32 %v11181, 4294901760
    %11870 = vmatpush1.msra.mxu0 %v11869
    %11871 = vmatprep.subr.mxu0 0.0
    %v11872 = vand.u32 %v11182, 4294901760
    %11873 = vmatpush1.msra.mxu0 %v11872
    %11874 = vmatprep.subr.mxu0 0.0
    %v11875 = vand.u32 %v11183, 4294901760
    %11876 = vmatpush1.msra.mxu0 %v11875
    %11877 = vmatprep.subr.mxu0 0.0
    %v11878 = vand.u32 %v11184, 4294901760
    %11879 = vmatpush1.msra.mxu0 %v11878
    %11880 = vmatprep.subr.mxu0 0.0
    %v11881 = vand.u32 %v11185, 4294901760
    %11882 = vmatpush1.msra.mxu0 %v11881
    %11883 = vmatprep.subr.mxu0 0.0
    %v11884 = vand.u32 %v11186, 4294901760
    %11885 = vmatpush1.msra.mxu0 %v11884
    %11886 = vmatprep.subr.mxu0 0.0
    %v11887 = vand.u32 %v11187, 4294901760
    %11888 = vmatpush1.msra.mxu0 %v11887
    %11889 = vmatprep.subr.mxu0 0.0
    %v11890 = vand.u32 %v11188, 4294901760
    %11891 = vmatpush1.msra.mxu0 %v11890
    %11892 = vmatprep.subr.mxu0 0.0
    %v11893 = vand.u32 %v11189, 4294901760
    %11894 = vmatpush1.msra.mxu0 %v11893
    %11895 = vmatprep.subr.mxu0 0.0
    %v11896 = vand.u32 %v11190, 4294901760
    %11897 = vmatpush1.msra.mxu0 %v11896
    %11898 = vmatprep.subr.mxu0 0.0
    %v11899 = vand.u32 %v11191, 4294901760
    %11900 = vmatpush1.msra.mxu0 %v11899
    %11901 = vmatprep.subr.mxu0 0.0
    %v11902 = vand.u32 %v11192, 4294901760
    %11903 = vmatpush1.msra.mxu0 %v11902
    %11904 = vmatprep.subr.mxu0 0.0
    %v11905 = vand.u32 %v11193, 4294901760
    %11906 = vmatpush1.msra.mxu0 %v11905
    %11907 = vmatprep.subr.mxu0 0.0
    %11908 = vmatpush1.msra.mxu0 0.0
    %11909 = vmatprep.subr.mxu0 0.0
    %11910 = vmatpush1.msra.mxu0 0.0
    %11911 = vmatprep.subr.mxu0 0.0
    %11912 = vmatpush1.msra.mxu0 0.0
    %11913 = vmatprep.subr.mxu0 0.0
    %11914 = vmatpush1.msra.mxu0 0.0
    %11915 = vmatprep.subr.mxu0 0.0
    %11916 = vmatpush1.msra.mxu0 0.0
    %11917 = vmatprep.subr.mxu0 0.0
    %11918 = vmatpush1.msra.mxu0 0.0
    %11919 = vmatprep.subr.mxu0 0.0
    %11920 = vmatpush1.msra.mxu0 0.0
    %11921 = vmatprep.subr.mxu0 0.0
    %11922 = vmatpush1.msra.mxu0 0.0
    %11923 = vmatprep.subr.mxu0 0.0
    %11924 = vmatpush1.msra.mxu0 0.0
    %11925 = vmatprep.subr.mxu0 0.0
    %11926 = vmatpush1.msra.mxu0 0.0
    %11927 = vmatprep.subr.mxu0 0.0
    %11928 = vmatpush1.msra.mxu0 0.0
    %11929 = vmatprep.subr.mxu0 0.0
    %11930 = vmatpush1.msra.mxu0 0.0
    %11931 = vmatprep.subr.mxu0 0.0
    %11932 = vmatpush1.msra.mxu0 0.0
    %11933 = vmatprep.subr.mxu0 0.0
    %11934 = vmatpush1.msra.mxu0 0.0
    %11935 = vmatprep.subr.mxu0 0.0
    %11936 = vmatpush1.msra.mxu0 0.0
    %11937 = vmatprep.subr.mxu0 0.0
    %11938 = vmatpush1.msra.mxu0 0.0
    %11939 = vmatprep.mubr.f32.mxu0 0.0
    %v11940 = vand.u32 %v11173, 4294901760
    %11941 = vmatmul.mubr.f32.gmra.mrb[0].mxu0 %v11940
    %v11942 = vpop.f32.mrb[0].mxu0
    %v11943 = vadd.f32 %v11838, %v11942
    %v11944 = vpop.f32.mrb[0].mxu0
    %11945 = vmatprep.mubr.f32.mxu0 0.0
    %v11946 = vand.u32 %v11174, 4294901760
    %11947 = vmatmul.mubr.f32.gmra.mrb[0].mxu0 %v11946
    %v11948 = vpop.f32.mrb[0].mxu0
    %v11949 = vadd.f32 %v11844, %v11948
    %v11950 = vpop.f32.mrb[0].mxu0
    %11951 = vmatprep.mubr.f32.mxu0 0.0
    %v11952 = vand.u32 %v11175, 4294901760
    %11953 = vmatmul.mubr.f32.gmra.mrb[0].mxu0 %v11952
    %v11954 = vpop.f32.mrb[0].mxu0
    %v11955 = vadd.f32 %v11850, %v11954
    %v11956 = vpop.f32.mrb[0].mxu0
    %11957 = vmatprep.mubr.f32.mxu0 0.0
    %v11958 = vand.u32 %v11176, 4294901760
    %11959 = vmatmul.mubr.f32.gmra.mrb[0].mxu0 %v11958
    %v11960 = vpop.f32.mrb[0].mxu0
    %v11961 = vadd.f32 %v11856, %v11960
    %v11962 = vpop.f32.mrb[0].mxu0
    %11963 = vdwg.mxu0
    %v11964 = vadd.f32 %v6352, %v11943
    %v11965 = vadd.f32 %v6353, %v11949
    %v11966 = vadd.f32 %v6354, %v11955
    %v11967 = vadd.f32 %v6355, %v11961
    %11968 = vst [vmem:[#allocation8] sm:$0xff] %v11964
    %11969 = vst [vmem:[#allocation8 + $0x8] sm:$0xff] %v11965
    %11970 = vst [vmem:[#allocation8 + $0x10] sm:$0xff] %v11966
    %11971 = vst [vmem:[#allocation8 + $0x18] sm:$0xff] %v11967
    // Predicated region
    $region50: #{tpu_custom_call.1} parent=1 // pred_check
      _
    $region51: #{tpu_custom_call.1} parent=1 // pred_check_branch
      %11973 = sbr.rel (0) target = $region53
    $region52: #{tpu_custom_call.1} parent=1 // pred_region
      %s11975 = ssub.s32 512, 512
      %11976 = vsyncadd [#allocation4], %s11975
      %s11977 = sshll.u32 [#allocation8], 4
      %s11978 = int_to_ptr.vmem [resolvable:$true] %s11977
      %11983 = dma.vmem_to_hbm [thread:$0]  %s11978, 512, %s9, [#allocation4], 128, 128, 8
    $region53: #{tpu_custom_call.1} parent=1 // pred_fallthru
      _
    // Predicated region
    $region54: #{tpu_custom_call.1} parent=1 // pred_check
      _
    $region55: #{tpu_custom_call.1} parent=1 // pred_check_branch
      %11985 = sbr.rel (0) target = $region57
    $region56: #{tpu_custom_call.1} parent=1 // pred_region
      %11986 = dma.done [#allocation4], 512
    $region57: #{tpu_custom_call.1} parent=1 // pred_fallthru
      _
    %11987 = vsyncpa [#allocation3], 1
    %11988 = vsyncpa [#allocation6], 1
    %11989 = vsyncpa [#allocation4], 1

</llo_original>
